<compile_context>
chip_gen: v6e
topology: v6e:2x2x1
jax: 0.10.0
libtpu: 0.0.40
codegen_flags: <defaults>
</compile_context>

<pallas_src>
import functools

import jax
import jax.numpy as jnp
from jax import lax
from jax.experimental import pallas as pl
from jax.experimental.pallas import tpu as pltpu

EMBED_SIZE = 64
BLOCK_SIZE = 32
NUM_HEADS = 4
HEAD_SIZE = EMBED_SIZE // NUM_HEADS
HIDDEN = 4 * EMBED_SIZE
LN_EPS = 1e-5


def _layernorm(x, gamma, beta):
    mu = jnp.mean(x, axis=-1, keepdims=True)
    var = jnp.mean((x - mu) ** 2, axis=-1, keepdims=True)
    return (x - mu) * lax.rsqrt(var + LN_EPS) * gamma + beta


def block_fast_kernel(
    x_ref,
    ln1_g_ref, ln1_b_ref,
    wqkv_ref, bqkv_ref,
    wp_ref, bp_ref,
    ln2_g_ref, ln2_b_ref,
    w1_ref, b1_ref, w2_ref, b2_ref,
    o_ref,
    *, seq_len,
):
    M, C = x_ref.shape            # M = BB * T rows of this grid step
    T = seq_len
    BB = M // T
    NH, HS = NUM_HEADS, HEAD_SIZE

    x = x_ref[...]                                    # (M, C) f32

    # ---- ln1 ----
    h = _layernorm(x, ln1_g_ref[...], ln1_b_ref[...])

    # ---- fused QKV projection: (M, 3C), lane-dense N = 192 ----
    # (the 1/sqrt(head_size) scale is pre-folded into the Q columns by prepare_params)
    qkv = jnp.dot(h, wqkv_ref[...], preferred_element_type=jnp.float32) + bqkv_ref[...]

    # ---- head-batched causal attention ----
    # Split heads once; leading batch order is (head, batch) so all reshapes are
    # major-dim only (no sublane/lane transposes).
    def split_heads(col_off):
        parts = [qkv[:, col_off + hd * HS: col_off + (hd + 1) * HS] for hd in range(NH)]
        return jnp.stack(parts, axis=0).reshape(NH * BB, T, HS)     # (NH*BB, T, HS)

    q = split_heads(0)
    k = split_heads(C)
    v = split_heads(2 * C)

    row = lax.broadcasted_iota(jnp.int32, (T, T), 0)
    col = lax.broadcasted_iota(jnp.int32, (T, T), 1)
    causal = (row >= col)[None]                       # (1, T, T) broadcasts over (NH*BB)

    wei = jnp.einsum('btd,bsd->bts', q, k,
                     preferred_element_type=jnp.float32)            # (NH*BB, T, T)
    wei = jnp.where(causal, wei, jnp.float32(-jnp.inf))
    wei = jnp.exp(wei - jnp.max(wei, axis=-1, keepdims=True))
    denom = jnp.sum(wei, axis=-1, keepdims=True)      # >= 1 after max-subtraction
    inv = pl.reciprocal(denom, approx=True)
    inv = inv * (2.0 - denom * inv)                   # one Newton step -> ~1e-7 rel err
    wei = wei * inv

    ctx = jnp.einsum('bts,bsd->btd', wei, v,
                     preferred_element_type=jnp.float32)            # (NH*BB, T, HS)
    ctx = ctx.reshape(NH, M, HS)
    att = jnp.concatenate([ctx[hd] for hd in range(NH)], axis=-1)   # (M, C) head-major

    # single K=64 output projection; dropout p=0.0 -> identity
    x1 = x + jnp.dot(att, wp_ref[...], preferred_element_type=jnp.float32) + bp_ref[...]

    # ---- ln2 + MLP ----
    h2 = _layernorm(x1, ln2_g_ref[...], ln2_b_ref[...])
    ff = jnp.dot(h2, w1_ref[...], preferred_element_type=jnp.float32) + b1_ref[...]
    ff = jnp.maximum(ff, 0.0)
    ff = jnp.dot(ff, w2_ref[...], preferred_element_type=jnp.float32) + b2_ref[...]

    o_ref[...] = x1 + ff


def _tensorcores_per_device():
    """Best-effort TC count of the attached device (perf-only decision)."""
    try:
        kind = jax.devices()[0].device_kind.lower()
    except Exception:
        return 1
    if "v7" in kind or "7x" in kind:
        return 2                      # v7x: 2 TensorCores per chip
    if "v4" in kind or "v5p" in kind or "v5 p" in kind:
        return 2                      # megacore chips
    return 1                          # v5e / v6e: single TensorCore


def _choose_block_batch(B):
    """Batch elements per grid step.

    Single-TC chips: one grid step with all rows (grid is a sequential loop, so
    extra steps are pure ~600-cycle overhead).  2-TC chips: exactly one step per
    core when B divides evenly; the block grows with B instead of adding steps.
    """
    n_tc = _tensorcores_per_device()
    if n_tc > 1 and B >= n_tc and B % n_tc == 0:
        return B // n_tc
    return B


def prepare_params(p):
    """One-time parameter prep: fuse Q|K|V into a (C, 3C) projection and fold the
    attention scale into the Q columns.  Call once; reuse across forward calls."""
    q = dict(p)
    if "wqkv" not in q:
        scale = jnp.float32(HEAD_SIZE ** -0.5)
        q["wqkv"] = jnp.concatenate([p["wq"] * scale, p["wk"], p["wv"]], axis=1)  # (C, 3C)
        q["bqkv"] = jnp.concatenate([p["bq"] * scale, p["bk"], p["bv"]], axis=1)  # (1, 3C)
    return q


def block_fast(x, p):
    B, T, C = x.shape
    assert C == EMBED_SIZE and T <= BLOCK_SIZE

    p = prepare_params(p)             # no-op if already prepared
    bb = _choose_block_batch(B)
    grid = (B // bb,)
    rows = bb * T

    x2 = x.reshape(B * T, C)          # free contiguous reshape in the wrapper

    full = lambda shape: pl.BlockSpec(shape, lambda b: (0,) * len(shape))
    in_specs = [
        pl.BlockSpec((rows, C), lambda b: (b, 0)),              # x rows
        full((1, C)), full((1, C)),                             # ln1 g/b
        full((C, 3 * C)), full((1, 3 * C)),                     # fused QKV w/b
        full((C, C)), full((1, C)),                             # proj w/b
        full((1, C)), full((1, C)),                             # ln2 g/b
        full((C, HIDDEN)), full((1, HIDDEN)),                   # fc1 w/b
        full((HIDDEN, C)), full((1, C)),                        # fc2 w/b
    ]
    args = (
        x2,
        p["ln1_g"], p["ln1_b"],
        p["wqkv"], p["bqkv"],
        p["wp"], p["bp"],
        p["ln2_g"], p["ln2_b"],
        p["w1"], p["b1"], p["w2"], p["b2"],
    )

    H = HIDDEN
    flops = 2 * B * T * (3 * C * C + 2 * T * C + C * C + 2 * C * H)
    transcendentals = B * NUM_HEADS * T * (T + 1)                 # exp + rcp
    param_bytes = sum(int(a.size) * a.dtype.itemsize for a in args[1:])
    bytes_accessed = 2 * B * T * C * 4 + param_bytes

    out2 = pl.pallas_call(
        functools.partial(block_fast_kernel, seq_len=T),
        out_shape=jax.ShapeDtypeStruct((B * T, C), jnp.float32),
        grid_spec=pltpu.PrefetchScalarGridSpec(
            num_scalar_prefetch=0,
            grid=grid,
            in_specs=in_specs,
            out_specs=pl.BlockSpec((rows, C), lambda b: (b, 0)),
        ),
        compiler_params=pltpu.CompilerParams(dimension_semantics=("parallel",)),
        cost_estimate=pl.CostEstimate(
            flops=flops,
            transcendentals=transcendentals,
            bytes_accessed=bytes_accessed,
        ),
    )(*args)

    # TODO(synk): if this block is used in a multi-layer stack, fuse layers into one
    # pallas_call (layer grid axis over weight BlockSpecs) to amortize launch cost.
    return out2.reshape(B, T, C)


def make_params(key):
    ks = jax.random.split(key, 12)
    n = lambda k, shape, s=0.02: (jax.random.normal(k, shape, jnp.float32) * s)
    C, H = EMBED_SIZE, HIDDEN
    return dict(
        ln1_g=jnp.ones((1, C), jnp.float32), ln1_b=jnp.zeros((1, C), jnp.float32),
        wq=n(ks[0], (C, C)), bq=n(ks[1], (1, C)),
        wk=n(ks[2], (C, C)), bk=n(ks[3], (1, C)),
        wv=n(ks[4], (C, C)), bv=n(ks[5], (1, C)),
        wp=n(ks[6], (C, C)), bp=n(ks[7], (1, C)),
        ln2_g=jnp.ones((1, C), jnp.float32), ln2_b=jnp.zeros((1, C), jnp.float32),
        w1=n(ks[8], (C, H)), b1=n(ks[9], (1, H)),
        w2=n(ks[10], (H, C)), b2=n(ks[11], (1, C)),
    )


def reference(x, p):
    """Pure-JAX mirror of the PyTorch Block_Fast forward pass."""
    B, T, C = x.shape

    def ln(z, g, b):
        mu = z.mean(-1, keepdims=True)
        var = ((z - mu) ** 2).mean(-1, keepdims=True)
        return (z - mu) / jnp.sqrt(var + LN_EPS) * g + b

    h = ln(x, p["ln1_g"], p["ln1_b"])
    q = h @ p["wq"] + p["bq"]
    k = h @ p["wk"] + p["bk"]
    v = h @ p["wv"] + p["bv"]
    rs = lambda z: z.reshape(B, T, NUM_HEADS, HEAD_SIZE).transpose(0, 2, 1, 3)
    q, k, v = rs(q), rs(k), rs(v)
    wei = (q @ k.transpose(0, 1, 3, 2)) * (HEAD_SIZE ** -0.5)
    tril = jnp.tril(jnp.ones((T, T), bool))
    wei = jnp.where(tril, wei, -jnp.inf)
    wei = jax.nn.softmax(wei, axis=-1)
    att = (wei @ v).transpose(0, 2, 1, 3).reshape(B, T, C)
    att = att @ p["wp"] + p["bp"]
    x1 = x + att
    h2 = ln(x1, p["ln2_g"], p["ln2_b"])
    ff = jnp.maximum(h2 @ p["w1"] + p["b1"], 0.0) @ p["w2"] + p["b2"]
    return x1 + ff


if __name__ == "__main__":
    key = jax.random.PRNGKey(0)
    kx, kp = jax.random.split(key)
    B, T, C = 8, BLOCK_SIZE, EMBED_SIZE
    x = jax.random.normal(kx, (B, T, C), jnp.float32)
    params = prepare_params(make_params(kp))   # one-time QKV fusion / scale fold

    out = block_fast(x, params)
    out = jax.block_until_ready(out)

    ref = reference(x, params)
    assert out.shape == (B, T, C)
    assert jnp.allclose(out, ref, atol=1e-4, rtol=1e-4), (
        float(jnp.max(jnp.abs(out - ref)))
    )
    print("KERNEL_OK")
</pallas_src>

<mosaic_0001>
module attributes {stable_mosaic.version = 11 : i64} {
  func.func @block_fast_kernel(%arg0: i32, %arg1: memref<256x64xf32, #tpu.memory_space<vmem>>, %arg2: memref<1x64xf32, #tpu.memory_space<vmem>>, %arg3: memref<1x64xf32, #tpu.memory_space<vmem>>, %arg4: memref<64x192xf32, #tpu.memory_space<vmem>>, %arg5: memref<1x192xf32, #tpu.memory_space<vmem>>, %arg6: memref<64x64xf32, #tpu.memory_space<vmem>>, %arg7: memref<1x64xf32, #tpu.memory_space<vmem>>, %arg8: memref<1x64xf32, #tpu.memory_space<vmem>>, %arg9: memref<1x64xf32, #tpu.memory_space<vmem>>, %arg10: memref<64x256xf32, #tpu.memory_space<vmem>>, %arg11: memref<1x256xf32, #tpu.memory_space<vmem>>, %arg12: memref<256x64xf32, #tpu.memory_space<vmem>>, %arg13: memref<1x64xf32, #tpu.memory_space<vmem>>, %arg14: memref<256x64xf32, #tpu.memory_space<vmem>>) attributes {dimension_semantics = [#tpu.dimension_semantics<parallel>], iteration_bounds = array<i64: 1>, scalar_prefetch = 0 : i64, scratch_operands = 0 : i64, tpu.core_type = #tpu.core_type<tc>, window_params = [{transform_indices = @transform_0, window_bounds = array<i64: 256, 64>}, {pipeline_mode = #tpu.pipeline_mode<synchronous>, transform_indices = @transform_1, window_bounds = array<i64: 1, 64>}, {pipeline_mode = #tpu.pipeline_mode<synchronous>, transform_indices = @transform_2, window_bounds = array<i64: 1, 64>}, {pipeline_mode = #tpu.pipeline_mode<synchronous>, transform_indices = @transform_3, window_bounds = array<i64: 64, 192>}, {pipeline_mode = #tpu.pipeline_mode<synchronous>, transform_indices = @transform_4, window_bounds = array<i64: 1, 192>}, {pipeline_mode = #tpu.pipeline_mode<synchronous>, transform_indices = @transform_5, window_bounds = array<i64: 64, 64>}, {pipeline_mode = #tpu.pipeline_mode<synchronous>, transform_indices = @transform_6, window_bounds = array<i64: 1, 64>}, {pipeline_mode = #tpu.pipeline_mode<synchronous>, transform_indices = @transform_7, window_bounds = array<i64: 1, 64>}, {pipeline_mode = #tpu.pipeline_mode<synchronous>, transform_indices = @transform_8, window_bounds = array<i64: 1, 64>}, {pipeline_mode = #tpu.pipeline_mode<synchronous>, transform_indices = @transform_9, window_bounds = array<i64: 64, 256>}, {pipeline_mode = #tpu.pipeline_mode<synchronous>, transform_indices = @transform_10, window_bounds = array<i64: 1, 256>}, {pipeline_mode = #tpu.pipeline_mode<synchronous>, transform_indices = @transform_11, window_bounds = array<i64: 256, 64>}, {pipeline_mode = #tpu.pipeline_mode<synchronous>, transform_indices = @transform_12, window_bounds = array<i64: 1, 64>}, {transform_indices = @transform_13, window_bounds = array<i64: 256, 64>}]} {
    %c0 = arith.constant 0 : index
    %c0_0 = arith.constant 0 : index
    %0 = vector.load %arg1[%c0, %c0_0] : memref<256x64xf32, #tpu.memory_space<vmem>>, vector<256x64xf32>
    %c0_1 = arith.constant 0 : index
    %c0_2 = arith.constant 0 : index
    %1 = vector.load %arg2[%c0_1, %c0_2] : memref<1x64xf32, #tpu.memory_space<vmem>>, vector<1x64xf32>
    %c0_3 = arith.constant 0 : index
    %c0_4 = arith.constant 0 : index
    %2 = vector.load %arg3[%c0_3, %c0_4] : memref<1x64xf32, #tpu.memory_space<vmem>>, vector<1x64xf32>
    %cst = arith.constant dense<0.000000e+00> : vector<256xf32>
    %3 = vector.multi_reduction <add>, %0, %cst [1] : vector<256x64xf32> to vector<256xf32>
    %4 = vector.shape_cast %3 : vector<256xf32> to vector<256x1xf32>
    %cst_5 = arith.constant 6.400000e+01 : f32
    %5 = vector.broadcast %cst_5 : f32 to vector<256x1xf32>
    %6 = arith.divf %4, %5 : vector<256x1xf32>
    %7 = vector.broadcast %6 : vector<256x1xf32> to vector<256x64xf32>
    %8 = arith.subf %0, %7 : vector<256x64xf32>
    %9 = arith.mulf %8, %8 : vector<256x64xf32>
    %cst_6 = arith.constant dense<0.000000e+00> : vector<256xf32>
    %10 = vector.multi_reduction <add>, %9, %cst_6 [1] : vector<256x64xf32> to vector<256xf32>
    %11 = vector.shape_cast %10 : vector<256xf32> to vector<256x1xf32>
    %cst_7 = arith.constant 6.400000e+01 : f32
    %12 = vector.broadcast %cst_7 : f32 to vector<256x1xf32>
    %13 = arith.divf %11, %12 : vector<256x1xf32>
    %14 = vector.broadcast %6 : vector<256x1xf32> to vector<256x64xf32>
    %15 = arith.subf %0, %14 : vector<256x64xf32>
    %cst_8 = arith.constant 9.99999974E-6 : f32
    %16 = vector.broadcast %cst_8 : f32 to vector<256x1xf32>
    %17 = arith.addf %13, %16 : vector<256x1xf32>
    %18 = math.rsqrt %17 : vector<256x1xf32>
    %19 = vector.broadcast %18 : vector<256x1xf32> to vector<256x64xf32>
    %20 = arith.mulf %15, %19 : vector<256x64xf32>
    %21 = vector.broadcast %1 : vector<1x64xf32> to vector<256x64xf32>
    %22 = arith.mulf %20, %21 : vector<256x64xf32>
    %23 = vector.broadcast %2 : vector<1x64xf32> to vector<256x64xf32>
    %24 = arith.addf %22, %23 : vector<256x64xf32>
    %c0_9 = arith.constant 0 : index
    %c0_10 = arith.constant 0 : index
    %25 = vector.load %arg4[%c0_9, %c0_10] : memref<64x192xf32, #tpu.memory_space<vmem>>, vector<64x192xf32>
    %cst_11 = arith.constant dense<0.000000e+00> : vector<256x192xf32>
    %26 = tpu.matmul %24, %25, %cst_11 {dimension_numbers = #tpu.dot_dimension_numbers<[1], [0], [0], [1], [0, 0, 1, 1], [], []>} : vector<256x64xf32>, vector<64x192xf32>, vector<256x192xf32> -> vector<256x192xf32>
    %c0_12 = arith.constant 0 : index
    %c0_13 = arith.constant 0 : index
    %27 = vector.load %arg5[%c0_12, %c0_13] : memref<1x192xf32, #tpu.memory_space<vmem>>, vector<1x192xf32>
    %28 = vector.broadcast %27 : vector<1x192xf32> to vector<256x192xf32>
    %29 = arith.addf %26, %28 : vector<256x192xf32>
    %30 = vector.extract_strided_slice %29 {offsets = [0, 0], sizes = [256, 16], strides = [1, 1]} : vector<256x192xf32> to vector<256x16xf32>
    %31 = vector.extract_strided_slice %29 {offsets = [0, 16], sizes = [256, 16], strides = [1, 1]} : vector<256x192xf32> to vector<256x16xf32>
    %32 = vector.extract_strided_slice %29 {offsets = [0, 32], sizes = [256, 16], strides = [1, 1]} : vector<256x192xf32> to vector<256x16xf32>
    %33 = vector.extract_strided_slice %29 {offsets = [0, 48], sizes = [256, 16], strides = [1, 1]} : vector<256x192xf32> to vector<256x16xf32>
    %34 = vector.shape_cast %30 : vector<256x16xf32> to vector<1x256x16xf32>
    %35 = vector.shape_cast %31 : vector<256x16xf32> to vector<1x256x16xf32>
    %36 = vector.shape_cast %32 : vector<256x16xf32> to vector<1x256x16xf32>
    %37 = vector.shape_cast %33 : vector<256x16xf32> to vector<1x256x16xf32>
    %38 = tpu.concatenate %34, %35, %36, %37 in 0 : vector<1x256x16xf32>, vector<1x256x16xf32>, vector<1x256x16xf32>, vector<1x256x16xf32> -> vector<4x256x16xf32>
    %39 = vector.shape_cast %38 : vector<4x256x16xf32> to vector<32x32x16xf32>
    %40 = vector.extract_strided_slice %29 {offsets = [0, 64], sizes = [256, 16], strides = [1, 1]} : vector<256x192xf32> to vector<256x16xf32>
    %41 = vector.extract_strided_slice %29 {offsets = [0, 80], sizes = [256, 16], strides = [1, 1]} : vector<256x192xf32> to vector<256x16xf32>
    %42 = vector.extract_strided_slice %29 {offsets = [0, 96], sizes = [256, 16], strides = [1, 1]} : vector<256x192xf32> to vector<256x16xf32>
    %43 = vector.extract_strided_slice %29 {offsets = [0, 112], sizes = [256, 16], strides = [1, 1]} : vector<256x192xf32> to vector<256x16xf32>
    %44 = vector.shape_cast %40 : vector<256x16xf32> to vector<1x256x16xf32>
    %45 = vector.shape_cast %41 : vector<256x16xf32> to vector<1x256x16xf32>
    %46 = vector.shape_cast %42 : vector<256x16xf32> to vector<1x256x16xf32>
    %47 = vector.shape_cast %43 : vector<256x16xf32> to vector<1x256x16xf32>
    %48 = tpu.concatenate %44, %45, %46, %47 in 0 : vector<1x256x16xf32>, vector<1x256x16xf32>, vector<1x256x16xf32>, vector<1x256x16xf32> -> vector<4x256x16xf32>
    %49 = vector.shape_cast %48 : vector<4x256x16xf32> to vector<32x32x16xf32>
    %50 = vector.extract_strided_slice %29 {offsets = [0, 128], sizes = [256, 16], strides = [1, 1]} : vector<256x192xf32> to vector<256x16xf32>
    %51 = vector.extract_strided_slice %29 {offsets = [0, 144], sizes = [256, 16], strides = [1, 1]} : vector<256x192xf32> to vector<256x16xf32>
    %52 = vector.extract_strided_slice %29 {offsets = [0, 160], sizes = [256, 16], strides = [1, 1]} : vector<256x192xf32> to vector<256x16xf32>
    %53 = vector.extract_strided_slice %29 {offsets = [0, 176], sizes = [256, 16], strides = [1, 1]} : vector<256x192xf32> to vector<256x16xf32>
    %54 = vector.shape_cast %50 : vector<256x16xf32> to vector<1x256x16xf32>
    %55 = vector.shape_cast %51 : vector<256x16xf32> to vector<1x256x16xf32>
    %56 = vector.shape_cast %52 : vector<256x16xf32> to vector<1x256x16xf32>
    %57 = vector.shape_cast %53 : vector<256x16xf32> to vector<1x256x16xf32>
    %58 = tpu.concatenate %54, %55, %56, %57 in 0 : vector<1x256x16xf32>, vector<1x256x16xf32>, vector<1x256x16xf32>, vector<1x256x16xf32> -> vector<4x256x16xf32>
    %59 = vector.shape_cast %58 : vector<4x256x16xf32> to vector<32x32x16xf32>
    %60 = tpu.iota {dimensions = array<i32: 0>} : vector<32x32xi32>
    %61 = tpu.iota {dimensions = array<i32: 1>} : vector<32x32xi32>
    %62 = arith.cmpi sge, %60, %61 : vector<32x32xi32>
    %63 = vector.shape_cast %62 : vector<32x32xi1> to vector<1x32x32xi1>
    "tpu.trace_start"() <{level = 10 : i32, message = "btd,bsd->bts"}> : () -> ()
    %cst_14 = arith.constant dense<0.000000e+00> : vector<32x32x32xf32>
    %64 = tpu.matmul %39, %49, %cst_14 {dimension_numbers = #tpu.dot_dimension_numbers<[2], [2], [1], [1], [0, 0, 0, 1, 1, 1], [0], [0]>} : vector<32x32x16xf32>, vector<32x32x16xf32>, vector<32x32x32xf32> -> vector<32x32x32xf32>
    %cst_15 = arith.constant 0xFF800000 : f32
    "tpu.trace_stop"() : () -> ()
    %65 = vector.shape_cast %63 : vector<1x32x32xi1> to vector<1x32x32xi1>
    %66 = vector.broadcast %65 : vector<1x32x32xi1> to vector<32x32x32xi1>
    %67 = vector.broadcast %cst_15 : f32 to vector<32x32x32xf32>
    %68 = arith.select %66, %64, %67 : vector<32x32x32xi1>, vector<32x32x32xf32>
    %cst_16 = arith.constant dense<0xFF800000> : vector<32x32xf32>
    %69 = vector.multi_reduction <maximumf>, %68, %cst_16 [2] : vector<32x32x32xf32> to vector<32x32xf32>
    %70 = vector.shape_cast %69 : vector<32x32xf32> to vector<32x32x1xf32>
    %71 = vector.broadcast %70 : vector<32x32x1xf32> to vector<32x32x32xf32>
    %72 = arith.subf %68, %71 : vector<32x32x32xf32>
    %73 = math.exp %72 : vector<32x32x32xf32>
    %cst_17 = arith.constant dense<0.000000e+00> : vector<32x32xf32>
    %74 = vector.multi_reduction <add>, %73, %cst_17 [2] : vector<32x32x32xf32> to vector<32x32xf32>
    %75 = vector.shape_cast %74 : vector<32x32xf32> to vector<32x32x1xf32>
    %76 = tpu.reciprocal %75 {approx = true} : vector<32x32x1xf32> -> vector<32x32x1xf32>
    %77 = arith.mulf %75, %76 : vector<32x32x1xf32>
    %cst_18 = arith.constant 2.000000e+00 : f32
    %78 = vector.broadcast %cst_18 : f32 to vector<32x32x1xf32>
    %79 = arith.subf %78, %77 : vector<32x32x1xf32>
    %80 = arith.mulf %76, %79 : vector<32x32x1xf32>
    %81 = vector.broadcast %80 : vector<32x32x1xf32> to vector<32x32x32xf32>
    %82 = arith.mulf %73, %81 : vector<32x32x32xf32>
    "tpu.trace_start"() <{level = 10 : i32, message = "bts,bsd->btd"}> : () -> ()
    %cst_19 = arith.constant dense<0.000000e+00> : vector<32x32x16xf32>
    %83 = tpu.matmul %82, %59, %cst_19 {dimension_numbers = #tpu.dot_dimension_numbers<[2], [1], [1], [2], [0, 0, 0, 1, 1, 2], [0], [0]>} : vector<32x32x32xf32>, vector<32x32x16xf32>, vector<32x32x16xf32> -> vector<32x32x16xf32>
    "tpu.trace_stop"() : () -> ()
    %84 = vector.shape_cast %83 : vector<32x32x16xf32> to vector<4x256x16xf32>
    %85 = vector.extract_strided_slice %84 {offsets = [0, 0, 0], sizes = [1, 256, 16], strides = [1, 1, 1]} : vector<4x256x16xf32> to vector<1x256x16xf32>
    %86 = vector.shape_cast %85 : vector<1x256x16xf32> to vector<256x16xf32>
    %87 = vector.extract_strided_slice %84 {offsets = [1, 0, 0], sizes = [1, 256, 16], strides = [1, 1, 1]} : vector<4x256x16xf32> to vector<1x256x16xf32>
    %88 = vector.shape_cast %87 : vector<1x256x16xf32> to vector<256x16xf32>
    %89 = vector.extract_strided_slice %84 {offsets = [2, 0, 0], sizes = [1, 256, 16], strides = [1, 1, 1]} : vector<4x256x16xf32> to vector<1x256x16xf32>
    %90 = vector.shape_cast %89 : vector<1x256x16xf32> to vector<256x16xf32>
    %91 = vector.extract_strided_slice %84 {offsets = [3, 0, 0], sizes = [1, 256, 16], strides = [1, 1, 1]} : vector<4x256x16xf32> to vector<1x256x16xf32>
    %92 = vector.shape_cast %91 : vector<1x256x16xf32> to vector<256x16xf32>
    %93 = tpu.concatenate %86, %88, %90, %92 in 1 : vector<256x16xf32>, vector<256x16xf32>, vector<256x16xf32>, vector<256x16xf32> -> vector<256x64xf32>
    %c0_20 = arith.constant 0 : index
    %c0_21 = arith.constant 0 : index
    %94 = vector.load %arg6[%c0_20, %c0_21] : memref<64x64xf32, #tpu.memory_space<vmem>>, vector<64x64xf32>
    %cst_22 = arith.constant dense<0.000000e+00> : vector<256x64xf32>
    %95 = tpu.matmul %93, %94, %cst_22 {dimension_numbers = #tpu.dot_dimension_numbers<[1], [0], [0], [1], [0, 0, 1, 1], [], []>} : vector<256x64xf32>, vector<64x64xf32>, vector<256x64xf32> -> vector<256x64xf32>
    %96 = arith.addf %0, %95 : vector<256x64xf32>
    %c0_23 = arith.constant 0 : index
    %c0_24 = arith.constant 0 : index
    %97 = vector.load %arg7[%c0_23, %c0_24] : memref<1x64xf32, #tpu.memory_space<vmem>>, vector<1x64xf32>
    %98 = vector.broadcast %97 : vector<1x64xf32> to vector<256x64xf32>
    %99 = arith.addf %96, %98 : vector<256x64xf32>
    %c0_25 = arith.constant 0 : index
    %c0_26 = arith.constant 0 : index
    %100 = vector.load %arg8[%c0_25, %c0_26] : memref<1x64xf32, #tpu.memory_space<vmem>>, vector<1x64xf32>
    %c0_27 = arith.constant 0 : index
    %c0_28 = arith.constant 0 : index
    %101 = vector.load %arg9[%c0_27, %c0_28] : memref<1x64xf32, #tpu.memory_space<vmem>>, vector<1x64xf32>
    %cst_29 = arith.constant dense<0.000000e+00> : vector<256xf32>
    %102 = vector.multi_reduction <add>, %99, %cst_29 [1] : vector<256x64xf32> to vector<256xf32>
    %103 = vector.shape_cast %102 : vector<256xf32> to vector<256x1xf32>
    %cst_30 = arith.constant 6.400000e+01 : f32
    %104 = vector.broadcast %cst_30 : f32 to vector<256x1xf32>
    %105 = arith.divf %103, %104 : vector<256x1xf32>
    %106 = vector.broadcast %105 : vector<256x1xf32> to vector<256x64xf32>
    %107 = arith.subf %99, %106 : vector<256x64xf32>
    %108 = arith.mulf %107, %107 : vector<256x64xf32>
    %cst_31 = arith.constant dense<0.000000e+00> : vector<256xf32>
    %109 = vector.multi_reduction <add>, %108, %cst_31 [1] : vector<256x64xf32> to vector<256xf32>
    %110 = vector.shape_cast %109 : vector<256xf32> to vector<256x1xf32>
    %cst_32 = arith.constant 6.400000e+01 : f32
    %111 = vector.broadcast %cst_32 : f32 to vector<256x1xf32>
    %112 = arith.divf %110, %111 : vector<256x1xf32>
    %113 = vector.broadcast %105 : vector<256x1xf32> to vector<256x64xf32>
    %114 = arith.subf %99, %113 : vector<256x64xf32>
    %cst_33 = arith.constant 9.99999974E-6 : f32
    %115 = vector.broadcast %cst_33 : f32 to vector<256x1xf32>
    %116 = arith.addf %112, %115 : vector<256x1xf32>
    %117 = math.rsqrt %116 : vector<256x1xf32>
    %118 = vector.broadcast %117 : vector<256x1xf32> to vector<256x64xf32>
    %119 = arith.mulf %114, %118 : vector<256x64xf32>
    %120 = vector.broadcast %100 : vector<1x64xf32> to vector<256x64xf32>
    %121 = arith.mulf %119, %120 : vector<256x64xf32>
    %122 = vector.broadcast %101 : vector<1x64xf32> to vector<256x64xf32>
    %123 = arith.addf %121, %122 : vector<256x64xf32>
    %c0_34 = arith.constant 0 : index
    %c0_35 = arith.constant 0 : index
    %124 = vector.load %arg10[%c0_34, %c0_35] : memref<64x256xf32, #tpu.memory_space<vmem>>, vector<64x256xf32>
    %cst_36 = arith.constant dense<0.000000e+00> : vector<256x256xf32>
    %125 = tpu.matmul %123, %124, %cst_36 {dimension_numbers = #tpu.dot_dimension_numbers<[1], [0], [0], [1], [0, 0, 1, 1], [], []>} : vector<256x64xf32>, vector<64x256xf32>, vector<256x256xf32> -> vector<256x256xf32>
    %c0_37 = arith.constant 0 : index
    %c0_38 = arith.constant 0 : index
    %126 = vector.load %arg11[%c0_37, %c0_38] : memref<1x256xf32, #tpu.memory_space<vmem>>, vector<1x256xf32>
    %127 = vector.broadcast %126 : vector<1x256xf32> to vector<256x256xf32>
    %128 = arith.addf %125, %127 : vector<256x256xf32>
    %cst_39 = arith.constant 0.000000e+00 : f32
    %129 = vector.broadcast %cst_39 : f32 to vector<256x256xf32>
    %130 = arith.maximumf %128, %129 : vector<256x256xf32>
    %c0_40 = arith.constant 0 : index
    %c0_41 = arith.constant 0 : index
    %131 = vector.load %arg12[%c0_40, %c0_41] : memref<256x64xf32, #tpu.memory_space<vmem>>, vector<256x64xf32>
    %cst_42 = arith.constant dense<0.000000e+00> : vector<256x64xf32>
    %132 = tpu.matmul %130, %131, %cst_42 {dimension_numbers = #tpu.dot_dimension_numbers<[1], [0], [0], [1], [0, 0, 1, 1], [], []>} : vector<256x256xf32>, vector<256x64xf32>, vector<256x64xf32> -> vector<256x64xf32>
    %c0_43 = arith.constant 0 : index
    %c0_44 = arith.constant 0 : index
    %133 = vector.load %arg13[%c0_43, %c0_44] : memref<1x64xf32, #tpu.memory_space<vmem>>, vector<1x64xf32>
    %134 = vector.broadcast %133 : vector<1x64xf32> to vector<256x64xf32>
    %135 = arith.addf %132, %134 : vector<256x64xf32>
    %136 = arith.addf %99, %135 : vector<256x64xf32>
    %c0_45 = arith.constant 0 : index
    %c0_46 = arith.constant 0 : index
    %137 = vector.load %arg14[%c0_45, %c0_46] : memref<256x64xf32, #tpu.memory_space<vmem>>, vector<256x64xf32>
    tpu.vector_store %arg14[%c0_45, %c0_46], %136 {strides = array<i32>} : memref<256x64xf32, #tpu.memory_space<vmem>>, vector<256x64xf32>,
    return
  }
  func.func @transform_0(%arg0: i32) -> (i32, i32) {
    %c0_i32 = arith.constant 0 : i32
    %c0_i32_0 = arith.constant 0 : i32
    return %arg0, %c0_i32 : i32, i32
  }
  func.func @transform_1(%arg0: i32) -> (i32, i32) {
    %c0_i32 = arith.constant 0 : i32
    %c0_i32_0 = arith.constant 0 : i32
    %c0_i32_1 = arith.constant 0 : i32
    return %c0_i32, %c0_i32_0 : i32, i32
  }
  func.func @transform_2(%arg0: i32) -> (i32, i32) {
    %c0_i32 = arith.constant 0 : i32
    %c0_i32_0 = arith.constant 0 : i32
    %c0_i32_1 = arith.constant 0 : i32
    return %c0_i32, %c0_i32_0 : i32, i32
  }
  func.func @transform_3(%arg0: i32) -> (i32, i32) {
    %c0_i32 = arith.constant 0 : i32
    %c0_i32_0 = arith.constant 0 : i32
    %c0_i32_1 = arith.constant 0 : i32
    return %c0_i32, %c0_i32_0 : i32, i32
  }
  func.func @transform_4(%arg0: i32) -> (i32, i32) {
    %c0_i32 = arith.constant 0 : i32
    %c0_i32_0 = arith.constant 0 : i32
    %c0_i32_1 = arith.constant 0 : i32
    return %c0_i32, %c0_i32_0 : i32, i32
  }
  func.func @transform_5(%arg0: i32) -> (i32, i32) {
    %c0_i32 = arith.constant 0 : i32
    %c0_i32_0 = arith.constant 0 : i32
    %c0_i32_1 = arith.constant 0 : i32
    return %c0_i32, %c0_i32_0 : i32, i32
  }
  func.func @transform_6(%arg0: i32) -> (i32, i32) {
    %c0_i32 = arith.constant 0 : i32
    %c0_i32_0 = arith.constant 0 : i32
    %c0_i32_1 = arith.constant 0 : i32
    return %c0_i32, %c0_i32_0 : i32, i32
  }
  func.func @transform_7(%arg0: i32) -> (i32, i32) {
    %c0_i32 = arith.constant 0 : i32
    %c0_i32_0 = arith.constant 0 : i32
    %c0_i32_1 = arith.constant 0 : i32
    return %c0_i32, %c0_i32_0 : i32, i32
  }
  func.func @transform_8(%arg0: i32) -> (i32, i32) {
    %c0_i32 = arith.constant 0 : i32
    %c0_i32_0 = arith.constant 0 : i32
    %c0_i32_1 = arith.constant 0 : i32
    return %c0_i32, %c0_i32_0 : i32, i32
  }
  func.func @transform_9(%arg0: i32) -> (i32, i32) {
    %c0_i32 = arith.constant 0 : i32
    %c0_i32_0 = arith.constant 0 : i32
    %c0_i32_1 = arith.constant 0 : i32
    return %c0_i32, %c0_i32_0 : i32, i32
  }
  func.func @transform_10(%arg0: i32) -> (i32, i32) {
    %c0_i32 = arith.constant 0 : i32
    %c0_i32_0 = arith.constant 0 : i32
    %c0_i32_1 = arith.constant 0 : i32
    return %c0_i32, %c0_i32_0 : i32, i32
  }
  func.func @transform_11(%arg0: i32) -> (i32, i32) {
    %c0_i32 = arith.constant 0 : i32
    %c0_i32_0 = arith.constant 0 : i32
    %c0_i32_1 = arith.constant 0 : i32
    return %c0_i32, %c0_i32_0 : i32, i32
  }
  func.func @transform_12(%arg0: i32) -> (i32, i32) {
    %c0_i32 = arith.constant 0 : i32
    %c0_i32_0 = arith.constant 0 : i32
    %c0_i32_1 = arith.constant 0 : i32
    return %c0_i32, %c0_i32_0 : i32, i32
  }
  func.func @transform_13(%arg0: i32) -> (i32, i32) {
    %c0_i32 = arith.constant 0 : i32
    %c0_i32_0 = arith.constant 0 : i32
    return %arg0, %c0_i32 : i32, i32
  }
}

</mosaic_0001>

<llo_original>
// kernel: tpu_custom_call.1
$region0: #{tpu_custom_call.1}
  #allocation0 [shape = 'u32[]', space=smem, size = 0x4, offset = 0x4, fixed_abs, tag = 'smem constant byte address 0x4 - core index']
  #allocation1 [shape = 'u32[144,128]{1,0:T(1,128)}', space=vmem, size = 0x12000, scoped, tag = 'internal scratch']
  %s0 = inlined_call_operand.vmem [shape: f32[256,64], index: 0, kind: input, shape index: {}]
  %s1 = inlined_call_operand.vmem [shape: f32[1,64], index: 1, kind: input, shape index: {}]
  %s2 = inlined_call_operand.vmem [shape: f32[1,64], index: 2, kind: input, shape index: {}]
  %s3 = inlined_call_operand.vmem [shape: f32[64,192], index: 3, kind: input, shape index: {}]
  %s4 = inlined_call_operand.vmem [shape: f32[1,192], index: 4, kind: input, shape index: {}]
  %s5 = inlined_call_operand.vmem [shape: f32[64,64], index: 5, kind: input, shape index: {}]
  %s6 = inlined_call_operand.vmem [shape: f32[1,64], index: 6, kind: input, shape index: {}]
  %s7 = inlined_call_operand.vmem [shape: f32[1,64], index: 7, kind: input, shape index: {}]
  %s8 = inlined_call_operand.vmem [shape: f32[1,64], index: 8, kind: input, shape index: {}]
  %s9 = inlined_call_operand.vmem [shape: f32[64,256], index: 9, kind: input, shape index: {}]
  %s10 = inlined_call_operand.vmem [shape: f32[1,256], index: 10, kind: input, shape index: {}]
  %s11 = inlined_call_operand.vmem [shape: f32[256,64], index: 11, kind: input, shape index: {}]
  %s12 = inlined_call_operand.vmem [shape: f32[1,64], index: 12, kind: input, shape index: {}]
  %s13 = inlined_call_operand.vmem [shape: f32[256,64], index: 13, kind: output, shape index: {}]
  %s14 = sld [smem:[#allocation0]]
  $region62: #{tpu_custom_call.1} parent=0
    _
  %s16 = ssub.s32 1, %s14
  %s17 = scalar_select 0, %s16, %s14
  // Predicated region
  $region2: #{tpu_custom_call.1} parent=0 // pred_check
    _
  $region3: #{tpu_custom_call.1} parent=0 // pred_check_branch
    %19 = sbr.rel (0) target = $region5
  $region4: #{tpu_custom_call.1} parent=0 // pred_region
    _
  $region5: #{tpu_custom_call.1} parent=0 // pred_fallthru
    _
  // Predicated region
  $region6: #{tpu_custom_call.1} parent=0 // pred_check
    _
  $region7: #{tpu_custom_call.1} parent=0 // pred_check_branch
    %21 = sbr.rel (0) target = $region9
  $region8: #{tpu_custom_call.1} parent=0 // pred_region
    _
  $region9: #{tpu_custom_call.1} parent=0 // pred_fallthru
    _
  // Predicated region
  $region10: #{tpu_custom_call.1} parent=0 // pred_check
    _
  $region11: #{tpu_custom_call.1} parent=0 // pred_check_branch
    %23 = sbr.rel (0) target = $region13
  $region12: #{tpu_custom_call.1} parent=0 // pred_region
    _
  $region13: #{tpu_custom_call.1} parent=0 // pred_fallthru
    _
  // Predicated region
  $region14: #{tpu_custom_call.1} parent=0 // pred_check
    _
  $region15: #{tpu_custom_call.1} parent=0 // pred_check_branch
    %25 = sbr.rel (0) target = $region17
  $region16: #{tpu_custom_call.1} parent=0 // pred_region
    _
  $region17: #{tpu_custom_call.1} parent=0 // pred_fallthru
    _
  // Predicated region
  $region18: #{tpu_custom_call.1} parent=0 // pred_check
    _
  $region19: #{tpu_custom_call.1} parent=0 // pred_check_branch
    %27 = sbr.rel (0) target = $region21
  $region20: #{tpu_custom_call.1} parent=0 // pred_region
    _
  $region21: #{tpu_custom_call.1} parent=0 // pred_fallthru
    _
  // Predicated region
  $region22: #{tpu_custom_call.1} parent=0 // pred_check
    _
  $region23: #{tpu_custom_call.1} parent=0 // pred_check_branch
    %29 = sbr.rel (0) target = $region25
  $region24: #{tpu_custom_call.1} parent=0 // pred_region
    _
  $region25: #{tpu_custom_call.1} parent=0 // pred_fallthru
    _
  // Predicated region
  $region26: #{tpu_custom_call.1} parent=0 // pred_check
    _
  $region27: #{tpu_custom_call.1} parent=0 // pred_check_branch
    %31 = sbr.rel (0) target = $region29
  $region28: #{tpu_custom_call.1} parent=0 // pred_region
    _
  $region29: #{tpu_custom_call.1} parent=0 // pred_fallthru
    _
  // Predicated region
  $region30: #{tpu_custom_call.1} parent=0 // pred_check
    _
  $region31: #{tpu_custom_call.1} parent=0 // pred_check_branch
    %33 = sbr.rel (0) target = $region33
  $region32: #{tpu_custom_call.1} parent=0 // pred_region
    _
  $region33: #{tpu_custom_call.1} parent=0 // pred_fallthru
    _
  // Predicated region
  $region34: #{tpu_custom_call.1} parent=0 // pred_check
    _
  $region35: #{tpu_custom_call.1} parent=0 // pred_check_branch
    %35 = sbr.rel (0) target = $region37
  $region36: #{tpu_custom_call.1} parent=0 // pred_region
    _
  $region37: #{tpu_custom_call.1} parent=0 // pred_fallthru
    _
  // Predicated region
  $region38: #{tpu_custom_call.1} parent=0 // pred_check
    _
  $region39: #{tpu_custom_call.1} parent=0 // pred_check_branch
    %37 = sbr.rel (0) target = $region41
  $region40: #{tpu_custom_call.1} parent=0 // pred_region
    _
  $region41: #{tpu_custom_call.1} parent=0 // pred_fallthru
    _
  // Predicated region
  $region42: #{tpu_custom_call.1} parent=0 // pred_check
    _
  $region43: #{tpu_custom_call.1} parent=0 // pred_check_branch
    %39 = sbr.rel (0) target = $region45
  $region44: #{tpu_custom_call.1} parent=0 // pred_region
    _
  $region45: #{tpu_custom_call.1} parent=0 // pred_fallthru
    _
  // Predicated region
  $region46: #{tpu_custom_call.1} parent=0 // pred_check
    _
  $region47: #{tpu_custom_call.1} parent=0 // pred_check_branch
    %41 = sbr.rel (0) target = $region49
  $region48: #{tpu_custom_call.1} parent=0 // pred_region
    _
  $region49: #{tpu_custom_call.1} parent=0 // pred_fallthru
    _
  // Predicated region
  $region50: #{tpu_custom_call.1} parent=0 // pred_check
    _
  $region51: #{tpu_custom_call.1} parent=0 // pred_check_branch
    %43 = sbr.rel (0) target = $region53
  $region52: #{tpu_custom_call.1} parent=0 // pred_region
    _
  $region53: #{tpu_custom_call.1} parent=0 // pred_fallthru
    _
  %v44 = vld [vmem:[%s0] sm:$0xff]
  %v45 = vld [vmem:[%s0 + $0x8] sm:$0xff]
  %v46 = vld [vmem:[%s0 + $0x10] sm:$0xff]
  %v47 = vld [vmem:[%s0 + $0x18] sm:$0xff]
  %v48 = vld [vmem:[%s0 + $0x20] sm:$0xff]
  %v49 = vld [vmem:[%s0 + $0x28] sm:$0xff]
  %v50 = vld [vmem:[%s0 + $0x30] sm:$0xff]
  %v51 = vld [vmem:[%s0 + $0x38] sm:$0xff]
  %v52 = vld [vmem:[%s0 + $0x40] sm:$0xff]
  %v53 = vld [vmem:[%s0 + $0x48] sm:$0xff]
  %v54 = vld [vmem:[%s0 + $0x50] sm:$0xff]
  %v55 = vld [vmem:[%s0 + $0x58] sm:$0xff]
  %v56 = vld [vmem:[%s0 + $0x60] sm:$0xff]
  %v57 = vld [vmem:[%s0 + $0x68] sm:$0xff]
  %v58 = vld [vmem:[%s0 + $0x70] sm:$0xff]
  %v59 = vld [vmem:[%s0 + $0x78] sm:$0xff]
  %v60 = vld [vmem:[%s0 + $0x80] sm:$0xff]
  %v61 = vld [vmem:[%s0 + $0x88] sm:$0xff]
  %v62 = vld [vmem:[%s0 + $0x90] sm:$0xff]
  %v63 = vld [vmem:[%s0 + $0x98] sm:$0xff]
  %v64 = vld [vmem:[%s0 + $0xa0] sm:$0xff]
  %v65 = vld [vmem:[%s0 + $0xa8] sm:$0xff]
  %v66 = vld [vmem:[%s0 + $0xb0] sm:$0xff]
  %v67 = vld [vmem:[%s0 + $0xb8] sm:$0xff]
  %v68 = vld [vmem:[%s0 + $0xc0] sm:$0xff]
  %v69 = vld [vmem:[%s0 + $0xc8] sm:$0xff]
  %v70 = vld [vmem:[%s0 + $0xd0] sm:$0xff]
  %v71 = vld [vmem:[%s0 + $0xd8] sm:$0xff]
  %v72 = vld [vmem:[%s0 + $0xe0] sm:$0xff]
  %v73 = vld [vmem:[%s0 + $0xe8] sm:$0xff]
  %v74 = vld [vmem:[%s0 + $0xf0] sm:$0xff]
  %v75 = vld [vmem:[%s0 + $0xf8] sm:$0xff]
  %v76 = vld [vmem:[%s1] sm:$0x1]
  %v77 = vld [vmem:[%s2] sm:$0x1]
  %vm78 = vcmask 523264
  %v79 = vsel %vm78, %v44, 0.0
  %80 = vadd.xlane.f32.xlu0 %v79
  %v81 = vpop.xlane.xlu0 %80
  %v82 = vsel %vm78, %v45, 0.0
  %83 = vadd.xlane.f32.xlu0 %v82
  %v84 = vpop.xlane.xlu0 %83
  %v85 = vsel %vm78, %v46, 0.0
  %86 = vadd.xlane.f32.xlu0 %v85
  %v87 = vpop.xlane.xlu0 %86
  %v88 = vsel %vm78, %v47, 0.0
  %89 = vadd.xlane.f32.xlu0 %v88
  %v90 = vpop.xlane.xlu0 %89
  %v91 = vsel %vm78, %v48, 0.0
  %92 = vadd.xlane.f32.xlu0 %v91
  %v93 = vpop.xlane.xlu0 %92
  %v94 = vsel %vm78, %v49, 0.0
  %95 = vadd.xlane.f32.xlu0 %v94
  %v96 = vpop.xlane.xlu0 %95
  %v97 = vsel %vm78, %v50, 0.0
  %98 = vadd.xlane.f32.xlu0 %v97
  %v99 = vpop.xlane.xlu0 %98
  %v100 = vsel %vm78, %v51, 0.0
  %101 = vadd.xlane.f32.xlu0 %v100
  %v102 = vpop.xlane.xlu0 %101
  %v103 = vsel %vm78, %v52, 0.0
  %104 = vadd.xlane.f32.xlu0 %v103
  %v105 = vpop.xlane.xlu0 %104
  %v106 = vsel %vm78, %v53, 0.0
  %107 = vadd.xlane.f32.xlu0 %v106
  %v108 = vpop.xlane.xlu0 %107
  %v109 = vsel %vm78, %v54, 0.0
  %110 = vadd.xlane.f32.xlu0 %v109
  %v111 = vpop.xlane.xlu0 %110
  %v112 = vsel %vm78, %v55, 0.0
  %113 = vadd.xlane.f32.xlu0 %v112
  %v114 = vpop.xlane.xlu0 %113
  %v115 = vsel %vm78, %v56, 0.0
  %116 = vadd.xlane.f32.xlu0 %v115
  %v117 = vpop.xlane.xlu0 %116
  %v118 = vsel %vm78, %v57, 0.0
  %119 = vadd.xlane.f32.xlu0 %v118
  %v120 = vpop.xlane.xlu0 %119
  %v121 = vsel %vm78, %v58, 0.0
  %122 = vadd.xlane.f32.xlu0 %v121
  %v123 = vpop.xlane.xlu0 %122
  %v124 = vsel %vm78, %v59, 0.0
  %125 = vadd.xlane.f32.xlu0 %v124
  %v126 = vpop.xlane.xlu0 %125
  %v127 = vsel %vm78, %v60, 0.0
  %128 = vadd.xlane.f32.xlu0 %v127
  %v129 = vpop.xlane.xlu0 %128
  %v130 = vsel %vm78, %v61, 0.0
  %131 = vadd.xlane.f32.xlu0 %v130
  %v132 = vpop.xlane.xlu0 %131
  %v133 = vsel %vm78, %v62, 0.0
  %134 = vadd.xlane.f32.xlu0 %v133
  %v135 = vpop.xlane.xlu0 %134
  %v136 = vsel %vm78, %v63, 0.0
  %137 = vadd.xlane.f32.xlu0 %v136
  %v138 = vpop.xlane.xlu0 %137
  %v139 = vsel %vm78, %v64, 0.0
  %140 = vadd.xlane.f32.xlu0 %v139
  %v141 = vpop.xlane.xlu0 %140
  %v142 = vsel %vm78, %v65, 0.0
  %143 = vadd.xlane.f32.xlu0 %v142
  %v144 = vpop.xlane.xlu0 %143
  %v145 = vsel %vm78, %v66, 0.0
  %146 = vadd.xlane.f32.xlu0 %v145
  %v147 = vpop.xlane.xlu0 %146
  %v148 = vsel %vm78, %v67, 0.0
  %149 = vadd.xlane.f32.xlu0 %v148
  %v150 = vpop.xlane.xlu0 %149
  %v151 = vsel %vm78, %v68, 0.0
  %152 = vadd.xlane.f32.xlu0 %v151
  %v153 = vpop.xlane.xlu0 %152
  %v154 = vsel %vm78, %v69, 0.0
  %155 = vadd.xlane.f32.xlu0 %v154
  %v156 = vpop.xlane.xlu0 %155
  %v157 = vsel %vm78, %v70, 0.0
  %158 = vadd.xlane.f32.xlu0 %v157
  %v159 = vpop.xlane.xlu0 %158
  %v160 = vsel %vm78, %v71, 0.0
  %161 = vadd.xlane.f32.xlu0 %v160
  %v162 = vpop.xlane.xlu0 %161
  %v163 = vsel %vm78, %v72, 0.0
  %164 = vadd.xlane.f32.xlu0 %v163
  %v165 = vpop.xlane.xlu0 %164
  %v166 = vsel %vm78, %v73, 0.0
  %167 = vadd.xlane.f32.xlu0 %v166
  %v168 = vpop.xlane.xlu0 %167
  %v169 = vsel %vm78, %v74, 0.0
  %170 = vadd.xlane.f32.xlu0 %v169
  %v171 = vpop.xlane.xlu0 %170
  %v172 = vsel %vm78, %v75, 0.0
  %173 = vadd.xlane.f32.xlu0 %v172
  %v174 = vpop.xlane.xlu0 %173
  %v175 = vrcp.pop 64.0
  %v176 = vmul.f32 %v81, %v175
  %v177 = vmul.f32 %v84, %v175
  %v178 = vmul.f32 %v87, %v175
  %v179 = vmul.f32 %v90, %v175
  %v180 = vmul.f32 %v93, %v175
  %v181 = vmul.f32 %v96, %v175
  %v182 = vmul.f32 %v99, %v175
  %v183 = vmul.f32 %v102, %v175
  %v184 = vmul.f32 %v105, %v175
  %v185 = vmul.f32 %v108, %v175
  %v186 = vmul.f32 %v111, %v175
  %v187 = vmul.f32 %v114, %v175
  %v188 = vmul.f32 %v117, %v175
  %v189 = vmul.f32 %v120, %v175
  %v190 = vmul.f32 %v123, %v175
  %v191 = vmul.f32 %v126, %v175
  %v192 = vmul.f32 %v129, %v175
  %v193 = vmul.f32 %v132, %v175
  %v194 = vmul.f32 %v135, %v175
  %v195 = vmul.f32 %v138, %v175
  %v196 = vmul.f32 %v141, %v175
  %v197 = vmul.f32 %v144, %v175
  %v198 = vmul.f32 %v147, %v175
  %v199 = vmul.f32 %v150, %v175
  %v200 = vmul.f32 %v153, %v175
  %v201 = vmul.f32 %v156, %v175
  %v202 = vmul.f32 %v159, %v175
  %v203 = vmul.f32 %v162, %v175
  %v204 = vmul.f32 %v165, %v175
  %v205 = vmul.f32 %v168, %v175
  %v206 = vmul.f32 %v171, %v175
  %v207 = vmul.f32 %v174, %v175
  %v208 = vsub.f32 %v44, %v176
  %v209 = vsub.f32 %v45, %v177
  %v210 = vsub.f32 %v46, %v178
  %v211 = vsub.f32 %v47, %v179
  %v212 = vsub.f32 %v48, %v180
  %v213 = vsub.f32 %v49, %v181
  %v214 = vsub.f32 %v50, %v182
  %v215 = vsub.f32 %v51, %v183
  %v216 = vsub.f32 %v52, %v184
  %v217 = vsub.f32 %v53, %v185
  %v218 = vsub.f32 %v54, %v186
  %v219 = vsub.f32 %v55, %v187
  %v220 = vsub.f32 %v56, %v188
  %v221 = vsub.f32 %v57, %v189
  %v222 = vsub.f32 %v58, %v190
  %v223 = vsub.f32 %v59, %v191
  %v224 = vsub.f32 %v60, %v192
  %v225 = vsub.f32 %v61, %v193
  %v226 = vsub.f32 %v62, %v194
  %v227 = vsub.f32 %v63, %v195
  %v228 = vsub.f32 %v64, %v196
  %v229 = vsub.f32 %v65, %v197
  %v230 = vsub.f32 %v66, %v198
  %v231 = vsub.f32 %v67, %v199
  %v232 = vsub.f32 %v68, %v200
  %v233 = vsub.f32 %v69, %v201
  %v234 = vsub.f32 %v70, %v202
  %v235 = vsub.f32 %v71, %v203
  %v236 = vsub.f32 %v72, %v204
  %v237 = vsub.f32 %v73, %v205
  %v238 = vsub.f32 %v74, %v206
  %v239 = vsub.f32 %v75, %v207
  %v240 = vmul.f32 %v208, %v208
  %v241 = vmul.f32 %v209, %v209
  %v242 = vmul.f32 %v210, %v210
  %v243 = vmul.f32 %v211, %v211
  %v244 = vmul.f32 %v212, %v212
  %v245 = vmul.f32 %v213, %v213
  %v246 = vmul.f32 %v214, %v214
  %v247 = vmul.f32 %v215, %v215
  %v248 = vmul.f32 %v216, %v216
  %v249 = vmul.f32 %v217, %v217
  %v250 = vmul.f32 %v218, %v218
  %v251 = vmul.f32 %v219, %v219
  %v252 = vmul.f32 %v220, %v220
  %v253 = vmul.f32 %v221, %v221
  %v254 = vmul.f32 %v222, %v222
  %v255 = vmul.f32 %v223, %v223
  %v256 = vmul.f32 %v224, %v224
  %v257 = vmul.f32 %v225, %v225
  %v258 = vmul.f32 %v226, %v226
  %v259 = vmul.f32 %v227, %v227
  %v260 = vmul.f32 %v228, %v228
  %v261 = vmul.f32 %v229, %v229
  %v262 = vmul.f32 %v230, %v230
  %v263 = vmul.f32 %v231, %v231
  %v264 = vmul.f32 %v232, %v232
  %v265 = vmul.f32 %v233, %v233
  %v266 = vmul.f32 %v234, %v234
  %v267 = vmul.f32 %v235, %v235
  %v268 = vmul.f32 %v236, %v236
  %v269 = vmul.f32 %v237, %v237
  %v270 = vmul.f32 %v238, %v238
  %v271 = vmul.f32 %v239, %v239
  %v272 = vsel %vm78, %v240, 0.0
  %273 = vadd.xlane.f32.xlu0 %v272
  %v274 = vpop.xlane.xlu0 %273
  %v275 = vsel %vm78, %v241, 0.0
  %276 = vadd.xlane.f32.xlu0 %v275
  %v277 = vpop.xlane.xlu0 %276
  %v278 = vsel %vm78, %v242, 0.0
  %279 = vadd.xlane.f32.xlu0 %v278
  %v280 = vpop.xlane.xlu0 %279
  %v281 = vsel %vm78, %v243, 0.0
  %282 = vadd.xlane.f32.xlu0 %v281
  %v283 = vpop.xlane.xlu0 %282
  %v284 = vsel %vm78, %v244, 0.0
  %285 = vadd.xlane.f32.xlu0 %v284
  %v286 = vpop.xlane.xlu0 %285
  %v287 = vsel %vm78, %v245, 0.0
  %288 = vadd.xlane.f32.xlu0 %v287
  %v289 = vpop.xlane.xlu0 %288
  %v290 = vsel %vm78, %v246, 0.0
  %291 = vadd.xlane.f32.xlu0 %v290
  %v292 = vpop.xlane.xlu0 %291
  %v293 = vsel %vm78, %v247, 0.0
  %294 = vadd.xlane.f32.xlu0 %v293
  %v295 = vpop.xlane.xlu0 %294
  %v296 = vsel %vm78, %v248, 0.0
  %297 = vadd.xlane.f32.xlu0 %v296
  %v298 = vpop.xlane.xlu0 %297
  %v299 = vsel %vm78, %v249, 0.0
  %300 = vadd.xlane.f32.xlu0 %v299
  %v301 = vpop.xlane.xlu0 %300
  %v302 = vsel %vm78, %v250, 0.0
  %303 = vadd.xlane.f32.xlu0 %v302
  %v304 = vpop.xlane.xlu0 %303
  %v305 = vsel %vm78, %v251, 0.0
  %306 = vadd.xlane.f32.xlu0 %v305
  %v307 = vpop.xlane.xlu0 %306
  %v308 = vsel %vm78, %v252, 0.0
  %309 = vadd.xlane.f32.xlu0 %v308
  %v310 = vpop.xlane.xlu0 %309
  %v311 = vsel %vm78, %v253, 0.0
  %312 = vadd.xlane.f32.xlu0 %v311
  %v313 = vpop.xlane.xlu0 %312
  %v314 = vsel %vm78, %v254, 0.0
  %315 = vadd.xlane.f32.xlu0 %v314
  %v316 = vpop.xlane.xlu0 %315
  %v317 = vsel %vm78, %v255, 0.0
  %318 = vadd.xlane.f32.xlu0 %v317
  %v319 = vpop.xlane.xlu0 %318
  %v320 = vsel %vm78, %v256, 0.0
  %321 = vadd.xlane.f32.xlu0 %v320
  %v322 = vpop.xlane.xlu0 %321
  %v323 = vsel %vm78, %v257, 0.0
  %324 = vadd.xlane.f32.xlu0 %v323
  %v325 = vpop.xlane.xlu0 %324
  %v326 = vsel %vm78, %v258, 0.0
  %327 = vadd.xlane.f32.xlu0 %v326
  %v328 = vpop.xlane.xlu0 %327
  %v329 = vsel %vm78, %v259, 0.0
  %330 = vadd.xlane.f32.xlu0 %v329
  %v331 = vpop.xlane.xlu0 %330
  %v332 = vsel %vm78, %v260, 0.0
  %333 = vadd.xlane.f32.xlu0 %v332
  %v334 = vpop.xlane.xlu0 %333
  %v335 = vsel %vm78, %v261, 0.0
  %336 = vadd.xlane.f32.xlu0 %v335
  %v337 = vpop.xlane.xlu0 %336
  %v338 = vsel %vm78, %v262, 0.0
  %339 = vadd.xlane.f32.xlu0 %v338
  %v340 = vpop.xlane.xlu0 %339
  %v341 = vsel %vm78, %v263, 0.0
  %342 = vadd.xlane.f32.xlu0 %v341
  %v343 = vpop.xlane.xlu0 %342
  %v344 = vsel %vm78, %v264, 0.0
  %345 = vadd.xlane.f32.xlu0 %v344
  %v346 = vpop.xlane.xlu0 %345
  %v347 = vsel %vm78, %v265, 0.0
  %348 = vadd.xlane.f32.xlu0 %v347
  %v349 = vpop.xlane.xlu0 %348
  %v350 = vsel %vm78, %v266, 0.0
  %351 = vadd.xlane.f32.xlu0 %v350
  %v352 = vpop.xlane.xlu0 %351
  %v353 = vsel %vm78, %v267, 0.0
  %354 = vadd.xlane.f32.xlu0 %v353
  %v355 = vpop.xlane.xlu0 %354
  %v356 = vsel %vm78, %v268, 0.0
  %357 = vadd.xlane.f32.xlu0 %v356
  %v358 = vpop.xlane.xlu0 %357
  %v359 = vsel %vm78, %v269, 0.0
  %360 = vadd.xlane.f32.xlu0 %v359
  %v361 = vpop.xlane.xlu0 %360
  %v362 = vsel %vm78, %v270, 0.0
  %363 = vadd.xlane.f32.xlu0 %v362
  %v364 = vpop.xlane.xlu0 %363
  %v365 = vsel %vm78, %v271, 0.0
  %366 = vadd.xlane.f32.xlu0 %v365
  %v367 = vpop.xlane.xlu0 %366
  %v368 = vmul.f32 %v274, %v175
  %v369 = vmul.f32 %v277, %v175
  %v370 = vmul.f32 %v280, %v175
  %v371 = vmul.f32 %v283, %v175
  %v372 = vmul.f32 %v286, %v175
  %v373 = vmul.f32 %v289, %v175
  %v374 = vmul.f32 %v292, %v175
  %v375 = vmul.f32 %v295, %v175
  %v376 = vmul.f32 %v298, %v175
  %v377 = vmul.f32 %v301, %v175
  %v378 = vmul.f32 %v304, %v175
  %v379 = vmul.f32 %v307, %v175
  %v380 = vmul.f32 %v310, %v175
  %v381 = vmul.f32 %v313, %v175
  %v382 = vmul.f32 %v316, %v175
  %v383 = vmul.f32 %v319, %v175
  %v384 = vmul.f32 %v322, %v175
  %v385 = vmul.f32 %v325, %v175
  %v386 = vmul.f32 %v328, %v175
  %v387 = vmul.f32 %v331, %v175
  %v388 = vmul.f32 %v334, %v175
  %v389 = vmul.f32 %v337, %v175
  %v390 = vmul.f32 %v340, %v175
  %v391 = vmul.f32 %v343, %v175
  %v392 = vmul.f32 %v346, %v175
  %v393 = vmul.f32 %v349, %v175
  %v394 = vmul.f32 %v352, %v175
  %v395 = vmul.f32 %v355, %v175
  %v396 = vmul.f32 %v358, %v175
  %v397 = vmul.f32 %v361, %v175
  %v398 = vmul.f32 %v364, %v175
  %v399 = vmul.f32 %v367, %v175
  %v400 = vadd.f32 %v368, 1e-05
  %v401 = vadd.f32 %v369, 1e-05
  %v402 = vadd.f32 %v370, 1e-05
  %v403 = vadd.f32 %v371, 1e-05
  %v404 = vadd.f32 %v372, 1e-05
  %v405 = vadd.f32 %v373, 1e-05
  %v406 = vadd.f32 %v374, 1e-05
  %v407 = vadd.f32 %v375, 1e-05
  %v408 = vadd.f32 %v376, 1e-05
  %v409 = vadd.f32 %v377, 1e-05
  %v410 = vadd.f32 %v378, 1e-05
  %v411 = vadd.f32 %v379, 1e-05
  %v412 = vadd.f32 %v380, 1e-05
  %v413 = vadd.f32 %v381, 1e-05
  %v414 = vadd.f32 %v382, 1e-05
  %v415 = vadd.f32 %v383, 1e-05
  %v416 = vadd.f32 %v384, 1e-05
  %v417 = vadd.f32 %v385, 1e-05
  %v418 = vadd.f32 %v386, 1e-05
  %v419 = vadd.f32 %v387, 1e-05
  %v420 = vadd.f32 %v388, 1e-05
  %v421 = vadd.f32 %v389, 1e-05
  %v422 = vadd.f32 %v390, 1e-05
  %v423 = vadd.f32 %v391, 1e-05
  %v424 = vadd.f32 %v392, 1e-05
  %v425 = vadd.f32 %v393, 1e-05
  %v426 = vadd.f32 %v394, 1e-05
  %v427 = vadd.f32 %v395, 1e-05
  %v428 = vadd.f32 %v396, 1e-05
  %v429 = vadd.f32 %v397, 1e-05
  %v430 = vadd.f32 %v398, 1e-05
  %v431 = vadd.f32 %v399, 1e-05
  %v432 = vrsqrt.pop %v400
  %v433 = vrsqrt.pop %v401
  %v434 = vrsqrt.pop %v402
  %v435 = vrsqrt.pop %v403
  %v436 = vrsqrt.pop %v404
  %v437 = vrsqrt.pop %v405
  %v438 = vrsqrt.pop %v406
  %v439 = vrsqrt.pop %v407
  %v440 = vrsqrt.pop %v408
  %v441 = vrsqrt.pop %v409
  %v442 = vrsqrt.pop %v410
  %v443 = vrsqrt.pop %v411
  %v444 = vrsqrt.pop %v412
  %v445 = vrsqrt.pop %v413
  %v446 = vrsqrt.pop %v414
  %v447 = vrsqrt.pop %v415
  %v448 = vrsqrt.pop %v416
  %v449 = vrsqrt.pop %v417
  %v450 = vrsqrt.pop %v418
  %v451 = vrsqrt.pop %v419
  %v452 = vrsqrt.pop %v420
  %v453 = vrsqrt.pop %v421
  %v454 = vrsqrt.pop %v422
  %v455 = vrsqrt.pop %v423
  %v456 = vrsqrt.pop %v424
  %v457 = vrsqrt.pop %v425
  %v458 = vrsqrt.pop %v426
  %v459 = vrsqrt.pop %v427
  %v460 = vrsqrt.pop %v428
  %v461 = vrsqrt.pop %v429
  %v462 = vrsqrt.pop %v430
  %v463 = vrsqrt.pop %v431
  %v464 = vmul.f32 %v208, %v432
  %v465 = vmul.f32 %v209, %v433
  %v466 = vmul.f32 %v210, %v434
  %v467 = vmul.f32 %v211, %v435
  %v468 = vmul.f32 %v212, %v436
  %v469 = vmul.f32 %v213, %v437
  %v470 = vmul.f32 %v214, %v438
  %v471 = vmul.f32 %v215, %v439
  %v472 = vmul.f32 %v216, %v440
  %v473 = vmul.f32 %v217, %v441
  %v474 = vmul.f32 %v218, %v442
  %v475 = vmul.f32 %v219, %v443
  %v476 = vmul.f32 %v220, %v444
  %v477 = vmul.f32 %v221, %v445
  %v478 = vmul.f32 %v222, %v446
  %v479 = vmul.f32 %v223, %v447
  %v480 = vmul.f32 %v224, %v448
  %v481 = vmul.f32 %v225, %v449
  %v482 = vmul.f32 %v226, %v450
  %v483 = vmul.f32 %v227, %v451
  %v484 = vmul.f32 %v228, %v452
  %v485 = vmul.f32 %v229, %v453
  %v486 = vmul.f32 %v230, %v454
  %v487 = vmul.f32 %v231, %v455
  %v488 = vmul.f32 %v232, %v456
  %v489 = vmul.f32 %v233, %v457
  %v490 = vmul.f32 %v234, %v458
  %v491 = vmul.f32 %v235, %v459
  %v492 = vmul.f32 %v236, %v460
  %v493 = vmul.f32 %v237, %v461
  %v494 = vmul.f32 %v238, %v462
  %v495 = vmul.f32 %v239, %v463
  %v497 = vlaneseq
  %v498 = vshrl.u32 %v497, 7
  %v499 = vsub.s32 0, %v498
  %v500 = vrot.slane %v76, %v499
  %v502 = vmul.f32 %v464, %v500
  %v503 = vmul.f32 %v465, %v500
  %v504 = vmul.f32 %v466, %v500
  %v505 = vmul.f32 %v467, %v500
  %v506 = vmul.f32 %v468, %v500
  %v507 = vmul.f32 %v469, %v500
  %v508 = vmul.f32 %v470, %v500
  %v509 = vmul.f32 %v471, %v500
  %v510 = vmul.f32 %v472, %v500
  %v511 = vmul.f32 %v473, %v500
  %v512 = vmul.f32 %v474, %v500
  %v513 = vmul.f32 %v475, %v500
  %v514 = vmul.f32 %v476, %v500
  %v515 = vmul.f32 %v477, %v500
  %v516 = vmul.f32 %v478, %v500
  %v517 = vmul.f32 %v479, %v500
  %v518 = vmul.f32 %v480, %v500
  %v519 = vmul.f32 %v481, %v500
  %v520 = vmul.f32 %v482, %v500
  %v521 = vmul.f32 %v483, %v500
  %v522 = vmul.f32 %v484, %v500
  %v523 = vmul.f32 %v485, %v500
  %v524 = vmul.f32 %v486, %v500
  %v525 = vmul.f32 %v487, %v500
  %v526 = vmul.f32 %v488, %v500
  %v527 = vmul.f32 %v489, %v500
  %v528 = vmul.f32 %v490, %v500
  %v529 = vmul.f32 %v491, %v500
  %v530 = vmul.f32 %v492, %v500
  %v531 = vmul.f32 %v493, %v500
  %v532 = vmul.f32 %v494, %v500
  %v533 = vmul.f32 %v495, %v500
  %v535 = vlaneseq
  %v536 = vshrl.u32 %v535, 7
  %v537 = vsub.s32 0, %v536
  %v538 = vrot.slane %v77, %v537
  %v540 = vadd.f32 %v502, %v538
  %v541 = vadd.f32 %v503, %v538
  %v542 = vadd.f32 %v504, %v538
  %v543 = vadd.f32 %v505, %v538
  %v544 = vadd.f32 %v506, %v538
  %v545 = vadd.f32 %v507, %v538
  %v546 = vadd.f32 %v508, %v538
  %v547 = vadd.f32 %v509, %v538
  %v548 = vadd.f32 %v510, %v538
  %v549 = vadd.f32 %v511, %v538
  %v550 = vadd.f32 %v512, %v538
  %v551 = vadd.f32 %v513, %v538
  %v552 = vadd.f32 %v514, %v538
  %v553 = vadd.f32 %v515, %v538
  %v554 = vadd.f32 %v516, %v538
  %v555 = vadd.f32 %v517, %v538
  %v556 = vadd.f32 %v518, %v538
  %v557 = vadd.f32 %v519, %v538
  %v558 = vadd.f32 %v520, %v538
  %v559 = vadd.f32 %v521, %v538
  %v560 = vadd.f32 %v522, %v538
  %v561 = vadd.f32 %v523, %v538
  %v562 = vadd.f32 %v524, %v538
  %v563 = vadd.f32 %v525, %v538
  %v564 = vadd.f32 %v526, %v538
  %v565 = vadd.f32 %v527, %v538
  %v566 = vadd.f32 %v528, %v538
  %v567 = vadd.f32 %v529, %v538
  %v568 = vadd.f32 %v530, %v538
  %v569 = vadd.f32 %v531, %v538
  %v570 = vadd.f32 %v532, %v538
  %v571 = vadd.f32 %v533, %v538
  %v572 = vld [vmem:[%s3] sm:$0xff]
  %v573 = vld [vmem:[%s3 + $0x8] sm:$0xff]
  %v574 = vld [vmem:[%s3 + $0x10] sm:$0xff]
  %v575 = vld [vmem:[%s3 + $0x18] sm:$0xff]
  %v576 = vld [vmem:[%s3 + $0x20] sm:$0xff]
  %v577 = vld [vmem:[%s3 + $0x28] sm:$0xff]
  %v578 = vld [vmem:[%s3 + $0x30] sm:$0xff]
  %v579 = vld [vmem:[%s3 + $0x38] sm:$0xff]
  %v580 = vld [vmem:[%s3 + $0x40] sm:$0xff]
  %v581 = vld [vmem:[%s3 + $0x48] sm:$0xff]
  %v582 = vld [vmem:[%s3 + $0x50] sm:$0xff]
  %v583 = vld [vmem:[%s3 + $0x58] sm:$0xff]
  %v584 = vld [vmem:[%s3 + $0x60] sm:$0xff]
  %v585 = vld [vmem:[%s3 + $0x68] sm:$0xff]
  %v586 = vld [vmem:[%s3 + $0x70] sm:$0xff]
  %v587 = vld [vmem:[%s3 + $0x78] sm:$0xff]
  %v588 = vld [vmem:[%s4] sm:$0x3]
  %v590 = vlaneseq
  %v591 = vshrl.u32 %v590, 7
  %v592 = vsub.s32 0, %v591
  %v593 = vrot.slane %v588, %v592
  %v594 = vlaneseq
  %v595 = vshrl.u32 %v594, 7
  %v596 = vsub.s32 1, %v595
  %v597 = vrot.slane %v588, %v596
  %v601 = vsel %vm78, %v540, 0
  %v604 = vsel %vm78, %v541, 0
  %v607 = vsel %vm78, %v542, 0
  %v610 = vsel %vm78, %v543, 0
  %v613 = vsel %vm78, %v544, 0
  %v616 = vsel %vm78, %v545, 0
  %v619 = vsel %vm78, %v546, 0
  %v622 = vsel %vm78, %v547, 0
  %v625 = vsel %vm78, %v548, 0
  %v628 = vsel %vm78, %v549, 0
  %v631 = vsel %vm78, %v550, 0
  %v634 = vsel %vm78, %v551, 0
  %v637 = vsel %vm78, %v552, 0
  %v640 = vsel %vm78, %v553, 0
  %v643 = vsel %vm78, %v554, 0
  %v646 = vsel %vm78, %v555, 0
  %v649 = vsel %vm78, %v556, 0
  %v652 = vsel %vm78, %v557, 0
  %v655 = vsel %vm78, %v558, 0
  %v658 = vsel %vm78, %v559, 0
  %v661 = vsel %vm78, %v560, 0
  %v664 = vsel %vm78, %v561, 0
  %v667 = vsel %vm78, %v562, 0
  %v670 = vsel %vm78, %v563, 0
  %v673 = vsel %vm78, %v564, 0
  %v676 = vsel %vm78, %v565, 0
  %v679 = vsel %vm78, %v566, 0
  %v682 = vsel %vm78, %v567, 0
  %v685 = vsel %vm78, %v568, 0
  %v688 = vsel %vm78, %v569, 0
  %v691 = vsel %vm78, %v570, 0
  %v694 = vsel %vm78, %v571, 0
  %696 = vmatprep.subr.mxu0 0.0
  %697 = vmatpush1.msra.mxu0 0.0
  %698 = vmatprep.subr.mxu0 0.0
  %699 = vmatpush1.msra.mxu0 0.0
  %700 = vmatprep.subr.mxu0 0.0
  %701 = vmatpush1.msra.mxu0 0.0
  %702 = vmatprep.subr.mxu0 0.0
  %703 = vmatpush1.msra.mxu0 0.0
  %704 = vmatprep.subr.mxu0 0.0
  %705 = vmatpush1.msra.mxu0 0.0
  %706 = vmatprep.subr.mxu0 0.0
  %707 = vmatpush1.msra.mxu0 0.0
  %708 = vmatprep.subr.mxu0 0.0
  %709 = vmatpush1.msra.mxu0 0.0
  %710 = vmatprep.subr.mxu0 0.0
  %711 = vmatpush1.msra.mxu0 0.0
  %712 = vmatprep.subr.mxu0 %v587
  %713 = vmatpush1.msra.mxu0 %v586
  %714 = vmatprep.subr.mxu0 %v585
  %715 = vmatpush1.msra.mxu0 %v584
  %716 = vmatprep.subr.mxu0 %v583
  %717 = vmatpush1.msra.mxu0 %v582
  %718 = vmatprep.subr.mxu0 %v581
  %719 = vmatpush1.msra.mxu0 %v580
  %720 = vmatprep.subr.mxu0 %v579
  %721 = vmatpush1.msra.mxu0 %v578
  %722 = vmatprep.subr.mxu0 %v577
  %723 = vmatpush1.msra.mxu0 %v576
  %724 = vmatprep.subr.mxu0 %v575
  %725 = vmatpush1.msra.mxu0 %v574
  %726 = vmatprep.subr.mxu0 %v573
  %727 = vmatpush1.msra.mxu0 %v572
  %728 = vmatprep.subr.mxu0 0.0
  %729 = vmatpush2.msra.mxu0 0.0
  %730 = vmatprep.subr.mxu0 0.0
  %731 = vmatpush2.msra.mxu0 0.0
  %732 = vmatprep.subr.mxu0 0.0
  %733 = vmatpush2.msra.mxu0 0.0
  %734 = vmatprep.subr.mxu0 0.0
  %735 = vmatpush2.msra.mxu0 0.0
  %736 = vmatprep.subr.mxu0 0.0
  %737 = vmatpush2.msra.mxu0 0.0
  %738 = vmatprep.subr.mxu0 0.0
  %739 = vmatpush2.msra.mxu0 0.0
  %740 = vmatprep.subr.mxu0 0.0
  %741 = vmatpush2.msra.mxu0 0.0
  %742 = vmatprep.subr.mxu0 0.0
  %743 = vmatpush2.msra.mxu0 0.0
  %744 = vmatprep.subr.mxu0 0.0
  %745 = vmatpush2.msra.mxu0 0.0
  %746 = vmatprep.subr.mxu0 0.0
  %747 = vmatpush2.msra.mxu0 0.0
  %748 = vmatprep.subr.mxu0 0.0
  %749 = vmatpush2.msra.mxu0 0.0
  %750 = vmatprep.subr.mxu0 0.0
  %751 = vmatpush2.msra.mxu0 0.0
  %752 = vmatprep.subr.mxu0 0.0
  %753 = vmatpush2.msra.mxu0 0.0
  %754 = vmatprep.subr.mxu0 0.0
  %755 = vmatpush2.msra.mxu0 0.0
  %756 = vmatprep.subr.mxu0 0.0
  %757 = vmatpush2.msra.mxu0 0.0
  %758 = vmatprep.subr.mxu0 0.0
  %759 = vmatpush2.msra.mxu0 0.0
  %760 = vmatprep.mubr.f32.mxu0 0.0
  %761 = vmatmul.mubr.f32.gmra.mxu0 %v601
  %v762 = vpop.f32.mrf.mxu0
  %v763 = vadd.f32 %v593, %v762
  %v764 = vpop.f32.mrf.mxu0
  %v765 = vadd.f32 %v597, %v764
  %766 = vmatprep.mubr.f32.mxu0 0.0
  %767 = vmatmul.mubr.f32.gmra.mxu0 %v604
  %v768 = vpop.f32.mrf.mxu0
  %v769 = vadd.f32 %v593, %v768
  %v770 = vpop.f32.mrf.mxu0
  %v771 = vadd.f32 %v597, %v770
  %772 = vmatprep.mubr.f32.mxu0 0.0
  %773 = vmatmul.mubr.f32.gmra.mxu0 %v607
  %v774 = vpop.f32.mrf.mxu0
  %v775 = vadd.f32 %v593, %v774
  %v776 = vpop.f32.mrf.mxu0
  %v777 = vadd.f32 %v597, %v776
  %778 = vmatprep.mubr.f32.mxu0 0.0
  %779 = vmatmul.mubr.f32.gmra.mxu0 %v610
  %v780 = vpop.f32.mrf.mxu0
  %v781 = vadd.f32 %v593, %v780
  %v782 = vpop.f32.mrf.mxu0
  %v783 = vadd.f32 %v597, %v782
  %784 = vmatprep.mubr.f32.mxu0 0.0
  %785 = vmatmul.mubr.f32.gmra.mxu0 %v613
  %v786 = vpop.f32.mrf.mxu0
  %v787 = vadd.f32 %v593, %v786
  %v788 = vpop.f32.mrf.mxu0
  %v789 = vadd.f32 %v597, %v788
  %790 = vmatprep.mubr.f32.mxu0 0.0
  %791 = vmatmul.mubr.f32.gmra.mxu0 %v616
  %v792 = vpop.f32.mrf.mxu0
  %v793 = vadd.f32 %v593, %v792
  %v794 = vpop.f32.mrf.mxu0
  %v795 = vadd.f32 %v597, %v794
  %796 = vmatprep.mubr.f32.mxu0 0.0
  %797 = vmatmul.mubr.f32.gmra.mxu0 %v619
  %v798 = vpop.f32.mrf.mxu0
  %v799 = vadd.f32 %v593, %v798
  %v800 = vpop.f32.mrf.mxu0
  %v801 = vadd.f32 %v597, %v800
  %802 = vmatprep.mubr.f32.mxu0 0.0
  %803 = vmatmul.mubr.f32.gmra.mxu0 %v622
  %v804 = vpop.f32.mrf.mxu0
  %v805 = vadd.f32 %v593, %v804
  %v806 = vpop.f32.mrf.mxu0
  %v807 = vadd.f32 %v597, %v806
  %808 = vmatprep.mubr.f32.mxu0 0.0
  %809 = vmatmul.mubr.f32.gmra.mxu0 %v625
  %v810 = vpop.f32.mrf.mxu0
  %v811 = vadd.f32 %v593, %v810
  %v812 = vpop.f32.mrf.mxu0
  %v813 = vadd.f32 %v597, %v812
  %814 = vmatprep.mubr.f32.mxu0 0.0
  %815 = vmatmul.mubr.f32.gmra.mxu0 %v628
  %v816 = vpop.f32.mrf.mxu0
  %v817 = vadd.f32 %v593, %v816
  %v818 = vpop.f32.mrf.mxu0
  %v819 = vadd.f32 %v597, %v818
  %820 = vmatprep.mubr.f32.mxu0 0.0
  %821 = vmatmul.mubr.f32.gmra.mxu0 %v631
  %v822 = vpop.f32.mrf.mxu0
  %v823 = vadd.f32 %v593, %v822
  %v824 = vpop.f32.mrf.mxu0
  %v825 = vadd.f32 %v597, %v824
  %826 = vmatprep.mubr.f32.mxu0 0.0
  %827 = vmatmul.mubr.f32.gmra.mxu0 %v634
  %v828 = vpop.f32.mrf.mxu0
  %v829 = vadd.f32 %v593, %v828
  %v830 = vpop.f32.mrf.mxu0
  %v831 = vadd.f32 %v597, %v830
  %832 = vmatprep.mubr.f32.mxu0 0.0
  %833 = vmatmul.mubr.f32.gmra.mxu0 %v637
  %v834 = vpop.f32.mrf.mxu0
  %v835 = vadd.f32 %v593, %v834
  %v836 = vpop.f32.mrf.mxu0
  %v837 = vadd.f32 %v597, %v836
  %838 = vmatprep.mubr.f32.mxu0 0.0
  %839 = vmatmul.mubr.f32.gmra.mxu0 %v640
  %v840 = vpop.f32.mrf.mxu0
  %v841 = vadd.f32 %v593, %v840
  %v842 = vpop.f32.mrf.mxu0
  %v843 = vadd.f32 %v597, %v842
  %844 = vmatprep.mubr.f32.mxu0 0.0
  %845 = vmatmul.mubr.f32.gmra.mxu0 %v643
  %v846 = vpop.f32.mrf.mxu0
  %v847 = vadd.f32 %v593, %v846
  %v848 = vpop.f32.mrf.mxu0
  %v849 = vadd.f32 %v597, %v848
  %850 = vmatprep.mubr.f32.mxu0 0.0
  %851 = vmatmul.mubr.f32.gmra.mxu0 %v646
  %v852 = vpop.f32.mrf.mxu0
  %v853 = vadd.f32 %v593, %v852
  %v854 = vpop.f32.mrf.mxu0
  %v855 = vadd.f32 %v597, %v854
  %856 = vmatprep.mubr.f32.mxu0 0.0
  %857 = vmatmul.mubr.f32.gmra.mxu0 %v649
  %v858 = vpop.f32.mrf.mxu0
  %v859 = vadd.f32 %v593, %v858
  %v860 = vpop.f32.mrf.mxu0
  %v861 = vadd.f32 %v597, %v860
  %862 = vmatprep.mubr.f32.mxu0 0.0
  %863 = vmatmul.mubr.f32.gmra.mxu0 %v652
  %v864 = vpop.f32.mrf.mxu0
  %v865 = vadd.f32 %v593, %v864
  %v866 = vpop.f32.mrf.mxu0
  %v867 = vadd.f32 %v597, %v866
  %868 = vmatprep.mubr.f32.mxu0 0.0
  %869 = vmatmul.mubr.f32.gmra.mxu0 %v655
  %v870 = vpop.f32.mrf.mxu0
  %v871 = vadd.f32 %v593, %v870
  %v872 = vpop.f32.mrf.mxu0
  %v873 = vadd.f32 %v597, %v872
  %874 = vmatprep.mubr.f32.mxu0 0.0
  %875 = vmatmul.mubr.f32.gmra.mxu0 %v658
  %v876 = vpop.f32.mrf.mxu0
  %v877 = vadd.f32 %v593, %v876
  %v878 = vpop.f32.mrf.mxu0
  %v879 = vadd.f32 %v597, %v878
  %880 = vmatprep.mubr.f32.mxu0 0.0
  %881 = vmatmul.mubr.f32.gmra.mxu0 %v661
  %v882 = vpop.f32.mrf.mxu0
  %v883 = vadd.f32 %v593, %v882
  %v884 = vpop.f32.mrf.mxu0
  %v885 = vadd.f32 %v597, %v884
  %886 = vmatprep.mubr.f32.mxu0 0.0
  %887 = vmatmul.mubr.f32.gmra.mxu0 %v664
  %v888 = vpop.f32.mrf.mxu0
  %v889 = vadd.f32 %v593, %v888
  %v890 = vpop.f32.mrf.mxu0
  %v891 = vadd.f32 %v597, %v890
  %892 = vmatprep.mubr.f32.mxu0 0.0
  %893 = vmatmul.mubr.f32.gmra.mxu0 %v667
  %v894 = vpop.f32.mrf.mxu0
  %v895 = vadd.f32 %v593, %v894
  %v896 = vpop.f32.mrf.mxu0
  %v897 = vadd.f32 %v597, %v896
  %898 = vmatprep.mubr.f32.mxu0 0.0
  %899 = vmatmul.mubr.f32.gmra.mxu0 %v670
  %v900 = vpop.f32.mrf.mxu0
  %v901 = vadd.f32 %v593, %v900
  %v902 = vpop.f32.mrf.mxu0
  %v903 = vadd.f32 %v597, %v902
  %904 = vmatprep.mubr.f32.mxu0 0.0
  %905 = vmatmul.mubr.f32.gmra.mxu0 %v673
  %v906 = vpop.f32.mrf.mxu0
  %v907 = vadd.f32 %v593, %v906
  %v908 = vpop.f32.mrf.mxu0
  %v909 = vadd.f32 %v597, %v908
  %910 = vmatprep.mubr.f32.mxu0 0.0
  %911 = vmatmul.mubr.f32.gmra.mxu0 %v676
  %v912 = vpop.f32.mrf.mxu0
  %v913 = vadd.f32 %v593, %v912
  %v914 = vpop.f32.mrf.mxu0
  %v915 = vadd.f32 %v597, %v914
  %916 = vmatprep.mubr.f32.mxu0 0.0
  %917 = vmatmul.mubr.f32.gmra.mxu0 %v679
  %v918 = vpop.f32.mrf.mxu0
  %v919 = vadd.f32 %v593, %v918
  %v920 = vpop.f32.mrf.mxu0
  %v921 = vadd.f32 %v597, %v920
  %922 = vmatprep.mubr.f32.mxu0 0.0
  %923 = vmatmul.mubr.f32.gmra.mxu0 %v682
  %v924 = vpop.f32.mrf.mxu0
  %v925 = vadd.f32 %v593, %v924
  %v926 = vpop.f32.mrf.mxu0
  %v927 = vadd.f32 %v597, %v926
  %928 = vmatprep.mubr.f32.mxu0 0.0
  %929 = vmatmul.mubr.f32.gmra.mxu0 %v685
  %v930 = vpop.f32.mrf.mxu0
  %v931 = vadd.f32 %v593, %v930
  %v932 = vpop.f32.mrf.mxu0
  %v933 = vadd.f32 %v597, %v932
  %934 = vmatprep.mubr.f32.mxu0 0.0
  %935 = vmatmul.mubr.f32.gmra.mxu0 %v688
  %v936 = vpop.f32.mrf.mxu0
  %v937 = vadd.f32 %v593, %v936
  %v938 = vpop.f32.mrf.mxu0
  %v939 = vadd.f32 %v597, %v938
  %940 = vmatprep.mubr.f32.mxu0 0.0
  %941 = vmatmul.mubr.f32.gmra.mxu0 %v691
  %v942 = vpop.f32.mrf.mxu0
  %v943 = vadd.f32 %v593, %v942
  %v944 = vpop.f32.mrf.mxu0
  %v945 = vadd.f32 %v597, %v944
  %946 = vmatprep.mubr.f32.mxu0 0.0
  %947 = vmatmul.mubr.f32.gmra.mxu0 %v694
  %v948 = vpop.f32.mrf.mxu0
  %v949 = vadd.f32 %v593, %v948
  %v950 = vpop.f32.mrf.mxu0
  %v951 = vadd.f32 %v597, %v950
  %952 = vdwg.mxu0
  %985 = vrot.lane.b32.xlu0 %v763, 112
  %v986 = vpop.permute.xlu0 %985
  %987 = vrot.lane.b32.xlu0 %v769, 112
  %v988 = vpop.permute.xlu0 %987
  %989 = vrot.lane.b32.xlu0 %v775, 112
  %v990 = vpop.permute.xlu0 %989
  %991 = vrot.lane.b32.xlu0 %v781, 112
  %v992 = vpop.permute.xlu0 %991
  %993 = vrot.lane.b32.xlu0 %v787, 112
  %v994 = vpop.permute.xlu0 %993
  %995 = vrot.lane.b32.xlu0 %v793, 112
  %v996 = vpop.permute.xlu0 %995
  %997 = vrot.lane.b32.xlu0 %v799, 112
  %v998 = vpop.permute.xlu0 %997
  %999 = vrot.lane.b32.xlu0 %v805, 112
  %v1000 = vpop.permute.xlu0 %999
  %1001 = vrot.lane.b32.xlu0 %v811, 112
  %v1002 = vpop.permute.xlu0 %1001
  %1003 = vrot.lane.b32.xlu0 %v817, 112
  %v1004 = vpop.permute.xlu0 %1003
  %1005 = vrot.lane.b32.xlu0 %v823, 112
  %v1006 = vpop.permute.xlu0 %1005
  %1007 = vrot.lane.b32.xlu0 %v829, 112
  %v1008 = vpop.permute.xlu0 %1007
  %1009 = vrot.lane.b32.xlu0 %v835, 112
  %v1010 = vpop.permute.xlu0 %1009
  %1011 = vrot.lane.b32.xlu0 %v841, 112
  %v1012 = vpop.permute.xlu0 %1011
  %1013 = vrot.lane.b32.xlu0 %v847, 112
  %v1014 = vpop.permute.xlu0 %1013
  %1015 = vrot.lane.b32.xlu0 %v853, 112
  %v1016 = vpop.permute.xlu0 %1015
  %1017 = vrot.lane.b32.xlu0 %v859, 112
  %v1018 = vpop.permute.xlu0 %1017
  %1019 = vrot.lane.b32.xlu0 %v865, 112
  %v1020 = vpop.permute.xlu0 %1019
  %1021 = vrot.lane.b32.xlu0 %v871, 112
  %v1022 = vpop.permute.xlu0 %1021
  %1023 = vrot.lane.b32.xlu0 %v877, 112
  %v1024 = vpop.permute.xlu0 %1023
  %1025 = vrot.lane.b32.xlu0 %v883, 112
  %v1026 = vpop.permute.xlu0 %1025
  %1027 = vrot.lane.b32.xlu0 %v889, 112
  %v1028 = vpop.permute.xlu0 %1027
  %1029 = vrot.lane.b32.xlu0 %v895, 112
  %v1030 = vpop.permute.xlu0 %1029
  %1031 = vrot.lane.b32.xlu0 %v901, 112
  %v1032 = vpop.permute.xlu0 %1031
  %1033 = vrot.lane.b32.xlu0 %v907, 112
  %v1034 = vpop.permute.xlu0 %1033
  %1035 = vrot.lane.b32.xlu0 %v913, 112
  %v1036 = vpop.permute.xlu0 %1035
  %1037 = vrot.lane.b32.xlu0 %v919, 112
  %v1038 = vpop.permute.xlu0 %1037
  %1039 = vrot.lane.b32.xlu0 %v925, 112
  %v1040 = vpop.permute.xlu0 %1039
  %1041 = vrot.lane.b32.xlu0 %v931, 112
  %v1042 = vpop.permute.xlu0 %1041
  %1043 = vrot.lane.b32.xlu0 %v937, 112
  %v1044 = vpop.permute.xlu0 %1043
  %1045 = vrot.lane.b32.xlu0 %v943, 112
  %v1046 = vpop.permute.xlu0 %1045
  %1047 = vrot.lane.b32.xlu0 %v949, 112
  %v1048 = vpop.permute.xlu0 %1047
  %1049 = vrot.lane.b32.xlu0 %v763, 96
  %v1050 = vpop.permute.xlu0 %1049
  %1051 = vrot.lane.b32.xlu0 %v769, 96
  %v1052 = vpop.permute.xlu0 %1051
  %1053 = vrot.lane.b32.xlu0 %v775, 96
  %v1054 = vpop.permute.xlu0 %1053
  %1055 = vrot.lane.b32.xlu0 %v781, 96
  %v1056 = vpop.permute.xlu0 %1055
  %1057 = vrot.lane.b32.xlu0 %v787, 96
  %v1058 = vpop.permute.xlu0 %1057
  %1059 = vrot.lane.b32.xlu0 %v793, 96
  %v1060 = vpop.permute.xlu0 %1059
  %1061 = vrot.lane.b32.xlu0 %v799, 96
  %v1062 = vpop.permute.xlu0 %1061
  %1063 = vrot.lane.b32.xlu0 %v805, 96
  %v1064 = vpop.permute.xlu0 %1063
  %1065 = vrot.lane.b32.xlu0 %v811, 96
  %v1066 = vpop.permute.xlu0 %1065
  %1067 = vrot.lane.b32.xlu0 %v817, 96
  %v1068 = vpop.permute.xlu0 %1067
  %1069 = vrot.lane.b32.xlu0 %v823, 96
  %v1070 = vpop.permute.xlu0 %1069
  %1071 = vrot.lane.b32.xlu0 %v829, 96
  %v1072 = vpop.permute.xlu0 %1071
  %1073 = vrot.lane.b32.xlu0 %v835, 96
  %v1074 = vpop.permute.xlu0 %1073
  %1075 = vrot.lane.b32.xlu0 %v841, 96
  %v1076 = vpop.permute.xlu0 %1075
  %1077 = vrot.lane.b32.xlu0 %v847, 96
  %v1078 = vpop.permute.xlu0 %1077
  %1079 = vrot.lane.b32.xlu0 %v853, 96
  %v1080 = vpop.permute.xlu0 %1079
  %1081 = vrot.lane.b32.xlu0 %v859, 96
  %v1082 = vpop.permute.xlu0 %1081
  %1083 = vrot.lane.b32.xlu0 %v865, 96
  %v1084 = vpop.permute.xlu0 %1083
  %1085 = vrot.lane.b32.xlu0 %v871, 96
  %v1086 = vpop.permute.xlu0 %1085
  %1087 = vrot.lane.b32.xlu0 %v877, 96
  %v1088 = vpop.permute.xlu0 %1087
  %1089 = vrot.lane.b32.xlu0 %v883, 96
  %v1090 = vpop.permute.xlu0 %1089
  %1091 = vrot.lane.b32.xlu0 %v889, 96
  %v1092 = vpop.permute.xlu0 %1091
  %1093 = vrot.lane.b32.xlu0 %v895, 96
  %v1094 = vpop.permute.xlu0 %1093
  %1095 = vrot.lane.b32.xlu0 %v901, 96
  %v1096 = vpop.permute.xlu0 %1095
  %1097 = vrot.lane.b32.xlu0 %v907, 96
  %v1098 = vpop.permute.xlu0 %1097
  %1099 = vrot.lane.b32.xlu0 %v913, 96
  %v1100 = vpop.permute.xlu0 %1099
  %1101 = vrot.lane.b32.xlu0 %v919, 96
  %v1102 = vpop.permute.xlu0 %1101
  %1103 = vrot.lane.b32.xlu0 %v925, 96
  %v1104 = vpop.permute.xlu0 %1103
  %1105 = vrot.lane.b32.xlu0 %v931, 96
  %v1106 = vpop.permute.xlu0 %1105
  %1107 = vrot.lane.b32.xlu0 %v937, 96
  %v1108 = vpop.permute.xlu0 %1107
  %1109 = vrot.lane.b32.xlu0 %v943, 96
  %v1110 = vpop.permute.xlu0 %1109
  %1111 = vrot.lane.b32.xlu0 %v949, 96
  %v1112 = vpop.permute.xlu0 %1111
  %1113 = vrot.lane.b32.xlu0 %v763, 80
  %v1114 = vpop.permute.xlu0 %1113
  %1115 = vrot.lane.b32.xlu0 %v769, 80
  %v1116 = vpop.permute.xlu0 %1115
  %1117 = vrot.lane.b32.xlu0 %v775, 80
  %v1118 = vpop.permute.xlu0 %1117
  %1119 = vrot.lane.b32.xlu0 %v781, 80
  %v1120 = vpop.permute.xlu0 %1119
  %1121 = vrot.lane.b32.xlu0 %v787, 80
  %v1122 = vpop.permute.xlu0 %1121
  %1123 = vrot.lane.b32.xlu0 %v793, 80
  %v1124 = vpop.permute.xlu0 %1123
  %1125 = vrot.lane.b32.xlu0 %v799, 80
  %v1126 = vpop.permute.xlu0 %1125
  %1127 = vrot.lane.b32.xlu0 %v805, 80
  %v1128 = vpop.permute.xlu0 %1127
  %1129 = vrot.lane.b32.xlu0 %v811, 80
  %v1130 = vpop.permute.xlu0 %1129
  %1131 = vrot.lane.b32.xlu0 %v817, 80
  %v1132 = vpop.permute.xlu0 %1131
  %1133 = vrot.lane.b32.xlu0 %v823, 80
  %v1134 = vpop.permute.xlu0 %1133
  %1135 = vrot.lane.b32.xlu0 %v829, 80
  %v1136 = vpop.permute.xlu0 %1135
  %1137 = vrot.lane.b32.xlu0 %v835, 80
  %v1138 = vpop.permute.xlu0 %1137
  %1139 = vrot.lane.b32.xlu0 %v841, 80
  %v1140 = vpop.permute.xlu0 %1139
  %1141 = vrot.lane.b32.xlu0 %v847, 80
  %v1142 = vpop.permute.xlu0 %1141
  %1143 = vrot.lane.b32.xlu0 %v853, 80
  %v1144 = vpop.permute.xlu0 %1143
  %1145 = vrot.lane.b32.xlu0 %v859, 80
  %v1146 = vpop.permute.xlu0 %1145
  %1147 = vrot.lane.b32.xlu0 %v865, 80
  %v1148 = vpop.permute.xlu0 %1147
  %1149 = vrot.lane.b32.xlu0 %v871, 80
  %v1150 = vpop.permute.xlu0 %1149
  %1151 = vrot.lane.b32.xlu0 %v877, 80
  %v1152 = vpop.permute.xlu0 %1151
  %1153 = vrot.lane.b32.xlu0 %v883, 80
  %v1154 = vpop.permute.xlu0 %1153
  %1155 = vrot.lane.b32.xlu0 %v889, 80
  %v1156 = vpop.permute.xlu0 %1155
  %1157 = vrot.lane.b32.xlu0 %v895, 80
  %v1158 = vpop.permute.xlu0 %1157
  %1159 = vrot.lane.b32.xlu0 %v901, 80
  %v1160 = vpop.permute.xlu0 %1159
  %1161 = vrot.lane.b32.xlu0 %v907, 80
  %v1162 = vpop.permute.xlu0 %1161
  %1163 = vrot.lane.b32.xlu0 %v913, 80
  %v1164 = vpop.permute.xlu0 %1163
  %1165 = vrot.lane.b32.xlu0 %v919, 80
  %v1166 = vpop.permute.xlu0 %1165
  %1167 = vrot.lane.b32.xlu0 %v925, 80
  %v1168 = vpop.permute.xlu0 %1167
  %1169 = vrot.lane.b32.xlu0 %v931, 80
  %v1170 = vpop.permute.xlu0 %1169
  %1171 = vrot.lane.b32.xlu0 %v937, 80
  %v1172 = vpop.permute.xlu0 %1171
  %1173 = vrot.lane.b32.xlu0 %v943, 80
  %v1174 = vpop.permute.xlu0 %1173
  %1175 = vrot.lane.b32.xlu0 %v949, 80
  %v1176 = vpop.permute.xlu0 %1175
  %1209 = vrot.lane.b32.xlu0 %v765, 112
  %v1210 = vpop.permute.xlu0 %1209
  %1211 = vrot.lane.b32.xlu0 %v771, 112
  %v1212 = vpop.permute.xlu0 %1211
  %1213 = vrot.lane.b32.xlu0 %v777, 112
  %v1214 = vpop.permute.xlu0 %1213
  %1215 = vrot.lane.b32.xlu0 %v783, 112
  %v1216 = vpop.permute.xlu0 %1215
  %1217 = vrot.lane.b32.xlu0 %v789, 112
  %v1218 = vpop.permute.xlu0 %1217
  %1219 = vrot.lane.b32.xlu0 %v795, 112
  %v1220 = vpop.permute.xlu0 %1219
  %1221 = vrot.lane.b32.xlu0 %v801, 112
  %v1222 = vpop.permute.xlu0 %1221
  %1223 = vrot.lane.b32.xlu0 %v807, 112
  %v1224 = vpop.permute.xlu0 %1223
  %1225 = vrot.lane.b32.xlu0 %v813, 112
  %v1226 = vpop.permute.xlu0 %1225
  %1227 = vrot.lane.b32.xlu0 %v819, 112
  %v1228 = vpop.permute.xlu0 %1227
  %1229 = vrot.lane.b32.xlu0 %v825, 112
  %v1230 = vpop.permute.xlu0 %1229
  %1231 = vrot.lane.b32.xlu0 %v831, 112
  %v1232 = vpop.permute.xlu0 %1231
  %1233 = vrot.lane.b32.xlu0 %v837, 112
  %v1234 = vpop.permute.xlu0 %1233
  %1235 = vrot.lane.b32.xlu0 %v843, 112
  %v1236 = vpop.permute.xlu0 %1235
  %1237 = vrot.lane.b32.xlu0 %v849, 112
  %v1238 = vpop.permute.xlu0 %1237
  %1239 = vrot.lane.b32.xlu0 %v855, 112
  %v1240 = vpop.permute.xlu0 %1239
  %1241 = vrot.lane.b32.xlu0 %v861, 112
  %v1242 = vpop.permute.xlu0 %1241
  %1243 = vrot.lane.b32.xlu0 %v867, 112
  %v1244 = vpop.permute.xlu0 %1243
  %1245 = vrot.lane.b32.xlu0 %v873, 112
  %v1246 = vpop.permute.xlu0 %1245
  %1247 = vrot.lane.b32.xlu0 %v879, 112
  %v1248 = vpop.permute.xlu0 %1247
  %1249 = vrot.lane.b32.xlu0 %v885, 112
  %v1250 = vpop.permute.xlu0 %1249
  %1251 = vrot.lane.b32.xlu0 %v891, 112
  %v1252 = vpop.permute.xlu0 %1251
  %1253 = vrot.lane.b32.xlu0 %v897, 112
  %v1254 = vpop.permute.xlu0 %1253
  %1255 = vrot.lane.b32.xlu0 %v903, 112
  %v1256 = vpop.permute.xlu0 %1255
  %1257 = vrot.lane.b32.xlu0 %v909, 112
  %v1258 = vpop.permute.xlu0 %1257
  %1259 = vrot.lane.b32.xlu0 %v915, 112
  %v1260 = vpop.permute.xlu0 %1259
  %1261 = vrot.lane.b32.xlu0 %v921, 112
  %v1262 = vpop.permute.xlu0 %1261
  %1263 = vrot.lane.b32.xlu0 %v927, 112
  %v1264 = vpop.permute.xlu0 %1263
  %1265 = vrot.lane.b32.xlu0 %v933, 112
  %v1266 = vpop.permute.xlu0 %1265
  %1267 = vrot.lane.b32.xlu0 %v939, 112
  %v1268 = vpop.permute.xlu0 %1267
  %1269 = vrot.lane.b32.xlu0 %v945, 112
  %v1270 = vpop.permute.xlu0 %1269
  %1271 = vrot.lane.b32.xlu0 %v951, 112
  %v1272 = vpop.permute.xlu0 %1271
  %1305 = vrot.lane.b32.xlu0 %v765, 96
  %v1306 = vpop.permute.xlu0 %1305
  %1307 = vrot.lane.b32.xlu0 %v771, 96
  %v1308 = vpop.permute.xlu0 %1307
  %1309 = vrot.lane.b32.xlu0 %v777, 96
  %v1310 = vpop.permute.xlu0 %1309
  %1311 = vrot.lane.b32.xlu0 %v783, 96
  %v1312 = vpop.permute.xlu0 %1311
  %1313 = vrot.lane.b32.xlu0 %v789, 96
  %v1314 = vpop.permute.xlu0 %1313
  %1315 = vrot.lane.b32.xlu0 %v795, 96
  %v1316 = vpop.permute.xlu0 %1315
  %1317 = vrot.lane.b32.xlu0 %v801, 96
  %v1318 = vpop.permute.xlu0 %1317
  %1319 = vrot.lane.b32.xlu0 %v807, 96
  %v1320 = vpop.permute.xlu0 %1319
  %1321 = vrot.lane.b32.xlu0 %v813, 96
  %v1322 = vpop.permute.xlu0 %1321
  %1323 = vrot.lane.b32.xlu0 %v819, 96
  %v1324 = vpop.permute.xlu0 %1323
  %1325 = vrot.lane.b32.xlu0 %v825, 96
  %v1326 = vpop.permute.xlu0 %1325
  %1327 = vrot.lane.b32.xlu0 %v831, 96
  %v1328 = vpop.permute.xlu0 %1327
  %1329 = vrot.lane.b32.xlu0 %v837, 96
  %v1330 = vpop.permute.xlu0 %1329
  %1331 = vrot.lane.b32.xlu0 %v843, 96
  %v1332 = vpop.permute.xlu0 %1331
  %1333 = vrot.lane.b32.xlu0 %v849, 96
  %v1334 = vpop.permute.xlu0 %1333
  %1335 = vrot.lane.b32.xlu0 %v855, 96
  %v1336 = vpop.permute.xlu0 %1335
  %1337 = vrot.lane.b32.xlu0 %v861, 96
  %v1338 = vpop.permute.xlu0 %1337
  %1339 = vrot.lane.b32.xlu0 %v867, 96
  %v1340 = vpop.permute.xlu0 %1339
  %1341 = vrot.lane.b32.xlu0 %v873, 96
  %v1342 = vpop.permute.xlu0 %1341
  %1343 = vrot.lane.b32.xlu0 %v879, 96
  %v1344 = vpop.permute.xlu0 %1343
  %1345 = vrot.lane.b32.xlu0 %v885, 96
  %v1346 = vpop.permute.xlu0 %1345
  %1347 = vrot.lane.b32.xlu0 %v891, 96
  %v1348 = vpop.permute.xlu0 %1347
  %1349 = vrot.lane.b32.xlu0 %v897, 96
  %v1350 = vpop.permute.xlu0 %1349
  %1351 = vrot.lane.b32.xlu0 %v903, 96
  %v1352 = vpop.permute.xlu0 %1351
  %1353 = vrot.lane.b32.xlu0 %v909, 96
  %v1354 = vpop.permute.xlu0 %1353
  %1355 = vrot.lane.b32.xlu0 %v915, 96
  %v1356 = vpop.permute.xlu0 %1355
  %1357 = vrot.lane.b32.xlu0 %v921, 96
  %v1358 = vpop.permute.xlu0 %1357
  %1359 = vrot.lane.b32.xlu0 %v927, 96
  %v1360 = vpop.permute.xlu0 %1359
  %1361 = vrot.lane.b32.xlu0 %v933, 96
  %v1362 = vpop.permute.xlu0 %1361
  %1363 = vrot.lane.b32.xlu0 %v939, 96
  %v1364 = vpop.permute.xlu0 %1363
  %1365 = vrot.lane.b32.xlu0 %v945, 96
  %v1366 = vpop.permute.xlu0 %1365
  %1367 = vrot.lane.b32.xlu0 %v951, 96
  %v1368 = vpop.permute.xlu0 %1367
  %1401 = vrot.lane.b32.xlu0 %v765, 80
  %v1402 = vpop.permute.xlu0 %1401
  %1403 = vrot.lane.b32.xlu0 %v771, 80
  %v1404 = vpop.permute.xlu0 %1403
  %1405 = vrot.lane.b32.xlu0 %v777, 80
  %v1406 = vpop.permute.xlu0 %1405
  %1407 = vrot.lane.b32.xlu0 %v783, 80
  %v1408 = vpop.permute.xlu0 %1407
  %1409 = vrot.lane.b32.xlu0 %v789, 80
  %v1410 = vpop.permute.xlu0 %1409
  %1411 = vrot.lane.b32.xlu0 %v795, 80
  %v1412 = vpop.permute.xlu0 %1411
  %1413 = vrot.lane.b32.xlu0 %v801, 80
  %v1414 = vpop.permute.xlu0 %1413
  %1415 = vrot.lane.b32.xlu0 %v807, 80
  %v1416 = vpop.permute.xlu0 %1415
  %1417 = vrot.lane.b32.xlu0 %v813, 80
  %v1418 = vpop.permute.xlu0 %1417
  %1419 = vrot.lane.b32.xlu0 %v819, 80
  %v1420 = vpop.permute.xlu0 %1419
  %1421 = vrot.lane.b32.xlu0 %v825, 80
  %v1422 = vpop.permute.xlu0 %1421
  %1423 = vrot.lane.b32.xlu0 %v831, 80
  %v1424 = vpop.permute.xlu0 %1423
  %1425 = vrot.lane.b32.xlu0 %v837, 80
  %v1426 = vpop.permute.xlu0 %1425
  %1427 = vrot.lane.b32.xlu0 %v843, 80
  %v1428 = vpop.permute.xlu0 %1427
  %1429 = vrot.lane.b32.xlu0 %v849, 80
  %v1430 = vpop.permute.xlu0 %1429
  %1431 = vrot.lane.b32.xlu0 %v855, 80
  %v1432 = vpop.permute.xlu0 %1431
  %1433 = vrot.lane.b32.xlu0 %v861, 80
  %v1434 = vpop.permute.xlu0 %1433
  %1435 = vrot.lane.b32.xlu0 %v867, 80
  %v1436 = vpop.permute.xlu0 %1435
  %1437 = vrot.lane.b32.xlu0 %v873, 80
  %v1438 = vpop.permute.xlu0 %1437
  %1439 = vrot.lane.b32.xlu0 %v879, 80
  %v1440 = vpop.permute.xlu0 %1439
  %1441 = vrot.lane.b32.xlu0 %v885, 80
  %v1442 = vpop.permute.xlu0 %1441
  %1443 = vrot.lane.b32.xlu0 %v891, 80
  %v1444 = vpop.permute.xlu0 %1443
  %1445 = vrot.lane.b32.xlu0 %v897, 80
  %v1446 = vpop.permute.xlu0 %1445
  %1447 = vrot.lane.b32.xlu0 %v903, 80
  %v1448 = vpop.permute.xlu0 %1447
  %1449 = vrot.lane.b32.xlu0 %v909, 80
  %v1450 = vpop.permute.xlu0 %1449
  %1451 = vrot.lane.b32.xlu0 %v915, 80
  %v1452 = vpop.permute.xlu0 %1451
  %1453 = vrot.lane.b32.xlu0 %v921, 80
  %v1454 = vpop.permute.xlu0 %1453
  %1455 = vrot.lane.b32.xlu0 %v927, 80
  %v1456 = vpop.permute.xlu0 %1455
  %1457 = vrot.lane.b32.xlu0 %v933, 80
  %v1458 = vpop.permute.xlu0 %1457
  %1459 = vrot.lane.b32.xlu0 %v939, 80
  %v1460 = vpop.permute.xlu0 %1459
  %1461 = vrot.lane.b32.xlu0 %v945, 80
  %v1462 = vpop.permute.xlu0 %1461
  %1463 = vrot.lane.b32.xlu0 %v951, 80
  %v1464 = vpop.permute.xlu0 %1463
  %v1497 = vlaneseq
  %v1498 = vshrl.u32 %v1497, 7
  %v1499 = vadd.s32 %v1498, 8
  %v1500 = vadd.s32 %v1498, 16
  %v1501 = vadd.s32 %v1498, 24
  %v1502 = vlaneseq
  %v1503 = vand.u32 %v1502, 127
  %vm1504 = vcmp.ge.s32.totalorder %v1498, %v1503
  %vm1505 = vcmp.ge.s32.totalorder %v1499, %v1503
  %vm1506 = vcmp.ge.s32.totalorder %v1500, %v1503
  %vm1507 = vcmp.ge.s32.totalorder %v1501, %v1503
  %1508 = vrot.lane.b32.xlu0 %v763, 64
  %v1509 = vpop.permute.xlu0 %1508
  %1510 = vrot.lane.b32.xlu0 %v769, 64
  %v1511 = vpop.permute.xlu0 %1510
  %1512 = vrot.lane.b32.xlu0 %v775, 64
  %v1513 = vpop.permute.xlu0 %1512
  %1514 = vrot.lane.b32.xlu0 %v781, 64
  %v1515 = vpop.permute.xlu0 %1514
  %vm1516 = vcmask 130048
  %v1517 = vsel %vm1516, %v763, 0
  %v1519 = vsel %vm1516, %v769, 0
  %v1521 = vsel %vm1516, %v775, 0
  %v1523 = vsel %vm1516, %v781, 0
  %v1525 = vsel %vm1516, %v1509, 0
  %v1527 = vsel %vm1516, %v1511, 0
  %v1529 = vsel %vm1516, %v1513, 0
  %v1531 = vsel %vm1516, %v1515, 0
  %1533 = vmatprep.subr.mxu0 0.0
  %1534 = vmatpush1.xpose.msra.mxu0 0.0
  %1535 = vmatprep.subr.mxu0 0.0
  %1536 = vmatpush1.xpose.msra.mxu0 0.0
  %1537 = vmatprep.subr.mxu0 0.0
  %1538 = vmatpush1.xpose.msra.mxu0 0.0
  %1539 = vmatprep.subr.mxu0 0.0
  %1540 = vmatpush1.xpose.msra.mxu0 0.0
  %1541 = vmatprep.subr.mxu0 0.0
  %1542 = vmatpush1.xpose.msra.mxu0 0.0
  %1543 = vmatprep.subr.mxu0 0.0
  %1544 = vmatpush1.xpose.msra.mxu0 0.0
  %1545 = vmatprep.subr.mxu0 0.0
  %1546 = vmatpush1.xpose.msra.mxu0 0.0
  %1547 = vmatprep.subr.mxu0 0.0
  %1548 = vmatpush1.xpose.msra.mxu0 0.0
  %1549 = vmatprep.subr.mxu0 0.0
  %1550 = vmatpush1.xpose.msra.mxu0 0.0
  %1551 = vmatprep.subr.mxu0 0.0
  %1552 = vmatpush1.xpose.msra.mxu0 0.0
  %1553 = vmatprep.subr.mxu0 0.0
  %1554 = vmatpush1.xpose.msra.mxu0 0.0
  %1555 = vmatprep.subr.mxu0 0.0
  %1556 = vmatpush1.xpose.msra.mxu0 0.0
  %1557 = vmatprep.subr.mxu0 0.0
  %1558 = vmatpush1.xpose.msra.mxu0 %v1531
  %1559 = vmatprep.subr.mxu0 0.0
  %1560 = vmatpush1.xpose.msra.mxu0 %v1529
  %1561 = vmatprep.subr.mxu0 0.0
  %1562 = vmatpush1.xpose.msra.mxu0 %v1527
  %1563 = vmatprep.subr.mxu0 0.0
  %1564 = vmatpush1.xpose.msra.mxu0 %v1525
  %1565 = vmatprep.subr.mxu0 0.0
  %1566 = vmatpush2.xpose.msra.mxu0 0.0
  %1567 = vmatprep.subr.mxu0 0.0
  %1568 = vmatpush2.xpose.msra.mxu0 0.0
  %1569 = vmatprep.subr.mxu0 0.0
  %1570 = vmatpush2.xpose.msra.mxu0 0.0
  %1571 = vmatprep.subr.mxu0 0.0
  %1572 = vmatpush2.xpose.msra.mxu0 0.0
  %1573 = vmatprep.subr.mxu0 0.0
  %1574 = vmatpush2.xpose.msra.mxu0 0.0
  %1575 = vmatprep.subr.mxu0 0.0
  %1576 = vmatpush2.xpose.msra.mxu0 0.0
  %1577 = vmatprep.subr.mxu0 0.0
  %1578 = vmatpush2.xpose.msra.mxu0 0.0
  %1579 = vmatprep.subr.mxu0 0.0
  %1580 = vmatpush2.xpose.msra.mxu0 0.0
  %1581 = vmatprep.subr.mxu0 0.0
  %1582 = vmatpush2.xpose.msra.mxu0 0.0
  %1583 = vmatprep.subr.mxu0 0.0
  %1584 = vmatpush2.xpose.msra.mxu0 0.0
  %1585 = vmatprep.subr.mxu0 0.0
  %1586 = vmatpush2.xpose.msra.mxu0 0.0
  %1587 = vmatprep.subr.mxu0 0.0
  %1588 = vmatpush2.xpose.msra.mxu0 0.0
  %1589 = vmatprep.subr.mxu0 0.0
  %1590 = vmatpush2.xpose.msra.mxu0 0.0
  %1591 = vmatprep.subr.mxu0 0.0
  %1592 = vmatpush2.xpose.msra.mxu0 0.0
  %1593 = vmatprep.subr.mxu0 0.0
  %1594 = vmatpush2.xpose.msra.mxu0 0.0
  %1595 = vmatprep.subr.mxu0 0.0
  %1596 = vmatpush2.xpose.msra.mxu0 0.0
  %1597 = vmatprep.mubr.f32.mxu0 0.0
  %1598 = vmatmul.mubr.f32.gmra.mxu0 %v1517
  %v1599 = vpop.f32.mrf.mxu0
  %v1600 = vadd.f32 0.0, %v1599
  %v1601 = vpop.f32.mrf.mxu0
  %1602 = vmatprep.mubr.f32.mxu0 0.0
  %1603 = vmatmul.mubr.f32.gmra.mxu0 %v1519
  %v1604 = vpop.f32.mrf.mxu0
  %v1605 = vadd.f32 0.0, %v1604
  %v1606 = vpop.f32.mrf.mxu0
  %1607 = vmatprep.mubr.f32.mxu0 0.0
  %1608 = vmatmul.mubr.f32.gmra.mxu0 %v1521
  %v1609 = vpop.f32.mrf.mxu0
  %v1610 = vadd.f32 0.0, %v1609
  %v1611 = vpop.f32.mrf.mxu0
  %1612 = vmatprep.mubr.f32.mxu0 0.0
  %1613 = vmatmul.mubr.f32.gmra.mxu0 %v1523
  %v1614 = vpop.f32.mrf.mxu0
  %v1615 = vadd.f32 0.0, %v1614
  %v1616 = vpop.f32.mrf.mxu0
  %1617 = vdwg.mxu0
  %1618 = vrot.lane.b32.xlu0 %v787, 64
  %v1619 = vpop.permute.xlu0 %1618
  %1620 = vrot.lane.b32.xlu0 %v793, 64
  %v1621 = vpop.permute.xlu0 %1620
  %1622 = vrot.lane.b32.xlu0 %v799, 64
  %v1623 = vpop.permute.xlu0 %1622
  %1624 = vrot.lane.b32.xlu0 %v805, 64
  %v1625 = vpop.permute.xlu0 %1624
  %v1626 = vsel %vm1516, %v787, 0
  %v1628 = vsel %vm1516, %v793, 0
  %v1630 = vsel %vm1516, %v799, 0
  %v1632 = vsel %vm1516, %v805, 0
  %v1634 = vsel %vm1516, %v1619, 0
  %v1636 = vsel %vm1516, %v1621, 0
  %v1638 = vsel %vm1516, %v1623, 0
  %v1640 = vsel %vm1516, %v1625, 0
  %1642 = vmatprep.subr.mxu0 0.0
  %1643 = vmatpush1.xpose.msra.mxu0 0.0
  %1644 = vmatprep.subr.mxu0 0.0
  %1645 = vmatpush1.xpose.msra.mxu0 0.0
  %1646 = vmatprep.subr.mxu0 0.0
  %1647 = vmatpush1.xpose.msra.mxu0 0.0
  %1648 = vmatprep.subr.mxu0 0.0
  %1649 = vmatpush1.xpose.msra.mxu0 0.0
  %1650 = vmatprep.subr.mxu0 0.0
  %1651 = vmatpush1.xpose.msra.mxu0 0.0
  %1652 = vmatprep.subr.mxu0 0.0
  %1653 = vmatpush1.xpose.msra.mxu0 0.0
  %1654 = vmatprep.subr.mxu0 0.0
  %1655 = vmatpush1.xpose.msra.mxu0 0.0
  %1656 = vmatprep.subr.mxu0 0.0
  %1657 = vmatpush1.xpose.msra.mxu0 0.0
  %1658 = vmatprep.subr.mxu0 0.0
  %1659 = vmatpush1.xpose.msra.mxu0 0.0
  %1660 = vmatprep.subr.mxu0 0.0
  %1661 = vmatpush1.xpose.msra.mxu0 0.0
  %1662 = vmatprep.subr.mxu0 0.0
  %1663 = vmatpush1.xpose.msra.mxu0 0.0
  %1664 = vmatprep.subr.mxu0 0.0
  %1665 = vmatpush1.xpose.msra.mxu0 0.0
  %1666 = vmatprep.subr.mxu0 0.0
  %1667 = vmatpush1.xpose.msra.mxu0 %v1640
  %1668 = vmatprep.subr.mxu0 0.0
  %1669 = vmatpush1.xpose.msra.mxu0 %v1638
  %1670 = vmatprep.subr.mxu0 0.0
  %1671 = vmatpush1.xpose.msra.mxu0 %v1636
  %1672 = vmatprep.subr.mxu0 0.0
  %1673 = vmatpush1.xpose.msra.mxu0 %v1634
  %1674 = vmatprep.subr.mxu0 0.0
  %1675 = vmatpush2.xpose.msra.mxu0 0.0
  %1676 = vmatprep.subr.mxu0 0.0
  %1677 = vmatpush2.xpose.msra.mxu0 0.0
  %1678 = vmatprep.subr.mxu0 0.0
  %1679 = vmatpush2.xpose.msra.mxu0 0.0
  %1680 = vmatprep.subr.mxu0 0.0
  %1681 = vmatpush2.xpose.msra.mxu0 0.0
  %1682 = vmatprep.subr.mxu0 0.0
  %1683 = vmatpush2.xpose.msra.mxu0 0.0
  %1684 = vmatprep.subr.mxu0 0.0
  %1685 = vmatpush2.xpose.msra.mxu0 0.0
  %1686 = vmatprep.subr.mxu0 0.0
  %1687 = vmatpush2.xpose.msra.mxu0 0.0
  %1688 = vmatprep.subr.mxu0 0.0
  %1689 = vmatpush2.xpose.msra.mxu0 0.0
  %1690 = vmatprep.subr.mxu0 0.0
  %1691 = vmatpush2.xpose.msra.mxu0 0.0
  %1692 = vmatprep.subr.mxu0 0.0
  %1693 = vmatpush2.xpose.msra.mxu0 0.0
  %1694 = vmatprep.subr.mxu0 0.0
  %1695 = vmatpush2.xpose.msra.mxu0 0.0
  %1696 = vmatprep.subr.mxu0 0.0
  %1697 = vmatpush2.xpose.msra.mxu0 0.0
  %1698 = vmatprep.subr.mxu0 0.0
  %1699 = vmatpush2.xpose.msra.mxu0 0.0
  %1700 = vmatprep.subr.mxu0 0.0
  %1701 = vmatpush2.xpose.msra.mxu0 0.0
  %1702 = vmatprep.subr.mxu0 0.0
  %1703 = vmatpush2.xpose.msra.mxu0 0.0
  %1704 = vmatprep.subr.mxu0 0.0
  %1705 = vmatpush2.xpose.msra.mxu0 0.0
  %1706 = vmatprep.mubr.f32.mxu0 0.0
  %1707 = vmatmul.mubr.f32.gmra.mxu0 %v1626
  %v1708 = vpop.f32.mrf.mxu0
  %v1709 = vadd.f32 0.0, %v1708
  %v1710 = vpop.f32.mrf.mxu0
  %1711 = vmatprep.mubr.f32.mxu0 0.0
  %1712 = vmatmul.mubr.f32.gmra.mxu0 %v1628
  %v1713 = vpop.f32.mrf.mxu0
  %v1714 = vadd.f32 0.0, %v1713
  %v1715 = vpop.f32.mrf.mxu0
  %1716 = vmatprep.mubr.f32.mxu0 0.0
  %1717 = vmatmul.mubr.f32.gmra.mxu0 %v1630
  %v1718 = vpop.f32.mrf.mxu0
  %v1719 = vadd.f32 0.0, %v1718
  %v1720 = vpop.f32.mrf.mxu0
  %1721 = vmatprep.mubr.f32.mxu0 0.0
  %1722 = vmatmul.mubr.f32.gmra.mxu0 %v1632
  %v1723 = vpop.f32.mrf.mxu0
  %v1724 = vadd.f32 0.0, %v1723
  %v1725 = vpop.f32.mrf.mxu0
  %1726 = vdwg.mxu0
  %1727 = vrot.lane.b32.xlu0 %v811, 64
  %v1728 = vpop.permute.xlu0 %1727
  %1729 = vrot.lane.b32.xlu0 %v817, 64
  %v1730 = vpop.permute.xlu0 %1729
  %1731 = vrot.lane.b32.xlu0 %v823, 64
  %v1732 = vpop.permute.xlu0 %1731
  %1733 = vrot.lane.b32.xlu0 %v829, 64
  %v1734 = vpop.permute.xlu0 %1733
  %v1735 = vsel %vm1516, %v811, 0
  %v1737 = vsel %vm1516, %v817, 0
  %v1739 = vsel %vm1516, %v823, 0
  %v1741 = vsel %vm1516, %v829, 0
  %v1743 = vsel %vm1516, %v1728, 0
  %v1745 = vsel %vm1516, %v1730, 0
  %v1747 = vsel %vm1516, %v1732, 0
  %v1749 = vsel %vm1516, %v1734, 0
  %1751 = vmatprep.subr.mxu0 0.0
  %1752 = vmatpush1.xpose.msra.mxu0 0.0
  %1753 = vmatprep.subr.mxu0 0.0
  %1754 = vmatpush1.xpose.msra.mxu0 0.0
  %1755 = vmatprep.subr.mxu0 0.0
  %1756 = vmatpush1.xpose.msra.mxu0 0.0
  %1757 = vmatprep.subr.mxu0 0.0
  %1758 = vmatpush1.xpose.msra.mxu0 0.0
  %1759 = vmatprep.subr.mxu0 0.0
  %1760 = vmatpush1.xpose.msra.mxu0 0.0
  %1761 = vmatprep.subr.mxu0 0.0
  %1762 = vmatpush1.xpose.msra.mxu0 0.0
  %1763 = vmatprep.subr.mxu0 0.0
  %1764 = vmatpush1.xpose.msra.mxu0 0.0
  %1765 = vmatprep.subr.mxu0 0.0
  %1766 = vmatpush1.xpose.msra.mxu0 0.0
  %1767 = vmatprep.subr.mxu0 0.0
  %1768 = vmatpush1.xpose.msra.mxu0 0.0
  %1769 = vmatprep.subr.mxu0 0.0
  %1770 = vmatpush1.xpose.msra.mxu0 0.0
  %1771 = vmatprep.subr.mxu0 0.0
  %1772 = vmatpush1.xpose.msra.mxu0 0.0
  %1773 = vmatprep.subr.mxu0 0.0
  %1774 = vmatpush1.xpose.msra.mxu0 0.0
  %1775 = vmatprep.subr.mxu0 0.0
  %1776 = vmatpush1.xpose.msra.mxu0 %v1749
  %1777 = vmatprep.subr.mxu0 0.0
  %1778 = vmatpush1.xpose.msra.mxu0 %v1747
  %1779 = vmatprep.subr.mxu0 0.0
  %1780 = vmatpush1.xpose.msra.mxu0 %v1745
  %1781 = vmatprep.subr.mxu0 0.0
  %1782 = vmatpush1.xpose.msra.mxu0 %v1743
  %1783 = vmatprep.subr.mxu0 0.0
  %1784 = vmatpush2.xpose.msra.mxu0 0.0
  %1785 = vmatprep.subr.mxu0 0.0
  %1786 = vmatpush2.xpose.msra.mxu0 0.0
  %1787 = vmatprep.subr.mxu0 0.0
  %1788 = vmatpush2.xpose.msra.mxu0 0.0
  %1789 = vmatprep.subr.mxu0 0.0
  %1790 = vmatpush2.xpose.msra.mxu0 0.0
  %1791 = vmatprep.subr.mxu0 0.0
  %1792 = vmatpush2.xpose.msra.mxu0 0.0
  %1793 = vmatprep.subr.mxu0 0.0
  %1794 = vmatpush2.xpose.msra.mxu0 0.0
  %1795 = vmatprep.subr.mxu0 0.0
  %1796 = vmatpush2.xpose.msra.mxu0 0.0
  %1797 = vmatprep.subr.mxu0 0.0
  %1798 = vmatpush2.xpose.msra.mxu0 0.0
  %1799 = vmatprep.subr.mxu0 0.0
  %1800 = vmatpush2.xpose.msra.mxu0 0.0
  %1801 = vmatprep.subr.mxu0 0.0
  %1802 = vmatpush2.xpose.msra.mxu0 0.0
  %1803 = vmatprep.subr.mxu0 0.0
  %1804 = vmatpush2.xpose.msra.mxu0 0.0
  %1805 = vmatprep.subr.mxu0 0.0
  %1806 = vmatpush2.xpose.msra.mxu0 0.0
  %1807 = vmatprep.subr.mxu0 0.0
  %1808 = vmatpush2.xpose.msra.mxu0 0.0
  %1809 = vmatprep.subr.mxu0 0.0
  %1810 = vmatpush2.xpose.msra.mxu0 0.0
  %1811 = vmatprep.subr.mxu0 0.0
  %1812 = vmatpush2.xpose.msra.mxu0 0.0
  %1813 = vmatprep.subr.mxu0 0.0
  %1814 = vmatpush2.xpose.msra.mxu0 0.0
  %1815 = vmatprep.mubr.f32.mxu0 0.0
  %1816 = vmatmul.mubr.f32.gmra.mxu0 %v1735
  %v1817 = vpop.f32.mrf.mxu0
  %v1818 = vadd.f32 0.0, %v1817
  %v1819 = vpop.f32.mrf.mxu0
  %1820 = vmatprep.mubr.f32.mxu0 0.0
  %1821 = vmatmul.mubr.f32.gmra.mxu0 %v1737
  %v1822 = vpop.f32.mrf.mxu0
  %v1823 = vadd.f32 0.0, %v1822
  %v1824 = vpop.f32.mrf.mxu0
  %1825 = vmatprep.mubr.f32.mxu0 0.0
  %1826 = vmatmul.mubr.f32.gmra.mxu0 %v1739
  %v1827 = vpop.f32.mrf.mxu0
  %v1828 = vadd.f32 0.0, %v1827
  %v1829 = vpop.f32.mrf.mxu0
  %1830 = vmatprep.mubr.f32.mxu0 0.0
  %1831 = vmatmul.mubr.f32.gmra.mxu0 %v1741
  %v1832 = vpop.f32.mrf.mxu0
  %v1833 = vadd.f32 0.0, %v1832
  %v1834 = vpop.f32.mrf.mxu0
  %1835 = vdwg.mxu0
  %1836 = vrot.lane.b32.xlu0 %v835, 64
  %v1837 = vpop.permute.xlu0 %1836
  %1838 = vrot.lane.b32.xlu0 %v841, 64
  %v1839 = vpop.permute.xlu0 %1838
  %1840 = vrot.lane.b32.xlu0 %v847, 64
  %v1841 = vpop.permute.xlu0 %1840
  %1842 = vrot.lane.b32.xlu0 %v853, 64
  %v1843 = vpop.permute.xlu0 %1842
  %v1844 = vsel %vm1516, %v835, 0
  %v1846 = vsel %vm1516, %v841, 0
  %v1848 = vsel %vm1516, %v847, 0
  %v1850 = vsel %vm1516, %v853, 0
  %v1852 = vsel %vm1516, %v1837, 0
  %v1854 = vsel %vm1516, %v1839, 0
  %v1856 = vsel %vm1516, %v1841, 0
  %v1858 = vsel %vm1516, %v1843, 0
  %1860 = vmatprep.subr.mxu0 0.0
  %1861 = vmatpush1.xpose.msra.mxu0 0.0
  %1862 = vmatprep.subr.mxu0 0.0
  %1863 = vmatpush1.xpose.msra.mxu0 0.0
  %1864 = vmatprep.subr.mxu0 0.0
  %1865 = vmatpush1.xpose.msra.mxu0 0.0
  %1866 = vmatprep.subr.mxu0 0.0
  %1867 = vmatpush1.xpose.msra.mxu0 0.0
  %1868 = vmatprep.subr.mxu0 0.0
  %1869 = vmatpush1.xpose.msra.mxu0 0.0
  %1870 = vmatprep.subr.mxu0 0.0
  %1871 = vmatpush1.xpose.msra.mxu0 0.0
  %1872 = vmatprep.subr.mxu0 0.0
  %1873 = vmatpush1.xpose.msra.mxu0 0.0
  %1874 = vmatprep.subr.mxu0 0.0
  %1875 = vmatpush1.xpose.msra.mxu0 0.0
  %1876 = vmatprep.subr.mxu0 0.0
  %1877 = vmatpush1.xpose.msra.mxu0 0.0
  %1878 = vmatprep.subr.mxu0 0.0
  %1879 = vmatpush1.xpose.msra.mxu0 0.0
  %1880 = vmatprep.subr.mxu0 0.0
  %1881 = vmatpush1.xpose.msra.mxu0 0.0
  %1882 = vmatprep.subr.mxu0 0.0
  %1883 = vmatpush1.xpose.msra.mxu0 0.0
  %1884 = vmatprep.subr.mxu0 0.0
  %1885 = vmatpush1.xpose.msra.mxu0 %v1858
  %1886 = vmatprep.subr.mxu0 0.0
  %1887 = vmatpush1.xpose.msra.mxu0 %v1856
  %1888 = vmatprep.subr.mxu0 0.0
  %1889 = vmatpush1.xpose.msra.mxu0 %v1854
  %1890 = vmatprep.subr.mxu0 0.0
  %1891 = vmatpush1.xpose.msra.mxu0 %v1852
  %1892 = vmatprep.subr.mxu0 0.0
  %1893 = vmatpush2.xpose.msra.mxu0 0.0
  %1894 = vmatprep.subr.mxu0 0.0
  %1895 = vmatpush2.xpose.msra.mxu0 0.0
  %1896 = vmatprep.subr.mxu0 0.0
  %1897 = vmatpush2.xpose.msra.mxu0 0.0
  %1898 = vmatprep.subr.mxu0 0.0
  %1899 = vmatpush2.xpose.msra.mxu0 0.0
  %1900 = vmatprep.subr.mxu0 0.0
  %1901 = vmatpush2.xpose.msra.mxu0 0.0
  %1902 = vmatprep.subr.mxu0 0.0
  %1903 = vmatpush2.xpose.msra.mxu0 0.0
  %1904 = vmatprep.subr.mxu0 0.0
  %1905 = vmatpush2.xpose.msra.mxu0 0.0
  %1906 = vmatprep.subr.mxu0 0.0
  %1907 = vmatpush2.xpose.msra.mxu0 0.0
  %1908 = vmatprep.subr.mxu0 0.0
  %1909 = vmatpush2.xpose.msra.mxu0 0.0
  %1910 = vmatprep.subr.mxu0 0.0
  %1911 = vmatpush2.xpose.msra.mxu0 0.0
  %1912 = vmatprep.subr.mxu0 0.0
  %1913 = vmatpush2.xpose.msra.mxu0 0.0
  %1914 = vmatprep.subr.mxu0 0.0
  %1915 = vmatpush2.xpose.msra.mxu0 0.0
  %1916 = vmatprep.subr.mxu0 0.0
  %1917 = vmatpush2.xpose.msra.mxu0 0.0
  %1918 = vmatprep.subr.mxu0 0.0
  %1919 = vmatpush2.xpose.msra.mxu0 0.0
  %1920 = vmatprep.subr.mxu0 0.0
  %1921 = vmatpush2.xpose.msra.mxu0 0.0
  %1922 = vmatprep.subr.mxu0 0.0
  %1923 = vmatpush2.xpose.msra.mxu0 0.0
  %1924 = vmatprep.mubr.f32.mxu0 0.0
  %1925 = vmatmul.mubr.f32.gmra.mxu0 %v1844
  %v1926 = vpop.f32.mrf.mxu0
  %v1927 = vadd.f32 0.0, %v1926
  %v1928 = vpop.f32.mrf.mxu0
  %1929 = vmatprep.mubr.f32.mxu0 0.0
  %1930 = vmatmul.mubr.f32.gmra.mxu0 %v1846
  %v1931 = vpop.f32.mrf.mxu0
  %v1932 = vadd.f32 0.0, %v1931
  %v1933 = vpop.f32.mrf.mxu0
  %1934 = vmatprep.mubr.f32.mxu0 0.0
  %1935 = vmatmul.mubr.f32.gmra.mxu0 %v1848
  %v1936 = vpop.f32.mrf.mxu0
  %v1937 = vadd.f32 0.0, %v1936
  %v1938 = vpop.f32.mrf.mxu0
  %1939 = vmatprep.mubr.f32.mxu0 0.0
  %1940 = vmatmul.mubr.f32.gmra.mxu0 %v1850
  %v1941 = vpop.f32.mrf.mxu0
  %v1942 = vadd.f32 0.0, %v1941
  %v1943 = vpop.f32.mrf.mxu0
  %1944 = vdwg.mxu0
  %1945 = vrot.lane.b32.xlu0 %v859, 64
  %v1946 = vpop.permute.xlu0 %1945
  %1947 = vrot.lane.b32.xlu0 %v865, 64
  %v1948 = vpop.permute.xlu0 %1947
  %1949 = vrot.lane.b32.xlu0 %v871, 64
  %v1950 = vpop.permute.xlu0 %1949
  %1951 = vrot.lane.b32.xlu0 %v877, 64
  %v1952 = vpop.permute.xlu0 %1951
  %v1953 = vsel %vm1516, %v859, 0
  %v1955 = vsel %vm1516, %v865, 0
  %v1957 = vsel %vm1516, %v871, 0
  %v1959 = vsel %vm1516, %v877, 0
  %v1961 = vsel %vm1516, %v1946, 0
  %v1963 = vsel %vm1516, %v1948, 0
  %v1965 = vsel %vm1516, %v1950, 0
  %v1967 = vsel %vm1516, %v1952, 0
  %1969 = vmatprep.subr.mxu0 0.0
  %1970 = vmatpush1.xpose.msra.mxu0 0.0
  %1971 = vmatprep.subr.mxu0 0.0
  %1972 = vmatpush1.xpose.msra.mxu0 0.0
  %1973 = vmatprep.subr.mxu0 0.0
  %1974 = vmatpush1.xpose.msra.mxu0 0.0
  %1975 = vmatprep.subr.mxu0 0.0
  %1976 = vmatpush1.xpose.msra.mxu0 0.0
  %1977 = vmatprep.subr.mxu0 0.0
  %1978 = vmatpush1.xpose.msra.mxu0 0.0
  %1979 = vmatprep.subr.mxu0 0.0
  %1980 = vmatpush1.xpose.msra.mxu0 0.0
  %1981 = vmatprep.subr.mxu0 0.0
  %1982 = vmatpush1.xpose.msra.mxu0 0.0
  %1983 = vmatprep.subr.mxu0 0.0
  %1984 = vmatpush1.xpose.msra.mxu0 0.0
  %1985 = vmatprep.subr.mxu0 0.0
  %1986 = vmatpush1.xpose.msra.mxu0 0.0
  %1987 = vmatprep.subr.mxu0 0.0
  %1988 = vmatpush1.xpose.msra.mxu0 0.0
  %1989 = vmatprep.subr.mxu0 0.0
  %1990 = vmatpush1.xpose.msra.mxu0 0.0
  %1991 = vmatprep.subr.mxu0 0.0
  %1992 = vmatpush1.xpose.msra.mxu0 0.0
  %1993 = vmatprep.subr.mxu0 0.0
  %1994 = vmatpush1.xpose.msra.mxu0 %v1967
  %1995 = vmatprep.subr.mxu0 0.0
  %1996 = vmatpush1.xpose.msra.mxu0 %v1965
  %1997 = vmatprep.subr.mxu0 0.0
  %1998 = vmatpush1.xpose.msra.mxu0 %v1963
  %1999 = vmatprep.subr.mxu0 0.0
  %2000 = vmatpush1.xpose.msra.mxu0 %v1961
  %2001 = vmatprep.subr.mxu0 0.0
  %2002 = vmatpush2.xpose.msra.mxu0 0.0
  %2003 = vmatprep.subr.mxu0 0.0
  %2004 = vmatpush2.xpose.msra.mxu0 0.0
  %2005 = vmatprep.subr.mxu0 0.0
  %2006 = vmatpush2.xpose.msra.mxu0 0.0
  %2007 = vmatprep.subr.mxu0 0.0
  %2008 = vmatpush2.xpose.msra.mxu0 0.0
  %2009 = vmatprep.subr.mxu0 0.0
  %2010 = vmatpush2.xpose.msra.mxu0 0.0
  %2011 = vmatprep.subr.mxu0 0.0
  %2012 = vmatpush2.xpose.msra.mxu0 0.0
  %2013 = vmatprep.subr.mxu0 0.0
  %2014 = vmatpush2.xpose.msra.mxu0 0.0
  %2015 = vmatprep.subr.mxu0 0.0
  %2016 = vmatpush2.xpose.msra.mxu0 0.0
  %2017 = vmatprep.subr.mxu0 0.0
  %2018 = vmatpush2.xpose.msra.mxu0 0.0
  %2019 = vmatprep.subr.mxu0 0.0
  %2020 = vmatpush2.xpose.msra.mxu0 0.0
  %2021 = vmatprep.subr.mxu0 0.0
  %2022 = vmatpush2.xpose.msra.mxu0 0.0
  %2023 = vmatprep.subr.mxu0 0.0
  %2024 = vmatpush2.xpose.msra.mxu0 0.0
  %2025 = vmatprep.subr.mxu0 0.0
  %2026 = vmatpush2.xpose.msra.mxu0 0.0
  %2027 = vmatprep.subr.mxu0 0.0
  %2028 = vmatpush2.xpose.msra.mxu0 0.0
  %2029 = vmatprep.subr.mxu0 0.0
  %2030 = vmatpush2.xpose.msra.mxu0 0.0
  %2031 = vmatprep.subr.mxu0 0.0
  %2032 = vmatpush2.xpose.msra.mxu0 0.0
  %2033 = vmatprep.mubr.f32.mxu0 0.0
  %2034 = vmatmul.mubr.f32.gmra.mxu0 %v1953
  %v2035 = vpop.f32.mrf.mxu0
  %v2036 = vadd.f32 0.0, %v2035
  %v2037 = vpop.f32.mrf.mxu0
  %2038 = vmatprep.mubr.f32.mxu0 0.0
  %2039 = vmatmul.mubr.f32.gmra.mxu0 %v1955
  %v2040 = vpop.f32.mrf.mxu0
  %v2041 = vadd.f32 0.0, %v2040
  %v2042 = vpop.f32.mrf.mxu0
  %2043 = vmatprep.mubr.f32.mxu0 0.0
  %2044 = vmatmul.mubr.f32.gmra.mxu0 %v1957
  %v2045 = vpop.f32.mrf.mxu0
  %v2046 = vadd.f32 0.0, %v2045
  %v2047 = vpop.f32.mrf.mxu0
  %2048 = vmatprep.mubr.f32.mxu0 0.0
  %2049 = vmatmul.mubr.f32.gmra.mxu0 %v1959
  %v2050 = vpop.f32.mrf.mxu0
  %v2051 = vadd.f32 0.0, %v2050
  %v2052 = vpop.f32.mrf.mxu0
  %2053 = vdwg.mxu0
  %2054 = vrot.lane.b32.xlu0 %v883, 64
  %v2055 = vpop.permute.xlu0 %2054
  %2056 = vrot.lane.b32.xlu0 %v889, 64
  %v2057 = vpop.permute.xlu0 %2056
  %2058 = vrot.lane.b32.xlu0 %v895, 64
  %v2059 = vpop.permute.xlu0 %2058
  %2060 = vrot.lane.b32.xlu0 %v901, 64
  %v2061 = vpop.permute.xlu0 %2060
  %v2062 = vsel %vm1516, %v883, 0
  %v2064 = vsel %vm1516, %v889, 0
  %v2066 = vsel %vm1516, %v895, 0
  %v2068 = vsel %vm1516, %v901, 0
  %v2070 = vsel %vm1516, %v2055, 0
  %v2072 = vsel %vm1516, %v2057, 0
  %v2074 = vsel %vm1516, %v2059, 0
  %v2076 = vsel %vm1516, %v2061, 0
  %2078 = vmatprep.subr.mxu0 0.0
  %2079 = vmatpush1.xpose.msra.mxu0 0.0
  %2080 = vmatprep.subr.mxu0 0.0
  %2081 = vmatpush1.xpose.msra.mxu0 0.0
  %2082 = vmatprep.subr.mxu0 0.0
  %2083 = vmatpush1.xpose.msra.mxu0 0.0
  %2084 = vmatprep.subr.mxu0 0.0
  %2085 = vmatpush1.xpose.msra.mxu0 0.0
  %2086 = vmatprep.subr.mxu0 0.0
  %2087 = vmatpush1.xpose.msra.mxu0 0.0
  %2088 = vmatprep.subr.mxu0 0.0
  %2089 = vmatpush1.xpose.msra.mxu0 0.0
  %2090 = vmatprep.subr.mxu0 0.0
  %2091 = vmatpush1.xpose.msra.mxu0 0.0
  %2092 = vmatprep.subr.mxu0 0.0
  %2093 = vmatpush1.xpose.msra.mxu0 0.0
  %2094 = vmatprep.subr.mxu0 0.0
  %2095 = vmatpush1.xpose.msra.mxu0 0.0
  %2096 = vmatprep.subr.mxu0 0.0
  %2097 = vmatpush1.xpose.msra.mxu0 0.0
  %2098 = vmatprep.subr.mxu0 0.0
  %2099 = vmatpush1.xpose.msra.mxu0 0.0
  %2100 = vmatprep.subr.mxu0 0.0
  %2101 = vmatpush1.xpose.msra.mxu0 0.0
  %2102 = vmatprep.subr.mxu0 0.0
  %2103 = vmatpush1.xpose.msra.mxu0 %v2076
  %2104 = vmatprep.subr.mxu0 0.0
  %2105 = vmatpush1.xpose.msra.mxu0 %v2074
  %2106 = vmatprep.subr.mxu0 0.0
  %2107 = vmatpush1.xpose.msra.mxu0 %v2072
  %2108 = vmatprep.subr.mxu0 0.0
  %2109 = vmatpush1.xpose.msra.mxu0 %v2070
  %2110 = vmatprep.subr.mxu0 0.0
  %2111 = vmatpush2.xpose.msra.mxu0 0.0
  %2112 = vmatprep.subr.mxu0 0.0
  %2113 = vmatpush2.xpose.msra.mxu0 0.0
  %2114 = vmatprep.subr.mxu0 0.0
  %2115 = vmatpush2.xpose.msra.mxu0 0.0
  %2116 = vmatprep.subr.mxu0 0.0
  %2117 = vmatpush2.xpose.msra.mxu0 0.0
  %2118 = vmatprep.subr.mxu0 0.0
  %2119 = vmatpush2.xpose.msra.mxu0 0.0
  %2120 = vmatprep.subr.mxu0 0.0
  %2121 = vmatpush2.xpose.msra.mxu0 0.0
  %2122 = vmatprep.subr.mxu0 0.0
  %2123 = vmatpush2.xpose.msra.mxu0 0.0
  %2124 = vmatprep.subr.mxu0 0.0
  %2125 = vmatpush2.xpose.msra.mxu0 0.0
  %2126 = vmatprep.subr.mxu0 0.0
  %2127 = vmatpush2.xpose.msra.mxu0 0.0
  %2128 = vmatprep.subr.mxu0 0.0
  %2129 = vmatpush2.xpose.msra.mxu0 0.0
  %2130 = vmatprep.subr.mxu0 0.0
  %2131 = vmatpush2.xpose.msra.mxu0 0.0
  %2132 = vmatprep.subr.mxu0 0.0
  %2133 = vmatpush2.xpose.msra.mxu0 0.0
  %2134 = vmatprep.subr.mxu0 0.0
  %2135 = vmatpush2.xpose.msra.mxu0 0.0
  %2136 = vmatprep.subr.mxu0 0.0
  %2137 = vmatpush2.xpose.msra.mxu0 0.0
  %2138 = vmatprep.subr.mxu0 0.0
  %2139 = vmatpush2.xpose.msra.mxu0 0.0
  %2140 = vmatprep.subr.mxu0 0.0
  %2141 = vmatpush2.xpose.msra.mxu0 0.0
  %2142 = vmatprep.mubr.f32.mxu0 0.0
  %2143 = vmatmul.mubr.f32.gmra.mxu0 %v2062
  %v2144 = vpop.f32.mrf.mxu0
  %v2145 = vadd.f32 0.0, %v2144
  %v2146 = vpop.f32.mrf.mxu0
  %2147 = vmatprep.mubr.f32.mxu0 0.0
  %2148 = vmatmul.mubr.f32.gmra.mxu0 %v2064
  %v2149 = vpop.f32.mrf.mxu0
  %v2150 = vadd.f32 0.0, %v2149
  %v2151 = vpop.f32.mrf.mxu0
  %2152 = vmatprep.mubr.f32.mxu0 0.0
  %2153 = vmatmul.mubr.f32.gmra.mxu0 %v2066
  %v2154 = vpop.f32.mrf.mxu0
  %v2155 = vadd.f32 0.0, %v2154
  %v2156 = vpop.f32.mrf.mxu0
  %2157 = vmatprep.mubr.f32.mxu0 0.0
  %2158 = vmatmul.mubr.f32.gmra.mxu0 %v2068
  %v2159 = vpop.f32.mrf.mxu0
  %v2160 = vadd.f32 0.0, %v2159
  %v2161 = vpop.f32.mrf.mxu0
  %2162 = vdwg.mxu0
  %2163 = vrot.lane.b32.xlu0 %v907, 64
  %v2164 = vpop.permute.xlu0 %2163
  %2165 = vrot.lane.b32.xlu0 %v913, 64
  %v2166 = vpop.permute.xlu0 %2165
  %2167 = vrot.lane.b32.xlu0 %v919, 64
  %v2168 = vpop.permute.xlu0 %2167
  %2169 = vrot.lane.b32.xlu0 %v925, 64
  %v2170 = vpop.permute.xlu0 %2169
  %v2171 = vsel %vm1516, %v907, 0
  %v2173 = vsel %vm1516, %v913, 0
  %v2175 = vsel %vm1516, %v919, 0
  %v2177 = vsel %vm1516, %v925, 0
  %v2179 = vsel %vm1516, %v2164, 0
  %v2181 = vsel %vm1516, %v2166, 0
  %v2183 = vsel %vm1516, %v2168, 0
  %v2185 = vsel %vm1516, %v2170, 0
  %2187 = vmatprep.subr.mxu0 0.0
  %2188 = vmatpush1.xpose.msra.mxu0 0.0
  %2189 = vmatprep.subr.mxu0 0.0
  %2190 = vmatpush1.xpose.msra.mxu0 0.0
  %2191 = vmatprep.subr.mxu0 0.0
  %2192 = vmatpush1.xpose.msra.mxu0 0.0
  %2193 = vmatprep.subr.mxu0 0.0
  %2194 = vmatpush1.xpose.msra.mxu0 0.0
  %2195 = vmatprep.subr.mxu0 0.0
  %2196 = vmatpush1.xpose.msra.mxu0 0.0
  %2197 = vmatprep.subr.mxu0 0.0
  %2198 = vmatpush1.xpose.msra.mxu0 0.0
  %2199 = vmatprep.subr.mxu0 0.0
  %2200 = vmatpush1.xpose.msra.mxu0 0.0
  %2201 = vmatprep.subr.mxu0 0.0
  %2202 = vmatpush1.xpose.msra.mxu0 0.0
  %2203 = vmatprep.subr.mxu0 0.0
  %2204 = vmatpush1.xpose.msra.mxu0 0.0
  %2205 = vmatprep.subr.mxu0 0.0
  %2206 = vmatpush1.xpose.msra.mxu0 0.0
  %2207 = vmatprep.subr.mxu0 0.0
  %2208 = vmatpush1.xpose.msra.mxu0 0.0
  %2209 = vmatprep.subr.mxu0 0.0
  %2210 = vmatpush1.xpose.msra.mxu0 0.0
  %2211 = vmatprep.subr.mxu0 0.0
  %2212 = vmatpush1.xpose.msra.mxu0 %v2185
  %2213 = vmatprep.subr.mxu0 0.0
  %2214 = vmatpush1.xpose.msra.mxu0 %v2183
  %2215 = vmatprep.subr.mxu0 0.0
  %2216 = vmatpush1.xpose.msra.mxu0 %v2181
  %2217 = vmatprep.subr.mxu0 0.0
  %2218 = vmatpush1.xpose.msra.mxu0 %v2179
  %2219 = vmatprep.subr.mxu0 0.0
  %2220 = vmatpush2.xpose.msra.mxu0 0.0
  %2221 = vmatprep.subr.mxu0 0.0
  %2222 = vmatpush2.xpose.msra.mxu0 0.0
  %2223 = vmatprep.subr.mxu0 0.0
  %2224 = vmatpush2.xpose.msra.mxu0 0.0
  %2225 = vmatprep.subr.mxu0 0.0
  %2226 = vmatpush2.xpose.msra.mxu0 0.0
  %2227 = vmatprep.subr.mxu0 0.0
  %2228 = vmatpush2.xpose.msra.mxu0 0.0
  %2229 = vmatprep.subr.mxu0 0.0
  %2230 = vmatpush2.xpose.msra.mxu0 0.0
  %2231 = vmatprep.subr.mxu0 0.0
  %2232 = vmatpush2.xpose.msra.mxu0 0.0
  %2233 = vmatprep.subr.mxu0 0.0
  %2234 = vmatpush2.xpose.msra.mxu0 0.0
  %2235 = vmatprep.subr.mxu0 0.0
  %2236 = vmatpush2.xpose.msra.mxu0 0.0
  %2237 = vmatprep.subr.mxu0 0.0
  %2238 = vmatpush2.xpose.msra.mxu0 0.0
  %2239 = vmatprep.subr.mxu0 0.0
  %2240 = vmatpush2.xpose.msra.mxu0 0.0
  %2241 = vmatprep.subr.mxu0 0.0
  %2242 = vmatpush2.xpose.msra.mxu0 0.0
  %2243 = vmatprep.subr.mxu0 0.0
  %2244 = vmatpush2.xpose.msra.mxu0 0.0
  %2245 = vmatprep.subr.mxu0 0.0
  %2246 = vmatpush2.xpose.msra.mxu0 0.0
  %2247 = vmatprep.subr.mxu0 0.0
  %2248 = vmatpush2.xpose.msra.mxu0 0.0
  %2249 = vmatprep.subr.mxu0 0.0
  %2250 = vmatpush2.xpose.msra.mxu0 0.0
  %2251 = vmatprep.mubr.f32.mxu0 0.0
  %2252 = vmatmul.mubr.f32.gmra.mxu0 %v2171
  %v2253 = vpop.f32.mrf.mxu0
  %v2254 = vadd.f32 0.0, %v2253
  %v2255 = vpop.f32.mrf.mxu0
  %2256 = vmatprep.mubr.f32.mxu0 0.0
  %2257 = vmatmul.mubr.f32.gmra.mxu0 %v2173
  %v2258 = vpop.f32.mrf.mxu0
  %v2259 = vadd.f32 0.0, %v2258
  %v2260 = vpop.f32.mrf.mxu0
  %2261 = vmatprep.mubr.f32.mxu0 0.0
  %2262 = vmatmul.mubr.f32.gmra.mxu0 %v2175
  %v2263 = vpop.f32.mrf.mxu0
  %v2264 = vadd.f32 0.0, %v2263
  %v2265 = vpop.f32.mrf.mxu0
  %2266 = vmatprep.mubr.f32.mxu0 0.0
  %2267 = vmatmul.mubr.f32.gmra.mxu0 %v2177
  %v2268 = vpop.f32.mrf.mxu0
  %v2269 = vadd.f32 0.0, %v2268
  %v2270 = vpop.f32.mrf.mxu0
  %2271 = vdwg.mxu0
  %2272 = vrot.lane.b32.xlu0 %v931, 64
  %v2273 = vpop.permute.xlu0 %2272
  %2274 = vrot.lane.b32.xlu0 %v937, 64
  %v2275 = vpop.permute.xlu0 %2274
  %2276 = vrot.lane.b32.xlu0 %v943, 64
  %v2277 = vpop.permute.xlu0 %2276
  %2278 = vrot.lane.b32.xlu0 %v949, 64
  %v2279 = vpop.permute.xlu0 %2278
  %v2280 = vsel %vm1516, %v931, 0
  %v2282 = vsel %vm1516, %v937, 0
  %v2284 = vsel %vm1516, %v943, 0
  %v2286 = vsel %vm1516, %v949, 0
  %v2288 = vsel %vm1516, %v2273, 0
  %v2290 = vsel %vm1516, %v2275, 0
  %v2292 = vsel %vm1516, %v2277, 0
  %v2294 = vsel %vm1516, %v2279, 0
  %2296 = vmatprep.subr.mxu0 0.0
  %2297 = vmatpush1.xpose.msra.mxu0 0.0
  %2298 = vmatprep.subr.mxu0 0.0
  %2299 = vmatpush1.xpose.msra.mxu0 0.0
  %2300 = vmatprep.subr.mxu0 0.0
  %2301 = vmatpush1.xpose.msra.mxu0 0.0
  %2302 = vmatprep.subr.mxu0 0.0
  %2303 = vmatpush1.xpose.msra.mxu0 0.0
  %2304 = vmatprep.subr.mxu0 0.0
  %2305 = vmatpush1.xpose.msra.mxu0 0.0
  %2306 = vmatprep.subr.mxu0 0.0
  %2307 = vmatpush1.xpose.msra.mxu0 0.0
  %2308 = vmatprep.subr.mxu0 0.0
  %2309 = vmatpush1.xpose.msra.mxu0 0.0
  %2310 = vmatprep.subr.mxu0 0.0
  %2311 = vmatpush1.xpose.msra.mxu0 0.0
  %2312 = vmatprep.subr.mxu0 0.0
  %2313 = vmatpush1.xpose.msra.mxu0 0.0
  %2314 = vmatprep.subr.mxu0 0.0
  %2315 = vmatpush1.xpose.msra.mxu0 0.0
  %2316 = vmatprep.subr.mxu0 0.0
  %2317 = vmatpush1.xpose.msra.mxu0 0.0
  %2318 = vmatprep.subr.mxu0 0.0
  %2319 = vmatpush1.xpose.msra.mxu0 0.0
  %2320 = vmatprep.subr.mxu0 0.0
  %2321 = vmatpush1.xpose.msra.mxu0 %v2294
  %2322 = vmatprep.subr.mxu0 0.0
  %2323 = vmatpush1.xpose.msra.mxu0 %v2292
  %2324 = vmatprep.subr.mxu0 0.0
  %2325 = vmatpush1.xpose.msra.mxu0 %v2290
  %2326 = vmatprep.subr.mxu0 0.0
  %2327 = vmatpush1.xpose.msra.mxu0 %v2288
  %2328 = vmatprep.subr.mxu0 0.0
  %2329 = vmatpush2.xpose.msra.mxu0 0.0
  %2330 = vmatprep.subr.mxu0 0.0
  %2331 = vmatpush2.xpose.msra.mxu0 0.0
  %2332 = vmatprep.subr.mxu0 0.0
  %2333 = vmatpush2.xpose.msra.mxu0 0.0
  %2334 = vmatprep.subr.mxu0 0.0
  %2335 = vmatpush2.xpose.msra.mxu0 0.0
  %2336 = vmatprep.subr.mxu0 0.0
  %2337 = vmatpush2.xpose.msra.mxu0 0.0
  %2338 = vmatprep.subr.mxu0 0.0
  %2339 = vmatpush2.xpose.msra.mxu0 0.0
  %2340 = vmatprep.subr.mxu0 0.0
  %2341 = vmatpush2.xpose.msra.mxu0 0.0
  %2342 = vmatprep.subr.mxu0 0.0
  %2343 = vmatpush2.xpose.msra.mxu0 0.0
  %2344 = vmatprep.subr.mxu0 0.0
  %2345 = vmatpush2.xpose.msra.mxu0 0.0
  %2346 = vmatprep.subr.mxu0 0.0
  %2347 = vmatpush2.xpose.msra.mxu0 0.0
  %2348 = vmatprep.subr.mxu0 0.0
  %2349 = vmatpush2.xpose.msra.mxu0 0.0
  %2350 = vmatprep.subr.mxu0 0.0
  %2351 = vmatpush2.xpose.msra.mxu0 0.0
  %2352 = vmatprep.subr.mxu0 0.0
  %2353 = vmatpush2.xpose.msra.mxu0 0.0
  %2354 = vmatprep.subr.mxu0 0.0
  %2355 = vmatpush2.xpose.msra.mxu0 0.0
  %2356 = vmatprep.subr.mxu0 0.0
  %2357 = vmatpush2.xpose.msra.mxu0 0.0
  %2358 = vmatprep.subr.mxu0 0.0
  %2359 = vmatpush2.xpose.msra.mxu0 0.0
  %2360 = vmatprep.mubr.f32.mxu0 0.0
  %2361 = vmatmul.mubr.f32.gmra.mxu0 %v2280
  %v2362 = vpop.f32.mrf.mxu0
  %v2363 = vadd.f32 0.0, %v2362
  %v2364 = vpop.f32.mrf.mxu0
  %2365 = vmatprep.mubr.f32.mxu0 0.0
  %2366 = vmatmul.mubr.f32.gmra.mxu0 %v2282
  %v2367 = vpop.f32.mrf.mxu0
  %v2368 = vadd.f32 0.0, %v2367
  %v2369 = vpop.f32.mrf.mxu0
  %2370 = vmatprep.mubr.f32.mxu0 0.0
  %2371 = vmatmul.mubr.f32.gmra.mxu0 %v2284
  %v2372 = vpop.f32.mrf.mxu0
  %v2373 = vadd.f32 0.0, %v2372
  %v2374 = vpop.f32.mrf.mxu0
  %2375 = vmatprep.mubr.f32.mxu0 0.0
  %2376 = vmatmul.mubr.f32.gmra.mxu0 %v2286
  %v2377 = vpop.f32.mrf.mxu0
  %v2378 = vadd.f32 0.0, %v2377
  %v2379 = vpop.f32.mrf.mxu0
  %2380 = vdwg.mxu0
  %2381 = vrot.lane.b32.xlu0 %v986, 64
  %v2382 = vpop.permute.xlu0 %2381
  %2383 = vrot.lane.b32.xlu0 %v988, 64
  %v2384 = vpop.permute.xlu0 %2383
  %2385 = vrot.lane.b32.xlu0 %v990, 64
  %v2386 = vpop.permute.xlu0 %2385
  %2387 = vrot.lane.b32.xlu0 %v992, 64
  %v2388 = vpop.permute.xlu0 %2387
  %v2389 = vsel %vm1516, %v986, 0
  %v2391 = vsel %vm1516, %v988, 0
  %v2393 = vsel %vm1516, %v990, 0
  %v2395 = vsel %vm1516, %v992, 0
  %v2397 = vsel %vm1516, %v2382, 0
  %v2399 = vsel %vm1516, %v2384, 0
  %v2401 = vsel %vm1516, %v2386, 0
  %v2403 = vsel %vm1516, %v2388, 0
  %2405 = vmatprep.subr.mxu0 0.0
  %2406 = vmatpush1.xpose.msra.mxu0 0.0
  %2407 = vmatprep.subr.mxu0 0.0
  %2408 = vmatpush1.xpose.msra.mxu0 0.0
  %2409 = vmatprep.subr.mxu0 0.0
  %2410 = vmatpush1.xpose.msra.mxu0 0.0
  %2411 = vmatprep.subr.mxu0 0.0
  %2412 = vmatpush1.xpose.msra.mxu0 0.0
  %2413 = vmatprep.subr.mxu0 0.0
  %2414 = vmatpush1.xpose.msra.mxu0 0.0
  %2415 = vmatprep.subr.mxu0 0.0
  %2416 = vmatpush1.xpose.msra.mxu0 0.0
  %2417 = vmatprep.subr.mxu0 0.0
  %2418 = vmatpush1.xpose.msra.mxu0 0.0
  %2419 = vmatprep.subr.mxu0 0.0
  %2420 = vmatpush1.xpose.msra.mxu0 0.0
  %2421 = vmatprep.subr.mxu0 0.0
  %2422 = vmatpush1.xpose.msra.mxu0 0.0
  %2423 = vmatprep.subr.mxu0 0.0
  %2424 = vmatpush1.xpose.msra.mxu0 0.0
  %2425 = vmatprep.subr.mxu0 0.0
  %2426 = vmatpush1.xpose.msra.mxu0 0.0
  %2427 = vmatprep.subr.mxu0 0.0
  %2428 = vmatpush1.xpose.msra.mxu0 0.0
  %2429 = vmatprep.subr.mxu0 0.0
  %2430 = vmatpush1.xpose.msra.mxu0 %v2403
  %2431 = vmatprep.subr.mxu0 0.0
  %2432 = vmatpush1.xpose.msra.mxu0 %v2401
  %2433 = vmatprep.subr.mxu0 0.0
  %2434 = vmatpush1.xpose.msra.mxu0 %v2399
  %2435 = vmatprep.subr.mxu0 0.0
  %2436 = vmatpush1.xpose.msra.mxu0 %v2397
  %2437 = vmatprep.subr.mxu0 0.0
  %2438 = vmatpush2.xpose.msra.mxu0 0.0
  %2439 = vmatprep.subr.mxu0 0.0
  %2440 = vmatpush2.xpose.msra.mxu0 0.0
  %2441 = vmatprep.subr.mxu0 0.0
  %2442 = vmatpush2.xpose.msra.mxu0 0.0
  %2443 = vmatprep.subr.mxu0 0.0
  %2444 = vmatpush2.xpose.msra.mxu0 0.0
  %2445 = vmatprep.subr.mxu0 0.0
  %2446 = vmatpush2.xpose.msra.mxu0 0.0
  %2447 = vmatprep.subr.mxu0 0.0
  %2448 = vmatpush2.xpose.msra.mxu0 0.0
  %2449 = vmatprep.subr.mxu0 0.0
  %2450 = vmatpush2.xpose.msra.mxu0 0.0
  %2451 = vmatprep.subr.mxu0 0.0
  %2452 = vmatpush2.xpose.msra.mxu0 0.0
  %2453 = vmatprep.subr.mxu0 0.0
  %2454 = vmatpush2.xpose.msra.mxu0 0.0
  %2455 = vmatprep.subr.mxu0 0.0
  %2456 = vmatpush2.xpose.msra.mxu0 0.0
  %2457 = vmatprep.subr.mxu0 0.0
  %2458 = vmatpush2.xpose.msra.mxu0 0.0
  %2459 = vmatprep.subr.mxu0 0.0
  %2460 = vmatpush2.xpose.msra.mxu0 0.0
  %2461 = vmatprep.subr.mxu0 0.0
  %2462 = vmatpush2.xpose.msra.mxu0 0.0
  %2463 = vmatprep.subr.mxu0 0.0
  %2464 = vmatpush2.xpose.msra.mxu0 0.0
  %2465 = vmatprep.subr.mxu0 0.0
  %2466 = vmatpush2.xpose.msra.mxu0 0.0
  %2467 = vmatprep.subr.mxu0 0.0
  %2468 = vmatpush2.xpose.msra.mxu0 0.0
  %2469 = vmatprep.mubr.f32.mxu0 0.0
  %2470 = vmatmul.mubr.f32.gmra.mxu0 %v2389
  %v2471 = vpop.f32.mrf.mxu0
  %v2472 = vadd.f32 0.0, %v2471
  %v2473 = vpop.f32.mrf.mxu0
  %2474 = vmatprep.mubr.f32.mxu0 0.0
  %2475 = vmatmul.mubr.f32.gmra.mxu0 %v2391
  %v2476 = vpop.f32.mrf.mxu0
  %v2477 = vadd.f32 0.0, %v2476
  %v2478 = vpop.f32.mrf.mxu0
  %2479 = vmatprep.mubr.f32.mxu0 0.0
  %2480 = vmatmul.mubr.f32.gmra.mxu0 %v2393
  %v2481 = vpop.f32.mrf.mxu0
  %v2482 = vadd.f32 0.0, %v2481
  %v2483 = vpop.f32.mrf.mxu0
  %2484 = vmatprep.mubr.f32.mxu0 0.0
  %2485 = vmatmul.mubr.f32.gmra.mxu0 %v2395
  %v2486 = vpop.f32.mrf.mxu0
  %v2487 = vadd.f32 0.0, %v2486
  %v2488 = vpop.f32.mrf.mxu0
  %2489 = vdwg.mxu0
  %2490 = vrot.lane.b32.xlu0 %v994, 64
  %v2491 = vpop.permute.xlu0 %2490
  %2492 = vrot.lane.b32.xlu0 %v996, 64
  %v2493 = vpop.permute.xlu0 %2492
  %2494 = vrot.lane.b32.xlu0 %v998, 64
  %v2495 = vpop.permute.xlu0 %2494
  %2496 = vrot.lane.b32.xlu0 %v1000, 64
  %v2497 = vpop.permute.xlu0 %2496
  %v2498 = vsel %vm1516, %v994, 0
  %v2500 = vsel %vm1516, %v996, 0
  %v2502 = vsel %vm1516, %v998, 0
  %v2504 = vsel %vm1516, %v1000, 0
  %v2506 = vsel %vm1516, %v2491, 0
  %v2508 = vsel %vm1516, %v2493, 0
  %v2510 = vsel %vm1516, %v2495, 0
  %v2512 = vsel %vm1516, %v2497, 0
  %2514 = vmatprep.subr.mxu0 0.0
  %2515 = vmatpush1.xpose.msra.mxu0 0.0
  %2516 = vmatprep.subr.mxu0 0.0
  %2517 = vmatpush1.xpose.msra.mxu0 0.0
  %2518 = vmatprep.subr.mxu0 0.0
  %2519 = vmatpush1.xpose.msra.mxu0 0.0
  %2520 = vmatprep.subr.mxu0 0.0
  %2521 = vmatpush1.xpose.msra.mxu0 0.0
  %2522 = vmatprep.subr.mxu0 0.0
  %2523 = vmatpush1.xpose.msra.mxu0 0.0
  %2524 = vmatprep.subr.mxu0 0.0
  %2525 = vmatpush1.xpose.msra.mxu0 0.0
  %2526 = vmatprep.subr.mxu0 0.0
  %2527 = vmatpush1.xpose.msra.mxu0 0.0
  %2528 = vmatprep.subr.mxu0 0.0
  %2529 = vmatpush1.xpose.msra.mxu0 0.0
  %2530 = vmatprep.subr.mxu0 0.0
  %2531 = vmatpush1.xpose.msra.mxu0 0.0
  %2532 = vmatprep.subr.mxu0 0.0
  %2533 = vmatpush1.xpose.msra.mxu0 0.0
  %2534 = vmatprep.subr.mxu0 0.0
  %2535 = vmatpush1.xpose.msra.mxu0 0.0
  %2536 = vmatprep.subr.mxu0 0.0
  %2537 = vmatpush1.xpose.msra.mxu0 0.0
  %2538 = vmatprep.subr.mxu0 0.0
  %2539 = vmatpush1.xpose.msra.mxu0 %v2512
  %2540 = vmatprep.subr.mxu0 0.0
  %2541 = vmatpush1.xpose.msra.mxu0 %v2510
  %2542 = vmatprep.subr.mxu0 0.0
  %2543 = vmatpush1.xpose.msra.mxu0 %v2508
  %2544 = vmatprep.subr.mxu0 0.0
  %2545 = vmatpush1.xpose.msra.mxu0 %v2506
  %2546 = vmatprep.subr.mxu0 0.0
  %2547 = vmatpush2.xpose.msra.mxu0 0.0
  %2548 = vmatprep.subr.mxu0 0.0
  %2549 = vmatpush2.xpose.msra.mxu0 0.0
  %2550 = vmatprep.subr.mxu0 0.0
  %2551 = vmatpush2.xpose.msra.mxu0 0.0
  %2552 = vmatprep.subr.mxu0 0.0
  %2553 = vmatpush2.xpose.msra.mxu0 0.0
  %2554 = vmatprep.subr.mxu0 0.0
  %2555 = vmatpush2.xpose.msra.mxu0 0.0
  %2556 = vmatprep.subr.mxu0 0.0
  %2557 = vmatpush2.xpose.msra.mxu0 0.0
  %2558 = vmatprep.subr.mxu0 0.0
  %2559 = vmatpush2.xpose.msra.mxu0 0.0
  %2560 = vmatprep.subr.mxu0 0.0
  %2561 = vmatpush2.xpose.msra.mxu0 0.0
  %2562 = vmatprep.subr.mxu0 0.0
  %2563 = vmatpush2.xpose.msra.mxu0 0.0
  %2564 = vmatprep.subr.mxu0 0.0
  %2565 = vmatpush2.xpose.msra.mxu0 0.0
  %2566 = vmatprep.subr.mxu0 0.0
  %2567 = vmatpush2.xpose.msra.mxu0 0.0
  %2568 = vmatprep.subr.mxu0 0.0
  %2569 = vmatpush2.xpose.msra.mxu0 0.0
  %2570 = vmatprep.subr.mxu0 0.0
  %2571 = vmatpush2.xpose.msra.mxu0 0.0
  %2572 = vmatprep.subr.mxu0 0.0
  %2573 = vmatpush2.xpose.msra.mxu0 0.0
  %2574 = vmatprep.subr.mxu0 0.0
  %2575 = vmatpush2.xpose.msra.mxu0 0.0
  %2576 = vmatprep.subr.mxu0 0.0
  %2577 = vmatpush2.xpose.msra.mxu0 0.0
  %2578 = vmatprep.mubr.f32.mxu0 0.0
  %2579 = vmatmul.mubr.f32.gmra.mxu0 %v2498
  %v2580 = vpop.f32.mrf.mxu0
  %v2581 = vadd.f32 0.0, %v2580
  %v2582 = vpop.f32.mrf.mxu0
  %2583 = vmatprep.mubr.f32.mxu0 0.0
  %2584 = vmatmul.mubr.f32.gmra.mxu0 %v2500
  %v2585 = vpop.f32.mrf.mxu0
  %v2586 = vadd.f32 0.0, %v2585
  %v2587 = vpop.f32.mrf.mxu0
  %2588 = vmatprep.mubr.f32.mxu0 0.0
  %2589 = vmatmul.mubr.f32.gmra.mxu0 %v2502
  %v2590 = vpop.f32.mrf.mxu0
  %v2591 = vadd.f32 0.0, %v2590
  %v2592 = vpop.f32.mrf.mxu0
  %2593 = vmatprep.mubr.f32.mxu0 0.0
  %2594 = vmatmul.mubr.f32.gmra.mxu0 %v2504
  %v2595 = vpop.f32.mrf.mxu0
  %v2596 = vadd.f32 0.0, %v2595
  %v2597 = vpop.f32.mrf.mxu0
  %2598 = vdwg.mxu0
  %2599 = vrot.lane.b32.xlu0 %v1002, 64
  %v2600 = vpop.permute.xlu0 %2599
  %2601 = vrot.lane.b32.xlu0 %v1004, 64
  %v2602 = vpop.permute.xlu0 %2601
  %2603 = vrot.lane.b32.xlu0 %v1006, 64
  %v2604 = vpop.permute.xlu0 %2603
  %2605 = vrot.lane.b32.xlu0 %v1008, 64
  %v2606 = vpop.permute.xlu0 %2605
  %v2607 = vsel %vm1516, %v1002, 0
  %v2609 = vsel %vm1516, %v1004, 0
  %v2611 = vsel %vm1516, %v1006, 0
  %v2613 = vsel %vm1516, %v1008, 0
  %v2615 = vsel %vm1516, %v2600, 0
  %v2617 = vsel %vm1516, %v2602, 0
  %v2619 = vsel %vm1516, %v2604, 0
  %v2621 = vsel %vm1516, %v2606, 0
  %2623 = vmatprep.subr.mxu0 0.0
  %2624 = vmatpush1.xpose.msra.mxu0 0.0
  %2625 = vmatprep.subr.mxu0 0.0
  %2626 = vmatpush1.xpose.msra.mxu0 0.0
  %2627 = vmatprep.subr.mxu0 0.0
  %2628 = vmatpush1.xpose.msra.mxu0 0.0
  %2629 = vmatprep.subr.mxu0 0.0
  %2630 = vmatpush1.xpose.msra.mxu0 0.0
  %2631 = vmatprep.subr.mxu0 0.0
  %2632 = vmatpush1.xpose.msra.mxu0 0.0
  %2633 = vmatprep.subr.mxu0 0.0
  %2634 = vmatpush1.xpose.msra.mxu0 0.0
  %2635 = vmatprep.subr.mxu0 0.0
  %2636 = vmatpush1.xpose.msra.mxu0 0.0
  %2637 = vmatprep.subr.mxu0 0.0
  %2638 = vmatpush1.xpose.msra.mxu0 0.0
  %2639 = vmatprep.subr.mxu0 0.0
  %2640 = vmatpush1.xpose.msra.mxu0 0.0
  %2641 = vmatprep.subr.mxu0 0.0
  %2642 = vmatpush1.xpose.msra.mxu0 0.0
  %2643 = vmatprep.subr.mxu0 0.0
  %2644 = vmatpush1.xpose.msra.mxu0 0.0
  %2645 = vmatprep.subr.mxu0 0.0
  %2646 = vmatpush1.xpose.msra.mxu0 0.0
  %2647 = vmatprep.subr.mxu0 0.0
  %2648 = vmatpush1.xpose.msra.mxu0 %v2621
  %2649 = vmatprep.subr.mxu0 0.0
  %2650 = vmatpush1.xpose.msra.mxu0 %v2619
  %2651 = vmatprep.subr.mxu0 0.0
  %2652 = vmatpush1.xpose.msra.mxu0 %v2617
  %2653 = vmatprep.subr.mxu0 0.0
  %2654 = vmatpush1.xpose.msra.mxu0 %v2615
  %2655 = vmatprep.subr.mxu0 0.0
  %2656 = vmatpush2.xpose.msra.mxu0 0.0
  %2657 = vmatprep.subr.mxu0 0.0
  %2658 = vmatpush2.xpose.msra.mxu0 0.0
  %2659 = vmatprep.subr.mxu0 0.0
  %2660 = vmatpush2.xpose.msra.mxu0 0.0
  %2661 = vmatprep.subr.mxu0 0.0
  %2662 = vmatpush2.xpose.msra.mxu0 0.0
  %2663 = vmatprep.subr.mxu0 0.0
  %2664 = vmatpush2.xpose.msra.mxu0 0.0
  %2665 = vmatprep.subr.mxu0 0.0
  %2666 = vmatpush2.xpose.msra.mxu0 0.0
  %2667 = vmatprep.subr.mxu0 0.0
  %2668 = vmatpush2.xpose.msra.mxu0 0.0
  %2669 = vmatprep.subr.mxu0 0.0
  %2670 = vmatpush2.xpose.msra.mxu0 0.0
  %2671 = vmatprep.subr.mxu0 0.0
  %2672 = vmatpush2.xpose.msra.mxu0 0.0
  %2673 = vmatprep.subr.mxu0 0.0
  %2674 = vmatpush2.xpose.msra.mxu0 0.0
  %2675 = vmatprep.subr.mxu0 0.0
  %2676 = vmatpush2.xpose.msra.mxu0 0.0
  %2677 = vmatprep.subr.mxu0 0.0
  %2678 = vmatpush2.xpose.msra.mxu0 0.0
  %2679 = vmatprep.subr.mxu0 0.0
  %2680 = vmatpush2.xpose.msra.mxu0 0.0
  %2681 = vmatprep.subr.mxu0 0.0
  %2682 = vmatpush2.xpose.msra.mxu0 0.0
  %2683 = vmatprep.subr.mxu0 0.0
  %2684 = vmatpush2.xpose.msra.mxu0 0.0
  %2685 = vmatprep.subr.mxu0 0.0
  %2686 = vmatpush2.xpose.msra.mxu0 0.0
  %2687 = vmatprep.mubr.f32.mxu0 0.0
  %2688 = vmatmul.mubr.f32.gmra.mxu0 %v2607
  %v2689 = vpop.f32.mrf.mxu0
  %v2690 = vadd.f32 0.0, %v2689
  %v2691 = vpop.f32.mrf.mxu0
  %2692 = vmatprep.mubr.f32.mxu0 0.0
  %2693 = vmatmul.mubr.f32.gmra.mxu0 %v2609
  %v2694 = vpop.f32.mrf.mxu0
  %v2695 = vadd.f32 0.0, %v2694
  %v2696 = vpop.f32.mrf.mxu0
  %2697 = vmatprep.mubr.f32.mxu0 0.0
  %2698 = vmatmul.mubr.f32.gmra.mxu0 %v2611
  %v2699 = vpop.f32.mrf.mxu0
  %v2700 = vadd.f32 0.0, %v2699
  %v2701 = vpop.f32.mrf.mxu0
  %2702 = vmatprep.mubr.f32.mxu0 0.0
  %2703 = vmatmul.mubr.f32.gmra.mxu0 %v2613
  %v2704 = vpop.f32.mrf.mxu0
  %v2705 = vadd.f32 0.0, %v2704
  %v2706 = vpop.f32.mrf.mxu0
  %2707 = vdwg.mxu0
  %2708 = vrot.lane.b32.xlu0 %v1010, 64
  %v2709 = vpop.permute.xlu0 %2708
  %2710 = vrot.lane.b32.xlu0 %v1012, 64
  %v2711 = vpop.permute.xlu0 %2710
  %2712 = vrot.lane.b32.xlu0 %v1014, 64
  %v2713 = vpop.permute.xlu0 %2712
  %2714 = vrot.lane.b32.xlu0 %v1016, 64
  %v2715 = vpop.permute.xlu0 %2714
  %v2716 = vsel %vm1516, %v1010, 0
  %v2718 = vsel %vm1516, %v1012, 0
  %v2720 = vsel %vm1516, %v1014, 0
  %v2722 = vsel %vm1516, %v1016, 0
  %v2724 = vsel %vm1516, %v2709, 0
  %v2726 = vsel %vm1516, %v2711, 0
  %v2728 = vsel %vm1516, %v2713, 0
  %v2730 = vsel %vm1516, %v2715, 0
  %2732 = vmatprep.subr.mxu0 0.0
  %2733 = vmatpush1.xpose.msra.mxu0 0.0
  %2734 = vmatprep.subr.mxu0 0.0
  %2735 = vmatpush1.xpose.msra.mxu0 0.0
  %2736 = vmatprep.subr.mxu0 0.0
  %2737 = vmatpush1.xpose.msra.mxu0 0.0
  %2738 = vmatprep.subr.mxu0 0.0
  %2739 = vmatpush1.xpose.msra.mxu0 0.0
  %2740 = vmatprep.subr.mxu0 0.0
  %2741 = vmatpush1.xpose.msra.mxu0 0.0
  %2742 = vmatprep.subr.mxu0 0.0
  %2743 = vmatpush1.xpose.msra.mxu0 0.0
  %2744 = vmatprep.subr.mxu0 0.0
  %2745 = vmatpush1.xpose.msra.mxu0 0.0
  %2746 = vmatprep.subr.mxu0 0.0
  %2747 = vmatpush1.xpose.msra.mxu0 0.0
  %2748 = vmatprep.subr.mxu0 0.0
  %2749 = vmatpush1.xpose.msra.mxu0 0.0
  %2750 = vmatprep.subr.mxu0 0.0
  %2751 = vmatpush1.xpose.msra.mxu0 0.0
  %2752 = vmatprep.subr.mxu0 0.0
  %2753 = vmatpush1.xpose.msra.mxu0 0.0
  %2754 = vmatprep.subr.mxu0 0.0
  %2755 = vmatpush1.xpose.msra.mxu0 0.0
  %2756 = vmatprep.subr.mxu0 0.0
  %2757 = vmatpush1.xpose.msra.mxu0 %v2730
  %2758 = vmatprep.subr.mxu0 0.0
  %2759 = vmatpush1.xpose.msra.mxu0 %v2728
  %2760 = vmatprep.subr.mxu0 0.0
  %2761 = vmatpush1.xpose.msra.mxu0 %v2726
  %2762 = vmatprep.subr.mxu0 0.0
  %2763 = vmatpush1.xpose.msra.mxu0 %v2724
  %2764 = vmatprep.subr.mxu0 0.0
  %2765 = vmatpush2.xpose.msra.mxu0 0.0
  %2766 = vmatprep.subr.mxu0 0.0
  %2767 = vmatpush2.xpose.msra.mxu0 0.0
  %2768 = vmatprep.subr.mxu0 0.0
  %2769 = vmatpush2.xpose.msra.mxu0 0.0
  %2770 = vmatprep.subr.mxu0 0.0
  %2771 = vmatpush2.xpose.msra.mxu0 0.0
  %2772 = vmatprep.subr.mxu0 0.0
  %2773 = vmatpush2.xpose.msra.mxu0 0.0
  %2774 = vmatprep.subr.mxu0 0.0
  %2775 = vmatpush2.xpose.msra.mxu0 0.0
  %2776 = vmatprep.subr.mxu0 0.0
  %2777 = vmatpush2.xpose.msra.mxu0 0.0
  %2778 = vmatprep.subr.mxu0 0.0
  %2779 = vmatpush2.xpose.msra.mxu0 0.0
  %2780 = vmatprep.subr.mxu0 0.0
  %2781 = vmatpush2.xpose.msra.mxu0 0.0
  %2782 = vmatprep.subr.mxu0 0.0
  %2783 = vmatpush2.xpose.msra.mxu0 0.0
  %2784 = vmatprep.subr.mxu0 0.0
  %2785 = vmatpush2.xpose.msra.mxu0 0.0
  %2786 = vmatprep.subr.mxu0 0.0
  %2787 = vmatpush2.xpose.msra.mxu0 0.0
  %2788 = vmatprep.subr.mxu0 0.0
  %2789 = vmatpush2.xpose.msra.mxu0 0.0
  %2790 = vmatprep.subr.mxu0 0.0
  %2791 = vmatpush2.xpose.msra.mxu0 0.0
  %2792 = vmatprep.subr.mxu0 0.0
  %2793 = vmatpush2.xpose.msra.mxu0 0.0
  %2794 = vmatprep.subr.mxu0 0.0
  %2795 = vmatpush2.xpose.msra.mxu0 0.0
  %2796 = vmatprep.mubr.f32.mxu0 0.0
  %2797 = vmatmul.mubr.f32.gmra.mxu0 %v2716
  %v2798 = vpop.f32.mrf.mxu0
  %v2799 = vadd.f32 0.0, %v2798
  %v2800 = vpop.f32.mrf.mxu0
  %2801 = vmatprep.mubr.f32.mxu0 0.0
  %2802 = vmatmul.mubr.f32.gmra.mxu0 %v2718
  %v2803 = vpop.f32.mrf.mxu0
  %v2804 = vadd.f32 0.0, %v2803
  %v2805 = vpop.f32.mrf.mxu0
  %2806 = vmatprep.mubr.f32.mxu0 0.0
  %2807 = vmatmul.mubr.f32.gmra.mxu0 %v2720
  %v2808 = vpop.f32.mrf.mxu0
  %v2809 = vadd.f32 0.0, %v2808
  %v2810 = vpop.f32.mrf.mxu0
  %2811 = vmatprep.mubr.f32.mxu0 0.0
  %2812 = vmatmul.mubr.f32.gmra.mxu0 %v2722
  %v2813 = vpop.f32.mrf.mxu0
  %v2814 = vadd.f32 0.0, %v2813
  %v2815 = vpop.f32.mrf.mxu0
  %2816 = vdwg.mxu0
  %2817 = vrot.lane.b32.xlu0 %v1018, 64
  %v2818 = vpop.permute.xlu0 %2817
  %2819 = vrot.lane.b32.xlu0 %v1020, 64
  %v2820 = vpop.permute.xlu0 %2819
  %2821 = vrot.lane.b32.xlu0 %v1022, 64
  %v2822 = vpop.permute.xlu0 %2821
  %2823 = vrot.lane.b32.xlu0 %v1024, 64
  %v2824 = vpop.permute.xlu0 %2823
  %v2825 = vsel %vm1516, %v1018, 0
  %v2827 = vsel %vm1516, %v1020, 0
  %v2829 = vsel %vm1516, %v1022, 0
  %v2831 = vsel %vm1516, %v1024, 0
  %v2833 = vsel %vm1516, %v2818, 0
  %v2835 = vsel %vm1516, %v2820, 0
  %v2837 = vsel %vm1516, %v2822, 0
  %v2839 = vsel %vm1516, %v2824, 0
  %2841 = vmatprep.subr.mxu0 0.0
  %2842 = vmatpush1.xpose.msra.mxu0 0.0
  %2843 = vmatprep.subr.mxu0 0.0
  %2844 = vmatpush1.xpose.msra.mxu0 0.0
  %2845 = vmatprep.subr.mxu0 0.0
  %2846 = vmatpush1.xpose.msra.mxu0 0.0
  %2847 = vmatprep.subr.mxu0 0.0
  %2848 = vmatpush1.xpose.msra.mxu0 0.0
  %2849 = vmatprep.subr.mxu0 0.0
  %2850 = vmatpush1.xpose.msra.mxu0 0.0
  %2851 = vmatprep.subr.mxu0 0.0
  %2852 = vmatpush1.xpose.msra.mxu0 0.0
  %2853 = vmatprep.subr.mxu0 0.0
  %2854 = vmatpush1.xpose.msra.mxu0 0.0
  %2855 = vmatprep.subr.mxu0 0.0
  %2856 = vmatpush1.xpose.msra.mxu0 0.0
  %2857 = vmatprep.subr.mxu0 0.0
  %2858 = vmatpush1.xpose.msra.mxu0 0.0
  %2859 = vmatprep.subr.mxu0 0.0
  %2860 = vmatpush1.xpose.msra.mxu0 0.0
  %2861 = vmatprep.subr.mxu0 0.0
  %2862 = vmatpush1.xpose.msra.mxu0 0.0
  %2863 = vmatprep.subr.mxu0 0.0
  %2864 = vmatpush1.xpose.msra.mxu0 0.0
  %2865 = vmatprep.subr.mxu0 0.0
  %2866 = vmatpush1.xpose.msra.mxu0 %v2839
  %2867 = vmatprep.subr.mxu0 0.0
  %2868 = vmatpush1.xpose.msra.mxu0 %v2837
  %2869 = vmatprep.subr.mxu0 0.0
  %2870 = vmatpush1.xpose.msra.mxu0 %v2835
  %2871 = vmatprep.subr.mxu0 0.0
  %2872 = vmatpush1.xpose.msra.mxu0 %v2833
  %2873 = vmatprep.subr.mxu0 0.0
  %2874 = vmatpush2.xpose.msra.mxu0 0.0
  %2875 = vmatprep.subr.mxu0 0.0
  %2876 = vmatpush2.xpose.msra.mxu0 0.0
  %2877 = vmatprep.subr.mxu0 0.0
  %2878 = vmatpush2.xpose.msra.mxu0 0.0
  %2879 = vmatprep.subr.mxu0 0.0
  %2880 = vmatpush2.xpose.msra.mxu0 0.0
  %2881 = vmatprep.subr.mxu0 0.0
  %2882 = vmatpush2.xpose.msra.mxu0 0.0
  %2883 = vmatprep.subr.mxu0 0.0
  %2884 = vmatpush2.xpose.msra.mxu0 0.0
  %2885 = vmatprep.subr.mxu0 0.0
  %2886 = vmatpush2.xpose.msra.mxu0 0.0
  %2887 = vmatprep.subr.mxu0 0.0
  %2888 = vmatpush2.xpose.msra.mxu0 0.0
  %2889 = vmatprep.subr.mxu0 0.0
  %2890 = vmatpush2.xpose.msra.mxu0 0.0
  %2891 = vmatprep.subr.mxu0 0.0
  %2892 = vmatpush2.xpose.msra.mxu0 0.0
  %2893 = vmatprep.subr.mxu0 0.0
  %2894 = vmatpush2.xpose.msra.mxu0 0.0
  %2895 = vmatprep.subr.mxu0 0.0
  %2896 = vmatpush2.xpose.msra.mxu0 0.0
  %2897 = vmatprep.subr.mxu0 0.0
  %2898 = vmatpush2.xpose.msra.mxu0 0.0
  %2899 = vmatprep.subr.mxu0 0.0
  %2900 = vmatpush2.xpose.msra.mxu0 0.0
  %2901 = vmatprep.subr.mxu0 0.0
  %2902 = vmatpush2.xpose.msra.mxu0 0.0
  %2903 = vmatprep.subr.mxu0 0.0
  %2904 = vmatpush2.xpose.msra.mxu0 0.0
  %2905 = vmatprep.mubr.f32.mxu0 0.0
  %2906 = vmatmul.mubr.f32.gmra.mxu0 %v2825
  %v2907 = vpop.f32.mrf.mxu0
  %v2908 = vadd.f32 0.0, %v2907
  %v2909 = vpop.f32.mrf.mxu0
  %2910 = vmatprep.mubr.f32.mxu0 0.0
  %2911 = vmatmul.mubr.f32.gmra.mxu0 %v2827
  %v2912 = vpop.f32.mrf.mxu0
  %v2913 = vadd.f32 0.0, %v2912
  %v2914 = vpop.f32.mrf.mxu0
  %2915 = vmatprep.mubr.f32.mxu0 0.0
  %2916 = vmatmul.mubr.f32.gmra.mxu0 %v2829
  %v2917 = vpop.f32.mrf.mxu0
  %v2918 = vadd.f32 0.0, %v2917
  %v2919 = vpop.f32.mrf.mxu0
  %2920 = vmatprep.mubr.f32.mxu0 0.0
  %2921 = vmatmul.mubr.f32.gmra.mxu0 %v2831
  %v2922 = vpop.f32.mrf.mxu0
  %v2923 = vadd.f32 0.0, %v2922
  %v2924 = vpop.f32.mrf.mxu0
  %2925 = vdwg.mxu0
  %2926 = vrot.lane.b32.xlu0 %v1026, 64
  %v2927 = vpop.permute.xlu0 %2926
  %2928 = vrot.lane.b32.xlu0 %v1028, 64
  %v2929 = vpop.permute.xlu0 %2928
  %2930 = vrot.lane.b32.xlu0 %v1030, 64
  %v2931 = vpop.permute.xlu0 %2930
  %2932 = vrot.lane.b32.xlu0 %v1032, 64
  %v2933 = vpop.permute.xlu0 %2932
  %v2934 = vsel %vm1516, %v1026, 0
  %v2936 = vsel %vm1516, %v1028, 0
  %v2938 = vsel %vm1516, %v1030, 0
  %v2940 = vsel %vm1516, %v1032, 0
  %v2942 = vsel %vm1516, %v2927, 0
  %v2944 = vsel %vm1516, %v2929, 0
  %v2946 = vsel %vm1516, %v2931, 0
  %v2948 = vsel %vm1516, %v2933, 0
  %2950 = vmatprep.subr.mxu0 0.0
  %2951 = vmatpush1.xpose.msra.mxu0 0.0
  %2952 = vmatprep.subr.mxu0 0.0
  %2953 = vmatpush1.xpose.msra.mxu0 0.0
  %2954 = vmatprep.subr.mxu0 0.0
  %2955 = vmatpush1.xpose.msra.mxu0 0.0
  %2956 = vmatprep.subr.mxu0 0.0
  %2957 = vmatpush1.xpose.msra.mxu0 0.0
  %2958 = vmatprep.subr.mxu0 0.0
  %2959 = vmatpush1.xpose.msra.mxu0 0.0
  %2960 = vmatprep.subr.mxu0 0.0
  %2961 = vmatpush1.xpose.msra.mxu0 0.0
  %2962 = vmatprep.subr.mxu0 0.0
  %2963 = vmatpush1.xpose.msra.mxu0 0.0
  %2964 = vmatprep.subr.mxu0 0.0
  %2965 = vmatpush1.xpose.msra.mxu0 0.0
  %2966 = vmatprep.subr.mxu0 0.0
  %2967 = vmatpush1.xpose.msra.mxu0 0.0
  %2968 = vmatprep.subr.mxu0 0.0
  %2969 = vmatpush1.xpose.msra.mxu0 0.0
  %2970 = vmatprep.subr.mxu0 0.0
  %2971 = vmatpush1.xpose.msra.mxu0 0.0
  %2972 = vmatprep.subr.mxu0 0.0
  %2973 = vmatpush1.xpose.msra.mxu0 0.0
  %2974 = vmatprep.subr.mxu0 0.0
  %2975 = vmatpush1.xpose.msra.mxu0 %v2948
  %2976 = vmatprep.subr.mxu0 0.0
  %2977 = vmatpush1.xpose.msra.mxu0 %v2946
  %2978 = vmatprep.subr.mxu0 0.0
  %2979 = vmatpush1.xpose.msra.mxu0 %v2944
  %2980 = vmatprep.subr.mxu0 0.0
  %2981 = vmatpush1.xpose.msra.mxu0 %v2942
  %2982 = vmatprep.subr.mxu0 0.0
  %2983 = vmatpush2.xpose.msra.mxu0 0.0
  %2984 = vmatprep.subr.mxu0 0.0
  %2985 = vmatpush2.xpose.msra.mxu0 0.0
  %2986 = vmatprep.subr.mxu0 0.0
  %2987 = vmatpush2.xpose.msra.mxu0 0.0
  %2988 = vmatprep.subr.mxu0 0.0
  %2989 = vmatpush2.xpose.msra.mxu0 0.0
  %2990 = vmatprep.subr.mxu0 0.0
  %2991 = vmatpush2.xpose.msra.mxu0 0.0
  %2992 = vmatprep.subr.mxu0 0.0
  %2993 = vmatpush2.xpose.msra.mxu0 0.0
  %2994 = vmatprep.subr.mxu0 0.0
  %2995 = vmatpush2.xpose.msra.mxu0 0.0
  %2996 = vmatprep.subr.mxu0 0.0
  %2997 = vmatpush2.xpose.msra.mxu0 0.0
  %2998 = vmatprep.subr.mxu0 0.0
  %2999 = vmatpush2.xpose.msra.mxu0 0.0
  %3000 = vmatprep.subr.mxu0 0.0
  %3001 = vmatpush2.xpose.msra.mxu0 0.0
  %3002 = vmatprep.subr.mxu0 0.0
  %3003 = vmatpush2.xpose.msra.mxu0 0.0
  %3004 = vmatprep.subr.mxu0 0.0
  %3005 = vmatpush2.xpose.msra.mxu0 0.0
  %3006 = vmatprep.subr.mxu0 0.0
  %3007 = vmatpush2.xpose.msra.mxu0 0.0
  %3008 = vmatprep.subr.mxu0 0.0
  %3009 = vmatpush2.xpose.msra.mxu0 0.0
  %3010 = vmatprep.subr.mxu0 0.0
  %3011 = vmatpush2.xpose.msra.mxu0 0.0
  %3012 = vmatprep.subr.mxu0 0.0
  %3013 = vmatpush2.xpose.msra.mxu0 0.0
  %3014 = vmatprep.mubr.f32.mxu0 0.0
  %3015 = vmatmul.mubr.f32.gmra.mxu0 %v2934
  %v3016 = vpop.f32.mrf.mxu0
  %v3017 = vadd.f32 0.0, %v3016
  %v3018 = vpop.f32.mrf.mxu0
  %3019 = vmatprep.mubr.f32.mxu0 0.0
  %3020 = vmatmul.mubr.f32.gmra.mxu0 %v2936
  %v3021 = vpop.f32.mrf.mxu0
  %v3022 = vadd.f32 0.0, %v3021
  %v3023 = vpop.f32.mrf.mxu0
  %3024 = vmatprep.mubr.f32.mxu0 0.0
  %3025 = vmatmul.mubr.f32.gmra.mxu0 %v2938
  %v3026 = vpop.f32.mrf.mxu0
  %v3027 = vadd.f32 0.0, %v3026
  %v3028 = vpop.f32.mrf.mxu0
  %3029 = vmatprep.mubr.f32.mxu0 0.0
  %3030 = vmatmul.mubr.f32.gmra.mxu0 %v2940
  %v3031 = vpop.f32.mrf.mxu0
  %v3032 = vadd.f32 0.0, %v3031
  %v3033 = vpop.f32.mrf.mxu0
  %3034 = vdwg.mxu0
  %3035 = vrot.lane.b32.xlu0 %v1034, 64
  %v3036 = vpop.permute.xlu0 %3035
  %3037 = vrot.lane.b32.xlu0 %v1036, 64
  %v3038 = vpop.permute.xlu0 %3037
  %3039 = vrot.lane.b32.xlu0 %v1038, 64
  %v3040 = vpop.permute.xlu0 %3039
  %3041 = vrot.lane.b32.xlu0 %v1040, 64
  %v3042 = vpop.permute.xlu0 %3041
  %v3043 = vsel %vm1516, %v1034, 0
  %v3045 = vsel %vm1516, %v1036, 0
  %v3047 = vsel %vm1516, %v1038, 0
  %v3049 = vsel %vm1516, %v1040, 0
  %v3051 = vsel %vm1516, %v3036, 0
  %v3053 = vsel %vm1516, %v3038, 0
  %v3055 = vsel %vm1516, %v3040, 0
  %v3057 = vsel %vm1516, %v3042, 0
  %3059 = vmatprep.subr.mxu0 0.0
  %3060 = vmatpush1.xpose.msra.mxu0 0.0
  %3061 = vmatprep.subr.mxu0 0.0
  %3062 = vmatpush1.xpose.msra.mxu0 0.0
  %3063 = vmatprep.subr.mxu0 0.0
  %3064 = vmatpush1.xpose.msra.mxu0 0.0
  %3065 = vmatprep.subr.mxu0 0.0
  %3066 = vmatpush1.xpose.msra.mxu0 0.0
  %3067 = vmatprep.subr.mxu0 0.0
  %3068 = vmatpush1.xpose.msra.mxu0 0.0
  %3069 = vmatprep.subr.mxu0 0.0
  %3070 = vmatpush1.xpose.msra.mxu0 0.0
  %3071 = vmatprep.subr.mxu0 0.0
  %3072 = vmatpush1.xpose.msra.mxu0 0.0
  %3073 = vmatprep.subr.mxu0 0.0
  %3074 = vmatpush1.xpose.msra.mxu0 0.0
  %3075 = vmatprep.subr.mxu0 0.0
  %3076 = vmatpush1.xpose.msra.mxu0 0.0
  %3077 = vmatprep.subr.mxu0 0.0
  %3078 = vmatpush1.xpose.msra.mxu0 0.0
  %3079 = vmatprep.subr.mxu0 0.0
  %3080 = vmatpush1.xpose.msra.mxu0 0.0
  %3081 = vmatprep.subr.mxu0 0.0
  %3082 = vmatpush1.xpose.msra.mxu0 0.0
  %3083 = vmatprep.subr.mxu0 0.0
  %3084 = vmatpush1.xpose.msra.mxu0 %v3057
  %3085 = vmatprep.subr.mxu0 0.0
  %3086 = vmatpush1.xpose.msra.mxu0 %v3055
  %3087 = vmatprep.subr.mxu0 0.0
  %3088 = vmatpush1.xpose.msra.mxu0 %v3053
  %3089 = vmatprep.subr.mxu0 0.0
  %3090 = vmatpush1.xpose.msra.mxu0 %v3051
  %3091 = vmatprep.subr.mxu0 0.0
  %3092 = vmatpush2.xpose.msra.mxu0 0.0
  %3093 = vmatprep.subr.mxu0 0.0
  %3094 = vmatpush2.xpose.msra.mxu0 0.0
  %3095 = vmatprep.subr.mxu0 0.0
  %3096 = vmatpush2.xpose.msra.mxu0 0.0
  %3097 = vmatprep.subr.mxu0 0.0
  %3098 = vmatpush2.xpose.msra.mxu0 0.0
  %3099 = vmatprep.subr.mxu0 0.0
  %3100 = vmatpush2.xpose.msra.mxu0 0.0
  %3101 = vmatprep.subr.mxu0 0.0
  %3102 = vmatpush2.xpose.msra.mxu0 0.0
  %3103 = vmatprep.subr.mxu0 0.0
  %3104 = vmatpush2.xpose.msra.mxu0 0.0
  %3105 = vmatprep.subr.mxu0 0.0
  %3106 = vmatpush2.xpose.msra.mxu0 0.0
  %3107 = vmatprep.subr.mxu0 0.0
  %3108 = vmatpush2.xpose.msra.mxu0 0.0
  %3109 = vmatprep.subr.mxu0 0.0
  %3110 = vmatpush2.xpose.msra.mxu0 0.0
  %3111 = vmatprep.subr.mxu0 0.0
  %3112 = vmatpush2.xpose.msra.mxu0 0.0
  %3113 = vmatprep.subr.mxu0 0.0
  %3114 = vmatpush2.xpose.msra.mxu0 0.0
  %3115 = vmatprep.subr.mxu0 0.0
  %3116 = vmatpush2.xpose.msra.mxu0 0.0
  %3117 = vmatprep.subr.mxu0 0.0
  %3118 = vmatpush2.xpose.msra.mxu0 0.0
  %3119 = vmatprep.subr.mxu0 0.0
  %3120 = vmatpush2.xpose.msra.mxu0 0.0
  %3121 = vmatprep.subr.mxu0 0.0
  %3122 = vmatpush2.xpose.msra.mxu0 0.0
  %3123 = vmatprep.mubr.f32.mxu0 0.0
  %3124 = vmatmul.mubr.f32.gmra.mxu0 %v3043
  %v3125 = vpop.f32.mrf.mxu0
  %v3126 = vadd.f32 0.0, %v3125
  %v3127 = vpop.f32.mrf.mxu0
  %3128 = vmatprep.mubr.f32.mxu0 0.0
  %3129 = vmatmul.mubr.f32.gmra.mxu0 %v3045
  %v3130 = vpop.f32.mrf.mxu0
  %v3131 = vadd.f32 0.0, %v3130
  %v3132 = vpop.f32.mrf.mxu0
  %3133 = vmatprep.mubr.f32.mxu0 0.0
  %3134 = vmatmul.mubr.f32.gmra.mxu0 %v3047
  %v3135 = vpop.f32.mrf.mxu0
  %v3136 = vadd.f32 0.0, %v3135
  %v3137 = vpop.f32.mrf.mxu0
  %3138 = vmatprep.mubr.f32.mxu0 0.0
  %3139 = vmatmul.mubr.f32.gmra.mxu0 %v3049
  %v3140 = vpop.f32.mrf.mxu0
  %v3141 = vadd.f32 0.0, %v3140
  %v3142 = vpop.f32.mrf.mxu0
  %3143 = vdwg.mxu0
  %3144 = vrot.lane.b32.xlu0 %v1042, 64
  %v3145 = vpop.permute.xlu0 %3144
  %3146 = vrot.lane.b32.xlu0 %v1044, 64
  %v3147 = vpop.permute.xlu0 %3146
  %3148 = vrot.lane.b32.xlu0 %v1046, 64
  %v3149 = vpop.permute.xlu0 %3148
  %3150 = vrot.lane.b32.xlu0 %v1048, 64
  %v3151 = vpop.permute.xlu0 %3150
  %v3152 = vsel %vm1516, %v1042, 0
  %v3154 = vsel %vm1516, %v1044, 0
  %v3156 = vsel %vm1516, %v1046, 0
  %v3158 = vsel %vm1516, %v1048, 0
  %v3160 = vsel %vm1516, %v3145, 0
  %v3162 = vsel %vm1516, %v3147, 0
  %v3164 = vsel %vm1516, %v3149, 0
  %v3166 = vsel %vm1516, %v3151, 0
  %3168 = vmatprep.subr.mxu0 0.0
  %3169 = vmatpush1.xpose.msra.mxu0 0.0
  %3170 = vmatprep.subr.mxu0 0.0
  %3171 = vmatpush1.xpose.msra.mxu0 0.0
  %3172 = vmatprep.subr.mxu0 0.0
  %3173 = vmatpush1.xpose.msra.mxu0 0.0
  %3174 = vmatprep.subr.mxu0 0.0
  %3175 = vmatpush1.xpose.msra.mxu0 0.0
  %3176 = vmatprep.subr.mxu0 0.0
  %3177 = vmatpush1.xpose.msra.mxu0 0.0
  %3178 = vmatprep.subr.mxu0 0.0
  %3179 = vmatpush1.xpose.msra.mxu0 0.0
  %3180 = vmatprep.subr.mxu0 0.0
  %3181 = vmatpush1.xpose.msra.mxu0 0.0
  %3182 = vmatprep.subr.mxu0 0.0
  %3183 = vmatpush1.xpose.msra.mxu0 0.0
  %3184 = vmatprep.subr.mxu0 0.0
  %3185 = vmatpush1.xpose.msra.mxu0 0.0
  %3186 = vmatprep.subr.mxu0 0.0
  %3187 = vmatpush1.xpose.msra.mxu0 0.0
  %3188 = vmatprep.subr.mxu0 0.0
  %3189 = vmatpush1.xpose.msra.mxu0 0.0
  %3190 = vmatprep.subr.mxu0 0.0
  %3191 = vmatpush1.xpose.msra.mxu0 0.0
  %3192 = vmatprep.subr.mxu0 0.0
  %3193 = vmatpush1.xpose.msra.mxu0 %v3166
  %3194 = vmatprep.subr.mxu0 0.0
  %3195 = vmatpush1.xpose.msra.mxu0 %v3164
  %3196 = vmatprep.subr.mxu0 0.0
  %3197 = vmatpush1.xpose.msra.mxu0 %v3162
  %3198 = vmatprep.subr.mxu0 0.0
  %3199 = vmatpush1.xpose.msra.mxu0 %v3160
  %3200 = vmatprep.subr.mxu0 0.0
  %3201 = vmatpush2.xpose.msra.mxu0 0.0
  %3202 = vmatprep.subr.mxu0 0.0
  %3203 = vmatpush2.xpose.msra.mxu0 0.0
  %3204 = vmatprep.subr.mxu0 0.0
  %3205 = vmatpush2.xpose.msra.mxu0 0.0
  %3206 = vmatprep.subr.mxu0 0.0
  %3207 = vmatpush2.xpose.msra.mxu0 0.0
  %3208 = vmatprep.subr.mxu0 0.0
  %3209 = vmatpush2.xpose.msra.mxu0 0.0
  %3210 = vmatprep.subr.mxu0 0.0
  %3211 = vmatpush2.xpose.msra.mxu0 0.0
  %3212 = vmatprep.subr.mxu0 0.0
  %3213 = vmatpush2.xpose.msra.mxu0 0.0
  %3214 = vmatprep.subr.mxu0 0.0
  %3215 = vmatpush2.xpose.msra.mxu0 0.0
  %3216 = vmatprep.subr.mxu0 0.0
  %3217 = vmatpush2.xpose.msra.mxu0 0.0
  %3218 = vmatprep.subr.mxu0 0.0
  %3219 = vmatpush2.xpose.msra.mxu0 0.0
  %3220 = vmatprep.subr.mxu0 0.0
  %3221 = vmatpush2.xpose.msra.mxu0 0.0
  %3222 = vmatprep.subr.mxu0 0.0
  %3223 = vmatpush2.xpose.msra.mxu0 0.0
  %3224 = vmatprep.subr.mxu0 0.0
  %3225 = vmatpush2.xpose.msra.mxu0 0.0
  %3226 = vmatprep.subr.mxu0 0.0
  %3227 = vmatpush2.xpose.msra.mxu0 0.0
  %3228 = vmatprep.subr.mxu0 0.0
  %3229 = vmatpush2.xpose.msra.mxu0 0.0
  %3230 = vmatprep.subr.mxu0 0.0
  %3231 = vmatpush2.xpose.msra.mxu0 0.0
  %3232 = vmatprep.mubr.f32.mxu0 0.0
  %3233 = vmatmul.mubr.f32.gmra.mxu0 %v3152
  %v3234 = vpop.f32.mrf.mxu0
  %v3235 = vadd.f32 0.0, %v3234
  %v3236 = vpop.f32.mrf.mxu0
  %3237 = vmatprep.mubr.f32.mxu0 0.0
  %3238 = vmatmul.mubr.f32.gmra.mxu0 %v3154
  %v3239 = vpop.f32.mrf.mxu0
  %v3240 = vadd.f32 0.0, %v3239
  %v3241 = vpop.f32.mrf.mxu0
  %3242 = vmatprep.mubr.f32.mxu0 0.0
  %3243 = vmatmul.mubr.f32.gmra.mxu0 %v3156
  %v3244 = vpop.f32.mrf.mxu0
  %v3245 = vadd.f32 0.0, %v3244
  %v3246 = vpop.f32.mrf.mxu0
  %3247 = vmatprep.mubr.f32.mxu0 0.0
  %3248 = vmatmul.mubr.f32.gmra.mxu0 %v3158
  %v3249 = vpop.f32.mrf.mxu0
  %v3250 = vadd.f32 0.0, %v3249
  %v3251 = vpop.f32.mrf.mxu0
  %3252 = vdwg.mxu0
  %3253 = vrot.lane.b32.xlu0 %v1050, 64
  %v3254 = vpop.permute.xlu0 %3253
  %3255 = vrot.lane.b32.xlu0 %v1052, 64
  %v3256 = vpop.permute.xlu0 %3255
  %3257 = vrot.lane.b32.xlu0 %v1054, 64
  %v3258 = vpop.permute.xlu0 %3257
  %3259 = vrot.lane.b32.xlu0 %v1056, 64
  %v3260 = vpop.permute.xlu0 %3259
  %v3261 = vsel %vm1516, %v1050, 0
  %v3263 = vsel %vm1516, %v1052, 0
  %v3265 = vsel %vm1516, %v1054, 0
  %v3267 = vsel %vm1516, %v1056, 0
  %v3269 = vsel %vm1516, %v3254, 0
  %v3271 = vsel %vm1516, %v3256, 0
  %v3273 = vsel %vm1516, %v3258, 0
  %v3275 = vsel %vm1516, %v3260, 0
  %3277 = vmatprep.subr.mxu0 0.0
  %3278 = vmatpush1.xpose.msra.mxu0 0.0
  %3279 = vmatprep.subr.mxu0 0.0
  %3280 = vmatpush1.xpose.msra.mxu0 0.0
  %3281 = vmatprep.subr.mxu0 0.0
  %3282 = vmatpush1.xpose.msra.mxu0 0.0
  %3283 = vmatprep.subr.mxu0 0.0
  %3284 = vmatpush1.xpose.msra.mxu0 0.0
  %3285 = vmatprep.subr.mxu0 0.0
  %3286 = vmatpush1.xpose.msra.mxu0 0.0
  %3287 = vmatprep.subr.mxu0 0.0
  %3288 = vmatpush1.xpose.msra.mxu0 0.0
  %3289 = vmatprep.subr.mxu0 0.0
  %3290 = vmatpush1.xpose.msra.mxu0 0.0
  %3291 = vmatprep.subr.mxu0 0.0
  %3292 = vmatpush1.xpose.msra.mxu0 0.0
  %3293 = vmatprep.subr.mxu0 0.0
  %3294 = vmatpush1.xpose.msra.mxu0 0.0
  %3295 = vmatprep.subr.mxu0 0.0
  %3296 = vmatpush1.xpose.msra.mxu0 0.0
  %3297 = vmatprep.subr.mxu0 0.0
  %3298 = vmatpush1.xpose.msra.mxu0 0.0
  %3299 = vmatprep.subr.mxu0 0.0
  %3300 = vmatpush1.xpose.msra.mxu0 0.0
  %3301 = vmatprep.subr.mxu0 0.0
  %3302 = vmatpush1.xpose.msra.mxu0 %v3275
  %3303 = vmatprep.subr.mxu0 0.0
  %3304 = vmatpush1.xpose.msra.mxu0 %v3273
  %3305 = vmatprep.subr.mxu0 0.0
  %3306 = vmatpush1.xpose.msra.mxu0 %v3271
  %3307 = vmatprep.subr.mxu0 0.0
  %3308 = vmatpush1.xpose.msra.mxu0 %v3269
  %3309 = vmatprep.subr.mxu0 0.0
  %3310 = vmatpush2.xpose.msra.mxu0 0.0
  %3311 = vmatprep.subr.mxu0 0.0
  %3312 = vmatpush2.xpose.msra.mxu0 0.0
  %3313 = vmatprep.subr.mxu0 0.0
  %3314 = vmatpush2.xpose.msra.mxu0 0.0
  %3315 = vmatprep.subr.mxu0 0.0
  %3316 = vmatpush2.xpose.msra.mxu0 0.0
  %3317 = vmatprep.subr.mxu0 0.0
  %3318 = vmatpush2.xpose.msra.mxu0 0.0
  %3319 = vmatprep.subr.mxu0 0.0
  %3320 = vmatpush2.xpose.msra.mxu0 0.0
  %3321 = vmatprep.subr.mxu0 0.0
  %3322 = vmatpush2.xpose.msra.mxu0 0.0
  %3323 = vmatprep.subr.mxu0 0.0
  %3324 = vmatpush2.xpose.msra.mxu0 0.0
  %3325 = vmatprep.subr.mxu0 0.0
  %3326 = vmatpush2.xpose.msra.mxu0 0.0
  %3327 = vmatprep.subr.mxu0 0.0
  %3328 = vmatpush2.xpose.msra.mxu0 0.0
  %3329 = vmatprep.subr.mxu0 0.0
  %3330 = vmatpush2.xpose.msra.mxu0 0.0
  %3331 = vmatprep.subr.mxu0 0.0
  %3332 = vmatpush2.xpose.msra.mxu0 0.0
  %3333 = vmatprep.subr.mxu0 0.0
  %3334 = vmatpush2.xpose.msra.mxu0 0.0
  %3335 = vmatprep.subr.mxu0 0.0
  %3336 = vmatpush2.xpose.msra.mxu0 0.0
  %3337 = vmatprep.subr.mxu0 0.0
  %3338 = vmatpush2.xpose.msra.mxu0 0.0
  %3339 = vmatprep.subr.mxu0 0.0
  %3340 = vmatpush2.xpose.msra.mxu0 0.0
  %3341 = vmatprep.mubr.f32.mxu0 0.0
  %3342 = vmatmul.mubr.f32.gmra.mxu0 %v3261
  %v3343 = vpop.f32.mrf.mxu0
  %v3344 = vadd.f32 0.0, %v3343
  %v3345 = vpop.f32.mrf.mxu0
  %3346 = vmatprep.mubr.f32.mxu0 0.0
  %3347 = vmatmul.mubr.f32.gmra.mxu0 %v3263
  %v3348 = vpop.f32.mrf.mxu0
  %v3349 = vadd.f32 0.0, %v3348
  %v3350 = vpop.f32.mrf.mxu0
  %3351 = vmatprep.mubr.f32.mxu0 0.0
  %3352 = vmatmul.mubr.f32.gmra.mxu0 %v3265
  %v3353 = vpop.f32.mrf.mxu0
  %v3354 = vadd.f32 0.0, %v3353
  %v3355 = vpop.f32.mrf.mxu0
  %3356 = vmatprep.mubr.f32.mxu0 0.0
  %3357 = vmatmul.mubr.f32.gmra.mxu0 %v3267
  %v3358 = vpop.f32.mrf.mxu0
  %v3359 = vadd.f32 0.0, %v3358
  %v3360 = vpop.f32.mrf.mxu0
  %3361 = vdwg.mxu0
  %3362 = vrot.lane.b32.xlu0 %v1058, 64
  %v3363 = vpop.permute.xlu0 %3362
  %3364 = vrot.lane.b32.xlu0 %v1060, 64
  %v3365 = vpop.permute.xlu0 %3364
  %3366 = vrot.lane.b32.xlu0 %v1062, 64
  %v3367 = vpop.permute.xlu0 %3366
  %3368 = vrot.lane.b32.xlu0 %v1064, 64
  %v3369 = vpop.permute.xlu0 %3368
  %v3370 = vsel %vm1516, %v1058, 0
  %v3372 = vsel %vm1516, %v1060, 0
  %v3374 = vsel %vm1516, %v1062, 0
  %v3376 = vsel %vm1516, %v1064, 0
  %v3378 = vsel %vm1516, %v3363, 0
  %v3380 = vsel %vm1516, %v3365, 0
  %v3382 = vsel %vm1516, %v3367, 0
  %v3384 = vsel %vm1516, %v3369, 0
  %3386 = vmatprep.subr.mxu0 0.0
  %3387 = vmatpush1.xpose.msra.mxu0 0.0
  %3388 = vmatprep.subr.mxu0 0.0
  %3389 = vmatpush1.xpose.msra.mxu0 0.0
  %3390 = vmatprep.subr.mxu0 0.0
  %3391 = vmatpush1.xpose.msra.mxu0 0.0
  %3392 = vmatprep.subr.mxu0 0.0
  %3393 = vmatpush1.xpose.msra.mxu0 0.0
  %3394 = vmatprep.subr.mxu0 0.0
  %3395 = vmatpush1.xpose.msra.mxu0 0.0
  %3396 = vmatprep.subr.mxu0 0.0
  %3397 = vmatpush1.xpose.msra.mxu0 0.0
  %3398 = vmatprep.subr.mxu0 0.0
  %3399 = vmatpush1.xpose.msra.mxu0 0.0
  %3400 = vmatprep.subr.mxu0 0.0
  %3401 = vmatpush1.xpose.msra.mxu0 0.0
  %3402 = vmatprep.subr.mxu0 0.0
  %3403 = vmatpush1.xpose.msra.mxu0 0.0
  %3404 = vmatprep.subr.mxu0 0.0
  %3405 = vmatpush1.xpose.msra.mxu0 0.0
  %3406 = vmatprep.subr.mxu0 0.0
  %3407 = vmatpush1.xpose.msra.mxu0 0.0
  %3408 = vmatprep.subr.mxu0 0.0
  %3409 = vmatpush1.xpose.msra.mxu0 0.0
  %3410 = vmatprep.subr.mxu0 0.0
  %3411 = vmatpush1.xpose.msra.mxu0 %v3384
  %3412 = vmatprep.subr.mxu0 0.0
  %3413 = vmatpush1.xpose.msra.mxu0 %v3382
  %3414 = vmatprep.subr.mxu0 0.0
  %3415 = vmatpush1.xpose.msra.mxu0 %v3380
  %3416 = vmatprep.subr.mxu0 0.0
  %3417 = vmatpush1.xpose.msra.mxu0 %v3378
  %3418 = vmatprep.subr.mxu0 0.0
  %3419 = vmatpush2.xpose.msra.mxu0 0.0
  %3420 = vmatprep.subr.mxu0 0.0
  %3421 = vmatpush2.xpose.msra.mxu0 0.0
  %3422 = vmatprep.subr.mxu0 0.0
  %3423 = vmatpush2.xpose.msra.mxu0 0.0
  %3424 = vmatprep.subr.mxu0 0.0
  %3425 = vmatpush2.xpose.msra.mxu0 0.0
  %3426 = vmatprep.subr.mxu0 0.0
  %3427 = vmatpush2.xpose.msra.mxu0 0.0
  %3428 = vmatprep.subr.mxu0 0.0
  %3429 = vmatpush2.xpose.msra.mxu0 0.0
  %3430 = vmatprep.subr.mxu0 0.0
  %3431 = vmatpush2.xpose.msra.mxu0 0.0
  %3432 = vmatprep.subr.mxu0 0.0
  %3433 = vmatpush2.xpose.msra.mxu0 0.0
  %3434 = vmatprep.subr.mxu0 0.0
  %3435 = vmatpush2.xpose.msra.mxu0 0.0
  %3436 = vmatprep.subr.mxu0 0.0
  %3437 = vmatpush2.xpose.msra.mxu0 0.0
  %3438 = vmatprep.subr.mxu0 0.0
  %3439 = vmatpush2.xpose.msra.mxu0 0.0
  %3440 = vmatprep.subr.mxu0 0.0
  %3441 = vmatpush2.xpose.msra.mxu0 0.0
  %3442 = vmatprep.subr.mxu0 0.0
  %3443 = vmatpush2.xpose.msra.mxu0 0.0
  %3444 = vmatprep.subr.mxu0 0.0
  %3445 = vmatpush2.xpose.msra.mxu0 0.0
  %3446 = vmatprep.subr.mxu0 0.0
  %3447 = vmatpush2.xpose.msra.mxu0 0.0
  %3448 = vmatprep.subr.mxu0 0.0
  %3449 = vmatpush2.xpose.msra.mxu0 0.0
  %3450 = vmatprep.mubr.f32.mxu0 0.0
  %3451 = vmatmul.mubr.f32.gmra.mxu0 %v3370
  %v3452 = vpop.f32.mrf.mxu0
  %v3453 = vadd.f32 0.0, %v3452
  %v3454 = vpop.f32.mrf.mxu0
  %3455 = vmatprep.mubr.f32.mxu0 0.0
  %3456 = vmatmul.mubr.f32.gmra.mxu0 %v3372
  %v3457 = vpop.f32.mrf.mxu0
  %v3458 = vadd.f32 0.0, %v3457
  %v3459 = vpop.f32.mrf.mxu0
  %3460 = vmatprep.mubr.f32.mxu0 0.0
  %3461 = vmatmul.mubr.f32.gmra.mxu0 %v3374
  %v3462 = vpop.f32.mrf.mxu0
  %v3463 = vadd.f32 0.0, %v3462
  %v3464 = vpop.f32.mrf.mxu0
  %3465 = vmatprep.mubr.f32.mxu0 0.0
  %3466 = vmatmul.mubr.f32.gmra.mxu0 %v3376
  %v3467 = vpop.f32.mrf.mxu0
  %v3468 = vadd.f32 0.0, %v3467
  %v3469 = vpop.f32.mrf.mxu0
  %3470 = vdwg.mxu0
  %3471 = vrot.lane.b32.xlu0 %v1066, 64
  %v3472 = vpop.permute.xlu0 %3471
  %3473 = vrot.lane.b32.xlu0 %v1068, 64
  %v3474 = vpop.permute.xlu0 %3473
  %3475 = vrot.lane.b32.xlu0 %v1070, 64
  %v3476 = vpop.permute.xlu0 %3475
  %3477 = vrot.lane.b32.xlu0 %v1072, 64
  %v3478 = vpop.permute.xlu0 %3477
  %v3479 = vsel %vm1516, %v1066, 0
  %v3481 = vsel %vm1516, %v1068, 0
  %v3483 = vsel %vm1516, %v1070, 0
  %v3485 = vsel %vm1516, %v1072, 0
  %v3487 = vsel %vm1516, %v3472, 0
  %v3489 = vsel %vm1516, %v3474, 0
  %v3491 = vsel %vm1516, %v3476, 0
  %v3493 = vsel %vm1516, %v3478, 0
  %3495 = vmatprep.subr.mxu0 0.0
  %3496 = vmatpush1.xpose.msra.mxu0 0.0
  %3497 = vmatprep.subr.mxu0 0.0
  %3498 = vmatpush1.xpose.msra.mxu0 0.0
  %3499 = vmatprep.subr.mxu0 0.0
  %3500 = vmatpush1.xpose.msra.mxu0 0.0
  %3501 = vmatprep.subr.mxu0 0.0
  %3502 = vmatpush1.xpose.msra.mxu0 0.0
  %3503 = vmatprep.subr.mxu0 0.0
  %3504 = vmatpush1.xpose.msra.mxu0 0.0
  %3505 = vmatprep.subr.mxu0 0.0
  %3506 = vmatpush1.xpose.msra.mxu0 0.0
  %3507 = vmatprep.subr.mxu0 0.0
  %3508 = vmatpush1.xpose.msra.mxu0 0.0
  %3509 = vmatprep.subr.mxu0 0.0
  %3510 = vmatpush1.xpose.msra.mxu0 0.0
  %3511 = vmatprep.subr.mxu0 0.0
  %3512 = vmatpush1.xpose.msra.mxu0 0.0
  %3513 = vmatprep.subr.mxu0 0.0
  %3514 = vmatpush1.xpose.msra.mxu0 0.0
  %3515 = vmatprep.subr.mxu0 0.0
  %3516 = vmatpush1.xpose.msra.mxu0 0.0
  %3517 = vmatprep.subr.mxu0 0.0
  %3518 = vmatpush1.xpose.msra.mxu0 0.0
  %3519 = vmatprep.subr.mxu0 0.0
  %3520 = vmatpush1.xpose.msra.mxu0 %v3493
  %3521 = vmatprep.subr.mxu0 0.0
  %3522 = vmatpush1.xpose.msra.mxu0 %v3491
  %3523 = vmatprep.subr.mxu0 0.0
  %3524 = vmatpush1.xpose.msra.mxu0 %v3489
  %3525 = vmatprep.subr.mxu0 0.0
  %3526 = vmatpush1.xpose.msra.mxu0 %v3487
  %3527 = vmatprep.subr.mxu0 0.0
  %3528 = vmatpush2.xpose.msra.mxu0 0.0
  %3529 = vmatprep.subr.mxu0 0.0
  %3530 = vmatpush2.xpose.msra.mxu0 0.0
  %3531 = vmatprep.subr.mxu0 0.0
  %3532 = vmatpush2.xpose.msra.mxu0 0.0
  %3533 = vmatprep.subr.mxu0 0.0
  %3534 = vmatpush2.xpose.msra.mxu0 0.0
  %3535 = vmatprep.subr.mxu0 0.0
  %3536 = vmatpush2.xpose.msra.mxu0 0.0
  %3537 = vmatprep.subr.mxu0 0.0
  %3538 = vmatpush2.xpose.msra.mxu0 0.0
  %3539 = vmatprep.subr.mxu0 0.0
  %3540 = vmatpush2.xpose.msra.mxu0 0.0
  %3541 = vmatprep.subr.mxu0 0.0
  %3542 = vmatpush2.xpose.msra.mxu0 0.0
  %3543 = vmatprep.subr.mxu0 0.0
  %3544 = vmatpush2.xpose.msra.mxu0 0.0
  %3545 = vmatprep.subr.mxu0 0.0
  %3546 = vmatpush2.xpose.msra.mxu0 0.0
  %3547 = vmatprep.subr.mxu0 0.0
  %3548 = vmatpush2.xpose.msra.mxu0 0.0
  %3549 = vmatprep.subr.mxu0 0.0
  %3550 = vmatpush2.xpose.msra.mxu0 0.0
  %3551 = vmatprep.subr.mxu0 0.0
  %3552 = vmatpush2.xpose.msra.mxu0 0.0
  %3553 = vmatprep.subr.mxu0 0.0
  %3554 = vmatpush2.xpose.msra.mxu0 0.0
  %3555 = vmatprep.subr.mxu0 0.0
  %3556 = vmatpush2.xpose.msra.mxu0 0.0
  %3557 = vmatprep.subr.mxu0 0.0
  %3558 = vmatpush2.xpose.msra.mxu0 0.0
  %3559 = vmatprep.mubr.f32.mxu0 0.0
  %3560 = vmatmul.mubr.f32.gmra.mxu0 %v3479
  %v3561 = vpop.f32.mrf.mxu0
  %v3562 = vadd.f32 0.0, %v3561
  %v3563 = vpop.f32.mrf.mxu0
  %3564 = vmatprep.mubr.f32.mxu0 0.0
  %3565 = vmatmul.mubr.f32.gmra.mxu0 %v3481
  %v3566 = vpop.f32.mrf.mxu0
  %v3567 = vadd.f32 0.0, %v3566
  %v3568 = vpop.f32.mrf.mxu0
  %3569 = vmatprep.mubr.f32.mxu0 0.0
  %3570 = vmatmul.mubr.f32.gmra.mxu0 %v3483
  %v3571 = vpop.f32.mrf.mxu0
  %v3572 = vadd.f32 0.0, %v3571
  %v3573 = vpop.f32.mrf.mxu0
  %3574 = vmatprep.mubr.f32.mxu0 0.0
  %3575 = vmatmul.mubr.f32.gmra.mxu0 %v3485
  %v3576 = vpop.f32.mrf.mxu0
  %v3577 = vadd.f32 0.0, %v3576
  %v3578 = vpop.f32.mrf.mxu0
  %3579 = vdwg.mxu0
  %3580 = vrot.lane.b32.xlu0 %v1074, 64
  %v3581 = vpop.permute.xlu0 %3580
  %3582 = vrot.lane.b32.xlu0 %v1076, 64
  %v3583 = vpop.permute.xlu0 %3582
  %3584 = vrot.lane.b32.xlu0 %v1078, 64
  %v3585 = vpop.permute.xlu0 %3584
  %3586 = vrot.lane.b32.xlu0 %v1080, 64
  %v3587 = vpop.permute.xlu0 %3586
  %v3588 = vsel %vm1516, %v1074, 0
  %v3590 = vsel %vm1516, %v1076, 0
  %v3592 = vsel %vm1516, %v1078, 0
  %v3594 = vsel %vm1516, %v1080, 0
  %v3596 = vsel %vm1516, %v3581, 0
  %v3598 = vsel %vm1516, %v3583, 0
  %v3600 = vsel %vm1516, %v3585, 0
  %v3602 = vsel %vm1516, %v3587, 0
  %3604 = vmatprep.subr.mxu0 0.0
  %3605 = vmatpush1.xpose.msra.mxu0 0.0
  %3606 = vmatprep.subr.mxu0 0.0
  %3607 = vmatpush1.xpose.msra.mxu0 0.0
  %3608 = vmatprep.subr.mxu0 0.0
  %3609 = vmatpush1.xpose.msra.mxu0 0.0
  %3610 = vmatprep.subr.mxu0 0.0
  %3611 = vmatpush1.xpose.msra.mxu0 0.0
  %3612 = vmatprep.subr.mxu0 0.0
  %3613 = vmatpush1.xpose.msra.mxu0 0.0
  %3614 = vmatprep.subr.mxu0 0.0
  %3615 = vmatpush1.xpose.msra.mxu0 0.0
  %3616 = vmatprep.subr.mxu0 0.0
  %3617 = vmatpush1.xpose.msra.mxu0 0.0
  %3618 = vmatprep.subr.mxu0 0.0
  %3619 = vmatpush1.xpose.msra.mxu0 0.0
  %3620 = vmatprep.subr.mxu0 0.0
  %3621 = vmatpush1.xpose.msra.mxu0 0.0
  %3622 = vmatprep.subr.mxu0 0.0
  %3623 = vmatpush1.xpose.msra.mxu0 0.0
  %3624 = vmatprep.subr.mxu0 0.0
  %3625 = vmatpush1.xpose.msra.mxu0 0.0
  %3626 = vmatprep.subr.mxu0 0.0
  %3627 = vmatpush1.xpose.msra.mxu0 0.0
  %3628 = vmatprep.subr.mxu0 0.0
  %3629 = vmatpush1.xpose.msra.mxu0 %v3602
  %3630 = vmatprep.subr.mxu0 0.0
  %3631 = vmatpush1.xpose.msra.mxu0 %v3600
  %3632 = vmatprep.subr.mxu0 0.0
  %3633 = vmatpush1.xpose.msra.mxu0 %v3598
  %3634 = vmatprep.subr.mxu0 0.0
  %3635 = vmatpush1.xpose.msra.mxu0 %v3596
  %3636 = vmatprep.subr.mxu0 0.0
  %3637 = vmatpush2.xpose.msra.mxu0 0.0
  %3638 = vmatprep.subr.mxu0 0.0
  %3639 = vmatpush2.xpose.msra.mxu0 0.0
  %3640 = vmatprep.subr.mxu0 0.0
  %3641 = vmatpush2.xpose.msra.mxu0 0.0
  %3642 = vmatprep.subr.mxu0 0.0
  %3643 = vmatpush2.xpose.msra.mxu0 0.0
  %3644 = vmatprep.subr.mxu0 0.0
  %3645 = vmatpush2.xpose.msra.mxu0 0.0
  %3646 = vmatprep.subr.mxu0 0.0
  %3647 = vmatpush2.xpose.msra.mxu0 0.0
  %3648 = vmatprep.subr.mxu0 0.0
  %3649 = vmatpush2.xpose.msra.mxu0 0.0
  %3650 = vmatprep.subr.mxu0 0.0
  %3651 = vmatpush2.xpose.msra.mxu0 0.0
  %3652 = vmatprep.subr.mxu0 0.0
  %3653 = vmatpush2.xpose.msra.mxu0 0.0
  %3654 = vmatprep.subr.mxu0 0.0
  %3655 = vmatpush2.xpose.msra.mxu0 0.0
  %3656 = vmatprep.subr.mxu0 0.0
  %3657 = vmatpush2.xpose.msra.mxu0 0.0
  %3658 = vmatprep.subr.mxu0 0.0
  %3659 = vmatpush2.xpose.msra.mxu0 0.0
  %3660 = vmatprep.subr.mxu0 0.0
  %3661 = vmatpush2.xpose.msra.mxu0 0.0
  %3662 = vmatprep.subr.mxu0 0.0
  %3663 = vmatpush2.xpose.msra.mxu0 0.0
  %3664 = vmatprep.subr.mxu0 0.0
  %3665 = vmatpush2.xpose.msra.mxu0 0.0
  %3666 = vmatprep.subr.mxu0 0.0
  %3667 = vmatpush2.xpose.msra.mxu0 0.0
  %3668 = vmatprep.mubr.f32.mxu0 0.0
  %3669 = vmatmul.mubr.f32.gmra.mxu0 %v3588
  %v3670 = vpop.f32.mrf.mxu0
  %v3671 = vadd.f32 0.0, %v3670
  %v3672 = vpop.f32.mrf.mxu0
  %3673 = vmatprep.mubr.f32.mxu0 0.0
  %3674 = vmatmul.mubr.f32.gmra.mxu0 %v3590
  %v3675 = vpop.f32.mrf.mxu0
  %v3676 = vadd.f32 0.0, %v3675
  %v3677 = vpop.f32.mrf.mxu0
  %3678 = vmatprep.mubr.f32.mxu0 0.0
  %3679 = vmatmul.mubr.f32.gmra.mxu0 %v3592
  %v3680 = vpop.f32.mrf.mxu0
  %v3681 = vadd.f32 0.0, %v3680
  %v3682 = vpop.f32.mrf.mxu0
  %3683 = vmatprep.mubr.f32.mxu0 0.0
  %3684 = vmatmul.mubr.f32.gmra.mxu0 %v3594
  %v3685 = vpop.f32.mrf.mxu0
  %v3686 = vadd.f32 0.0, %v3685
  %v3687 = vpop.f32.mrf.mxu0
  %3688 = vdwg.mxu0
  %3689 = vrot.lane.b32.xlu0 %v1082, 64
  %v3690 = vpop.permute.xlu0 %3689
  %3691 = vrot.lane.b32.xlu0 %v1084, 64
  %v3692 = vpop.permute.xlu0 %3691
  %3693 = vrot.lane.b32.xlu0 %v1086, 64
  %v3694 = vpop.permute.xlu0 %3693
  %3695 = vrot.lane.b32.xlu0 %v1088, 64
  %v3696 = vpop.permute.xlu0 %3695
  %v3697 = vsel %vm1516, %v1082, 0
  %v3699 = vsel %vm1516, %v1084, 0
  %v3701 = vsel %vm1516, %v1086, 0
  %v3703 = vsel %vm1516, %v1088, 0
  %v3705 = vsel %vm1516, %v3690, 0
  %v3707 = vsel %vm1516, %v3692, 0
  %v3709 = vsel %vm1516, %v3694, 0
  %v3711 = vsel %vm1516, %v3696, 0
  %3713 = vmatprep.subr.mxu0 0.0
  %3714 = vmatpush1.xpose.msra.mxu0 0.0
  %3715 = vmatprep.subr.mxu0 0.0
  %3716 = vmatpush1.xpose.msra.mxu0 0.0
  %3717 = vmatprep.subr.mxu0 0.0
  %3718 = vmatpush1.xpose.msra.mxu0 0.0
  %3719 = vmatprep.subr.mxu0 0.0
  %3720 = vmatpush1.xpose.msra.mxu0 0.0
  %3721 = vmatprep.subr.mxu0 0.0
  %3722 = vmatpush1.xpose.msra.mxu0 0.0
  %3723 = vmatprep.subr.mxu0 0.0
  %3724 = vmatpush1.xpose.msra.mxu0 0.0
  %3725 = vmatprep.subr.mxu0 0.0
  %3726 = vmatpush1.xpose.msra.mxu0 0.0
  %3727 = vmatprep.subr.mxu0 0.0
  %3728 = vmatpush1.xpose.msra.mxu0 0.0
  %3729 = vmatprep.subr.mxu0 0.0
  %3730 = vmatpush1.xpose.msra.mxu0 0.0
  %3731 = vmatprep.subr.mxu0 0.0
  %3732 = vmatpush1.xpose.msra.mxu0 0.0
  %3733 = vmatprep.subr.mxu0 0.0
  %3734 = vmatpush1.xpose.msra.mxu0 0.0
  %3735 = vmatprep.subr.mxu0 0.0
  %3736 = vmatpush1.xpose.msra.mxu0 0.0
  %3737 = vmatprep.subr.mxu0 0.0
  %3738 = vmatpush1.xpose.msra.mxu0 %v3711
  %3739 = vmatprep.subr.mxu0 0.0
  %3740 = vmatpush1.xpose.msra.mxu0 %v3709
  %3741 = vmatprep.subr.mxu0 0.0
  %3742 = vmatpush1.xpose.msra.mxu0 %v3707
  %3743 = vmatprep.subr.mxu0 0.0
  %3744 = vmatpush1.xpose.msra.mxu0 %v3705
  %3745 = vmatprep.subr.mxu0 0.0
  %3746 = vmatpush2.xpose.msra.mxu0 0.0
  %3747 = vmatprep.subr.mxu0 0.0
  %3748 = vmatpush2.xpose.msra.mxu0 0.0
  %3749 = vmatprep.subr.mxu0 0.0
  %3750 = vmatpush2.xpose.msra.mxu0 0.0
  %3751 = vmatprep.subr.mxu0 0.0
  %3752 = vmatpush2.xpose.msra.mxu0 0.0
  %3753 = vmatprep.subr.mxu0 0.0
  %3754 = vmatpush2.xpose.msra.mxu0 0.0
  %3755 = vmatprep.subr.mxu0 0.0
  %3756 = vmatpush2.xpose.msra.mxu0 0.0
  %3757 = vmatprep.subr.mxu0 0.0
  %3758 = vmatpush2.xpose.msra.mxu0 0.0
  %3759 = vmatprep.subr.mxu0 0.0
  %3760 = vmatpush2.xpose.msra.mxu0 0.0
  %3761 = vmatprep.subr.mxu0 0.0
  %3762 = vmatpush2.xpose.msra.mxu0 0.0
  %3763 = vmatprep.subr.mxu0 0.0
  %3764 = vmatpush2.xpose.msra.mxu0 0.0
  %3765 = vmatprep.subr.mxu0 0.0
  %3766 = vmatpush2.xpose.msra.mxu0 0.0
  %3767 = vmatprep.subr.mxu0 0.0
  %3768 = vmatpush2.xpose.msra.mxu0 0.0
  %3769 = vmatprep.subr.mxu0 0.0
  %3770 = vmatpush2.xpose.msra.mxu0 0.0
  %3771 = vmatprep.subr.mxu0 0.0
  %3772 = vmatpush2.xpose.msra.mxu0 0.0
  %3773 = vmatprep.subr.mxu0 0.0
  %3774 = vmatpush2.xpose.msra.mxu0 0.0
  %3775 = vmatprep.subr.mxu0 0.0
  %3776 = vmatpush2.xpose.msra.mxu0 0.0
  %3777 = vmatprep.mubr.f32.mxu0 0.0
  %3778 = vmatmul.mubr.f32.gmra.mxu0 %v3697
  %v3779 = vpop.f32.mrf.mxu0
  %v3780 = vadd.f32 0.0, %v3779
  %v3781 = vpop.f32.mrf.mxu0
  %3782 = vmatprep.mubr.f32.mxu0 0.0
  %3783 = vmatmul.mubr.f32.gmra.mxu0 %v3699
  %v3784 = vpop.f32.mrf.mxu0
  %v3785 = vadd.f32 0.0, %v3784
  %v3786 = vpop.f32.mrf.mxu0
  %3787 = vmatprep.mubr.f32.mxu0 0.0
  %3788 = vmatmul.mubr.f32.gmra.mxu0 %v3701
  %v3789 = vpop.f32.mrf.mxu0
  %v3790 = vadd.f32 0.0, %v3789
  %v3791 = vpop.f32.mrf.mxu0
  %3792 = vmatprep.mubr.f32.mxu0 0.0
  %3793 = vmatmul.mubr.f32.gmra.mxu0 %v3703
  %v3794 = vpop.f32.mrf.mxu0
  %v3795 = vadd.f32 0.0, %v3794
  %v3796 = vpop.f32.mrf.mxu0
  %3797 = vdwg.mxu0
  %3798 = vrot.lane.b32.xlu0 %v1090, 64
  %v3799 = vpop.permute.xlu0 %3798
  %3800 = vrot.lane.b32.xlu0 %v1092, 64
  %v3801 = vpop.permute.xlu0 %3800
  %3802 = vrot.lane.b32.xlu0 %v1094, 64
  %v3803 = vpop.permute.xlu0 %3802
  %3804 = vrot.lane.b32.xlu0 %v1096, 64
  %v3805 = vpop.permute.xlu0 %3804
  %v3806 = vsel %vm1516, %v1090, 0
  %v3808 = vsel %vm1516, %v1092, 0
  %v3810 = vsel %vm1516, %v1094, 0
  %v3812 = vsel %vm1516, %v1096, 0
  %v3814 = vsel %vm1516, %v3799, 0
  %v3816 = vsel %vm1516, %v3801, 0
  %v3818 = vsel %vm1516, %v3803, 0
  %v3820 = vsel %vm1516, %v3805, 0
  %3822 = vmatprep.subr.mxu0 0.0
  %3823 = vmatpush1.xpose.msra.mxu0 0.0
  %3824 = vmatprep.subr.mxu0 0.0
  %3825 = vmatpush1.xpose.msra.mxu0 0.0
  %3826 = vmatprep.subr.mxu0 0.0
  %3827 = vmatpush1.xpose.msra.mxu0 0.0
  %3828 = vmatprep.subr.mxu0 0.0
  %3829 = vmatpush1.xpose.msra.mxu0 0.0
  %3830 = vmatprep.subr.mxu0 0.0
  %3831 = vmatpush1.xpose.msra.mxu0 0.0
  %3832 = vmatprep.subr.mxu0 0.0
  %3833 = vmatpush1.xpose.msra.mxu0 0.0
  %3834 = vmatprep.subr.mxu0 0.0
  %3835 = vmatpush1.xpose.msra.mxu0 0.0
  %3836 = vmatprep.subr.mxu0 0.0
  %3837 = vmatpush1.xpose.msra.mxu0 0.0
  %3838 = vmatprep.subr.mxu0 0.0
  %3839 = vmatpush1.xpose.msra.mxu0 0.0
  %3840 = vmatprep.subr.mxu0 0.0
  %3841 = vmatpush1.xpose.msra.mxu0 0.0
  %3842 = vmatprep.subr.mxu0 0.0
  %3843 = vmatpush1.xpose.msra.mxu0 0.0
  %3844 = vmatprep.subr.mxu0 0.0
  %3845 = vmatpush1.xpose.msra.mxu0 0.0
  %3846 = vmatprep.subr.mxu0 0.0
  %3847 = vmatpush1.xpose.msra.mxu0 %v3820
  %3848 = vmatprep.subr.mxu0 0.0
  %3849 = vmatpush1.xpose.msra.mxu0 %v3818
  %3850 = vmatprep.subr.mxu0 0.0
  %3851 = vmatpush1.xpose.msra.mxu0 %v3816
  %3852 = vmatprep.subr.mxu0 0.0
  %3853 = vmatpush1.xpose.msra.mxu0 %v3814
  %3854 = vmatprep.subr.mxu0 0.0
  %3855 = vmatpush2.xpose.msra.mxu0 0.0
  %3856 = vmatprep.subr.mxu0 0.0
  %3857 = vmatpush2.xpose.msra.mxu0 0.0
  %3858 = vmatprep.subr.mxu0 0.0
  %3859 = vmatpush2.xpose.msra.mxu0 0.0
  %3860 = vmatprep.subr.mxu0 0.0
  %3861 = vmatpush2.xpose.msra.mxu0 0.0
  %3862 = vmatprep.subr.mxu0 0.0
  %3863 = vmatpush2.xpose.msra.mxu0 0.0
  %3864 = vmatprep.subr.mxu0 0.0
  %3865 = vmatpush2.xpose.msra.mxu0 0.0
  %3866 = vmatprep.subr.mxu0 0.0
  %3867 = vmatpush2.xpose.msra.mxu0 0.0
  %3868 = vmatprep.subr.mxu0 0.0
  %3869 = vmatpush2.xpose.msra.mxu0 0.0
  %3870 = vmatprep.subr.mxu0 0.0
  %3871 = vmatpush2.xpose.msra.mxu0 0.0
  %3872 = vmatprep.subr.mxu0 0.0
  %3873 = vmatpush2.xpose.msra.mxu0 0.0
  %3874 = vmatprep.subr.mxu0 0.0
  %3875 = vmatpush2.xpose.msra.mxu0 0.0
  %3876 = vmatprep.subr.mxu0 0.0
  %3877 = vmatpush2.xpose.msra.mxu0 0.0
  %3878 = vmatprep.subr.mxu0 0.0
  %3879 = vmatpush2.xpose.msra.mxu0 0.0
  %3880 = vmatprep.subr.mxu0 0.0
  %3881 = vmatpush2.xpose.msra.mxu0 0.0
  %3882 = vmatprep.subr.mxu0 0.0
  %3883 = vmatpush2.xpose.msra.mxu0 0.0
  %3884 = vmatprep.subr.mxu0 0.0
  %3885 = vmatpush2.xpose.msra.mxu0 0.0
  %3886 = vmatprep.mubr.f32.mxu0 0.0
  %3887 = vmatmul.mubr.f32.gmra.mxu0 %v3806
  %v3888 = vpop.f32.mrf.mxu0
  %v3889 = vadd.f32 0.0, %v3888
  %v3890 = vpop.f32.mrf.mxu0
  %3891 = vmatprep.mubr.f32.mxu0 0.0
  %3892 = vmatmul.mubr.f32.gmra.mxu0 %v3808
  %v3893 = vpop.f32.mrf.mxu0
  %v3894 = vadd.f32 0.0, %v3893
  %v3895 = vpop.f32.mrf.mxu0
  %3896 = vmatprep.mubr.f32.mxu0 0.0
  %3897 = vmatmul.mubr.f32.gmra.mxu0 %v3810
  %v3898 = vpop.f32.mrf.mxu0
  %v3899 = vadd.f32 0.0, %v3898
  %v3900 = vpop.f32.mrf.mxu0
  %3901 = vmatprep.mubr.f32.mxu0 0.0
  %3902 = vmatmul.mubr.f32.gmra.mxu0 %v3812
  %v3903 = vpop.f32.mrf.mxu0
  %v3904 = vadd.f32 0.0, %v3903
  %v3905 = vpop.f32.mrf.mxu0
  %3906 = vdwg.mxu0
  %3907 = vrot.lane.b32.xlu0 %v1098, 64
  %v3908 = vpop.permute.xlu0 %3907
  %3909 = vrot.lane.b32.xlu0 %v1100, 64
  %v3910 = vpop.permute.xlu0 %3909
  %3911 = vrot.lane.b32.xlu0 %v1102, 64
  %v3912 = vpop.permute.xlu0 %3911
  %3913 = vrot.lane.b32.xlu0 %v1104, 64
  %v3914 = vpop.permute.xlu0 %3913
  %v3915 = vsel %vm1516, %v1098, 0
  %v3917 = vsel %vm1516, %v1100, 0
  %v3919 = vsel %vm1516, %v1102, 0
  %v3921 = vsel %vm1516, %v1104, 0
  %v3923 = vsel %vm1516, %v3908, 0
  %v3925 = vsel %vm1516, %v3910, 0
  %v3927 = vsel %vm1516, %v3912, 0
  %v3929 = vsel %vm1516, %v3914, 0
  %3931 = vmatprep.subr.mxu0 0.0
  %3932 = vmatpush1.xpose.msra.mxu0 0.0
  %3933 = vmatprep.subr.mxu0 0.0
  %3934 = vmatpush1.xpose.msra.mxu0 0.0
  %3935 = vmatprep.subr.mxu0 0.0
  %3936 = vmatpush1.xpose.msra.mxu0 0.0
  %3937 = vmatprep.subr.mxu0 0.0
  %3938 = vmatpush1.xpose.msra.mxu0 0.0
  %3939 = vmatprep.subr.mxu0 0.0
  %3940 = vmatpush1.xpose.msra.mxu0 0.0
  %3941 = vmatprep.subr.mxu0 0.0
  %3942 = vmatpush1.xpose.msra.mxu0 0.0
  %3943 = vmatprep.subr.mxu0 0.0
  %3944 = vmatpush1.xpose.msra.mxu0 0.0
  %3945 = vmatprep.subr.mxu0 0.0
  %3946 = vmatpush1.xpose.msra.mxu0 0.0
  %3947 = vmatprep.subr.mxu0 0.0
  %3948 = vmatpush1.xpose.msra.mxu0 0.0
  %3949 = vmatprep.subr.mxu0 0.0
  %3950 = vmatpush1.xpose.msra.mxu0 0.0
  %3951 = vmatprep.subr.mxu0 0.0
  %3952 = vmatpush1.xpose.msra.mxu0 0.0
  %3953 = vmatprep.subr.mxu0 0.0
  %3954 = vmatpush1.xpose.msra.mxu0 0.0
  %3955 = vmatprep.subr.mxu0 0.0
  %3956 = vmatpush1.xpose.msra.mxu0 %v3929
  %3957 = vmatprep.subr.mxu0 0.0
  %3958 = vmatpush1.xpose.msra.mxu0 %v3927
  %3959 = vmatprep.subr.mxu0 0.0
  %3960 = vmatpush1.xpose.msra.mxu0 %v3925
  %3961 = vmatprep.subr.mxu0 0.0
  %3962 = vmatpush1.xpose.msra.mxu0 %v3923
  %3963 = vmatprep.subr.mxu0 0.0
  %3964 = vmatpush2.xpose.msra.mxu0 0.0
  %3965 = vmatprep.subr.mxu0 0.0
  %3966 = vmatpush2.xpose.msra.mxu0 0.0
  %3967 = vmatprep.subr.mxu0 0.0
  %3968 = vmatpush2.xpose.msra.mxu0 0.0
  %3969 = vmatprep.subr.mxu0 0.0
  %3970 = vmatpush2.xpose.msra.mxu0 0.0
  %3971 = vmatprep.subr.mxu0 0.0
  %3972 = vmatpush2.xpose.msra.mxu0 0.0
  %3973 = vmatprep.subr.mxu0 0.0
  %3974 = vmatpush2.xpose.msra.mxu0 0.0
  %3975 = vmatprep.subr.mxu0 0.0
  %3976 = vmatpush2.xpose.msra.mxu0 0.0
  %3977 = vmatprep.subr.mxu0 0.0
  %3978 = vmatpush2.xpose.msra.mxu0 0.0
  %3979 = vmatprep.subr.mxu0 0.0
  %3980 = vmatpush2.xpose.msra.mxu0 0.0
  %3981 = vmatprep.subr.mxu0 0.0
  %3982 = vmatpush2.xpose.msra.mxu0 0.0
  %3983 = vmatprep.subr.mxu0 0.0
  %3984 = vmatpush2.xpose.msra.mxu0 0.0
  %3985 = vmatprep.subr.mxu0 0.0
  %3986 = vmatpush2.xpose.msra.mxu0 0.0
  %3987 = vmatprep.subr.mxu0 0.0
  %3988 = vmatpush2.xpose.msra.mxu0 0.0
  %3989 = vmatprep.subr.mxu0 0.0
  %3990 = vmatpush2.xpose.msra.mxu0 0.0
  %3991 = vmatprep.subr.mxu0 0.0
  %3992 = vmatpush2.xpose.msra.mxu0 0.0
  %3993 = vmatprep.subr.mxu0 0.0
  %3994 = vmatpush2.xpose.msra.mxu0 0.0
  %3995 = vmatprep.mubr.f32.mxu0 0.0
  %3996 = vmatmul.mubr.f32.gmra.mxu0 %v3915
  %v3997 = vpop.f32.mrf.mxu0
  %v3998 = vadd.f32 0.0, %v3997
  %v3999 = vpop.f32.mrf.mxu0
  %4000 = vmatprep.mubr.f32.mxu0 0.0
  %4001 = vmatmul.mubr.f32.gmra.mxu0 %v3917
  %v4002 = vpop.f32.mrf.mxu0
  %v4003 = vadd.f32 0.0, %v4002
  %v4004 = vpop.f32.mrf.mxu0
  %4005 = vmatprep.mubr.f32.mxu0 0.0
  %4006 = vmatmul.mubr.f32.gmra.mxu0 %v3919
  %v4007 = vpop.f32.mrf.mxu0
  %v4008 = vadd.f32 0.0, %v4007
  %v4009 = vpop.f32.mrf.mxu0
  %4010 = vmatprep.mubr.f32.mxu0 0.0
  %4011 = vmatmul.mubr.f32.gmra.mxu0 %v3921
  %v4012 = vpop.f32.mrf.mxu0
  %v4013 = vadd.f32 0.0, %v4012
  %v4014 = vpop.f32.mrf.mxu0
  %4015 = vdwg.mxu0
  %4016 = vrot.lane.b32.xlu0 %v1106, 64
  %v4017 = vpop.permute.xlu0 %4016
  %4018 = vrot.lane.b32.xlu0 %v1108, 64
  %v4019 = vpop.permute.xlu0 %4018
  %4020 = vrot.lane.b32.xlu0 %v1110, 64
  %v4021 = vpop.permute.xlu0 %4020
  %4022 = vrot.lane.b32.xlu0 %v1112, 64
  %v4023 = vpop.permute.xlu0 %4022
  %v4024 = vsel %vm1516, %v1106, 0
  %v4026 = vsel %vm1516, %v1108, 0
  %v4028 = vsel %vm1516, %v1110, 0
  %v4030 = vsel %vm1516, %v1112, 0
  %v4032 = vsel %vm1516, %v4017, 0
  %v4034 = vsel %vm1516, %v4019, 0
  %v4036 = vsel %vm1516, %v4021, 0
  %v4038 = vsel %vm1516, %v4023, 0
  %4040 = vmatprep.subr.mxu0 0.0
  %4041 = vmatpush1.xpose.msra.mxu0 0.0
  %4042 = vmatprep.subr.mxu0 0.0
  %4043 = vmatpush1.xpose.msra.mxu0 0.0
  %4044 = vmatprep.subr.mxu0 0.0
  %4045 = vmatpush1.xpose.msra.mxu0 0.0
  %4046 = vmatprep.subr.mxu0 0.0
  %4047 = vmatpush1.xpose.msra.mxu0 0.0
  %4048 = vmatprep.subr.mxu0 0.0
  %4049 = vmatpush1.xpose.msra.mxu0 0.0
  %4050 = vmatprep.subr.mxu0 0.0
  %4051 = vmatpush1.xpose.msra.mxu0 0.0
  %4052 = vmatprep.subr.mxu0 0.0
  %4053 = vmatpush1.xpose.msra.mxu0 0.0
  %4054 = vmatprep.subr.mxu0 0.0
  %4055 = vmatpush1.xpose.msra.mxu0 0.0
  %4056 = vmatprep.subr.mxu0 0.0
  %4057 = vmatpush1.xpose.msra.mxu0 0.0
  %4058 = vmatprep.subr.mxu0 0.0
  %4059 = vmatpush1.xpose.msra.mxu0 0.0
  %4060 = vmatprep.subr.mxu0 0.0
  %4061 = vmatpush1.xpose.msra.mxu0 0.0
  %4062 = vmatprep.subr.mxu0 0.0
  %4063 = vmatpush1.xpose.msra.mxu0 0.0
  %4064 = vmatprep.subr.mxu0 0.0
  %4065 = vmatpush1.xpose.msra.mxu0 %v4038
  %4066 = vmatprep.subr.mxu0 0.0
  %4067 = vmatpush1.xpose.msra.mxu0 %v4036
  %4068 = vmatprep.subr.mxu0 0.0
  %4069 = vmatpush1.xpose.msra.mxu0 %v4034
  %4070 = vmatprep.subr.mxu0 0.0
  %4071 = vmatpush1.xpose.msra.mxu0 %v4032
  %4072 = vmatprep.subr.mxu0 0.0
  %4073 = vmatpush2.xpose.msra.mxu0 0.0
  %4074 = vmatprep.subr.mxu0 0.0
  %4075 = vmatpush2.xpose.msra.mxu0 0.0
  %4076 = vmatprep.subr.mxu0 0.0
  %4077 = vmatpush2.xpose.msra.mxu0 0.0
  %4078 = vmatprep.subr.mxu0 0.0
  %4079 = vmatpush2.xpose.msra.mxu0 0.0
  %4080 = vmatprep.subr.mxu0 0.0
  %4081 = vmatpush2.xpose.msra.mxu0 0.0
  %4082 = vmatprep.subr.mxu0 0.0
  %4083 = vmatpush2.xpose.msra.mxu0 0.0
  %4084 = vmatprep.subr.mxu0 0.0
  %4085 = vmatpush2.xpose.msra.mxu0 0.0
  %4086 = vmatprep.subr.mxu0 0.0
  %4087 = vmatpush2.xpose.msra.mxu0 0.0
  %4088 = vmatprep.subr.mxu0 0.0
  %4089 = vmatpush2.xpose.msra.mxu0 0.0
  %4090 = vmatprep.subr.mxu0 0.0
  %4091 = vmatpush2.xpose.msra.mxu0 0.0
  %4092 = vmatprep.subr.mxu0 0.0
  %4093 = vmatpush2.xpose.msra.mxu0 0.0
  %4094 = vmatprep.subr.mxu0 0.0
  %4095 = vmatpush2.xpose.msra.mxu0 0.0
  %4096 = vmatprep.subr.mxu0 0.0
  %4097 = vmatpush2.xpose.msra.mxu0 0.0
  %4098 = vmatprep.subr.mxu0 0.0
  %4099 = vmatpush2.xpose.msra.mxu0 0.0
  %4100 = vmatprep.subr.mxu0 0.0
  %4101 = vmatpush2.xpose.msra.mxu0 0.0
  %4102 = vmatprep.subr.mxu0 0.0
  %4103 = vmatpush2.xpose.msra.mxu0 0.0
  %4104 = vmatprep.mubr.f32.mxu0 0.0
  %4105 = vmatmul.mubr.f32.gmra.mxu0 %v4024
  %v4106 = vpop.f32.mrf.mxu0
  %v4107 = vadd.f32 0.0, %v4106
  %v4108 = vpop.f32.mrf.mxu0
  %4109 = vmatprep.mubr.f32.mxu0 0.0
  %4110 = vmatmul.mubr.f32.gmra.mxu0 %v4026
  %v4111 = vpop.f32.mrf.mxu0
  %v4112 = vadd.f32 0.0, %v4111
  %v4113 = vpop.f32.mrf.mxu0
  %4114 = vmatprep.mubr.f32.mxu0 0.0
  %4115 = vmatmul.mubr.f32.gmra.mxu0 %v4028
  %v4116 = vpop.f32.mrf.mxu0
  %v4117 = vadd.f32 0.0, %v4116
  %v4118 = vpop.f32.mrf.mxu0
  %4119 = vmatprep.mubr.f32.mxu0 0.0
  %4120 = vmatmul.mubr.f32.gmra.mxu0 %v4030
  %v4121 = vpop.f32.mrf.mxu0
  %v4122 = vadd.f32 0.0, %v4121
  %v4123 = vpop.f32.mrf.mxu0
  %4124 = vdwg.mxu0
  %4125 = vrot.lane.b32.xlu0 %v1114, 64
  %v4126 = vpop.permute.xlu0 %4125
  %4127 = vrot.lane.b32.xlu0 %v1116, 64
  %v4128 = vpop.permute.xlu0 %4127
  %4129 = vrot.lane.b32.xlu0 %v1118, 64
  %v4130 = vpop.permute.xlu0 %4129
  %4131 = vrot.lane.b32.xlu0 %v1120, 64
  %v4132 = vpop.permute.xlu0 %4131
  %v4133 = vsel %vm1516, %v1114, 0
  %v4135 = vsel %vm1516, %v1116, 0
  %v4137 = vsel %vm1516, %v1118, 0
  %v4139 = vsel %vm1516, %v1120, 0
  %v4141 = vsel %vm1516, %v4126, 0
  %v4143 = vsel %vm1516, %v4128, 0
  %v4145 = vsel %vm1516, %v4130, 0
  %v4147 = vsel %vm1516, %v4132, 0
  %4149 = vmatprep.subr.mxu0 0.0
  %4150 = vmatpush1.xpose.msra.mxu0 0.0
  %4151 = vmatprep.subr.mxu0 0.0
  %4152 = vmatpush1.xpose.msra.mxu0 0.0
  %4153 = vmatprep.subr.mxu0 0.0
  %4154 = vmatpush1.xpose.msra.mxu0 0.0
  %4155 = vmatprep.subr.mxu0 0.0
  %4156 = vmatpush1.xpose.msra.mxu0 0.0
  %4157 = vmatprep.subr.mxu0 0.0
  %4158 = vmatpush1.xpose.msra.mxu0 0.0
  %4159 = vmatprep.subr.mxu0 0.0
  %4160 = vmatpush1.xpose.msra.mxu0 0.0
  %4161 = vmatprep.subr.mxu0 0.0
  %4162 = vmatpush1.xpose.msra.mxu0 0.0
  %4163 = vmatprep.subr.mxu0 0.0
  %4164 = vmatpush1.xpose.msra.mxu0 0.0
  %4165 = vmatprep.subr.mxu0 0.0
  %4166 = vmatpush1.xpose.msra.mxu0 0.0
  %4167 = vmatprep.subr.mxu0 0.0
  %4168 = vmatpush1.xpose.msra.mxu0 0.0
  %4169 = vmatprep.subr.mxu0 0.0
  %4170 = vmatpush1.xpose.msra.mxu0 0.0
  %4171 = vmatprep.subr.mxu0 0.0
  %4172 = vmatpush1.xpose.msra.mxu0 0.0
  %4173 = vmatprep.subr.mxu0 0.0
  %4174 = vmatpush1.xpose.msra.mxu0 %v4147
  %4175 = vmatprep.subr.mxu0 0.0
  %4176 = vmatpush1.xpose.msra.mxu0 %v4145
  %4177 = vmatprep.subr.mxu0 0.0
  %4178 = vmatpush1.xpose.msra.mxu0 %v4143
  %4179 = vmatprep.subr.mxu0 0.0
  %4180 = vmatpush1.xpose.msra.mxu0 %v4141
  %4181 = vmatprep.subr.mxu0 0.0
  %4182 = vmatpush2.xpose.msra.mxu0 0.0
  %4183 = vmatprep.subr.mxu0 0.0
  %4184 = vmatpush2.xpose.msra.mxu0 0.0
  %4185 = vmatprep.subr.mxu0 0.0
  %4186 = vmatpush2.xpose.msra.mxu0 0.0
  %4187 = vmatprep.subr.mxu0 0.0
  %4188 = vmatpush2.xpose.msra.mxu0 0.0
  %4189 = vmatprep.subr.mxu0 0.0
  %4190 = vmatpush2.xpose.msra.mxu0 0.0
  %4191 = vmatprep.subr.mxu0 0.0
  %4192 = vmatpush2.xpose.msra.mxu0 0.0
  %4193 = vmatprep.subr.mxu0 0.0
  %4194 = vmatpush2.xpose.msra.mxu0 0.0
  %4195 = vmatprep.subr.mxu0 0.0
  %4196 = vmatpush2.xpose.msra.mxu0 0.0
  %4197 = vmatprep.subr.mxu0 0.0
  %4198 = vmatpush2.xpose.msra.mxu0 0.0
  %4199 = vmatprep.subr.mxu0 0.0
  %4200 = vmatpush2.xpose.msra.mxu0 0.0
  %4201 = vmatprep.subr.mxu0 0.0
  %4202 = vmatpush2.xpose.msra.mxu0 0.0
  %4203 = vmatprep.subr.mxu0 0.0
  %4204 = vmatpush2.xpose.msra.mxu0 0.0
  %4205 = vmatprep.subr.mxu0 0.0
  %4206 = vmatpush2.xpose.msra.mxu0 0.0
  %4207 = vmatprep.subr.mxu0 0.0
  %4208 = vmatpush2.xpose.msra.mxu0 0.0
  %4209 = vmatprep.subr.mxu0 0.0
  %4210 = vmatpush2.xpose.msra.mxu0 0.0
  %4211 = vmatprep.subr.mxu0 0.0
  %4212 = vmatpush2.xpose.msra.mxu0 0.0
  %4213 = vmatprep.mubr.f32.mxu0 0.0
  %4214 = vmatmul.mubr.f32.gmra.mxu0 %v4133
  %v4215 = vpop.f32.mrf.mxu0
  %v4216 = vadd.f32 0.0, %v4215
  %v4217 = vpop.f32.mrf.mxu0
  %4218 = vmatprep.mubr.f32.mxu0 0.0
  %4219 = vmatmul.mubr.f32.gmra.mxu0 %v4135
  %v4220 = vpop.f32.mrf.mxu0
  %v4221 = vadd.f32 0.0, %v4220
  %v4222 = vpop.f32.mrf.mxu0
  %4223 = vmatprep.mubr.f32.mxu0 0.0
  %4224 = vmatmul.mubr.f32.gmra.mxu0 %v4137
  %v4225 = vpop.f32.mrf.mxu0
  %v4226 = vadd.f32 0.0, %v4225
  %v4227 = vpop.f32.mrf.mxu0
  %4228 = vmatprep.mubr.f32.mxu0 0.0
  %4229 = vmatmul.mubr.f32.gmra.mxu0 %v4139
  %v4230 = vpop.f32.mrf.mxu0
  %v4231 = vadd.f32 0.0, %v4230
  %v4232 = vpop.f32.mrf.mxu0
  %4233 = vdwg.mxu0
  %4234 = vrot.lane.b32.xlu0 %v1122, 64
  %v4235 = vpop.permute.xlu0 %4234
  %4236 = vrot.lane.b32.xlu0 %v1124, 64
  %v4237 = vpop.permute.xlu0 %4236
  %4238 = vrot.lane.b32.xlu0 %v1126, 64
  %v4239 = vpop.permute.xlu0 %4238
  %4240 = vrot.lane.b32.xlu0 %v1128, 64
  %v4241 = vpop.permute.xlu0 %4240
  %v4242 = vsel %vm1516, %v1122, 0
  %v4244 = vsel %vm1516, %v1124, 0
  %v4246 = vsel %vm1516, %v1126, 0
  %v4248 = vsel %vm1516, %v1128, 0
  %v4250 = vsel %vm1516, %v4235, 0
  %v4252 = vsel %vm1516, %v4237, 0
  %v4254 = vsel %vm1516, %v4239, 0
  %v4256 = vsel %vm1516, %v4241, 0
  %4258 = vmatprep.subr.mxu0 0.0
  %4259 = vmatpush1.xpose.msra.mxu0 0.0
  %4260 = vmatprep.subr.mxu0 0.0
  %4261 = vmatpush1.xpose.msra.mxu0 0.0
  %4262 = vmatprep.subr.mxu0 0.0
  %4263 = vmatpush1.xpose.msra.mxu0 0.0
  %4264 = vmatprep.subr.mxu0 0.0
  %4265 = vmatpush1.xpose.msra.mxu0 0.0
  %4266 = vmatprep.subr.mxu0 0.0
  %4267 = vmatpush1.xpose.msra.mxu0 0.0
  %4268 = vmatprep.subr.mxu0 0.0
  %4269 = vmatpush1.xpose.msra.mxu0 0.0
  %4270 = vmatprep.subr.mxu0 0.0
  %4271 = vmatpush1.xpose.msra.mxu0 0.0
  %4272 = vmatprep.subr.mxu0 0.0
  %4273 = vmatpush1.xpose.msra.mxu0 0.0
  %4274 = vmatprep.subr.mxu0 0.0
  %4275 = vmatpush1.xpose.msra.mxu0 0.0
  %4276 = vmatprep.subr.mxu0 0.0
  %4277 = vmatpush1.xpose.msra.mxu0 0.0
  %4278 = vmatprep.subr.mxu0 0.0
  %4279 = vmatpush1.xpose.msra.mxu0 0.0
  %4280 = vmatprep.subr.mxu0 0.0
  %4281 = vmatpush1.xpose.msra.mxu0 0.0
  %4282 = vmatprep.subr.mxu0 0.0
  %4283 = vmatpush1.xpose.msra.mxu0 %v4256
  %4284 = vmatprep.subr.mxu0 0.0
  %4285 = vmatpush1.xpose.msra.mxu0 %v4254
  %4286 = vmatprep.subr.mxu0 0.0
  %4287 = vmatpush1.xpose.msra.mxu0 %v4252
  %4288 = vmatprep.subr.mxu0 0.0
  %4289 = vmatpush1.xpose.msra.mxu0 %v4250
  %4290 = vmatprep.subr.mxu0 0.0
  %4291 = vmatpush2.xpose.msra.mxu0 0.0
  %4292 = vmatprep.subr.mxu0 0.0
  %4293 = vmatpush2.xpose.msra.mxu0 0.0
  %4294 = vmatprep.subr.mxu0 0.0
  %4295 = vmatpush2.xpose.msra.mxu0 0.0
  %4296 = vmatprep.subr.mxu0 0.0
  %4297 = vmatpush2.xpose.msra.mxu0 0.0
  %4298 = vmatprep.subr.mxu0 0.0
  %4299 = vmatpush2.xpose.msra.mxu0 0.0
  %4300 = vmatprep.subr.mxu0 0.0
  %4301 = vmatpush2.xpose.msra.mxu0 0.0
  %4302 = vmatprep.subr.mxu0 0.0
  %4303 = vmatpush2.xpose.msra.mxu0 0.0
  %4304 = vmatprep.subr.mxu0 0.0
  %4305 = vmatpush2.xpose.msra.mxu0 0.0
  %4306 = vmatprep.subr.mxu0 0.0
  %4307 = vmatpush2.xpose.msra.mxu0 0.0
  %4308 = vmatprep.subr.mxu0 0.0
  %4309 = vmatpush2.xpose.msra.mxu0 0.0
  %4310 = vmatprep.subr.mxu0 0.0
  %4311 = vmatpush2.xpose.msra.mxu0 0.0
  %4312 = vmatprep.subr.mxu0 0.0
  %4313 = vmatpush2.xpose.msra.mxu0 0.0
  %4314 = vmatprep.subr.mxu0 0.0
  %4315 = vmatpush2.xpose.msra.mxu0 0.0
  %4316 = vmatprep.subr.mxu0 0.0
  %4317 = vmatpush2.xpose.msra.mxu0 0.0
  %4318 = vmatprep.subr.mxu0 0.0
  %4319 = vmatpush2.xpose.msra.mxu0 0.0
  %4320 = vmatprep.subr.mxu0 0.0
  %4321 = vmatpush2.xpose.msra.mxu0 0.0
  %4322 = vmatprep.mubr.f32.mxu0 0.0
  %4323 = vmatmul.mubr.f32.gmra.mxu0 %v4242
  %v4324 = vpop.f32.mrf.mxu0
  %v4325 = vadd.f32 0.0, %v4324
  %v4326 = vpop.f32.mrf.mxu0
  %4327 = vmatprep.mubr.f32.mxu0 0.0
  %4328 = vmatmul.mubr.f32.gmra.mxu0 %v4244
  %v4329 = vpop.f32.mrf.mxu0
  %v4330 = vadd.f32 0.0, %v4329
  %v4331 = vpop.f32.mrf.mxu0
  %4332 = vmatprep.mubr.f32.mxu0 0.0
  %4333 = vmatmul.mubr.f32.gmra.mxu0 %v4246
  %v4334 = vpop.f32.mrf.mxu0
  %v4335 = vadd.f32 0.0, %v4334
  %v4336 = vpop.f32.mrf.mxu0
  %4337 = vmatprep.mubr.f32.mxu0 0.0
  %4338 = vmatmul.mubr.f32.gmra.mxu0 %v4248
  %v4339 = vpop.f32.mrf.mxu0
  %v4340 = vadd.f32 0.0, %v4339
  %v4341 = vpop.f32.mrf.mxu0
  %4342 = vdwg.mxu0
  %4343 = vrot.lane.b32.xlu0 %v1130, 64
  %v4344 = vpop.permute.xlu0 %4343
  %4345 = vrot.lane.b32.xlu0 %v1132, 64
  %v4346 = vpop.permute.xlu0 %4345
  %4347 = vrot.lane.b32.xlu0 %v1134, 64
  %v4348 = vpop.permute.xlu0 %4347
  %4349 = vrot.lane.b32.xlu0 %v1136, 64
  %v4350 = vpop.permute.xlu0 %4349
  %v4351 = vsel %vm1516, %v1130, 0
  %v4353 = vsel %vm1516, %v1132, 0
  %v4355 = vsel %vm1516, %v1134, 0
  %v4357 = vsel %vm1516, %v1136, 0
  %v4359 = vsel %vm1516, %v4344, 0
  %v4361 = vsel %vm1516, %v4346, 0
  %v4363 = vsel %vm1516, %v4348, 0
  %v4365 = vsel %vm1516, %v4350, 0
  %4367 = vmatprep.subr.mxu0 0.0
  %4368 = vmatpush1.xpose.msra.mxu0 0.0
  %4369 = vmatprep.subr.mxu0 0.0
  %4370 = vmatpush1.xpose.msra.mxu0 0.0
  %4371 = vmatprep.subr.mxu0 0.0
  %4372 = vmatpush1.xpose.msra.mxu0 0.0
  %4373 = vmatprep.subr.mxu0 0.0
  %4374 = vmatpush1.xpose.msra.mxu0 0.0
  %4375 = vmatprep.subr.mxu0 0.0
  %4376 = vmatpush1.xpose.msra.mxu0 0.0
  %4377 = vmatprep.subr.mxu0 0.0
  %4378 = vmatpush1.xpose.msra.mxu0 0.0
  %4379 = vmatprep.subr.mxu0 0.0
  %4380 = vmatpush1.xpose.msra.mxu0 0.0
  %4381 = vmatprep.subr.mxu0 0.0
  %4382 = vmatpush1.xpose.msra.mxu0 0.0
  %4383 = vmatprep.subr.mxu0 0.0
  %4384 = vmatpush1.xpose.msra.mxu0 0.0
  %4385 = vmatprep.subr.mxu0 0.0
  %4386 = vmatpush1.xpose.msra.mxu0 0.0
  %4387 = vmatprep.subr.mxu0 0.0
  %4388 = vmatpush1.xpose.msra.mxu0 0.0
  %4389 = vmatprep.subr.mxu0 0.0
  %4390 = vmatpush1.xpose.msra.mxu0 0.0
  %4391 = vmatprep.subr.mxu0 0.0
  %4392 = vmatpush1.xpose.msra.mxu0 %v4365
  %4393 = vmatprep.subr.mxu0 0.0
  %4394 = vmatpush1.xpose.msra.mxu0 %v4363
  %4395 = vmatprep.subr.mxu0 0.0
  %4396 = vmatpush1.xpose.msra.mxu0 %v4361
  %4397 = vmatprep.subr.mxu0 0.0
  %4398 = vmatpush1.xpose.msra.mxu0 %v4359
  %4399 = vmatprep.subr.mxu0 0.0
  %4400 = vmatpush2.xpose.msra.mxu0 0.0
  %4401 = vmatprep.subr.mxu0 0.0
  %4402 = vmatpush2.xpose.msra.mxu0 0.0
  %4403 = vmatprep.subr.mxu0 0.0
  %4404 = vmatpush2.xpose.msra.mxu0 0.0
  %4405 = vmatprep.subr.mxu0 0.0
  %4406 = vmatpush2.xpose.msra.mxu0 0.0
  %4407 = vmatprep.subr.mxu0 0.0
  %4408 = vmatpush2.xpose.msra.mxu0 0.0
  %4409 = vmatprep.subr.mxu0 0.0
  %4410 = vmatpush2.xpose.msra.mxu0 0.0
  %4411 = vmatprep.subr.mxu0 0.0
  %4412 = vmatpush2.xpose.msra.mxu0 0.0
  %4413 = vmatprep.subr.mxu0 0.0
  %4414 = vmatpush2.xpose.msra.mxu0 0.0
  %4415 = vmatprep.subr.mxu0 0.0
  %4416 = vmatpush2.xpose.msra.mxu0 0.0
  %4417 = vmatprep.subr.mxu0 0.0
  %4418 = vmatpush2.xpose.msra.mxu0 0.0
  %4419 = vmatprep.subr.mxu0 0.0
  %4420 = vmatpush2.xpose.msra.mxu0 0.0
  %4421 = vmatprep.subr.mxu0 0.0
  %4422 = vmatpush2.xpose.msra.mxu0 0.0
  %4423 = vmatprep.subr.mxu0 0.0
  %4424 = vmatpush2.xpose.msra.mxu0 0.0
  %4425 = vmatprep.subr.mxu0 0.0
  %4426 = vmatpush2.xpose.msra.mxu0 0.0
  %4427 = vmatprep.subr.mxu0 0.0
  %4428 = vmatpush2.xpose.msra.mxu0 0.0
  %4429 = vmatprep.subr.mxu0 0.0
  %4430 = vmatpush2.xpose.msra.mxu0 0.0
  %4431 = vmatprep.mubr.f32.mxu0 0.0
  %4432 = vmatmul.mubr.f32.gmra.mxu0 %v4351
  %v4433 = vpop.f32.mrf.mxu0
  %v4434 = vadd.f32 0.0, %v4433
  %v4435 = vpop.f32.mrf.mxu0
  %4436 = vmatprep.mubr.f32.mxu0 0.0
  %4437 = vmatmul.mubr.f32.gmra.mxu0 %v4353
  %v4438 = vpop.f32.mrf.mxu0
  %v4439 = vadd.f32 0.0, %v4438
  %v4440 = vpop.f32.mrf.mxu0
  %4441 = vmatprep.mubr.f32.mxu0 0.0
  %4442 = vmatmul.mubr.f32.gmra.mxu0 %v4355
  %v4443 = vpop.f32.mrf.mxu0
  %v4444 = vadd.f32 0.0, %v4443
  %v4445 = vpop.f32.mrf.mxu0
  %4446 = vmatprep.mubr.f32.mxu0 0.0
  %4447 = vmatmul.mubr.f32.gmra.mxu0 %v4357
  %v4448 = vpop.f32.mrf.mxu0
  %v4449 = vadd.f32 0.0, %v4448
  %v4450 = vpop.f32.mrf.mxu0
  %4451 = vdwg.mxu0
  %4452 = vrot.lane.b32.xlu0 %v1138, 64
  %v4453 = vpop.permute.xlu0 %4452
  %4454 = vrot.lane.b32.xlu0 %v1140, 64
  %v4455 = vpop.permute.xlu0 %4454
  %4456 = vrot.lane.b32.xlu0 %v1142, 64
  %v4457 = vpop.permute.xlu0 %4456
  %4458 = vrot.lane.b32.xlu0 %v1144, 64
  %v4459 = vpop.permute.xlu0 %4458
  %v4460 = vsel %vm1516, %v1138, 0
  %v4462 = vsel %vm1516, %v1140, 0
  %v4464 = vsel %vm1516, %v1142, 0
  %v4466 = vsel %vm1516, %v1144, 0
  %v4468 = vsel %vm1516, %v4453, 0
  %v4470 = vsel %vm1516, %v4455, 0
  %v4472 = vsel %vm1516, %v4457, 0
  %v4474 = vsel %vm1516, %v4459, 0
  %4476 = vmatprep.subr.mxu0 0.0
  %4477 = vmatpush1.xpose.msra.mxu0 0.0
  %4478 = vmatprep.subr.mxu0 0.0
  %4479 = vmatpush1.xpose.msra.mxu0 0.0
  %4480 = vmatprep.subr.mxu0 0.0
  %4481 = vmatpush1.xpose.msra.mxu0 0.0
  %4482 = vmatprep.subr.mxu0 0.0
  %4483 = vmatpush1.xpose.msra.mxu0 0.0
  %4484 = vmatprep.subr.mxu0 0.0
  %4485 = vmatpush1.xpose.msra.mxu0 0.0
  %4486 = vmatprep.subr.mxu0 0.0
  %4487 = vmatpush1.xpose.msra.mxu0 0.0
  %4488 = vmatprep.subr.mxu0 0.0
  %4489 = vmatpush1.xpose.msra.mxu0 0.0
  %4490 = vmatprep.subr.mxu0 0.0
  %4491 = vmatpush1.xpose.msra.mxu0 0.0
  %4492 = vmatprep.subr.mxu0 0.0
  %4493 = vmatpush1.xpose.msra.mxu0 0.0
  %4494 = vmatprep.subr.mxu0 0.0
  %4495 = vmatpush1.xpose.msra.mxu0 0.0
  %4496 = vmatprep.subr.mxu0 0.0
  %4497 = vmatpush1.xpose.msra.mxu0 0.0
  %4498 = vmatprep.subr.mxu0 0.0
  %4499 = vmatpush1.xpose.msra.mxu0 0.0
  %4500 = vmatprep.subr.mxu0 0.0
  %4501 = vmatpush1.xpose.msra.mxu0 %v4474
  %4502 = vmatprep.subr.mxu0 0.0
  %4503 = vmatpush1.xpose.msra.mxu0 %v4472
  %4504 = vmatprep.subr.mxu0 0.0
  %4505 = vmatpush1.xpose.msra.mxu0 %v4470
  %4506 = vmatprep.subr.mxu0 0.0
  %4507 = vmatpush1.xpose.msra.mxu0 %v4468
  %4508 = vmatprep.subr.mxu0 0.0
  %4509 = vmatpush2.xpose.msra.mxu0 0.0
  %4510 = vmatprep.subr.mxu0 0.0
  %4511 = vmatpush2.xpose.msra.mxu0 0.0
  %4512 = vmatprep.subr.mxu0 0.0
  %4513 = vmatpush2.xpose.msra.mxu0 0.0
  %4514 = vmatprep.subr.mxu0 0.0
  %4515 = vmatpush2.xpose.msra.mxu0 0.0
  %4516 = vmatprep.subr.mxu0 0.0
  %4517 = vmatpush2.xpose.msra.mxu0 0.0
  %4518 = vmatprep.subr.mxu0 0.0
  %4519 = vmatpush2.xpose.msra.mxu0 0.0
  %4520 = vmatprep.subr.mxu0 0.0
  %4521 = vmatpush2.xpose.msra.mxu0 0.0
  %4522 = vmatprep.subr.mxu0 0.0
  %4523 = vmatpush2.xpose.msra.mxu0 0.0
  %4524 = vmatprep.subr.mxu0 0.0
  %4525 = vmatpush2.xpose.msra.mxu0 0.0
  %4526 = vmatprep.subr.mxu0 0.0
  %4527 = vmatpush2.xpose.msra.mxu0 0.0
  %4528 = vmatprep.subr.mxu0 0.0
  %4529 = vmatpush2.xpose.msra.mxu0 0.0
  %4530 = vmatprep.subr.mxu0 0.0
  %4531 = vmatpush2.xpose.msra.mxu0 0.0
  %4532 = vmatprep.subr.mxu0 0.0
  %4533 = vmatpush2.xpose.msra.mxu0 0.0
  %4534 = vmatprep.subr.mxu0 0.0
  %4535 = vmatpush2.xpose.msra.mxu0 0.0
  %4536 = vmatprep.subr.mxu0 0.0
  %4537 = vmatpush2.xpose.msra.mxu0 0.0
  %4538 = vmatprep.subr.mxu0 0.0
  %4539 = vmatpush2.xpose.msra.mxu0 0.0
  %4540 = vmatprep.mubr.f32.mxu0 0.0
  %4541 = vmatmul.mubr.f32.gmra.mxu0 %v4460
  %v4542 = vpop.f32.mrf.mxu0
  %v4543 = vadd.f32 0.0, %v4542
  %v4544 = vpop.f32.mrf.mxu0
  %4545 = vmatprep.mubr.f32.mxu0 0.0
  %4546 = vmatmul.mubr.f32.gmra.mxu0 %v4462
  %v4547 = vpop.f32.mrf.mxu0
  %v4548 = vadd.f32 0.0, %v4547
  %v4549 = vpop.f32.mrf.mxu0
  %4550 = vmatprep.mubr.f32.mxu0 0.0
  %4551 = vmatmul.mubr.f32.gmra.mxu0 %v4464
  %v4552 = vpop.f32.mrf.mxu0
  %v4553 = vadd.f32 0.0, %v4552
  %v4554 = vpop.f32.mrf.mxu0
  %4555 = vmatprep.mubr.f32.mxu0 0.0
  %4556 = vmatmul.mubr.f32.gmra.mxu0 %v4466
  %v4557 = vpop.f32.mrf.mxu0
  %v4558 = vadd.f32 0.0, %v4557
  %v4559 = vpop.f32.mrf.mxu0
  %4560 = vdwg.mxu0
  %4561 = vrot.lane.b32.xlu0 %v1146, 64
  %v4562 = vpop.permute.xlu0 %4561
  %4563 = vrot.lane.b32.xlu0 %v1148, 64
  %v4564 = vpop.permute.xlu0 %4563
  %4565 = vrot.lane.b32.xlu0 %v1150, 64
  %v4566 = vpop.permute.xlu0 %4565
  %4567 = vrot.lane.b32.xlu0 %v1152, 64
  %v4568 = vpop.permute.xlu0 %4567
  %v4569 = vsel %vm1516, %v1146, 0
  %v4571 = vsel %vm1516, %v1148, 0
  %v4573 = vsel %vm1516, %v1150, 0
  %v4575 = vsel %vm1516, %v1152, 0
  %v4577 = vsel %vm1516, %v4562, 0
  %v4579 = vsel %vm1516, %v4564, 0
  %v4581 = vsel %vm1516, %v4566, 0
  %v4583 = vsel %vm1516, %v4568, 0
  %4585 = vmatprep.subr.mxu0 0.0
  %4586 = vmatpush1.xpose.msra.mxu0 0.0
  %4587 = vmatprep.subr.mxu0 0.0
  %4588 = vmatpush1.xpose.msra.mxu0 0.0
  %4589 = vmatprep.subr.mxu0 0.0
  %4590 = vmatpush1.xpose.msra.mxu0 0.0
  %4591 = vmatprep.subr.mxu0 0.0
  %4592 = vmatpush1.xpose.msra.mxu0 0.0
  %4593 = vmatprep.subr.mxu0 0.0
  %4594 = vmatpush1.xpose.msra.mxu0 0.0
  %4595 = vmatprep.subr.mxu0 0.0
  %4596 = vmatpush1.xpose.msra.mxu0 0.0
  %4597 = vmatprep.subr.mxu0 0.0
  %4598 = vmatpush1.xpose.msra.mxu0 0.0
  %4599 = vmatprep.subr.mxu0 0.0
  %4600 = vmatpush1.xpose.msra.mxu0 0.0
  %4601 = vmatprep.subr.mxu0 0.0
  %4602 = vmatpush1.xpose.msra.mxu0 0.0
  %4603 = vmatprep.subr.mxu0 0.0
  %4604 = vmatpush1.xpose.msra.mxu0 0.0
  %4605 = vmatprep.subr.mxu0 0.0
  %4606 = vmatpush1.xpose.msra.mxu0 0.0
  %4607 = vmatprep.subr.mxu0 0.0
  %4608 = vmatpush1.xpose.msra.mxu0 0.0
  %4609 = vmatprep.subr.mxu0 0.0
  %4610 = vmatpush1.xpose.msra.mxu0 %v4583
  %4611 = vmatprep.subr.mxu0 0.0
  %4612 = vmatpush1.xpose.msra.mxu0 %v4581
  %4613 = vmatprep.subr.mxu0 0.0
  %4614 = vmatpush1.xpose.msra.mxu0 %v4579
  %4615 = vmatprep.subr.mxu0 0.0
  %4616 = vmatpush1.xpose.msra.mxu0 %v4577
  %4617 = vmatprep.subr.mxu0 0.0
  %4618 = vmatpush2.xpose.msra.mxu0 0.0
  %4619 = vmatprep.subr.mxu0 0.0
  %4620 = vmatpush2.xpose.msra.mxu0 0.0
  %4621 = vmatprep.subr.mxu0 0.0
  %4622 = vmatpush2.xpose.msra.mxu0 0.0
  %4623 = vmatprep.subr.mxu0 0.0
  %4624 = vmatpush2.xpose.msra.mxu0 0.0
  %4625 = vmatprep.subr.mxu0 0.0
  %4626 = vmatpush2.xpose.msra.mxu0 0.0
  %4627 = vmatprep.subr.mxu0 0.0
  %4628 = vmatpush2.xpose.msra.mxu0 0.0
  %4629 = vmatprep.subr.mxu0 0.0
  %4630 = vmatpush2.xpose.msra.mxu0 0.0
  %4631 = vmatprep.subr.mxu0 0.0
  %4632 = vmatpush2.xpose.msra.mxu0 0.0
  %4633 = vmatprep.subr.mxu0 0.0
  %4634 = vmatpush2.xpose.msra.mxu0 0.0
  %4635 = vmatprep.subr.mxu0 0.0
  %4636 = vmatpush2.xpose.msra.mxu0 0.0
  %4637 = vmatprep.subr.mxu0 0.0
  %4638 = vmatpush2.xpose.msra.mxu0 0.0
  %4639 = vmatprep.subr.mxu0 0.0
  %4640 = vmatpush2.xpose.msra.mxu0 0.0
  %4641 = vmatprep.subr.mxu0 0.0
  %4642 = vmatpush2.xpose.msra.mxu0 0.0
  %4643 = vmatprep.subr.mxu0 0.0
  %4644 = vmatpush2.xpose.msra.mxu0 0.0
  %4645 = vmatprep.subr.mxu0 0.0
  %4646 = vmatpush2.xpose.msra.mxu0 0.0
  %4647 = vmatprep.subr.mxu0 0.0
  %4648 = vmatpush2.xpose.msra.mxu0 0.0
  %4649 = vmatprep.mubr.f32.mxu0 0.0
  %4650 = vmatmul.mubr.f32.gmra.mxu0 %v4569
  %v4651 = vpop.f32.mrf.mxu0
  %v4652 = vadd.f32 0.0, %v4651
  %v4653 = vpop.f32.mrf.mxu0
  %4654 = vmatprep.mubr.f32.mxu0 0.0
  %4655 = vmatmul.mubr.f32.gmra.mxu0 %v4571
  %v4656 = vpop.f32.mrf.mxu0
  %v4657 = vadd.f32 0.0, %v4656
  %v4658 = vpop.f32.mrf.mxu0
  %4659 = vmatprep.mubr.f32.mxu0 0.0
  %4660 = vmatmul.mubr.f32.gmra.mxu0 %v4573
  %v4661 = vpop.f32.mrf.mxu0
  %v4662 = vadd.f32 0.0, %v4661
  %v4663 = vpop.f32.mrf.mxu0
  %4664 = vmatprep.mubr.f32.mxu0 0.0
  %4665 = vmatmul.mubr.f32.gmra.mxu0 %v4575
  %v4666 = vpop.f32.mrf.mxu0
  %v4667 = vadd.f32 0.0, %v4666
  %v4668 = vpop.f32.mrf.mxu0
  %4669 = vdwg.mxu0
  %4670 = vrot.lane.b32.xlu0 %v1154, 64
  %v4671 = vpop.permute.xlu0 %4670
  %4672 = vrot.lane.b32.xlu0 %v1156, 64
  %v4673 = vpop.permute.xlu0 %4672
  %4674 = vrot.lane.b32.xlu0 %v1158, 64
  %v4675 = vpop.permute.xlu0 %4674
  %4676 = vrot.lane.b32.xlu0 %v1160, 64
  %v4677 = vpop.permute.xlu0 %4676
  %v4678 = vsel %vm1516, %v1154, 0
  %v4680 = vsel %vm1516, %v1156, 0
  %v4682 = vsel %vm1516, %v1158, 0
  %v4684 = vsel %vm1516, %v1160, 0
  %v4686 = vsel %vm1516, %v4671, 0
  %v4688 = vsel %vm1516, %v4673, 0
  %v4690 = vsel %vm1516, %v4675, 0
  %v4692 = vsel %vm1516, %v4677, 0
  %4694 = vmatprep.subr.mxu0 0.0
  %4695 = vmatpush1.xpose.msra.mxu0 0.0
  %4696 = vmatprep.subr.mxu0 0.0
  %4697 = vmatpush1.xpose.msra.mxu0 0.0
  %4698 = vmatprep.subr.mxu0 0.0
  %4699 = vmatpush1.xpose.msra.mxu0 0.0
  %4700 = vmatprep.subr.mxu0 0.0
  %4701 = vmatpush1.xpose.msra.mxu0 0.0
  %4702 = vmatprep.subr.mxu0 0.0
  %4703 = vmatpush1.xpose.msra.mxu0 0.0
  %4704 = vmatprep.subr.mxu0 0.0
  %4705 = vmatpush1.xpose.msra.mxu0 0.0
  %4706 = vmatprep.subr.mxu0 0.0
  %4707 = vmatpush1.xpose.msra.mxu0 0.0
  %4708 = vmatprep.subr.mxu0 0.0
  %4709 = vmatpush1.xpose.msra.mxu0 0.0
  %4710 = vmatprep.subr.mxu0 0.0
  %4711 = vmatpush1.xpose.msra.mxu0 0.0
  %4712 = vmatprep.subr.mxu0 0.0
  %4713 = vmatpush1.xpose.msra.mxu0 0.0
  %4714 = vmatprep.subr.mxu0 0.0
  %4715 = vmatpush1.xpose.msra.mxu0 0.0
  %4716 = vmatprep.subr.mxu0 0.0
  %4717 = vmatpush1.xpose.msra.mxu0 0.0
  %4718 = vmatprep.subr.mxu0 0.0
  %4719 = vmatpush1.xpose.msra.mxu0 %v4692
  %4720 = vmatprep.subr.mxu0 0.0
  %4721 = vmatpush1.xpose.msra.mxu0 %v4690
  %4722 = vmatprep.subr.mxu0 0.0
  %4723 = vmatpush1.xpose.msra.mxu0 %v4688
  %4724 = vmatprep.subr.mxu0 0.0
  %4725 = vmatpush1.xpose.msra.mxu0 %v4686
  %4726 = vmatprep.subr.mxu0 0.0
  %4727 = vmatpush2.xpose.msra.mxu0 0.0
  %4728 = vmatprep.subr.mxu0 0.0
  %4729 = vmatpush2.xpose.msra.mxu0 0.0
  %4730 = vmatprep.subr.mxu0 0.0
  %4731 = vmatpush2.xpose.msra.mxu0 0.0
  %4732 = vmatprep.subr.mxu0 0.0
  %4733 = vmatpush2.xpose.msra.mxu0 0.0
  %4734 = vmatprep.subr.mxu0 0.0
  %4735 = vmatpush2.xpose.msra.mxu0 0.0
  %4736 = vmatprep.subr.mxu0 0.0
  %4737 = vmatpush2.xpose.msra.mxu0 0.0
  %4738 = vmatprep.subr.mxu0 0.0
  %4739 = vmatpush2.xpose.msra.mxu0 0.0
  %4740 = vmatprep.subr.mxu0 0.0
  %4741 = vmatpush2.xpose.msra.mxu0 0.0
  %4742 = vmatprep.subr.mxu0 0.0
  %4743 = vmatpush2.xpose.msra.mxu0 0.0
  %4744 = vmatprep.subr.mxu0 0.0
  %4745 = vmatpush2.xpose.msra.mxu0 0.0
  %4746 = vmatprep.subr.mxu0 0.0
  %4747 = vmatpush2.xpose.msra.mxu0 0.0
  %4748 = vmatprep.subr.mxu0 0.0
  %4749 = vmatpush2.xpose.msra.mxu0 0.0
  %4750 = vmatprep.subr.mxu0 0.0
  %4751 = vmatpush2.xpose.msra.mxu0 0.0
  %4752 = vmatprep.subr.mxu0 0.0
  %4753 = vmatpush2.xpose.msra.mxu0 0.0
  %4754 = vmatprep.subr.mxu0 0.0
  %4755 = vmatpush2.xpose.msra.mxu0 0.0
  %4756 = vmatprep.subr.mxu0 0.0
  %4757 = vmatpush2.xpose.msra.mxu0 0.0
  %4758 = vmatprep.mubr.f32.mxu0 0.0
  %4759 = vmatmul.mubr.f32.gmra.mxu0 %v4678
  %v4760 = vpop.f32.mrf.mxu0
  %v4761 = vadd.f32 0.0, %v4760
  %v4762 = vpop.f32.mrf.mxu0
  %4763 = vmatprep.mubr.f32.mxu0 0.0
  %4764 = vmatmul.mubr.f32.gmra.mxu0 %v4680
  %v4765 = vpop.f32.mrf.mxu0
  %v4766 = vadd.f32 0.0, %v4765
  %v4767 = vpop.f32.mrf.mxu0
  %4768 = vmatprep.mubr.f32.mxu0 0.0
  %4769 = vmatmul.mubr.f32.gmra.mxu0 %v4682
  %v4770 = vpop.f32.mrf.mxu0
  %v4771 = vadd.f32 0.0, %v4770
  %v4772 = vpop.f32.mrf.mxu0
  %4773 = vmatprep.mubr.f32.mxu0 0.0
  %4774 = vmatmul.mubr.f32.gmra.mxu0 %v4684
  %v4775 = vpop.f32.mrf.mxu0
  %v4776 = vadd.f32 0.0, %v4775
  %v4777 = vpop.f32.mrf.mxu0
  %4778 = vdwg.mxu0
  %4779 = vrot.lane.b32.xlu0 %v1162, 64
  %v4780 = vpop.permute.xlu0 %4779
  %4781 = vrot.lane.b32.xlu0 %v1164, 64
  %v4782 = vpop.permute.xlu0 %4781
  %4783 = vrot.lane.b32.xlu0 %v1166, 64
  %v4784 = vpop.permute.xlu0 %4783
  %4785 = vrot.lane.b32.xlu0 %v1168, 64
  %v4786 = vpop.permute.xlu0 %4785
  %v4787 = vsel %vm1516, %v1162, 0
  %v4789 = vsel %vm1516, %v1164, 0
  %v4791 = vsel %vm1516, %v1166, 0
  %v4793 = vsel %vm1516, %v1168, 0
  %v4795 = vsel %vm1516, %v4780, 0
  %v4797 = vsel %vm1516, %v4782, 0
  %v4799 = vsel %vm1516, %v4784, 0
  %v4801 = vsel %vm1516, %v4786, 0
  %4803 = vmatprep.subr.mxu0 0.0
  %4804 = vmatpush1.xpose.msra.mxu0 0.0
  %4805 = vmatprep.subr.mxu0 0.0
  %4806 = vmatpush1.xpose.msra.mxu0 0.0
  %4807 = vmatprep.subr.mxu0 0.0
  %4808 = vmatpush1.xpose.msra.mxu0 0.0
  %4809 = vmatprep.subr.mxu0 0.0
  %4810 = vmatpush1.xpose.msra.mxu0 0.0
  %4811 = vmatprep.subr.mxu0 0.0
  %4812 = vmatpush1.xpose.msra.mxu0 0.0
  %4813 = vmatprep.subr.mxu0 0.0
  %4814 = vmatpush1.xpose.msra.mxu0 0.0
  %4815 = vmatprep.subr.mxu0 0.0
  %4816 = vmatpush1.xpose.msra.mxu0 0.0
  %4817 = vmatprep.subr.mxu0 0.0
  %4818 = vmatpush1.xpose.msra.mxu0 0.0
  %4819 = vmatprep.subr.mxu0 0.0
  %4820 = vmatpush1.xpose.msra.mxu0 0.0
  %4821 = vmatprep.subr.mxu0 0.0
  %4822 = vmatpush1.xpose.msra.mxu0 0.0
  %4823 = vmatprep.subr.mxu0 0.0
  %4824 = vmatpush1.xpose.msra.mxu0 0.0
  %4825 = vmatprep.subr.mxu0 0.0
  %4826 = vmatpush1.xpose.msra.mxu0 0.0
  %4827 = vmatprep.subr.mxu0 0.0
  %4828 = vmatpush1.xpose.msra.mxu0 %v4801
  %4829 = vmatprep.subr.mxu0 0.0
  %4830 = vmatpush1.xpose.msra.mxu0 %v4799
  %4831 = vmatprep.subr.mxu0 0.0
  %4832 = vmatpush1.xpose.msra.mxu0 %v4797
  %4833 = vmatprep.subr.mxu0 0.0
  %4834 = vmatpush1.xpose.msra.mxu0 %v4795
  %4835 = vmatprep.subr.mxu0 0.0
  %4836 = vmatpush2.xpose.msra.mxu0 0.0
  %4837 = vmatprep.subr.mxu0 0.0
  %4838 = vmatpush2.xpose.msra.mxu0 0.0
  %4839 = vmatprep.subr.mxu0 0.0
  %4840 = vmatpush2.xpose.msra.mxu0 0.0
  %4841 = vmatprep.subr.mxu0 0.0
  %4842 = vmatpush2.xpose.msra.mxu0 0.0
  %4843 = vmatprep.subr.mxu0 0.0
  %4844 = vmatpush2.xpose.msra.mxu0 0.0
  %4845 = vmatprep.subr.mxu0 0.0
  %4846 = vmatpush2.xpose.msra.mxu0 0.0
  %4847 = vmatprep.subr.mxu0 0.0
  %4848 = vmatpush2.xpose.msra.mxu0 0.0
  %4849 = vmatprep.subr.mxu0 0.0
  %4850 = vmatpush2.xpose.msra.mxu0 0.0
  %4851 = vmatprep.subr.mxu0 0.0
  %4852 = vmatpush2.xpose.msra.mxu0 0.0
  %4853 = vmatprep.subr.mxu0 0.0
  %4854 = vmatpush2.xpose.msra.mxu0 0.0
  %4855 = vmatprep.subr.mxu0 0.0
  %4856 = vmatpush2.xpose.msra.mxu0 0.0
  %4857 = vmatprep.subr.mxu0 0.0
  %4858 = vmatpush2.xpose.msra.mxu0 0.0
  %4859 = vmatprep.subr.mxu0 0.0
  %4860 = vmatpush2.xpose.msra.mxu0 0.0
  %4861 = vmatprep.subr.mxu0 0.0
  %4862 = vmatpush2.xpose.msra.mxu0 0.0
  %4863 = vmatprep.subr.mxu0 0.0
  %4864 = vmatpush2.xpose.msra.mxu0 0.0
  %4865 = vmatprep.subr.mxu0 0.0
  %4866 = vmatpush2.xpose.msra.mxu0 0.0
  %4867 = vmatprep.mubr.f32.mxu0 0.0
  %4868 = vmatmul.mubr.f32.gmra.mxu0 %v4787
  %v4869 = vpop.f32.mrf.mxu0
  %v4870 = vadd.f32 0.0, %v4869
  %v4871 = vpop.f32.mrf.mxu0
  %4872 = vmatprep.mubr.f32.mxu0 0.0
  %4873 = vmatmul.mubr.f32.gmra.mxu0 %v4789
  %v4874 = vpop.f32.mrf.mxu0
  %v4875 = vadd.f32 0.0, %v4874
  %v4876 = vpop.f32.mrf.mxu0
  %4877 = vmatprep.mubr.f32.mxu0 0.0
  %4878 = vmatmul.mubr.f32.gmra.mxu0 %v4791
  %v4879 = vpop.f32.mrf.mxu0
  %v4880 = vadd.f32 0.0, %v4879
  %v4881 = vpop.f32.mrf.mxu0
  %4882 = vmatprep.mubr.f32.mxu0 0.0
  %4883 = vmatmul.mubr.f32.gmra.mxu0 %v4793
  %v4884 = vpop.f32.mrf.mxu0
  %v4885 = vadd.f32 0.0, %v4884
  %v4886 = vpop.f32.mrf.mxu0
  %4887 = vdwg.mxu0
  %4888 = vrot.lane.b32.xlu0 %v1170, 64
  %v4889 = vpop.permute.xlu0 %4888
  %4890 = vrot.lane.b32.xlu0 %v1172, 64
  %v4891 = vpop.permute.xlu0 %4890
  %4892 = vrot.lane.b32.xlu0 %v1174, 64
  %v4893 = vpop.permute.xlu0 %4892
  %4894 = vrot.lane.b32.xlu0 %v1176, 64
  %v4895 = vpop.permute.xlu0 %4894
  %v4896 = vsel %vm1516, %v1170, 0
  %v4898 = vsel %vm1516, %v1172, 0
  %v4900 = vsel %vm1516, %v1174, 0
  %v4902 = vsel %vm1516, %v1176, 0
  %v4904 = vsel %vm1516, %v4889, 0
  %v4906 = vsel %vm1516, %v4891, 0
  %v4908 = vsel %vm1516, %v4893, 0
  %v4910 = vsel %vm1516, %v4895, 0
  %4912 = vmatprep.subr.mxu0 0.0
  %4913 = vmatpush1.xpose.msra.mxu0 0.0
  %4914 = vmatprep.subr.mxu0 0.0
  %4915 = vmatpush1.xpose.msra.mxu0 0.0
  %4916 = vmatprep.subr.mxu0 0.0
  %4917 = vmatpush1.xpose.msra.mxu0 0.0
  %4918 = vmatprep.subr.mxu0 0.0
  %4919 = vmatpush1.xpose.msra.mxu0 0.0
  %4920 = vmatprep.subr.mxu0 0.0
  %4921 = vmatpush1.xpose.msra.mxu0 0.0
  %4922 = vmatprep.subr.mxu0 0.0
  %4923 = vmatpush1.xpose.msra.mxu0 0.0
  %4924 = vmatprep.subr.mxu0 0.0
  %4925 = vmatpush1.xpose.msra.mxu0 0.0
  %4926 = vmatprep.subr.mxu0 0.0
  %4927 = vmatpush1.xpose.msra.mxu0 0.0
  %4928 = vmatprep.subr.mxu0 0.0
  %4929 = vmatpush1.xpose.msra.mxu0 0.0
  %4930 = vmatprep.subr.mxu0 0.0
  %4931 = vmatpush1.xpose.msra.mxu0 0.0
  %4932 = vmatprep.subr.mxu0 0.0
  %4933 = vmatpush1.xpose.msra.mxu0 0.0
  %4934 = vmatprep.subr.mxu0 0.0
  %4935 = vmatpush1.xpose.msra.mxu0 0.0
  %4936 = vmatprep.subr.mxu0 0.0
  %4937 = vmatpush1.xpose.msra.mxu0 %v4910
  %4938 = vmatprep.subr.mxu0 0.0
  %4939 = vmatpush1.xpose.msra.mxu0 %v4908
  %4940 = vmatprep.subr.mxu0 0.0
  %4941 = vmatpush1.xpose.msra.mxu0 %v4906
  %4942 = vmatprep.subr.mxu0 0.0
  %4943 = vmatpush1.xpose.msra.mxu0 %v4904
  %4944 = vmatprep.subr.mxu0 0.0
  %4945 = vmatpush2.xpose.msra.mxu0 0.0
  %4946 = vmatprep.subr.mxu0 0.0
  %4947 = vmatpush2.xpose.msra.mxu0 0.0
  %4948 = vmatprep.subr.mxu0 0.0
  %4949 = vmatpush2.xpose.msra.mxu0 0.0
  %4950 = vmatprep.subr.mxu0 0.0
  %4951 = vmatpush2.xpose.msra.mxu0 0.0
  %4952 = vmatprep.subr.mxu0 0.0
  %4953 = vmatpush2.xpose.msra.mxu0 0.0
  %4954 = vmatprep.subr.mxu0 0.0
  %4955 = vmatpush2.xpose.msra.mxu0 0.0
  %4956 = vmatprep.subr.mxu0 0.0
  %4957 = vmatpush2.xpose.msra.mxu0 0.0
  %4958 = vmatprep.subr.mxu0 0.0
  %4959 = vmatpush2.xpose.msra.mxu0 0.0
  %4960 = vmatprep.subr.mxu0 0.0
  %4961 = vmatpush2.xpose.msra.mxu0 0.0
  %4962 = vmatprep.subr.mxu0 0.0
  %4963 = vmatpush2.xpose.msra.mxu0 0.0
  %4964 = vmatprep.subr.mxu0 0.0
  %4965 = vmatpush2.xpose.msra.mxu0 0.0
  %4966 = vmatprep.subr.mxu0 0.0
  %4967 = vmatpush2.xpose.msra.mxu0 0.0
  %4968 = vmatprep.subr.mxu0 0.0
  %4969 = vmatpush2.xpose.msra.mxu0 0.0
  %4970 = vmatprep.subr.mxu0 0.0
  %4971 = vmatpush2.xpose.msra.mxu0 0.0
  %4972 = vmatprep.subr.mxu0 0.0
  %4973 = vmatpush2.xpose.msra.mxu0 0.0
  %4974 = vmatprep.subr.mxu0 0.0
  %4975 = vmatpush2.xpose.msra.mxu0 0.0
  %4976 = vmatprep.mubr.f32.mxu0 0.0
  %4977 = vmatmul.mubr.f32.gmra.mxu0 %v4896
  %v4978 = vpop.f32.mrf.mxu0
  %v4979 = vadd.f32 0.0, %v4978
  %v4980 = vpop.f32.mrf.mxu0
  %4981 = vmatprep.mubr.f32.mxu0 0.0
  %4982 = vmatmul.mubr.f32.gmra.mxu0 %v4898
  %v4983 = vpop.f32.mrf.mxu0
  %v4984 = vadd.f32 0.0, %v4983
  %v4985 = vpop.f32.mrf.mxu0
  %4986 = vmatprep.mubr.f32.mxu0 0.0
  %4987 = vmatmul.mubr.f32.gmra.mxu0 %v4900
  %v4988 = vpop.f32.mrf.mxu0
  %v4989 = vadd.f32 0.0, %v4988
  %v4990 = vpop.f32.mrf.mxu0
  %4991 = vmatprep.mubr.f32.mxu0 0.0
  %4992 = vmatmul.mubr.f32.gmra.mxu0 %v4902
  %v4993 = vpop.f32.mrf.mxu0
  %v4994 = vadd.f32 0.0, %v4993
  %v4995 = vpop.f32.mrf.mxu0
  %4996 = vdwg.mxu0
  %v4997 = vsel %vm1504, 1, 0
  %v4998 = vsel %vm1505, 1, 0
  %v4999 = vsel %vm1506, 1, 0
  %v5000 = vsel %vm1507, 1, 0
  %vm5001 = vcmp.eq.s32.totalorder %v4997, 1
  %vm5002 = vcmp.eq.s32.totalorder %v4998, 1
  %vm5003 = vcmp.eq.s32.totalorder %v4999, 1
  %vm5004 = vcmp.eq.s32.totalorder %v5000, 1
  %v5005 = vsel %vm5001, %v1600, -inf
  %v5006 = vsel %vm5002, %v1605, -inf
  %v5007 = vsel %vm5003, %v1610, -inf
  %v5008 = vsel %vm5004, %v1615, -inf
  %v5009 = vsel %vm5001, %v1709, -inf
  %v5010 = vsel %vm5002, %v1714, -inf
  %v5011 = vsel %vm5003, %v1719, -inf
  %v5012 = vsel %vm5004, %v1724, -inf
  %v5013 = vsel %vm5001, %v1818, -inf
  %v5014 = vsel %vm5002, %v1823, -inf
  %v5015 = vsel %vm5003, %v1828, -inf
  %v5016 = vsel %vm5004, %v1833, -inf
  %v5017 = vsel %vm5001, %v1927, -inf
  %v5018 = vsel %vm5002, %v1932, -inf
  %v5019 = vsel %vm5003, %v1937, -inf
  %v5020 = vsel %vm5004, %v1942, -inf
  %v5021 = vsel %vm5001, %v2036, -inf
  %v5022 = vsel %vm5002, %v2041, -inf
  %v5023 = vsel %vm5003, %v2046, -inf
  %v5024 = vsel %vm5004, %v2051, -inf
  %v5025 = vsel %vm5001, %v2145, -inf
  %v5026 = vsel %vm5002, %v2150, -inf
  %v5027 = vsel %vm5003, %v2155, -inf
  %v5028 = vsel %vm5004, %v2160, -inf
  %v5029 = vsel %vm5001, %v2254, -inf
  %v5030 = vsel %vm5002, %v2259, -inf
  %v5031 = vsel %vm5003, %v2264, -inf
  %v5032 = vsel %vm5004, %v2269, -inf
  %v5033 = vsel %vm5001, %v2363, -inf
  %v5034 = vsel %vm5002, %v2368, -inf
  %v5035 = vsel %vm5003, %v2373, -inf
  %v5036 = vsel %vm5004, %v2378, -inf
  %v5037 = vsel %vm5001, %v2472, -inf
  %v5038 = vsel %vm5002, %v2477, -inf
  %v5039 = vsel %vm5003, %v2482, -inf
  %v5040 = vsel %vm5004, %v2487, -inf
  %v5041 = vsel %vm5001, %v2581, -inf
  %v5042 = vsel %vm5002, %v2586, -inf
  %v5043 = vsel %vm5003, %v2591, -inf
  %v5044 = vsel %vm5004, %v2596, -inf
  %v5045 = vsel %vm5001, %v2690, -inf
  %v5046 = vsel %vm5002, %v2695, -inf
  %v5047 = vsel %vm5003, %v2700, -inf
  %v5048 = vsel %vm5004, %v2705, -inf
  %v5049 = vsel %vm5001, %v2799, -inf
  %v5050 = vsel %vm5002, %v2804, -inf
  %v5051 = vsel %vm5003, %v2809, -inf
  %v5052 = vsel %vm5004, %v2814, -inf
  %v5053 = vsel %vm5001, %v2908, -inf
  %v5054 = vsel %vm5002, %v2913, -inf
  %v5055 = vsel %vm5003, %v2918, -inf
  %v5056 = vsel %vm5004, %v2923, -inf
  %v5057 = vsel %vm5001, %v3017, -inf
  %v5058 = vsel %vm5002, %v3022, -inf
  %v5059 = vsel %vm5003, %v3027, -inf
  %v5060 = vsel %vm5004, %v3032, -inf
  %v5061 = vsel %vm5001, %v3126, -inf
  %v5062 = vsel %vm5002, %v3131, -inf
  %v5063 = vsel %vm5003, %v3136, -inf
  %v5064 = vsel %vm5004, %v3141, -inf
  %v5065 = vsel %vm5001, %v3235, -inf
  %v5066 = vsel %vm5002, %v3240, -inf
  %v5067 = vsel %vm5003, %v3245, -inf
  %v5068 = vsel %vm5004, %v3250, -inf
  %v5069 = vsel %vm5001, %v3344, -inf
  %v5070 = vsel %vm5002, %v3349, -inf
  %v5071 = vsel %vm5003, %v3354, -inf
  %v5072 = vsel %vm5004, %v3359, -inf
  %v5073 = vsel %vm5001, %v3453, -inf
  %v5074 = vsel %vm5002, %v3458, -inf
  %v5075 = vsel %vm5003, %v3463, -inf
  %v5076 = vsel %vm5004, %v3468, -inf
  %v5077 = vsel %vm5001, %v3562, -inf
  %v5078 = vsel %vm5002, %v3567, -inf
  %v5079 = vsel %vm5003, %v3572, -inf
  %v5080 = vsel %vm5004, %v3577, -inf
  %v5081 = vsel %vm5001, %v3671, -inf
  %v5082 = vsel %vm5002, %v3676, -inf
  %v5083 = vsel %vm5003, %v3681, -inf
  %v5084 = vsel %vm5004, %v3686, -inf
  %v5085 = vsel %vm5001, %v3780, -inf
  %v5086 = vsel %vm5002, %v3785, -inf
  %v5087 = vsel %vm5003, %v3790, -inf
  %v5088 = vsel %vm5004, %v3795, -inf
  %v5089 = vsel %vm5001, %v3889, -inf
  %v5090 = vsel %vm5002, %v3894, -inf
  %v5091 = vsel %vm5003, %v3899, -inf
  %v5092 = vsel %vm5004, %v3904, -inf
  %v5093 = vsel %vm5001, %v3998, -inf
  %v5094 = vsel %vm5002, %v4003, -inf
  %v5095 = vsel %vm5003, %v4008, -inf
  %v5096 = vsel %vm5004, %v4013, -inf
  %v5097 = vsel %vm5001, %v4107, -inf
  %v5098 = vsel %vm5002, %v4112, -inf
  %v5099 = vsel %vm5003, %v4117, -inf
  %v5100 = vsel %vm5004, %v4122, -inf
  %v5101 = vsel %vm5001, %v4216, -inf
  %v5102 = vsel %vm5002, %v4221, -inf
  %v5103 = vsel %vm5003, %v4226, -inf
  %v5104 = vsel %vm5004, %v4231, -inf
  %v5105 = vsel %vm5001, %v4325, -inf
  %v5106 = vsel %vm5002, %v4330, -inf
  %v5107 = vsel %vm5003, %v4335, -inf
  %v5108 = vsel %vm5004, %v4340, -inf
  %v5109 = vsel %vm5001, %v4434, -inf
  %v5110 = vsel %vm5002, %v4439, -inf
  %v5111 = vsel %vm5003, %v4444, -inf
  %v5112 = vsel %vm5004, %v4449, -inf
  %v5113 = vsel %vm5001, %v4543, -inf
  %v5114 = vsel %vm5002, %v4548, -inf
  %v5115 = vsel %vm5003, %v4553, -inf
  %v5116 = vsel %vm5004, %v4558, -inf
  %v5117 = vsel %vm5001, %v4652, -inf
  %v5118 = vsel %vm5002, %v4657, -inf
  %v5119 = vsel %vm5003, %v4662, -inf
  %v5120 = vsel %vm5004, %v4667, -inf
  %v5121 = vsel %vm5001, %v4761, -inf
  %v5122 = vsel %vm5002, %v4766, -inf
  %v5123 = vsel %vm5003, %v4771, -inf
  %v5124 = vsel %vm5004, %v4776, -inf
  %v5125 = vsel %vm5001, %v4870, -inf
  %v5126 = vsel %vm5002, %v4875, -inf
  %v5127 = vsel %vm5003, %v4880, -inf
  %v5128 = vsel %vm5004, %v4885, -inf
  %v5129 = vsel %vm5001, %v4979, -inf
  %v5130 = vsel %vm5002, %v4984, -inf
  %v5131 = vsel %vm5003, %v4989, -inf
  %v5132 = vsel %vm5004, %v4994, -inf
  %vm5133 = vcmask 261120
  %v5134 = vsel %vm5133, %v5005, -inf
  %5135 = vmax.xlane.f32.xlu0 %v5134
  %v5136 = vpop.xlane.xlu0 %5135
  %v5137 = vsel %vm5133, %v5006, -inf
  %5138 = vmax.xlane.f32.xlu0 %v5137
  %v5139 = vpop.xlane.xlu0 %5138
  %v5140 = vsel %vm5133, %v5007, -inf
  %5141 = vmax.xlane.f32.xlu0 %v5140
  %v5142 = vpop.xlane.xlu0 %5141
  %v5143 = vsel %vm5133, %v5008, -inf
  %5144 = vmax.xlane.f32.xlu0 %v5143
  %v5145 = vpop.xlane.xlu0 %5144
  %v5146 = vsel %vm5133, %v5009, -inf
  %5147 = vmax.xlane.f32.xlu0 %v5146
  %v5148 = vpop.xlane.xlu0 %5147
  %v5149 = vsel %vm5133, %v5010, -inf
  %5150 = vmax.xlane.f32.xlu0 %v5149
  %v5151 = vpop.xlane.xlu0 %5150
  %v5152 = vsel %vm5133, %v5011, -inf
  %5153 = vmax.xlane.f32.xlu0 %v5152
  %v5154 = vpop.xlane.xlu0 %5153
  %v5155 = vsel %vm5133, %v5012, -inf
  %5156 = vmax.xlane.f32.xlu0 %v5155
  %v5157 = vpop.xlane.xlu0 %5156
  %v5158 = vsel %vm5133, %v5013, -inf
  %5159 = vmax.xlane.f32.xlu0 %v5158
  %v5160 = vpop.xlane.xlu0 %5159
  %v5161 = vsel %vm5133, %v5014, -inf
  %5162 = vmax.xlane.f32.xlu0 %v5161
  %v5163 = vpop.xlane.xlu0 %5162
  %v5164 = vsel %vm5133, %v5015, -inf
  %5165 = vmax.xlane.f32.xlu0 %v5164
  %v5166 = vpop.xlane.xlu0 %5165
  %v5167 = vsel %vm5133, %v5016, -inf
  %5168 = vmax.xlane.f32.xlu0 %v5167
  %v5169 = vpop.xlane.xlu0 %5168
  %v5170 = vsel %vm5133, %v5017, -inf
  %5171 = vmax.xlane.f32.xlu0 %v5170
  %v5172 = vpop.xlane.xlu0 %5171
  %v5173 = vsel %vm5133, %v5018, -inf
  %5174 = vmax.xlane.f32.xlu0 %v5173
  %v5175 = vpop.xlane.xlu0 %5174
  %v5176 = vsel %vm5133, %v5019, -inf
  %5177 = vmax.xlane.f32.xlu0 %v5176
  %v5178 = vpop.xlane.xlu0 %5177
  %v5179 = vsel %vm5133, %v5020, -inf
  %5180 = vmax.xlane.f32.xlu0 %v5179
  %v5181 = vpop.xlane.xlu0 %5180
  %v5182 = vsel %vm5133, %v5021, -inf
  %5183 = vmax.xlane.f32.xlu0 %v5182
  %v5184 = vpop.xlane.xlu0 %5183
  %v5185 = vsel %vm5133, %v5022, -inf
  %5186 = vmax.xlane.f32.xlu0 %v5185
  %v5187 = vpop.xlane.xlu0 %5186
  %v5188 = vsel %vm5133, %v5023, -inf
  %5189 = vmax.xlane.f32.xlu0 %v5188
  %v5190 = vpop.xlane.xlu0 %5189
  %v5191 = vsel %vm5133, %v5024, -inf
  %5192 = vmax.xlane.f32.xlu0 %v5191
  %v5193 = vpop.xlane.xlu0 %5192
  %v5194 = vsel %vm5133, %v5025, -inf
  %5195 = vmax.xlane.f32.xlu0 %v5194
  %v5196 = vpop.xlane.xlu0 %5195
  %v5197 = vsel %vm5133, %v5026, -inf
  %5198 = vmax.xlane.f32.xlu0 %v5197
  %v5199 = vpop.xlane.xlu0 %5198
  %v5200 = vsel %vm5133, %v5027, -inf
  %5201 = vmax.xlane.f32.xlu0 %v5200
  %v5202 = vpop.xlane.xlu0 %5201
  %v5203 = vsel %vm5133, %v5028, -inf
  %5204 = vmax.xlane.f32.xlu0 %v5203
  %v5205 = vpop.xlane.xlu0 %5204
  %v5206 = vsel %vm5133, %v5029, -inf
  %5207 = vmax.xlane.f32.xlu0 %v5206
  %v5208 = vpop.xlane.xlu0 %5207
  %v5209 = vsel %vm5133, %v5030, -inf
  %5210 = vmax.xlane.f32.xlu0 %v5209
  %v5211 = vpop.xlane.xlu0 %5210
  %v5212 = vsel %vm5133, %v5031, -inf
  %5213 = vmax.xlane.f32.xlu0 %v5212
  %v5214 = vpop.xlane.xlu0 %5213
  %v5215 = vsel %vm5133, %v5032, -inf
  %5216 = vmax.xlane.f32.xlu0 %v5215
  %v5217 = vpop.xlane.xlu0 %5216
  %v5218 = vsel %vm5133, %v5033, -inf
  %5219 = vmax.xlane.f32.xlu0 %v5218
  %v5220 = vpop.xlane.xlu0 %5219
  %v5221 = vsel %vm5133, %v5034, -inf
  %5222 = vmax.xlane.f32.xlu0 %v5221
  %v5223 = vpop.xlane.xlu0 %5222
  %v5224 = vsel %vm5133, %v5035, -inf
  %5225 = vmax.xlane.f32.xlu0 %v5224
  %v5226 = vpop.xlane.xlu0 %5225
  %v5227 = vsel %vm5133, %v5036, -inf
  %5228 = vmax.xlane.f32.xlu0 %v5227
  %v5229 = vpop.xlane.xlu0 %5228
  %v5230 = vsel %vm5133, %v5037, -inf
  %5231 = vmax.xlane.f32.xlu0 %v5230
  %v5232 = vpop.xlane.xlu0 %5231
  %v5233 = vsel %vm5133, %v5038, -inf
  %5234 = vmax.xlane.f32.xlu0 %v5233
  %v5235 = vpop.xlane.xlu0 %5234
  %v5236 = vsel %vm5133, %v5039, -inf
  %5237 = vmax.xlane.f32.xlu0 %v5236
  %v5238 = vpop.xlane.xlu0 %5237
  %v5239 = vsel %vm5133, %v5040, -inf
  %5240 = vmax.xlane.f32.xlu0 %v5239
  %v5241 = vpop.xlane.xlu0 %5240
  %v5242 = vsel %vm5133, %v5041, -inf
  %5243 = vmax.xlane.f32.xlu0 %v5242
  %v5244 = vpop.xlane.xlu0 %5243
  %v5245 = vsel %vm5133, %v5042, -inf
  %5246 = vmax.xlane.f32.xlu0 %v5245
  %v5247 = vpop.xlane.xlu0 %5246
  %v5248 = vsel %vm5133, %v5043, -inf
  %5249 = vmax.xlane.f32.xlu0 %v5248
  %v5250 = vpop.xlane.xlu0 %5249
  %v5251 = vsel %vm5133, %v5044, -inf
  %5252 = vmax.xlane.f32.xlu0 %v5251
  %v5253 = vpop.xlane.xlu0 %5252
  %v5254 = vsel %vm5133, %v5045, -inf
  %5255 = vmax.xlane.f32.xlu0 %v5254
  %v5256 = vpop.xlane.xlu0 %5255
  %v5257 = vsel %vm5133, %v5046, -inf
  %5258 = vmax.xlane.f32.xlu0 %v5257
  %v5259 = vpop.xlane.xlu0 %5258
  %v5260 = vsel %vm5133, %v5047, -inf
  %5261 = vmax.xlane.f32.xlu0 %v5260
  %v5262 = vpop.xlane.xlu0 %5261
  %v5263 = vsel %vm5133, %v5048, -inf
  %5264 = vmax.xlane.f32.xlu0 %v5263
  %v5265 = vpop.xlane.xlu0 %5264
  %v5266 = vsel %vm5133, %v5049, -inf
  %5267 = vmax.xlane.f32.xlu0 %v5266
  %v5268 = vpop.xlane.xlu0 %5267
  %v5269 = vsel %vm5133, %v5050, -inf
  %5270 = vmax.xlane.f32.xlu0 %v5269
  %v5271 = vpop.xlane.xlu0 %5270
  %v5272 = vsel %vm5133, %v5051, -inf
  %5273 = vmax.xlane.f32.xlu0 %v5272
  %v5274 = vpop.xlane.xlu0 %5273
  %v5275 = vsel %vm5133, %v5052, -inf
  %5276 = vmax.xlane.f32.xlu0 %v5275
  %v5277 = vpop.xlane.xlu0 %5276
  %v5278 = vsel %vm5133, %v5053, -inf
  %5279 = vmax.xlane.f32.xlu0 %v5278
  %v5280 = vpop.xlane.xlu0 %5279
  %v5281 = vsel %vm5133, %v5054, -inf
  %5282 = vmax.xlane.f32.xlu0 %v5281
  %v5283 = vpop.xlane.xlu0 %5282
  %v5284 = vsel %vm5133, %v5055, -inf
  %5285 = vmax.xlane.f32.xlu0 %v5284
  %v5286 = vpop.xlane.xlu0 %5285
  %v5287 = vsel %vm5133, %v5056, -inf
  %5288 = vmax.xlane.f32.xlu0 %v5287
  %v5289 = vpop.xlane.xlu0 %5288
  %v5290 = vsel %vm5133, %v5057, -inf
  %5291 = vmax.xlane.f32.xlu0 %v5290
  %v5292 = vpop.xlane.xlu0 %5291
  %v5293 = vsel %vm5133, %v5058, -inf
  %5294 = vmax.xlane.f32.xlu0 %v5293
  %v5295 = vpop.xlane.xlu0 %5294
  %v5296 = vsel %vm5133, %v5059, -inf
  %5297 = vmax.xlane.f32.xlu0 %v5296
  %v5298 = vpop.xlane.xlu0 %5297
  %v5299 = vsel %vm5133, %v5060, -inf
  %5300 = vmax.xlane.f32.xlu0 %v5299
  %v5301 = vpop.xlane.xlu0 %5300
  %v5302 = vsel %vm5133, %v5061, -inf
  %5303 = vmax.xlane.f32.xlu0 %v5302
  %v5304 = vpop.xlane.xlu0 %5303
  %v5305 = vsel %vm5133, %v5062, -inf
  %5306 = vmax.xlane.f32.xlu0 %v5305
  %v5307 = vpop.xlane.xlu0 %5306
  %v5308 = vsel %vm5133, %v5063, -inf
  %5309 = vmax.xlane.f32.xlu0 %v5308
  %v5310 = vpop.xlane.xlu0 %5309
  %v5311 = vsel %vm5133, %v5064, -inf
  %5312 = vmax.xlane.f32.xlu0 %v5311
  %v5313 = vpop.xlane.xlu0 %5312
  %v5314 = vsel %vm5133, %v5065, -inf
  %5315 = vmax.xlane.f32.xlu0 %v5314
  %v5316 = vpop.xlane.xlu0 %5315
  %v5317 = vsel %vm5133, %v5066, -inf
  %5318 = vmax.xlane.f32.xlu0 %v5317
  %v5319 = vpop.xlane.xlu0 %5318
  %v5320 = vsel %vm5133, %v5067, -inf
  %5321 = vmax.xlane.f32.xlu0 %v5320
  %v5322 = vpop.xlane.xlu0 %5321
  %v5323 = vsel %vm5133, %v5068, -inf
  %5324 = vmax.xlane.f32.xlu0 %v5323
  %v5325 = vpop.xlane.xlu0 %5324
  %v5326 = vsel %vm5133, %v5069, -inf
  %5327 = vmax.xlane.f32.xlu0 %v5326
  %v5328 = vpop.xlane.xlu0 %5327
  %v5329 = vsel %vm5133, %v5070, -inf
  %5330 = vmax.xlane.f32.xlu0 %v5329
  %v5331 = vpop.xlane.xlu0 %5330
  %v5332 = vsel %vm5133, %v5071, -inf
  %5333 = vmax.xlane.f32.xlu0 %v5332
  %v5334 = vpop.xlane.xlu0 %5333
  %v5335 = vsel %vm5133, %v5072, -inf
  %5336 = vmax.xlane.f32.xlu0 %v5335
  %v5337 = vpop.xlane.xlu0 %5336
  %v5338 = vsel %vm5133, %v5073, -inf
  %5339 = vmax.xlane.f32.xlu0 %v5338
  %v5340 = vpop.xlane.xlu0 %5339
  %v5341 = vsel %vm5133, %v5074, -inf
  %5342 = vmax.xlane.f32.xlu0 %v5341
  %v5343 = vpop.xlane.xlu0 %5342
  %v5344 = vsel %vm5133, %v5075, -inf
  %5345 = vmax.xlane.f32.xlu0 %v5344
  %v5346 = vpop.xlane.xlu0 %5345
  %v5347 = vsel %vm5133, %v5076, -inf
  %5348 = vmax.xlane.f32.xlu0 %v5347
  %v5349 = vpop.xlane.xlu0 %5348
  %v5350 = vsel %vm5133, %v5077, -inf
  %5351 = vmax.xlane.f32.xlu0 %v5350
  %v5352 = vpop.xlane.xlu0 %5351
  %v5353 = vsel %vm5133, %v5078, -inf
  %5354 = vmax.xlane.f32.xlu0 %v5353
  %v5355 = vpop.xlane.xlu0 %5354
  %v5356 = vsel %vm5133, %v5079, -inf
  %5357 = vmax.xlane.f32.xlu0 %v5356
  %v5358 = vpop.xlane.xlu0 %5357
  %v5359 = vsel %vm5133, %v5080, -inf
  %5360 = vmax.xlane.f32.xlu0 %v5359
  %v5361 = vpop.xlane.xlu0 %5360
  %v5362 = vsel %vm5133, %v5081, -inf
  %5363 = vmax.xlane.f32.xlu0 %v5362
  %v5364 = vpop.xlane.xlu0 %5363
  %v5365 = vsel %vm5133, %v5082, -inf
  %5366 = vmax.xlane.f32.xlu0 %v5365
  %v5367 = vpop.xlane.xlu0 %5366
  %v5368 = vsel %vm5133, %v5083, -inf
  %5369 = vmax.xlane.f32.xlu0 %v5368
  %v5370 = vpop.xlane.xlu0 %5369
  %v5371 = vsel %vm5133, %v5084, -inf
  %5372 = vmax.xlane.f32.xlu0 %v5371
  %v5373 = vpop.xlane.xlu0 %5372
  %v5374 = vsel %vm5133, %v5085, -inf
  %5375 = vmax.xlane.f32.xlu0 %v5374
  %v5376 = vpop.xlane.xlu0 %5375
  %v5377 = vsel %vm5133, %v5086, -inf
  %5378 = vmax.xlane.f32.xlu0 %v5377
  %v5379 = vpop.xlane.xlu0 %5378
  %v5380 = vsel %vm5133, %v5087, -inf
  %5381 = vmax.xlane.f32.xlu0 %v5380
  %v5382 = vpop.xlane.xlu0 %5381
  %v5383 = vsel %vm5133, %v5088, -inf
  %5384 = vmax.xlane.f32.xlu0 %v5383
  %v5385 = vpop.xlane.xlu0 %5384
  %v5386 = vsel %vm5133, %v5089, -inf
  %5387 = vmax.xlane.f32.xlu0 %v5386
  %v5388 = vpop.xlane.xlu0 %5387
  %v5389 = vsel %vm5133, %v5090, -inf
  %5390 = vmax.xlane.f32.xlu0 %v5389
  %v5391 = vpop.xlane.xlu0 %5390
  %v5392 = vsel %vm5133, %v5091, -inf
  %5393 = vmax.xlane.f32.xlu0 %v5392
  %v5394 = vpop.xlane.xlu0 %5393
  %v5395 = vsel %vm5133, %v5092, -inf
  %5396 = vmax.xlane.f32.xlu0 %v5395
  %v5397 = vpop.xlane.xlu0 %5396
  %v5398 = vsel %vm5133, %v5093, -inf
  %5399 = vmax.xlane.f32.xlu0 %v5398
  %v5400 = vpop.xlane.xlu0 %5399
  %v5401 = vsel %vm5133, %v5094, -inf
  %5402 = vmax.xlane.f32.xlu0 %v5401
  %v5403 = vpop.xlane.xlu0 %5402
  %v5404 = vsel %vm5133, %v5095, -inf
  %5405 = vmax.xlane.f32.xlu0 %v5404
  %v5406 = vpop.xlane.xlu0 %5405
  %v5407 = vsel %vm5133, %v5096, -inf
  %5408 = vmax.xlane.f32.xlu0 %v5407
  %v5409 = vpop.xlane.xlu0 %5408
  %v5410 = vsel %vm5133, %v5097, -inf
  %5411 = vmax.xlane.f32.xlu0 %v5410
  %v5412 = vpop.xlane.xlu0 %5411
  %v5413 = vsel %vm5133, %v5098, -inf
  %5414 = vmax.xlane.f32.xlu0 %v5413
  %v5415 = vpop.xlane.xlu0 %5414
  %v5416 = vsel %vm5133, %v5099, -inf
  %5417 = vmax.xlane.f32.xlu0 %v5416
  %v5418 = vpop.xlane.xlu0 %5417
  %v5419 = vsel %vm5133, %v5100, -inf
  %5420 = vmax.xlane.f32.xlu0 %v5419
  %v5421 = vpop.xlane.xlu0 %5420
  %v5422 = vsel %vm5133, %v5101, -inf
  %5423 = vmax.xlane.f32.xlu0 %v5422
  %v5424 = vpop.xlane.xlu0 %5423
  %v5425 = vsel %vm5133, %v5102, -inf
  %5426 = vmax.xlane.f32.xlu0 %v5425
  %v5427 = vpop.xlane.xlu0 %5426
  %v5428 = vsel %vm5133, %v5103, -inf
  %5429 = vmax.xlane.f32.xlu0 %v5428
  %v5430 = vpop.xlane.xlu0 %5429
  %v5431 = vsel %vm5133, %v5104, -inf
  %5432 = vmax.xlane.f32.xlu0 %v5431
  %v5433 = vpop.xlane.xlu0 %5432
  %v5434 = vsel %vm5133, %v5105, -inf
  %5435 = vmax.xlane.f32.xlu0 %v5434
  %v5436 = vpop.xlane.xlu0 %5435
  %v5437 = vsel %vm5133, %v5106, -inf
  %5438 = vmax.xlane.f32.xlu0 %v5437
  %v5439 = vpop.xlane.xlu0 %5438
  %v5440 = vsel %vm5133, %v5107, -inf
  %5441 = vmax.xlane.f32.xlu0 %v5440
  %v5442 = vpop.xlane.xlu0 %5441
  %v5443 = vsel %vm5133, %v5108, -inf
  %5444 = vmax.xlane.f32.xlu0 %v5443
  %v5445 = vpop.xlane.xlu0 %5444
  %v5446 = vsel %vm5133, %v5109, -inf
  %5447 = vmax.xlane.f32.xlu0 %v5446
  %v5448 = vpop.xlane.xlu0 %5447
  %v5449 = vsel %vm5133, %v5110, -inf
  %5450 = vmax.xlane.f32.xlu0 %v5449
  %v5451 = vpop.xlane.xlu0 %5450
  %v5452 = vsel %vm5133, %v5111, -inf
  %5453 = vmax.xlane.f32.xlu0 %v5452
  %v5454 = vpop.xlane.xlu0 %5453
  %v5455 = vsel %vm5133, %v5112, -inf
  %5456 = vmax.xlane.f32.xlu0 %v5455
  %v5457 = vpop.xlane.xlu0 %5456
  %v5458 = vsel %vm5133, %v5113, -inf
  %5459 = vmax.xlane.f32.xlu0 %v5458
  %v5460 = vpop.xlane.xlu0 %5459
  %v5461 = vsel %vm5133, %v5114, -inf
  %5462 = vmax.xlane.f32.xlu0 %v5461
  %v5463 = vpop.xlane.xlu0 %5462
  %v5464 = vsel %vm5133, %v5115, -inf
  %5465 = vmax.xlane.f32.xlu0 %v5464
  %v5466 = vpop.xlane.xlu0 %5465
  %v5467 = vsel %vm5133, %v5116, -inf
  %5468 = vmax.xlane.f32.xlu0 %v5467
  %v5469 = vpop.xlane.xlu0 %5468
  %v5470 = vsel %vm5133, %v5117, -inf
  %5471 = vmax.xlane.f32.xlu0 %v5470
  %v5472 = vpop.xlane.xlu0 %5471
  %v5473 = vsel %vm5133, %v5118, -inf
  %5474 = vmax.xlane.f32.xlu0 %v5473
  %v5475 = vpop.xlane.xlu0 %5474
  %v5476 = vsel %vm5133, %v5119, -inf
  %5477 = vmax.xlane.f32.xlu0 %v5476
  %v5478 = vpop.xlane.xlu0 %5477
  %v5479 = vsel %vm5133, %v5120, -inf
  %5480 = vmax.xlane.f32.xlu0 %v5479
  %v5481 = vpop.xlane.xlu0 %5480
  %v5482 = vsel %vm5133, %v5121, -inf
  %5483 = vmax.xlane.f32.xlu0 %v5482
  %v5484 = vpop.xlane.xlu0 %5483
  %v5485 = vsel %vm5133, %v5122, -inf
  %5486 = vmax.xlane.f32.xlu0 %v5485
  %v5487 = vpop.xlane.xlu0 %5486
  %v5488 = vsel %vm5133, %v5123, -inf
  %5489 = vmax.xlane.f32.xlu0 %v5488
  %v5490 = vpop.xlane.xlu0 %5489
  %v5491 = vsel %vm5133, %v5124, -inf
  %5492 = vmax.xlane.f32.xlu0 %v5491
  %v5493 = vpop.xlane.xlu0 %5492
  %v5494 = vsel %vm5133, %v5125, -inf
  %5495 = vmax.xlane.f32.xlu0 %v5494
  %v5496 = vpop.xlane.xlu0 %5495
  %v5497 = vsel %vm5133, %v5126, -inf
  %5498 = vmax.xlane.f32.xlu0 %v5497
  %v5499 = vpop.xlane.xlu0 %5498
  %v5500 = vsel %vm5133, %v5127, -inf
  %5501 = vmax.xlane.f32.xlu0 %v5500
  %v5502 = vpop.xlane.xlu0 %5501
  %v5503 = vsel %vm5133, %v5128, -inf
  %5504 = vmax.xlane.f32.xlu0 %v5503
  %v5505 = vpop.xlane.xlu0 %5504
  %v5506 = vsel %vm5133, %v5129, -inf
  %5507 = vmax.xlane.f32.xlu0 %v5506
  %v5508 = vpop.xlane.xlu0 %5507
  %v5509 = vsel %vm5133, %v5130, -inf
  %5510 = vmax.xlane.f32.xlu0 %v5509
  %v5511 = vpop.xlane.xlu0 %5510
  %v5512 = vsel %vm5133, %v5131, -inf
  %5513 = vmax.xlane.f32.xlu0 %v5512
  %v5514 = vpop.xlane.xlu0 %5513
  %v5515 = vsel %vm5133, %v5132, -inf
  %5516 = vmax.xlane.f32.xlu0 %v5515
  %v5517 = vpop.xlane.xlu0 %5516
  %v5518 = vsub.f32 %v5005, %v5136
  %v5519 = vsub.f32 %v5006, %v5139
  %v5520 = vsub.f32 %v5007, %v5142
  %v5521 = vsub.f32 %v5008, %v5145
  %v5522 = vsub.f32 %v5009, %v5148
  %v5523 = vsub.f32 %v5010, %v5151
  %v5524 = vsub.f32 %v5011, %v5154
  %v5525 = vsub.f32 %v5012, %v5157
  %v5526 = vsub.f32 %v5013, %v5160
  %v5527 = vsub.f32 %v5014, %v5163
  %v5528 = vsub.f32 %v5015, %v5166
  %v5529 = vsub.f32 %v5016, %v5169
  %v5530 = vsub.f32 %v5017, %v5172
  %v5531 = vsub.f32 %v5018, %v5175
  %v5532 = vsub.f32 %v5019, %v5178
  %v5533 = vsub.f32 %v5020, %v5181
  %v5534 = vsub.f32 %v5021, %v5184
  %v5535 = vsub.f32 %v5022, %v5187
  %v5536 = vsub.f32 %v5023, %v5190
  %v5537 = vsub.f32 %v5024, %v5193
  %v5538 = vsub.f32 %v5025, %v5196
  %v5539 = vsub.f32 %v5026, %v5199
  %v5540 = vsub.f32 %v5027, %v5202
  %v5541 = vsub.f32 %v5028, %v5205
  %v5542 = vsub.f32 %v5029, %v5208
  %v5543 = vsub.f32 %v5030, %v5211
  %v5544 = vsub.f32 %v5031, %v5214
  %v5545 = vsub.f32 %v5032, %v5217
  %v5546 = vsub.f32 %v5033, %v5220
  %v5547 = vsub.f32 %v5034, %v5223
  %v5548 = vsub.f32 %v5035, %v5226
  %v5549 = vsub.f32 %v5036, %v5229
  %v5550 = vsub.f32 %v5037, %v5232
  %v5551 = vsub.f32 %v5038, %v5235
  %v5552 = vsub.f32 %v5039, %v5238
  %v5553 = vsub.f32 %v5040, %v5241
  %v5554 = vsub.f32 %v5041, %v5244
  %v5555 = vsub.f32 %v5042, %v5247
  %v5556 = vsub.f32 %v5043, %v5250
  %v5557 = vsub.f32 %v5044, %v5253
  %v5558 = vsub.f32 %v5045, %v5256
  %v5559 = vsub.f32 %v5046, %v5259
  %v5560 = vsub.f32 %v5047, %v5262
  %v5561 = vsub.f32 %v5048, %v5265
  %v5562 = vsub.f32 %v5049, %v5268
  %v5563 = vsub.f32 %v5050, %v5271
  %v5564 = vsub.f32 %v5051, %v5274
  %v5565 = vsub.f32 %v5052, %v5277
  %v5566 = vsub.f32 %v5053, %v5280
  %v5567 = vsub.f32 %v5054, %v5283
  %v5568 = vsub.f32 %v5055, %v5286
  %v5569 = vsub.f32 %v5056, %v5289
  %v5570 = vsub.f32 %v5057, %v5292
  %v5571 = vsub.f32 %v5058, %v5295
  %v5572 = vsub.f32 %v5059, %v5298
  %v5573 = vsub.f32 %v5060, %v5301
  %v5574 = vsub.f32 %v5061, %v5304
  %v5575 = vsub.f32 %v5062, %v5307
  %v5576 = vsub.f32 %v5063, %v5310
  %v5577 = vsub.f32 %v5064, %v5313
  %v5578 = vsub.f32 %v5065, %v5316
  %v5579 = vsub.f32 %v5066, %v5319
  %v5580 = vsub.f32 %v5067, %v5322
  %v5581 = vsub.f32 %v5068, %v5325
  %v5582 = vsub.f32 %v5069, %v5328
  %v5583 = vsub.f32 %v5070, %v5331
  %v5584 = vsub.f32 %v5071, %v5334
  %v5585 = vsub.f32 %v5072, %v5337
  %v5586 = vsub.f32 %v5073, %v5340
  %v5587 = vsub.f32 %v5074, %v5343
  %v5588 = vsub.f32 %v5075, %v5346
  %v5589 = vsub.f32 %v5076, %v5349
  %v5590 = vsub.f32 %v5077, %v5352
  %v5591 = vsub.f32 %v5078, %v5355
  %v5592 = vsub.f32 %v5079, %v5358
  %v5593 = vsub.f32 %v5080, %v5361
  %v5594 = vsub.f32 %v5081, %v5364
  %v5595 = vsub.f32 %v5082, %v5367
  %v5596 = vsub.f32 %v5083, %v5370
  %v5597 = vsub.f32 %v5084, %v5373
  %v5598 = vsub.f32 %v5085, %v5376
  %v5599 = vsub.f32 %v5086, %v5379
  %v5600 = vsub.f32 %v5087, %v5382
  %v5601 = vsub.f32 %v5088, %v5385
  %v5602 = vsub.f32 %v5089, %v5388
  %v5603 = vsub.f32 %v5090, %v5391
  %v5604 = vsub.f32 %v5091, %v5394
  %v5605 = vsub.f32 %v5092, %v5397
  %v5606 = vsub.f32 %v5093, %v5400
  %v5607 = vsub.f32 %v5094, %v5403
  %v5608 = vsub.f32 %v5095, %v5406
  %v5609 = vsub.f32 %v5096, %v5409
  %v5610 = vsub.f32 %v5097, %v5412
  %v5611 = vsub.f32 %v5098, %v5415
  %v5612 = vsub.f32 %v5099, %v5418
  %v5613 = vsub.f32 %v5100, %v5421
  %v5614 = vsub.f32 %v5101, %v5424
  %v5615 = vsub.f32 %v5102, %v5427
  %v5616 = vsub.f32 %v5103, %v5430
  %v5617 = vsub.f32 %v5104, %v5433
  %v5618 = vsub.f32 %v5105, %v5436
  %v5619 = vsub.f32 %v5106, %v5439
  %v5620 = vsub.f32 %v5107, %v5442
  %v5621 = vsub.f32 %v5108, %v5445
  %v5622 = vsub.f32 %v5109, %v5448
  %v5623 = vsub.f32 %v5110, %v5451
  %v5624 = vsub.f32 %v5111, %v5454
  %v5625 = vsub.f32 %v5112, %v5457
  %v5626 = vsub.f32 %v5113, %v5460
  %v5627 = vsub.f32 %v5114, %v5463
  %v5628 = vsub.f32 %v5115, %v5466
  %v5629 = vsub.f32 %v5116, %v5469
  %v5630 = vsub.f32 %v5117, %v5472
  %v5631 = vsub.f32 %v5118, %v5475
  %v5632 = vsub.f32 %v5119, %v5478
  %v5633 = vsub.f32 %v5120, %v5481
  %v5634 = vsub.f32 %v5121, %v5484
  %v5635 = vsub.f32 %v5122, %v5487
  %v5636 = vsub.f32 %v5123, %v5490
  %v5637 = vsub.f32 %v5124, %v5493
  %v5638 = vsub.f32 %v5125, %v5496
  %v5639 = vsub.f32 %v5126, %v5499
  %v5640 = vsub.f32 %v5127, %v5502
  %v5641 = vsub.f32 %v5128, %v5505
  %v5642 = vsub.f32 %v5129, %v5508
  %v5643 = vsub.f32 %v5130, %v5511
  %v5644 = vsub.f32 %v5131, %v5514
  %v5645 = vsub.f32 %v5132, %v5517
  %v5646 = vmul.f32 %v5518, 1.442695
  %v5647 = vpow.pop %v5646
  %v5648 = vmul.f32 %v5519, 1.442695
  %v5649 = vpow.pop %v5648
  %v5650 = vmul.f32 %v5520, 1.442695
  %v5651 = vpow.pop %v5650
  %v5652 = vmul.f32 %v5521, 1.442695
  %v5653 = vpow.pop %v5652
  %v5654 = vmul.f32 %v5522, 1.442695
  %v5655 = vpow.pop %v5654
  %v5656 = vmul.f32 %v5523, 1.442695
  %v5657 = vpow.pop %v5656
  %v5658 = vmul.f32 %v5524, 1.442695
  %v5659 = vpow.pop %v5658
  %v5660 = vmul.f32 %v5525, 1.442695
  %v5661 = vpow.pop %v5660
  %v5662 = vmul.f32 %v5526, 1.442695
  %v5663 = vpow.pop %v5662
  %v5664 = vmul.f32 %v5527, 1.442695
  %v5665 = vpow.pop %v5664
  %v5666 = vmul.f32 %v5528, 1.442695
  %v5667 = vpow.pop %v5666
  %v5668 = vmul.f32 %v5529, 1.442695
  %v5669 = vpow.pop %v5668
  %v5670 = vmul.f32 %v5530, 1.442695
  %v5671 = vpow.pop %v5670
  %v5672 = vmul.f32 %v5531, 1.442695
  %v5673 = vpow.pop %v5672
  %v5674 = vmul.f32 %v5532, 1.442695
  %v5675 = vpow.pop %v5674
  %v5676 = vmul.f32 %v5533, 1.442695
  %v5677 = vpow.pop %v5676
  %v5678 = vmul.f32 %v5534, 1.442695
  %v5679 = vpow.pop %v5678
  %v5680 = vmul.f32 %v5535, 1.442695
  %v5681 = vpow.pop %v5680
  %v5682 = vmul.f32 %v5536, 1.442695
  %v5683 = vpow.pop %v5682
  %v5684 = vmul.f32 %v5537, 1.442695
  %v5685 = vpow.pop %v5684
  %v5686 = vmul.f32 %v5538, 1.442695
  %v5687 = vpow.pop %v5686
  %v5688 = vmul.f32 %v5539, 1.442695
  %v5689 = vpow.pop %v5688
  %v5690 = vmul.f32 %v5540, 1.442695
  %v5691 = vpow.pop %v5690
  %v5692 = vmul.f32 %v5541, 1.442695
  %v5693 = vpow.pop %v5692
  %v5694 = vmul.f32 %v5542, 1.442695
  %v5695 = vpow.pop %v5694
  %v5696 = vmul.f32 %v5543, 1.442695
  %v5697 = vpow.pop %v5696
  %v5698 = vmul.f32 %v5544, 1.442695
  %v5699 = vpow.pop %v5698
  %v5700 = vmul.f32 %v5545, 1.442695
  %v5701 = vpow.pop %v5700
  %v5702 = vmul.f32 %v5546, 1.442695
  %v5703 = vpow.pop %v5702
  %v5704 = vmul.f32 %v5547, 1.442695
  %v5705 = vpow.pop %v5704
  %v5706 = vmul.f32 %v5548, 1.442695
  %v5707 = vpow.pop %v5706
  %v5708 = vmul.f32 %v5549, 1.442695
  %v5709 = vpow.pop %v5708
  %v5710 = vmul.f32 %v5550, 1.442695
  %v5711 = vpow.pop %v5710
  %v5712 = vmul.f32 %v5551, 1.442695
  %v5713 = vpow.pop %v5712
  %v5714 = vmul.f32 %v5552, 1.442695
  %v5715 = vpow.pop %v5714
  %v5716 = vmul.f32 %v5553, 1.442695
  %v5717 = vpow.pop %v5716
  %v5718 = vmul.f32 %v5554, 1.442695
  %v5719 = vpow.pop %v5718
  %v5720 = vmul.f32 %v5555, 1.442695
  %v5721 = vpow.pop %v5720
  %v5722 = vmul.f32 %v5556, 1.442695
  %v5723 = vpow.pop %v5722
  %v5724 = vmul.f32 %v5557, 1.442695
  %v5725 = vpow.pop %v5724
  %v5726 = vmul.f32 %v5558, 1.442695
  %v5727 = vpow.pop %v5726
  %v5728 = vmul.f32 %v5559, 1.442695
  %v5729 = vpow.pop %v5728
  %v5730 = vmul.f32 %v5560, 1.442695
  %v5731 = vpow.pop %v5730
  %v5732 = vmul.f32 %v5561, 1.442695
  %v5733 = vpow.pop %v5732
  %v5734 = vmul.f32 %v5562, 1.442695
  %v5735 = vpow.pop %v5734
  %v5736 = vmul.f32 %v5563, 1.442695
  %v5737 = vpow.pop %v5736
  %v5738 = vmul.f32 %v5564, 1.442695
  %v5739 = vpow.pop %v5738
  %v5740 = vmul.f32 %v5565, 1.442695
  %v5741 = vpow.pop %v5740
  %v5742 = vmul.f32 %v5566, 1.442695
  %v5743 = vpow.pop %v5742
  %v5744 = vmul.f32 %v5567, 1.442695
  %v5745 = vpow.pop %v5744
  %v5746 = vmul.f32 %v5568, 1.442695
  %v5747 = vpow.pop %v5746
  %v5748 = vmul.f32 %v5569, 1.442695
  %v5749 = vpow.pop %v5748
  %v5750 = vmul.f32 %v5570, 1.442695
  %v5751 = vpow.pop %v5750
  %v5752 = vmul.f32 %v5571, 1.442695
  %v5753 = vpow.pop %v5752
  %v5754 = vmul.f32 %v5572, 1.442695
  %v5755 = vpow.pop %v5754
  %v5756 = vmul.f32 %v5573, 1.442695
  %v5757 = vpow.pop %v5756
  %v5758 = vmul.f32 %v5574, 1.442695
  %v5759 = vpow.pop %v5758
  %v5760 = vmul.f32 %v5575, 1.442695
  %v5761 = vpow.pop %v5760
  %v5762 = vmul.f32 %v5576, 1.442695
  %v5763 = vpow.pop %v5762
  %v5764 = vmul.f32 %v5577, 1.442695
  %v5765 = vpow.pop %v5764
  %v5766 = vmul.f32 %v5578, 1.442695
  %v5767 = vpow.pop %v5766
  %v5768 = vmul.f32 %v5579, 1.442695
  %v5769 = vpow.pop %v5768
  %v5770 = vmul.f32 %v5580, 1.442695
  %v5771 = vpow.pop %v5770
  %v5772 = vmul.f32 %v5581, 1.442695
  %v5773 = vpow.pop %v5772
  %v5774 = vmul.f32 %v5582, 1.442695
  %v5775 = vpow.pop %v5774
  %v5776 = vmul.f32 %v5583, 1.442695
  %v5777 = vpow.pop %v5776
  %v5778 = vmul.f32 %v5584, 1.442695
  %v5779 = vpow.pop %v5778
  %v5780 = vmul.f32 %v5585, 1.442695
  %v5781 = vpow.pop %v5780
  %v5782 = vmul.f32 %v5586, 1.442695
  %v5783 = vpow.pop %v5782
  %v5784 = vmul.f32 %v5587, 1.442695
  %v5785 = vpow.pop %v5784
  %v5786 = vmul.f32 %v5588, 1.442695
  %v5787 = vpow.pop %v5786
  %v5788 = vmul.f32 %v5589, 1.442695
  %v5789 = vpow.pop %v5788
  %v5790 = vmul.f32 %v5590, 1.442695
  %v5791 = vpow.pop %v5790
  %v5792 = vmul.f32 %v5591, 1.442695
  %v5793 = vpow.pop %v5792
  %v5794 = vmul.f32 %v5592, 1.442695
  %v5795 = vpow.pop %v5794
  %v5796 = vmul.f32 %v5593, 1.442695
  %v5797 = vpow.pop %v5796
  %v5798 = vmul.f32 %v5594, 1.442695
  %v5799 = vpow.pop %v5798
  %v5800 = vmul.f32 %v5595, 1.442695
  %v5801 = vpow.pop %v5800
  %v5802 = vmul.f32 %v5596, 1.442695
  %v5803 = vpow.pop %v5802
  %v5804 = vmul.f32 %v5597, 1.442695
  %v5805 = vpow.pop %v5804
  %v5806 = vmul.f32 %v5598, 1.442695
  %v5807 = vpow.pop %v5806
  %v5808 = vmul.f32 %v5599, 1.442695
  %v5809 = vpow.pop %v5808
  %v5810 = vmul.f32 %v5600, 1.442695
  %v5811 = vpow.pop %v5810
  %v5812 = vmul.f32 %v5601, 1.442695
  %v5813 = vpow.pop %v5812
  %v5814 = vmul.f32 %v5602, 1.442695
  %v5815 = vpow.pop %v5814
  %v5816 = vmul.f32 %v5603, 1.442695
  %v5817 = vpow.pop %v5816
  %v5818 = vmul.f32 %v5604, 1.442695
  %v5819 = vpow.pop %v5818
  %v5820 = vmul.f32 %v5605, 1.442695
  %v5821 = vpow.pop %v5820
  %v5822 = vmul.f32 %v5606, 1.442695
  %v5823 = vpow.pop %v5822
  %v5824 = vmul.f32 %v5607, 1.442695
  %v5825 = vpow.pop %v5824
  %v5826 = vmul.f32 %v5608, 1.442695
  %v5827 = vpow.pop %v5826
  %v5828 = vmul.f32 %v5609, 1.442695
  %v5829 = vpow.pop %v5828
  %v5830 = vmul.f32 %v5610, 1.442695
  %v5831 = vpow.pop %v5830
  %v5832 = vmul.f32 %v5611, 1.442695
  %v5833 = vpow.pop %v5832
  %v5834 = vmul.f32 %v5612, 1.442695
  %v5835 = vpow.pop %v5834
  %v5836 = vmul.f32 %v5613, 1.442695
  %v5837 = vpow.pop %v5836
  %v5838 = vmul.f32 %v5614, 1.442695
  %v5839 = vpow.pop %v5838
  %v5840 = vmul.f32 %v5615, 1.442695
  %v5841 = vpow.pop %v5840
  %v5842 = vmul.f32 %v5616, 1.442695
  %v5843 = vpow.pop %v5842
  %v5844 = vmul.f32 %v5617, 1.442695
  %v5845 = vpow.pop %v5844
  %v5846 = vmul.f32 %v5618, 1.442695
  %v5847 = vpow.pop %v5846
  %v5848 = vmul.f32 %v5619, 1.442695
  %v5849 = vpow.pop %v5848
  %v5850 = vmul.f32 %v5620, 1.442695
  %v5851 = vpow.pop %v5850
  %v5852 = vmul.f32 %v5621, 1.442695
  %v5853 = vpow.pop %v5852
  %v5854 = vmul.f32 %v5622, 1.442695
  %v5855 = vpow.pop %v5854
  %v5856 = vmul.f32 %v5623, 1.442695
  %v5857 = vpow.pop %v5856
  %v5858 = vmul.f32 %v5624, 1.442695
  %v5859 = vpow.pop %v5858
  %v5860 = vmul.f32 %v5625, 1.442695
  %v5861 = vpow.pop %v5860
  %v5862 = vmul.f32 %v5626, 1.442695
  %v5863 = vpow.pop %v5862
  %v5864 = vmul.f32 %v5627, 1.442695
  %v5865 = vpow.pop %v5864
  %v5866 = vmul.f32 %v5628, 1.442695
  %v5867 = vpow.pop %v5866
  %v5868 = vmul.f32 %v5629, 1.442695
  %v5869 = vpow.pop %v5868
  %v5870 = vmul.f32 %v5630, 1.442695
  %v5871 = vpow.pop %v5870
  %v5872 = vmul.f32 %v5631, 1.442695
  %v5873 = vpow.pop %v5872
  %v5874 = vmul.f32 %v5632, 1.442695
  %v5875 = vpow.pop %v5874
  %v5876 = vmul.f32 %v5633, 1.442695
  %v5877 = vpow.pop %v5876
  %v5878 = vmul.f32 %v5634, 1.442695
  %v5879 = vpow.pop %v5878
  %v5880 = vmul.f32 %v5635, 1.442695
  %v5881 = vpow.pop %v5880
  %v5882 = vmul.f32 %v5636, 1.442695
  %v5883 = vpow.pop %v5882
  %v5884 = vmul.f32 %v5637, 1.442695
  %v5885 = vpow.pop %v5884
  %v5886 = vmul.f32 %v5638, 1.442695
  %v5887 = vpow.pop %v5886
  %v5888 = vmul.f32 %v5639, 1.442695
  %v5889 = vpow.pop %v5888
  %v5890 = vmul.f32 %v5640, 1.442695
  %v5891 = vpow.pop %v5890
  %v5892 = vmul.f32 %v5641, 1.442695
  %v5893 = vpow.pop %v5892
  %v5894 = vmul.f32 %v5642, 1.442695
  %v5895 = vpow.pop %v5894
  %v5896 = vmul.f32 %v5643, 1.442695
  %v5897 = vpow.pop %v5896
  %v5898 = vmul.f32 %v5644, 1.442695
  %v5899 = vpow.pop %v5898
  %v5900 = vmul.f32 %v5645, 1.442695
  %v5901 = vpow.pop %v5900
  %v5902 = vsel %vm5133, %v5647, 0.0
  %5903 = vadd.xlane.f32.xlu0 %v5902
  %v5904 = vpop.xlane.xlu0 %5903
  %v5905 = vsel %vm5133, %v5649, 0.0
  %5906 = vadd.xlane.f32.xlu0 %v5905
  %v5907 = vpop.xlane.xlu0 %5906
  %v5908 = vsel %vm5133, %v5651, 0.0
  %5909 = vadd.xlane.f32.xlu0 %v5908
  %v5910 = vpop.xlane.xlu0 %5909
  %v5911 = vsel %vm5133, %v5653, 0.0
  %5912 = vadd.xlane.f32.xlu0 %v5911
  %v5913 = vpop.xlane.xlu0 %5912
  %v5914 = vsel %vm5133, %v5655, 0.0
  %5915 = vadd.xlane.f32.xlu0 %v5914
  %v5916 = vpop.xlane.xlu0 %5915
  %v5917 = vsel %vm5133, %v5657, 0.0
  %5918 = vadd.xlane.f32.xlu0 %v5917
  %v5919 = vpop.xlane.xlu0 %5918
  %v5920 = vsel %vm5133, %v5659, 0.0
  %5921 = vadd.xlane.f32.xlu0 %v5920
  %v5922 = vpop.xlane.xlu0 %5921
  %v5923 = vsel %vm5133, %v5661, 0.0
  %5924 = vadd.xlane.f32.xlu0 %v5923
  %v5925 = vpop.xlane.xlu0 %5924
  %v5926 = vsel %vm5133, %v5663, 0.0
  %5927 = vadd.xlane.f32.xlu0 %v5926
  %v5928 = vpop.xlane.xlu0 %5927
  %v5929 = vsel %vm5133, %v5665, 0.0
  %5930 = vadd.xlane.f32.xlu0 %v5929
  %v5931 = vpop.xlane.xlu0 %5930
  %v5932 = vsel %vm5133, %v5667, 0.0
  %5933 = vadd.xlane.f32.xlu0 %v5932
  %v5934 = vpop.xlane.xlu0 %5933
  %v5935 = vsel %vm5133, %v5669, 0.0
  %5936 = vadd.xlane.f32.xlu0 %v5935
  %v5937 = vpop.xlane.xlu0 %5936
  %v5938 = vsel %vm5133, %v5671, 0.0
  %5939 = vadd.xlane.f32.xlu0 %v5938
  %v5940 = vpop.xlane.xlu0 %5939
  %v5941 = vsel %vm5133, %v5673, 0.0
  %5942 = vadd.xlane.f32.xlu0 %v5941
  %v5943 = vpop.xlane.xlu0 %5942
  %v5944 = vsel %vm5133, %v5675, 0.0
  %5945 = vadd.xlane.f32.xlu0 %v5944
  %v5946 = vpop.xlane.xlu0 %5945
  %v5947 = vsel %vm5133, %v5677, 0.0
  %5948 = vadd.xlane.f32.xlu0 %v5947
  %v5949 = vpop.xlane.xlu0 %5948
  %v5950 = vsel %vm5133, %v5679, 0.0
  %5951 = vadd.xlane.f32.xlu0 %v5950
  %v5952 = vpop.xlane.xlu0 %5951
  %v5953 = vsel %vm5133, %v5681, 0.0
  %5954 = vadd.xlane.f32.xlu0 %v5953
  %v5955 = vpop.xlane.xlu0 %5954
  %v5956 = vsel %vm5133, %v5683, 0.0
  %5957 = vadd.xlane.f32.xlu0 %v5956
  %v5958 = vpop.xlane.xlu0 %5957
  %v5959 = vsel %vm5133, %v5685, 0.0
  %5960 = vadd.xlane.f32.xlu0 %v5959
  %v5961 = vpop.xlane.xlu0 %5960
  %v5962 = vsel %vm5133, %v5687, 0.0
  %5963 = vadd.xlane.f32.xlu0 %v5962
  %v5964 = vpop.xlane.xlu0 %5963
  %v5965 = vsel %vm5133, %v5689, 0.0
  %5966 = vadd.xlane.f32.xlu0 %v5965
  %v5967 = vpop.xlane.xlu0 %5966
  %v5968 = vsel %vm5133, %v5691, 0.0
  %5969 = vadd.xlane.f32.xlu0 %v5968
  %v5970 = vpop.xlane.xlu0 %5969
  %v5971 = vsel %vm5133, %v5693, 0.0
  %5972 = vadd.xlane.f32.xlu0 %v5971
  %v5973 = vpop.xlane.xlu0 %5972
  %v5974 = vsel %vm5133, %v5695, 0.0
  %5975 = vadd.xlane.f32.xlu0 %v5974
  %v5976 = vpop.xlane.xlu0 %5975
  %v5977 = vsel %vm5133, %v5697, 0.0
  %5978 = vadd.xlane.f32.xlu0 %v5977
  %v5979 = vpop.xlane.xlu0 %5978
  %v5980 = vsel %vm5133, %v5699, 0.0
  %5981 = vadd.xlane.f32.xlu0 %v5980
  %v5982 = vpop.xlane.xlu0 %5981
  %v5983 = vsel %vm5133, %v5701, 0.0
  %5984 = vadd.xlane.f32.xlu0 %v5983
  %v5985 = vpop.xlane.xlu0 %5984
  %v5986 = vsel %vm5133, %v5703, 0.0
  %5987 = vadd.xlane.f32.xlu0 %v5986
  %v5988 = vpop.xlane.xlu0 %5987
  %v5989 = vsel %vm5133, %v5705, 0.0
  %5990 = vadd.xlane.f32.xlu0 %v5989
  %v5991 = vpop.xlane.xlu0 %5990
  %v5992 = vsel %vm5133, %v5707, 0.0
  %5993 = vadd.xlane.f32.xlu0 %v5992
  %v5994 = vpop.xlane.xlu0 %5993
  %v5995 = vsel %vm5133, %v5709, 0.0
  %5996 = vadd.xlane.f32.xlu0 %v5995
  %v5997 = vpop.xlane.xlu0 %5996
  %v5998 = vsel %vm5133, %v5711, 0.0
  %5999 = vadd.xlane.f32.xlu0 %v5998
  %v6000 = vpop.xlane.xlu0 %5999
  %v6001 = vsel %vm5133, %v5713, 0.0
  %6002 = vadd.xlane.f32.xlu0 %v6001
  %v6003 = vpop.xlane.xlu0 %6002
  %v6004 = vsel %vm5133, %v5715, 0.0
  %6005 = vadd.xlane.f32.xlu0 %v6004
  %v6006 = vpop.xlane.xlu0 %6005
  %v6007 = vsel %vm5133, %v5717, 0.0
  %6008 = vadd.xlane.f32.xlu0 %v6007
  %v6009 = vpop.xlane.xlu0 %6008
  %v6010 = vsel %vm5133, %v5719, 0.0
  %6011 = vadd.xlane.f32.xlu0 %v6010
  %v6012 = vpop.xlane.xlu0 %6011
  %v6013 = vsel %vm5133, %v5721, 0.0
  %6014 = vadd.xlane.f32.xlu0 %v6013
  %v6015 = vpop.xlane.xlu0 %6014
  %v6016 = vsel %vm5133, %v5723, 0.0
  %6017 = vadd.xlane.f32.xlu0 %v6016
  %v6018 = vpop.xlane.xlu0 %6017
  %v6019 = vsel %vm5133, %v5725, 0.0
  %6020 = vadd.xlane.f32.xlu0 %v6019
  %v6021 = vpop.xlane.xlu0 %6020
  %v6022 = vsel %vm5133, %v5727, 0.0
  %6023 = vadd.xlane.f32.xlu0 %v6022
  %v6024 = vpop.xlane.xlu0 %6023
  %v6025 = vsel %vm5133, %v5729, 0.0
  %6026 = vadd.xlane.f32.xlu0 %v6025
  %v6027 = vpop.xlane.xlu0 %6026
  %v6028 = vsel %vm5133, %v5731, 0.0
  %6029 = vadd.xlane.f32.xlu0 %v6028
  %v6030 = vpop.xlane.xlu0 %6029
  %v6031 = vsel %vm5133, %v5733, 0.0
  %6032 = vadd.xlane.f32.xlu0 %v6031
  %v6033 = vpop.xlane.xlu0 %6032
  %v6034 = vsel %vm5133, %v5735, 0.0
  %6035 = vadd.xlane.f32.xlu0 %v6034
  %v6036 = vpop.xlane.xlu0 %6035
  %v6037 = vsel %vm5133, %v5737, 0.0
  %6038 = vadd.xlane.f32.xlu0 %v6037
  %v6039 = vpop.xlane.xlu0 %6038
  %v6040 = vsel %vm5133, %v5739, 0.0
  %6041 = vadd.xlane.f32.xlu0 %v6040
  %v6042 = vpop.xlane.xlu0 %6041
  %v6043 = vsel %vm5133, %v5741, 0.0
  %6044 = vadd.xlane.f32.xlu0 %v6043
  %v6045 = vpop.xlane.xlu0 %6044
  %v6046 = vsel %vm5133, %v5743, 0.0
  %6047 = vadd.xlane.f32.xlu0 %v6046
  %v6048 = vpop.xlane.xlu0 %6047
  %v6049 = vsel %vm5133, %v5745, 0.0
  %6050 = vadd.xlane.f32.xlu0 %v6049
  %v6051 = vpop.xlane.xlu0 %6050
  %v6052 = vsel %vm5133, %v5747, 0.0
  %6053 = vadd.xlane.f32.xlu0 %v6052
  %v6054 = vpop.xlane.xlu0 %6053
  %v6055 = vsel %vm5133, %v5749, 0.0
  %6056 = vadd.xlane.f32.xlu0 %v6055
  %v6057 = vpop.xlane.xlu0 %6056
  %v6058 = vsel %vm5133, %v5751, 0.0
  %6059 = vadd.xlane.f32.xlu0 %v6058
  %v6060 = vpop.xlane.xlu0 %6059
  %v6061 = vsel %vm5133, %v5753, 0.0
  %6062 = vadd.xlane.f32.xlu0 %v6061
  %v6063 = vpop.xlane.xlu0 %6062
  %v6064 = vsel %vm5133, %v5755, 0.0
  %6065 = vadd.xlane.f32.xlu0 %v6064
  %v6066 = vpop.xlane.xlu0 %6065
  %v6067 = vsel %vm5133, %v5757, 0.0
  %6068 = vadd.xlane.f32.xlu0 %v6067
  %v6069 = vpop.xlane.xlu0 %6068
  %v6070 = vsel %vm5133, %v5759, 0.0
  %6071 = vadd.xlane.f32.xlu0 %v6070
  %v6072 = vpop.xlane.xlu0 %6071
  %v6073 = vsel %vm5133, %v5761, 0.0
  %6074 = vadd.xlane.f32.xlu0 %v6073
  %v6075 = vpop.xlane.xlu0 %6074
  %v6076 = vsel %vm5133, %v5763, 0.0
  %6077 = vadd.xlane.f32.xlu0 %v6076
  %v6078 = vpop.xlane.xlu0 %6077
  %v6079 = vsel %vm5133, %v5765, 0.0
  %6080 = vadd.xlane.f32.xlu0 %v6079
  %v6081 = vpop.xlane.xlu0 %6080
  %v6082 = vsel %vm5133, %v5767, 0.0
  %6083 = vadd.xlane.f32.xlu0 %v6082
  %v6084 = vpop.xlane.xlu0 %6083
  %v6085 = vsel %vm5133, %v5769, 0.0
  %6086 = vadd.xlane.f32.xlu0 %v6085
  %v6087 = vpop.xlane.xlu0 %6086
  %v6088 = vsel %vm5133, %v5771, 0.0
  %6089 = vadd.xlane.f32.xlu0 %v6088
  %v6090 = vpop.xlane.xlu0 %6089
  %v6091 = vsel %vm5133, %v5773, 0.0
  %6092 = vadd.xlane.f32.xlu0 %v6091
  %v6093 = vpop.xlane.xlu0 %6092
  %v6094 = vsel %vm5133, %v5775, 0.0
  %6095 = vadd.xlane.f32.xlu0 %v6094
  %v6096 = vpop.xlane.xlu0 %6095
  %v6097 = vsel %vm5133, %v5777, 0.0
  %6098 = vadd.xlane.f32.xlu0 %v6097
  %v6099 = vpop.xlane.xlu0 %6098
  %v6100 = vsel %vm5133, %v5779, 0.0
  %6101 = vadd.xlane.f32.xlu0 %v6100
  %v6102 = vpop.xlane.xlu0 %6101
  %v6103 = vsel %vm5133, %v5781, 0.0
  %6104 = vadd.xlane.f32.xlu0 %v6103
  %v6105 = vpop.xlane.xlu0 %6104
  %v6106 = vsel %vm5133, %v5783, 0.0
  %6107 = vadd.xlane.f32.xlu0 %v6106
  %v6108 = vpop.xlane.xlu0 %6107
  %v6109 = vsel %vm5133, %v5785, 0.0
  %6110 = vadd.xlane.f32.xlu0 %v6109
  %v6111 = vpop.xlane.xlu0 %6110
  %v6112 = vsel %vm5133, %v5787, 0.0
  %6113 = vadd.xlane.f32.xlu0 %v6112
  %v6114 = vpop.xlane.xlu0 %6113
  %v6115 = vsel %vm5133, %v5789, 0.0
  %6116 = vadd.xlane.f32.xlu0 %v6115
  %v6117 = vpop.xlane.xlu0 %6116
  %v6118 = vsel %vm5133, %v5791, 0.0
  %6119 = vadd.xlane.f32.xlu0 %v6118
  %v6120 = vpop.xlane.xlu0 %6119
  %v6121 = vsel %vm5133, %v5793, 0.0
  %6122 = vadd.xlane.f32.xlu0 %v6121
  %v6123 = vpop.xlane.xlu0 %6122
  %v6124 = vsel %vm5133, %v5795, 0.0
  %6125 = vadd.xlane.f32.xlu0 %v6124
  %v6126 = vpop.xlane.xlu0 %6125
  %v6127 = vsel %vm5133, %v5797, 0.0
  %6128 = vadd.xlane.f32.xlu0 %v6127
  %v6129 = vpop.xlane.xlu0 %6128
  %v6130 = vsel %vm5133, %v5799, 0.0
  %6131 = vadd.xlane.f32.xlu0 %v6130
  %v6132 = vpop.xlane.xlu0 %6131
  %v6133 = vsel %vm5133, %v5801, 0.0
  %6134 = vadd.xlane.f32.xlu0 %v6133
  %v6135 = vpop.xlane.xlu0 %6134
  %v6136 = vsel %vm5133, %v5803, 0.0
  %6137 = vadd.xlane.f32.xlu0 %v6136
  %v6138 = vpop.xlane.xlu0 %6137
  %v6139 = vsel %vm5133, %v5805, 0.0
  %6140 = vadd.xlane.f32.xlu0 %v6139
  %v6141 = vpop.xlane.xlu0 %6140
  %v6142 = vsel %vm5133, %v5807, 0.0
  %6143 = vadd.xlane.f32.xlu0 %v6142
  %v6144 = vpop.xlane.xlu0 %6143
  %v6145 = vsel %vm5133, %v5809, 0.0
  %6146 = vadd.xlane.f32.xlu0 %v6145
  %v6147 = vpop.xlane.xlu0 %6146
  %v6148 = vsel %vm5133, %v5811, 0.0
  %6149 = vadd.xlane.f32.xlu0 %v6148
  %v6150 = vpop.xlane.xlu0 %6149
  %v6151 = vsel %vm5133, %v5813, 0.0
  %6152 = vadd.xlane.f32.xlu0 %v6151
  %v6153 = vpop.xlane.xlu0 %6152
  %v6154 = vsel %vm5133, %v5815, 0.0
  %6155 = vadd.xlane.f32.xlu0 %v6154
  %v6156 = vpop.xlane.xlu0 %6155
  %v6157 = vsel %vm5133, %v5817, 0.0
  %6158 = vadd.xlane.f32.xlu0 %v6157
  %v6159 = vpop.xlane.xlu0 %6158
  %v6160 = vsel %vm5133, %v5819, 0.0
  %6161 = vadd.xlane.f32.xlu0 %v6160
  %v6162 = vpop.xlane.xlu0 %6161
  %v6163 = vsel %vm5133, %v5821, 0.0
  %6164 = vadd.xlane.f32.xlu0 %v6163
  %v6165 = vpop.xlane.xlu0 %6164
  %v6166 = vsel %vm5133, %v5823, 0.0
  %6167 = vadd.xlane.f32.xlu0 %v6166
  %v6168 = vpop.xlane.xlu0 %6167
  %v6169 = vsel %vm5133, %v5825, 0.0
  %6170 = vadd.xlane.f32.xlu0 %v6169
  %v6171 = vpop.xlane.xlu0 %6170
  %v6172 = vsel %vm5133, %v5827, 0.0
  %6173 = vadd.xlane.f32.xlu0 %v6172
  %v6174 = vpop.xlane.xlu0 %6173
  %v6175 = vsel %vm5133, %v5829, 0.0
  %6176 = vadd.xlane.f32.xlu0 %v6175
  %v6177 = vpop.xlane.xlu0 %6176
  %v6178 = vsel %vm5133, %v5831, 0.0
  %6179 = vadd.xlane.f32.xlu0 %v6178
  %v6180 = vpop.xlane.xlu0 %6179
  %v6181 = vsel %vm5133, %v5833, 0.0
  %6182 = vadd.xlane.f32.xlu0 %v6181
  %v6183 = vpop.xlane.xlu0 %6182
  %v6184 = vsel %vm5133, %v5835, 0.0
  %6185 = vadd.xlane.f32.xlu0 %v6184
  %v6186 = vpop.xlane.xlu0 %6185
  %v6187 = vsel %vm5133, %v5837, 0.0
  %6188 = vadd.xlane.f32.xlu0 %v6187
  %v6189 = vpop.xlane.xlu0 %6188
  %v6190 = vsel %vm5133, %v5839, 0.0
  %6191 = vadd.xlane.f32.xlu0 %v6190
  %v6192 = vpop.xlane.xlu0 %6191
  %v6193 = vsel %vm5133, %v5841, 0.0
  %6194 = vadd.xlane.f32.xlu0 %v6193
  %v6195 = vpop.xlane.xlu0 %6194
  %v6196 = vsel %vm5133, %v5843, 0.0
  %6197 = vadd.xlane.f32.xlu0 %v6196
  %v6198 = vpop.xlane.xlu0 %6197
  %v6199 = vsel %vm5133, %v5845, 0.0
  %6200 = vadd.xlane.f32.xlu0 %v6199
  %v6201 = vpop.xlane.xlu0 %6200
  %v6202 = vsel %vm5133, %v5847, 0.0
  %6203 = vadd.xlane.f32.xlu0 %v6202
  %v6204 = vpop.xlane.xlu0 %6203
  %v6205 = vsel %vm5133, %v5849, 0.0
  %6206 = vadd.xlane.f32.xlu0 %v6205
  %v6207 = vpop.xlane.xlu0 %6206
  %v6208 = vsel %vm5133, %v5851, 0.0
  %6209 = vadd.xlane.f32.xlu0 %v6208
  %v6210 = vpop.xlane.xlu0 %6209
  %v6211 = vsel %vm5133, %v5853, 0.0
  %6212 = vadd.xlane.f32.xlu0 %v6211
  %v6213 = vpop.xlane.xlu0 %6212
  %v6214 = vsel %vm5133, %v5855, 0.0
  %6215 = vadd.xlane.f32.xlu0 %v6214
  %v6216 = vpop.xlane.xlu0 %6215
  %v6217 = vsel %vm5133, %v5857, 0.0
  %6218 = vadd.xlane.f32.xlu0 %v6217
  %v6219 = vpop.xlane.xlu0 %6218
  %v6220 = vsel %vm5133, %v5859, 0.0
  %6221 = vadd.xlane.f32.xlu0 %v6220
  %v6222 = vpop.xlane.xlu0 %6221
  %v6223 = vsel %vm5133, %v5861, 0.0
  %6224 = vadd.xlane.f32.xlu0 %v6223
  %v6225 = vpop.xlane.xlu0 %6224
  %v6226 = vsel %vm5133, %v5863, 0.0
  %6227 = vadd.xlane.f32.xlu0 %v6226
  %v6228 = vpop.xlane.xlu0 %6227
  %v6229 = vsel %vm5133, %v5865, 0.0
  %6230 = vadd.xlane.f32.xlu0 %v6229
  %v6231 = vpop.xlane.xlu0 %6230
  %v6232 = vsel %vm5133, %v5867, 0.0
  %6233 = vadd.xlane.f32.xlu0 %v6232
  %v6234 = vpop.xlane.xlu0 %6233
  %v6235 = vsel %vm5133, %v5869, 0.0
  %6236 = vadd.xlane.f32.xlu0 %v6235
  %v6237 = vpop.xlane.xlu0 %6236
  %v6238 = vsel %vm5133, %v5871, 0.0
  %6239 = vadd.xlane.f32.xlu0 %v6238
  %v6240 = vpop.xlane.xlu0 %6239
  %v6241 = vsel %vm5133, %v5873, 0.0
  %6242 = vadd.xlane.f32.xlu0 %v6241
  %v6243 = vpop.xlane.xlu0 %6242
  %v6244 = vsel %vm5133, %v5875, 0.0
  %6245 = vadd.xlane.f32.xlu0 %v6244
  %v6246 = vpop.xlane.xlu0 %6245
  %v6247 = vsel %vm5133, %v5877, 0.0
  %6248 = vadd.xlane.f32.xlu0 %v6247
  %v6249 = vpop.xlane.xlu0 %6248
  %v6250 = vsel %vm5133, %v5879, 0.0
  %6251 = vadd.xlane.f32.xlu0 %v6250
  %v6252 = vpop.xlane.xlu0 %6251
  %v6253 = vsel %vm5133, %v5881, 0.0
  %6254 = vadd.xlane.f32.xlu0 %v6253
  %v6255 = vpop.xlane.xlu0 %6254
  %v6256 = vsel %vm5133, %v5883, 0.0
  %6257 = vadd.xlane.f32.xlu0 %v6256
  %v6258 = vpop.xlane.xlu0 %6257
  %v6259 = vsel %vm5133, %v5885, 0.0
  %6260 = vadd.xlane.f32.xlu0 %v6259
  %v6261 = vpop.xlane.xlu0 %6260
  %v6262 = vsel %vm5133, %v5887, 0.0
  %6263 = vadd.xlane.f32.xlu0 %v6262
  %v6264 = vpop.xlane.xlu0 %6263
  %v6265 = vsel %vm5133, %v5889, 0.0
  %6266 = vadd.xlane.f32.xlu0 %v6265
  %v6267 = vpop.xlane.xlu0 %6266
  %v6268 = vsel %vm5133, %v5891, 0.0
  %6269 = vadd.xlane.f32.xlu0 %v6268
  %v6270 = vpop.xlane.xlu0 %6269
  %v6271 = vsel %vm5133, %v5893, 0.0
  %6272 = vadd.xlane.f32.xlu0 %v6271
  %v6273 = vpop.xlane.xlu0 %6272
  %v6274 = vsel %vm5133, %v5895, 0.0
  %6275 = vadd.xlane.f32.xlu0 %v6274
  %v6276 = vpop.xlane.xlu0 %6275
  %v6277 = vsel %vm5133, %v5897, 0.0
  %6278 = vadd.xlane.f32.xlu0 %v6277
  %v6279 = vpop.xlane.xlu0 %6278
  %v6280 = vsel %vm5133, %v5899, 0.0
  %6281 = vadd.xlane.f32.xlu0 %v6280
  %v6282 = vpop.xlane.xlu0 %6281
  %v6283 = vsel %vm5133, %v5901, 0.0
  %6284 = vadd.xlane.f32.xlu0 %v6283
  %v6285 = vpop.xlane.xlu0 %6284
  %v6286 = vrcp.pop %v5904
  %v6287 = vrcp.pop %v5907
  %v6288 = vrcp.pop %v5910
  %v6289 = vrcp.pop %v5913
  %v6290 = vrcp.pop %v5916
  %v6291 = vrcp.pop %v5919
  %v6292 = vrcp.pop %v5922
  %v6293 = vrcp.pop %v5925
  %v6294 = vrcp.pop %v5928
  %v6295 = vrcp.pop %v5931
  %v6296 = vrcp.pop %v5934
  %v6297 = vrcp.pop %v5937
  %v6298 = vrcp.pop %v5940
  %v6299 = vrcp.pop %v5943
  %v6300 = vrcp.pop %v5946
  %v6301 = vrcp.pop %v5949
  %v6302 = vrcp.pop %v5952
  %v6303 = vrcp.pop %v5955
  %v6304 = vrcp.pop %v5958
  %v6305 = vrcp.pop %v5961
  %v6306 = vrcp.pop %v5964
  %v6307 = vrcp.pop %v5967
  %v6308 = vrcp.pop %v5970
  %v6309 = vrcp.pop %v5973
  %v6310 = vrcp.pop %v5976
  %v6311 = vrcp.pop %v5979
  %v6312 = vrcp.pop %v5982
  %v6313 = vrcp.pop %v5985
  %v6314 = vrcp.pop %v5988
  %v6315 = vrcp.pop %v5991
  %v6316 = vrcp.pop %v5994
  %v6317 = vrcp.pop %v5997
  %v6318 = vrcp.pop %v6000
  %v6319 = vrcp.pop %v6003
  %v6320 = vrcp.pop %v6006
  %v6321 = vrcp.pop %v6009
  %v6322 = vrcp.pop %v6012
  %v6323 = vrcp.pop %v6015
  %v6324 = vrcp.pop %v6018
  %v6325 = vrcp.pop %v6021
  %v6326 = vrcp.pop %v6024
  %v6327 = vrcp.pop %v6027
  %v6328 = vrcp.pop %v6030
  %v6329 = vrcp.pop %v6033
  %v6330 = vrcp.pop %v6036
  %v6331 = vrcp.pop %v6039
  %v6332 = vrcp.pop %v6042
  %v6333 = vrcp.pop %v6045
  %v6334 = vrcp.pop %v6048
  %v6335 = vrcp.pop %v6051
  %v6336 = vrcp.pop %v6054
  %v6337 = vrcp.pop %v6057
  %v6338 = vrcp.pop %v6060
  %v6339 = vrcp.pop %v6063
  %v6340 = vrcp.pop %v6066
  %v6341 = vrcp.pop %v6069
  %v6342 = vrcp.pop %v6072
  %v6343 = vrcp.pop %v6075
  %v6344 = vrcp.pop %v6078
  %v6345 = vrcp.pop %v6081
  %v6346 = vrcp.pop %v6084
  %v6347 = vrcp.pop %v6087
  %v6348 = vrcp.pop %v6090
  %v6349 = vrcp.pop %v6093
  %v6350 = vrcp.pop %v6096
  %v6351 = vrcp.pop %v6099
  %v6352 = vrcp.pop %v6102
  %v6353 = vrcp.pop %v6105
  %v6354 = vrcp.pop %v6108
  %v6355 = vrcp.pop %v6111
  %v6356 = vrcp.pop %v6114
  %v6357 = vrcp.pop %v6117
  %v6358 = vrcp.pop %v6120
  %v6359 = vrcp.pop %v6123
  %v6360 = vrcp.pop %v6126
  %v6361 = vrcp.pop %v6129
  %v6362 = vrcp.pop %v6132
  %v6363 = vrcp.pop %v6135
  %v6364 = vrcp.pop %v6138
  %v6365 = vrcp.pop %v6141
  %v6366 = vrcp.pop %v6144
  %v6367 = vrcp.pop %v6147
  %v6368 = vrcp.pop %v6150
  %v6369 = vrcp.pop %v6153
  %v6370 = vrcp.pop %v6156
  %v6371 = vrcp.pop %v6159
  %v6372 = vrcp.pop %v6162
  %v6373 = vrcp.pop %v6165
  %v6374 = vrcp.pop %v6168
  %v6375 = vrcp.pop %v6171
  %v6376 = vrcp.pop %v6174
  %v6377 = vrcp.pop %v6177
  %v6378 = vrcp.pop %v6180
  %v6379 = vrcp.pop %v6183
  %v6380 = vrcp.pop %v6186
  %v6381 = vrcp.pop %v6189
  %v6382 = vrcp.pop %v6192
  %v6383 = vrcp.pop %v6195
  %v6384 = vrcp.pop %v6198
  %v6385 = vrcp.pop %v6201
  %v6386 = vrcp.pop %v6204
  %v6387 = vrcp.pop %v6207
  %v6388 = vrcp.pop %v6210
  %v6389 = vrcp.pop %v6213
  %v6390 = vrcp.pop %v6216
  %v6391 = vrcp.pop %v6219
  %v6392 = vrcp.pop %v6222
  %v6393 = vrcp.pop %v6225
  %v6394 = vrcp.pop %v6228
  %v6395 = vrcp.pop %v6231
  %v6396 = vrcp.pop %v6234
  %v6397 = vrcp.pop %v6237
  %v6398 = vrcp.pop %v6240
  %v6399 = vrcp.pop %v6243
  %v6400 = vrcp.pop %v6246
  %v6401 = vrcp.pop %v6249
  %v6402 = vrcp.pop %v6252
  %v6403 = vrcp.pop %v6255
  %v6404 = vrcp.pop %v6258
  %v6405 = vrcp.pop %v6261
  %v6406 = vrcp.pop %v6264
  %v6407 = vrcp.pop %v6267
  %v6408 = vrcp.pop %v6270
  %v6409 = vrcp.pop %v6273
  %v6410 = vrcp.pop %v6276
  %v6411 = vrcp.pop %v6279
  %v6412 = vrcp.pop %v6282
  %v6413 = vrcp.pop %v6285
  %v6414 = vmul.f32 %v5904, %v6286
  %v6415 = vmul.f32 %v5907, %v6287
  %v6416 = vmul.f32 %v5910, %v6288
  %v6417 = vmul.f32 %v5913, %v6289
  %v6418 = vmul.f32 %v5916, %v6290
  %v6419 = vmul.f32 %v5919, %v6291
  %v6420 = vmul.f32 %v5922, %v6292
  %v6421 = vmul.f32 %v5925, %v6293
  %v6422 = vmul.f32 %v5928, %v6294
  %v6423 = vmul.f32 %v5931, %v6295
  %v6424 = vmul.f32 %v5934, %v6296
  %v6425 = vmul.f32 %v5937, %v6297
  %v6426 = vmul.f32 %v5940, %v6298
  %v6427 = vmul.f32 %v5943, %v6299
  %v6428 = vmul.f32 %v5946, %v6300
  %v6429 = vmul.f32 %v5949, %v6301
  %v6430 = vmul.f32 %v5952, %v6302
  %v6431 = vmul.f32 %v5955, %v6303
  %v6432 = vmul.f32 %v5958, %v6304
  %v6433 = vmul.f32 %v5961, %v6305
  %v6434 = vmul.f32 %v5964, %v6306
  %v6435 = vmul.f32 %v5967, %v6307
  %v6436 = vmul.f32 %v5970, %v6308
  %v6437 = vmul.f32 %v5973, %v6309
  %v6438 = vmul.f32 %v5976, %v6310
  %v6439 = vmul.f32 %v5979, %v6311
  %v6440 = vmul.f32 %v5982, %v6312
  %v6441 = vmul.f32 %v5985, %v6313
  %v6442 = vmul.f32 %v5988, %v6314
  %v6443 = vmul.f32 %v5991, %v6315
  %v6444 = vmul.f32 %v5994, %v6316
  %v6445 = vmul.f32 %v5997, %v6317
  %v6446 = vmul.f32 %v6000, %v6318
  %v6447 = vmul.f32 %v6003, %v6319
  %v6448 = vmul.f32 %v6006, %v6320
  %v6449 = vmul.f32 %v6009, %v6321
  %v6450 = vmul.f32 %v6012, %v6322
  %v6451 = vmul.f32 %v6015, %v6323
  %v6452 = vmul.f32 %v6018, %v6324
  %v6453 = vmul.f32 %v6021, %v6325
  %v6454 = vmul.f32 %v6024, %v6326
  %v6455 = vmul.f32 %v6027, %v6327
  %v6456 = vmul.f32 %v6030, %v6328
  %v6457 = vmul.f32 %v6033, %v6329
  %v6458 = vmul.f32 %v6036, %v6330
  %v6459 = vmul.f32 %v6039, %v6331
  %v6460 = vmul.f32 %v6042, %v6332
  %v6461 = vmul.f32 %v6045, %v6333
  %v6462 = vmul.f32 %v6048, %v6334
  %v6463 = vmul.f32 %v6051, %v6335
  %v6464 = vmul.f32 %v6054, %v6336
  %v6465 = vmul.f32 %v6057, %v6337
  %v6466 = vmul.f32 %v6060, %v6338
  %v6467 = vmul.f32 %v6063, %v6339
  %v6468 = vmul.f32 %v6066, %v6340
  %v6469 = vmul.f32 %v6069, %v6341
  %v6470 = vmul.f32 %v6072, %v6342
  %v6471 = vmul.f32 %v6075, %v6343
  %v6472 = vmul.f32 %v6078, %v6344
  %v6473 = vmul.f32 %v6081, %v6345
  %v6474 = vmul.f32 %v6084, %v6346
  %v6475 = vmul.f32 %v6087, %v6347
  %v6476 = vmul.f32 %v6090, %v6348
  %v6477 = vmul.f32 %v6093, %v6349
  %v6478 = vmul.f32 %v6096, %v6350
  %v6479 = vmul.f32 %v6099, %v6351
  %v6480 = vmul.f32 %v6102, %v6352
  %v6481 = vmul.f32 %v6105, %v6353
  %v6482 = vmul.f32 %v6108, %v6354
  %v6483 = vmul.f32 %v6111, %v6355
  %v6484 = vmul.f32 %v6114, %v6356
  %v6485 = vmul.f32 %v6117, %v6357
  %v6486 = vmul.f32 %v6120, %v6358
  %v6487 = vmul.f32 %v6123, %v6359
  %v6488 = vmul.f32 %v6126, %v6360
  %v6489 = vmul.f32 %v6129, %v6361
  %v6490 = vmul.f32 %v6132, %v6362
  %v6491 = vmul.f32 %v6135, %v6363
  %v6492 = vmul.f32 %v6138, %v6364
  %v6493 = vmul.f32 %v6141, %v6365
  %v6494 = vmul.f32 %v6144, %v6366
  %v6495 = vmul.f32 %v6147, %v6367
  %v6496 = vmul.f32 %v6150, %v6368
  %v6497 = vmul.f32 %v6153, %v6369
  %v6498 = vmul.f32 %v6156, %v6370
  %v6499 = vmul.f32 %v6159, %v6371
  %v6500 = vmul.f32 %v6162, %v6372
  %v6501 = vmul.f32 %v6165, %v6373
  %v6502 = vmul.f32 %v6168, %v6374
  %v6503 = vmul.f32 %v6171, %v6375
  %v6504 = vmul.f32 %v6174, %v6376
  %v6505 = vmul.f32 %v6177, %v6377
  %v6506 = vmul.f32 %v6180, %v6378
  %v6507 = vmul.f32 %v6183, %v6379
  %v6508 = vmul.f32 %v6186, %v6380
  %v6509 = vmul.f32 %v6189, %v6381
  %v6510 = vmul.f32 %v6192, %v6382
  %v6511 = vmul.f32 %v6195, %v6383
  %v6512 = vmul.f32 %v6198, %v6384
  %v6513 = vmul.f32 %v6201, %v6385
  %v6514 = vmul.f32 %v6204, %v6386
  %v6515 = vmul.f32 %v6207, %v6387
  %v6516 = vmul.f32 %v6210, %v6388
  %v6517 = vmul.f32 %v6213, %v6389
  %v6518 = vmul.f32 %v6216, %v6390
  %v6519 = vmul.f32 %v6219, %v6391
  %v6520 = vmul.f32 %v6222, %v6392
  %v6521 = vmul.f32 %v6225, %v6393
  %v6522 = vmul.f32 %v6228, %v6394
  %v6523 = vmul.f32 %v6231, %v6395
  %v6524 = vmul.f32 %v6234, %v6396
  %v6525 = vmul.f32 %v6237, %v6397
  %v6526 = vmul.f32 %v6240, %v6398
  %v6527 = vmul.f32 %v6243, %v6399
  %v6528 = vmul.f32 %v6246, %v6400
  %v6529 = vmul.f32 %v6249, %v6401
  %v6530 = vmul.f32 %v6252, %v6402
  %v6531 = vmul.f32 %v6255, %v6403
  %v6532 = vmul.f32 %v6258, %v6404
  %v6533 = vmul.f32 %v6261, %v6405
  %v6534 = vmul.f32 %v6264, %v6406
  %v6535 = vmul.f32 %v6267, %v6407
  %v6536 = vmul.f32 %v6270, %v6408
  %v6537 = vmul.f32 %v6273, %v6409
  %v6538 = vmul.f32 %v6276, %v6410
  %v6539 = vmul.f32 %v6279, %v6411
  %v6540 = vmul.f32 %v6282, %v6412
  %v6541 = vmul.f32 %v6285, %v6413
  %v6542 = vsub.f32 2.0, %v6414
  %v6543 = vsub.f32 2.0, %v6415
  %v6544 = vsub.f32 2.0, %v6416
  %v6545 = vsub.f32 2.0, %v6417
  %v6546 = vsub.f32 2.0, %v6418
  %v6547 = vsub.f32 2.0, %v6419
  %v6548 = vsub.f32 2.0, %v6420
  %v6549 = vsub.f32 2.0, %v6421
  %v6550 = vsub.f32 2.0, %v6422
  %v6551 = vsub.f32 2.0, %v6423
  %v6552 = vsub.f32 2.0, %v6424
  %v6553 = vsub.f32 2.0, %v6425
  %v6554 = vsub.f32 2.0, %v6426
  %v6555 = vsub.f32 2.0, %v6427
  %v6556 = vsub.f32 2.0, %v6428
  %v6557 = vsub.f32 2.0, %v6429
  %v6558 = vsub.f32 2.0, %v6430
  %v6559 = vsub.f32 2.0, %v6431
  %v6560 = vsub.f32 2.0, %v6432
  %v6561 = vsub.f32 2.0, %v6433
  %v6562 = vsub.f32 2.0, %v6434
  %v6563 = vsub.f32 2.0, %v6435
  %v6564 = vsub.f32 2.0, %v6436
  %v6565 = vsub.f32 2.0, %v6437
  %v6566 = vsub.f32 2.0, %v6438
  %v6567 = vsub.f32 2.0, %v6439
  %v6568 = vsub.f32 2.0, %v6440
  %v6569 = vsub.f32 2.0, %v6441
  %v6570 = vsub.f32 2.0, %v6442
  %v6571 = vsub.f32 2.0, %v6443
  %v6572 = vsub.f32 2.0, %v6444
  %v6573 = vsub.f32 2.0, %v6445
  %v6574 = vsub.f32 2.0, %v6446
  %v6575 = vsub.f32 2.0, %v6447
  %v6576 = vsub.f32 2.0, %v6448
  %v6577 = vsub.f32 2.0, %v6449
  %v6578 = vsub.f32 2.0, %v6450
  %v6579 = vsub.f32 2.0, %v6451
  %v6580 = vsub.f32 2.0, %v6452
  %v6581 = vsub.f32 2.0, %v6453
  %v6582 = vsub.f32 2.0, %v6454
  %v6583 = vsub.f32 2.0, %v6455
  %v6584 = vsub.f32 2.0, %v6456
  %v6585 = vsub.f32 2.0, %v6457
  %v6586 = vsub.f32 2.0, %v6458
  %v6587 = vsub.f32 2.0, %v6459
  %v6588 = vsub.f32 2.0, %v6460
  %v6589 = vsub.f32 2.0, %v6461
  %v6590 = vsub.f32 2.0, %v6462
  %v6591 = vsub.f32 2.0, %v6463
  %v6592 = vsub.f32 2.0, %v6464
  %v6593 = vsub.f32 2.0, %v6465
  %v6594 = vsub.f32 2.0, %v6466
  %v6595 = vsub.f32 2.0, %v6467
  %v6596 = vsub.f32 2.0, %v6468
  %v6597 = vsub.f32 2.0, %v6469
  %v6598 = vsub.f32 2.0, %v6470
  %v6599 = vsub.f32 2.0, %v6471
  %v6600 = vsub.f32 2.0, %v6472
  %v6601 = vsub.f32 2.0, %v6473
  %v6602 = vsub.f32 2.0, %v6474
  %v6603 = vsub.f32 2.0, %v6475
  %v6604 = vsub.f32 2.0, %v6476
  %v6605 = vsub.f32 2.0, %v6477
  %v6606 = vsub.f32 2.0, %v6478
  %v6607 = vsub.f32 2.0, %v6479
  %v6608 = vsub.f32 2.0, %v6480
  %v6609 = vsub.f32 2.0, %v6481
  %v6610 = vsub.f32 2.0, %v6482
  %v6611 = vsub.f32 2.0, %v6483
  %v6612 = vsub.f32 2.0, %v6484
  %v6613 = vsub.f32 2.0, %v6485
  %v6614 = vsub.f32 2.0, %v6486
  %v6615 = vsub.f32 2.0, %v6487
  %v6616 = vsub.f32 2.0, %v6488
  %v6617 = vsub.f32 2.0, %v6489
  %v6618 = vsub.f32 2.0, %v6490
  %v6619 = vsub.f32 2.0, %v6491
  %v6620 = vsub.f32 2.0, %v6492
  %v6621 = vsub.f32 2.0, %v6493
  %v6622 = vsub.f32 2.0, %v6494
  %v6623 = vsub.f32 2.0, %v6495
  %v6624 = vsub.f32 2.0, %v6496
  %v6625 = vsub.f32 2.0, %v6497
  %v6626 = vsub.f32 2.0, %v6498
  %v6627 = vsub.f32 2.0, %v6499
  %v6628 = vsub.f32 2.0, %v6500
  %v6629 = vsub.f32 2.0, %v6501
  %v6630 = vsub.f32 2.0, %v6502
  %v6631 = vsub.f32 2.0, %v6503
  %v6632 = vsub.f32 2.0, %v6504
  %v6633 = vsub.f32 2.0, %v6505
  %v6634 = vsub.f32 2.0, %v6506
  %v6635 = vsub.f32 2.0, %v6507
  %v6636 = vsub.f32 2.0, %v6508
  %v6637 = vsub.f32 2.0, %v6509
  %v6638 = vsub.f32 2.0, %v6510
  %v6639 = vsub.f32 2.0, %v6511
  %v6640 = vsub.f32 2.0, %v6512
  %v6641 = vsub.f32 2.0, %v6513
  %v6642 = vsub.f32 2.0, %v6514
  %v6643 = vsub.f32 2.0, %v6515
  %v6644 = vsub.f32 2.0, %v6516
  %v6645 = vsub.f32 2.0, %v6517
  %v6646 = vsub.f32 2.0, %v6518
  %v6647 = vsub.f32 2.0, %v6519
  %v6648 = vsub.f32 2.0, %v6520
  %v6649 = vsub.f32 2.0, %v6521
  %v6650 = vsub.f32 2.0, %v6522
  %v6651 = vsub.f32 2.0, %v6523
  %v6652 = vsub.f32 2.0, %v6524
  %v6653 = vsub.f32 2.0, %v6525
  %v6654 = vsub.f32 2.0, %v6526
  %v6655 = vsub.f32 2.0, %v6527
  %v6656 = vsub.f32 2.0, %v6528
  %v6657 = vsub.f32 2.0, %v6529
  %v6658 = vsub.f32 2.0, %v6530
  %v6659 = vsub.f32 2.0, %v6531
  %v6660 = vsub.f32 2.0, %v6532
  %v6661 = vsub.f32 2.0, %v6533
  %v6662 = vsub.f32 2.0, %v6534
  %v6663 = vsub.f32 2.0, %v6535
  %v6664 = vsub.f32 2.0, %v6536
  %v6665 = vsub.f32 2.0, %v6537
  %v6666 = vsub.f32 2.0, %v6538
  %v6667 = vsub.f32 2.0, %v6539
  %v6668 = vsub.f32 2.0, %v6540
  %v6669 = vsub.f32 2.0, %v6541
  %v6670 = vmul.f32 %v6286, %v6542
  %v6671 = vmul.f32 %v6287, %v6543
  %v6672 = vmul.f32 %v6288, %v6544
  %v6673 = vmul.f32 %v6289, %v6545
  %v6674 = vmul.f32 %v6290, %v6546
  %v6675 = vmul.f32 %v6291, %v6547
  %v6676 = vmul.f32 %v6292, %v6548
  %v6677 = vmul.f32 %v6293, %v6549
  %v6678 = vmul.f32 %v6294, %v6550
  %v6679 = vmul.f32 %v6295, %v6551
  %v6680 = vmul.f32 %v6296, %v6552
  %v6681 = vmul.f32 %v6297, %v6553
  %v6682 = vmul.f32 %v6298, %v6554
  %v6683 = vmul.f32 %v6299, %v6555
  %v6684 = vmul.f32 %v6300, %v6556
  %v6685 = vmul.f32 %v6301, %v6557
  %v6686 = vmul.f32 %v6302, %v6558
  %v6687 = vmul.f32 %v6303, %v6559
  %v6688 = vmul.f32 %v6304, %v6560
  %v6689 = vmul.f32 %v6305, %v6561
  %v6690 = vmul.f32 %v6306, %v6562
  %v6691 = vmul.f32 %v6307, %v6563
  %v6692 = vmul.f32 %v6308, %v6564
  %v6693 = vmul.f32 %v6309, %v6565
  %v6694 = vmul.f32 %v6310, %v6566
  %v6695 = vmul.f32 %v6311, %v6567
  %v6696 = vmul.f32 %v6312, %v6568
  %v6697 = vmul.f32 %v6313, %v6569
  %v6698 = vmul.f32 %v6314, %v6570
  %v6699 = vmul.f32 %v6315, %v6571
  %v6700 = vmul.f32 %v6316, %v6572
  %v6701 = vmul.f32 %v6317, %v6573
  %v6702 = vmul.f32 %v6318, %v6574
  %v6703 = vmul.f32 %v6319, %v6575
  %v6704 = vmul.f32 %v6320, %v6576
  %v6705 = vmul.f32 %v6321, %v6577
  %v6706 = vmul.f32 %v6322, %v6578
  %v6707 = vmul.f32 %v6323, %v6579
  %v6708 = vmul.f32 %v6324, %v6580
  %v6709 = vmul.f32 %v6325, %v6581
  %v6710 = vmul.f32 %v6326, %v6582
  %v6711 = vmul.f32 %v6327, %v6583
  %v6712 = vmul.f32 %v6328, %v6584
  %v6713 = vmul.f32 %v6329, %v6585
  %v6714 = vmul.f32 %v6330, %v6586
  %v6715 = vmul.f32 %v6331, %v6587
  %v6716 = vmul.f32 %v6332, %v6588
  %v6717 = vmul.f32 %v6333, %v6589
  %v6718 = vmul.f32 %v6334, %v6590
  %v6719 = vmul.f32 %v6335, %v6591
  %v6720 = vmul.f32 %v6336, %v6592
  %v6721 = vmul.f32 %v6337, %v6593
  %v6722 = vmul.f32 %v6338, %v6594
  %v6723 = vmul.f32 %v6339, %v6595
  %v6724 = vmul.f32 %v6340, %v6596
  %v6725 = vmul.f32 %v6341, %v6597
  %v6726 = vmul.f32 %v6342, %v6598
  %v6727 = vmul.f32 %v6343, %v6599
  %v6728 = vmul.f32 %v6344, %v6600
  %v6729 = vmul.f32 %v6345, %v6601
  %v6730 = vmul.f32 %v6346, %v6602
  %v6731 = vmul.f32 %v6347, %v6603
  %v6732 = vmul.f32 %v6348, %v6604
  %v6733 = vmul.f32 %v6349, %v6605
  %v6734 = vmul.f32 %v6350, %v6606
  %v6735 = vmul.f32 %v6351, %v6607
  %v6736 = vmul.f32 %v6352, %v6608
  %v6737 = vmul.f32 %v6353, %v6609
  %v6738 = vmul.f32 %v6354, %v6610
  %v6739 = vmul.f32 %v6355, %v6611
  %v6740 = vmul.f32 %v6356, %v6612
  %v6741 = vmul.f32 %v6357, %v6613
  %v6742 = vmul.f32 %v6358, %v6614
  %v6743 = vmul.f32 %v6359, %v6615
  %v6744 = vmul.f32 %v6360, %v6616
  %v6745 = vmul.f32 %v6361, %v6617
  %v6746 = vmul.f32 %v6362, %v6618
  %v6747 = vmul.f32 %v6363, %v6619
  %v6748 = vmul.f32 %v6364, %v6620
  %v6749 = vmul.f32 %v6365, %v6621
  %v6750 = vmul.f32 %v6366, %v6622
  %v6751 = vmul.f32 %v6367, %v6623
  %v6752 = vmul.f32 %v6368, %v6624
  %v6753 = vmul.f32 %v6369, %v6625
  %v6754 = vmul.f32 %v6370, %v6626
  %v6755 = vmul.f32 %v6371, %v6627
  %v6756 = vmul.f32 %v6372, %v6628
  %v6757 = vmul.f32 %v6373, %v6629
  %v6758 = vmul.f32 %v6374, %v6630
  %v6759 = vmul.f32 %v6375, %v6631
  %v6760 = vmul.f32 %v6376, %v6632
  %v6761 = vmul.f32 %v6377, %v6633
  %v6762 = vmul.f32 %v6378, %v6634
  %v6763 = vmul.f32 %v6379, %v6635
  %v6764 = vmul.f32 %v6380, %v6636
  %v6765 = vmul.f32 %v6381, %v6637
  %v6766 = vmul.f32 %v6382, %v6638
  %v6767 = vmul.f32 %v6383, %v6639
  %v6768 = vmul.f32 %v6384, %v6640
  %v6769 = vmul.f32 %v6385, %v6641
  %v6770 = vmul.f32 %v6386, %v6642
  %v6771 = vmul.f32 %v6387, %v6643
  %v6772 = vmul.f32 %v6388, %v6644
  %v6773 = vmul.f32 %v6389, %v6645
  %v6774 = vmul.f32 %v6390, %v6646
  %v6775 = vmul.f32 %v6391, %v6647
  %v6776 = vmul.f32 %v6392, %v6648
  %v6777 = vmul.f32 %v6393, %v6649
  %v6778 = vmul.f32 %v6394, %v6650
  %v6779 = vmul.f32 %v6395, %v6651
  %v6780 = vmul.f32 %v6396, %v6652
  %v6781 = vmul.f32 %v6397, %v6653
  %v6782 = vmul.f32 %v6398, %v6654
  %v6783 = vmul.f32 %v6399, %v6655
  %v6784 = vmul.f32 %v6400, %v6656
  %v6785 = vmul.f32 %v6401, %v6657
  %v6786 = vmul.f32 %v6402, %v6658
  %v6787 = vmul.f32 %v6403, %v6659
  %v6788 = vmul.f32 %v6404, %v6660
  %v6789 = vmul.f32 %v6405, %v6661
  %v6790 = vmul.f32 %v6406, %v6662
  %v6791 = vmul.f32 %v6407, %v6663
  %v6792 = vmul.f32 %v6408, %v6664
  %v6793 = vmul.f32 %v6409, %v6665
  %v6794 = vmul.f32 %v6410, %v6666
  %v6795 = vmul.f32 %v6411, %v6667
  %v6796 = vmul.f32 %v6412, %v6668
  %v6797 = vmul.f32 %v6413, %v6669
  %v6798 = vmul.f32 %v5647, %v6670
  %v6799 = vmul.f32 %v5649, %v6671
  %v6800 = vmul.f32 %v5651, %v6672
  %v6801 = vmul.f32 %v5653, %v6673
  %v6802 = vmul.f32 %v5655, %v6674
  %v6803 = vmul.f32 %v5657, %v6675
  %v6804 = vmul.f32 %v5659, %v6676
  %v6805 = vmul.f32 %v5661, %v6677
  %v6806 = vmul.f32 %v5663, %v6678
  %v6807 = vmul.f32 %v5665, %v6679
  %v6808 = vmul.f32 %v5667, %v6680
  %v6809 = vmul.f32 %v5669, %v6681
  %v6810 = vmul.f32 %v5671, %v6682
  %v6811 = vmul.f32 %v5673, %v6683
  %v6812 = vmul.f32 %v5675, %v6684
  %v6813 = vmul.f32 %v5677, %v6685
  %v6814 = vmul.f32 %v5679, %v6686
  %v6815 = vmul.f32 %v5681, %v6687
  %v6816 = vmul.f32 %v5683, %v6688
  %v6817 = vmul.f32 %v5685, %v6689
  %v6818 = vmul.f32 %v5687, %v6690
  %v6819 = vmul.f32 %v5689, %v6691
  %v6820 = vmul.f32 %v5691, %v6692
  %v6821 = vmul.f32 %v5693, %v6693
  %v6822 = vmul.f32 %v5695, %v6694
  %v6823 = vmul.f32 %v5697, %v6695
  %v6824 = vmul.f32 %v5699, %v6696
  %v6825 = vmul.f32 %v5701, %v6697
  %v6826 = vmul.f32 %v5703, %v6698
  %v6827 = vmul.f32 %v5705, %v6699
  %v6828 = vmul.f32 %v5707, %v6700
  %v6829 = vmul.f32 %v5709, %v6701
  %v6830 = vmul.f32 %v5711, %v6702
  %v6831 = vmul.f32 %v5713, %v6703
  %v6832 = vmul.f32 %v5715, %v6704
  %v6833 = vmul.f32 %v5717, %v6705
  %v6834 = vmul.f32 %v5719, %v6706
  %v6835 = vmul.f32 %v5721, %v6707
  %v6836 = vmul.f32 %v5723, %v6708
  %v6837 = vmul.f32 %v5725, %v6709
  %v6838 = vmul.f32 %v5727, %v6710
  %v6839 = vmul.f32 %v5729, %v6711
  %v6840 = vmul.f32 %v5731, %v6712
  %v6841 = vmul.f32 %v5733, %v6713
  %v6842 = vmul.f32 %v5735, %v6714
  %v6843 = vmul.f32 %v5737, %v6715
  %v6844 = vmul.f32 %v5739, %v6716
  %v6845 = vmul.f32 %v5741, %v6717
  %v6846 = vmul.f32 %v5743, %v6718
  %v6847 = vmul.f32 %v5745, %v6719
  %v6848 = vmul.f32 %v5747, %v6720
  %v6849 = vmul.f32 %v5749, %v6721
  %v6850 = vmul.f32 %v5751, %v6722
  %v6851 = vmul.f32 %v5753, %v6723
  %v6852 = vmul.f32 %v5755, %v6724
  %v6853 = vmul.f32 %v5757, %v6725
  %v6854 = vmul.f32 %v5759, %v6726
  %v6855 = vmul.f32 %v5761, %v6727
  %v6856 = vmul.f32 %v5763, %v6728
  %v6857 = vmul.f32 %v5765, %v6729
  %v6858 = vmul.f32 %v5767, %v6730
  %v6859 = vmul.f32 %v5769, %v6731
  %v6860 = vmul.f32 %v5771, %v6732
  %v6861 = vmul.f32 %v5773, %v6733
  %v6862 = vmul.f32 %v5775, %v6734
  %v6863 = vmul.f32 %v5777, %v6735
  %v6864 = vmul.f32 %v5779, %v6736
  %v6865 = vmul.f32 %v5781, %v6737
  %v6866 = vmul.f32 %v5783, %v6738
  %v6867 = vmul.f32 %v5785, %v6739
  %v6868 = vmul.f32 %v5787, %v6740
  %v6869 = vmul.f32 %v5789, %v6741
  %v6870 = vmul.f32 %v5791, %v6742
  %v6871 = vmul.f32 %v5793, %v6743
  %v6872 = vmul.f32 %v5795, %v6744
  %v6873 = vmul.f32 %v5797, %v6745
  %v6874 = vmul.f32 %v5799, %v6746
  %v6875 = vmul.f32 %v5801, %v6747
  %v6876 = vmul.f32 %v5803, %v6748
  %v6877 = vmul.f32 %v5805, %v6749
  %v6878 = vmul.f32 %v5807, %v6750
  %v6879 = vmul.f32 %v5809, %v6751
  %v6880 = vmul.f32 %v5811, %v6752
  %v6881 = vmul.f32 %v5813, %v6753
  %v6882 = vmul.f32 %v5815, %v6754
  %v6883 = vmul.f32 %v5817, %v6755
  %v6884 = vmul.f32 %v5819, %v6756
  %v6885 = vmul.f32 %v5821, %v6757
  %v6886 = vmul.f32 %v5823, %v6758
  %v6887 = vmul.f32 %v5825, %v6759
  %v6888 = vmul.f32 %v5827, %v6760
  %v6889 = vmul.f32 %v5829, %v6761
  %v6890 = vmul.f32 %v5831, %v6762
  %v6891 = vmul.f32 %v5833, %v6763
  %v6892 = vmul.f32 %v5835, %v6764
  %v6893 = vmul.f32 %v5837, %v6765
  %v6894 = vmul.f32 %v5839, %v6766
  %v6895 = vmul.f32 %v5841, %v6767
  %v6896 = vmul.f32 %v5843, %v6768
  %v6897 = vmul.f32 %v5845, %v6769
  %v6898 = vmul.f32 %v5847, %v6770
  %v6899 = vmul.f32 %v5849, %v6771
  %v6900 = vmul.f32 %v5851, %v6772
  %v6901 = vmul.f32 %v5853, %v6773
  %v6902 = vmul.f32 %v5855, %v6774
  %v6903 = vmul.f32 %v5857, %v6775
  %v6904 = vmul.f32 %v5859, %v6776
  %v6905 = vmul.f32 %v5861, %v6777
  %v6906 = vmul.f32 %v5863, %v6778
  %v6907 = vmul.f32 %v5865, %v6779
  %v6908 = vmul.f32 %v5867, %v6780
  %v6909 = vmul.f32 %v5869, %v6781
  %v6910 = vmul.f32 %v5871, %v6782
  %v6911 = vmul.f32 %v5873, %v6783
  %v6912 = vmul.f32 %v5875, %v6784
  %v6913 = vmul.f32 %v5877, %v6785
  %v6914 = vmul.f32 %v5879, %v6786
  %v6915 = vmul.f32 %v5881, %v6787
  %v6916 = vmul.f32 %v5883, %v6788
  %v6917 = vmul.f32 %v5885, %v6789
  %v6918 = vmul.f32 %v5887, %v6790
  %v6919 = vmul.f32 %v5889, %v6791
  %v6920 = vmul.f32 %v5891, %v6792
  %v6921 = vmul.f32 %v5893, %v6793
  %v6922 = vmul.f32 %v5895, %v6794
  %v6923 = vmul.f32 %v5897, %v6795
  %v6924 = vmul.f32 %v5899, %v6796
  %v6925 = vmul.f32 %v5901, %v6797
  %v6927 = vsel %vm5133, %v6798, 0
  %v6930 = vsel %vm5133, %v6799, 0
  %v6933 = vsel %vm5133, %v6800, 0
  %v6936 = vsel %vm5133, %v6801, 0
  %6938 = vmatprep.subr.mxu0 0.0
  %6939 = vmatpush1.msra.mxu0 0.0
  %6940 = vmatprep.subr.mxu0 0.0
  %6941 = vmatpush1.msra.mxu0 0.0
  %6942 = vmatprep.subr.mxu0 0.0
  %6943 = vmatpush1.msra.mxu0 0.0
  %6944 = vmatprep.subr.mxu0 0.0
  %6945 = vmatpush1.msra.mxu0 0.0
  %6946 = vmatprep.subr.mxu0 0.0
  %6947 = vmatpush1.msra.mxu0 0.0
  %6948 = vmatprep.subr.mxu0 0.0
  %6949 = vmatpush1.msra.mxu0 0.0
  %6950 = vmatprep.subr.mxu0 0.0
  %6951 = vmatpush1.msra.mxu0 0.0
  %6952 = vmatprep.subr.mxu0 0.0
  %6953 = vmatpush1.msra.mxu0 0.0
  %6954 = vmatprep.subr.mxu0 0.0
  %6955 = vmatpush1.msra.mxu0 0.0
  %6956 = vmatprep.subr.mxu0 0.0
  %6957 = vmatpush1.msra.mxu0 0.0
  %6958 = vmatprep.subr.mxu0 0.0
  %6959 = vmatpush1.msra.mxu0 0.0
  %6960 = vmatprep.subr.mxu0 0.0
  %6961 = vmatpush1.msra.mxu0 0.0
  %6962 = vmatprep.subr.mxu0 0.0
  %6963 = vmatpush1.msra.mxu0 %v783
  %6964 = vmatprep.subr.mxu0 0.0
  %6965 = vmatpush1.msra.mxu0 %v777
  %6966 = vmatprep.subr.mxu0 0.0
  %6967 = vmatpush1.msra.mxu0 %v771
  %6968 = vmatprep.subr.mxu0 0.0
  %6969 = vmatpush1.msra.mxu0 %v765
  %6970 = vmatprep.subr.mxu0 0.0
  %6971 = vmatpush2.msra.mxu0 0.0
  %6972 = vmatprep.subr.mxu0 0.0
  %6973 = vmatpush2.msra.mxu0 0.0
  %6974 = vmatprep.subr.mxu0 0.0
  %6975 = vmatpush2.msra.mxu0 0.0
  %6976 = vmatprep.subr.mxu0 0.0
  %6977 = vmatpush2.msra.mxu0 0.0
  %6978 = vmatprep.subr.mxu0 0.0
  %6979 = vmatpush2.msra.mxu0 0.0
  %6980 = vmatprep.subr.mxu0 0.0
  %6981 = vmatpush2.msra.mxu0 0.0
  %6982 = vmatprep.subr.mxu0 0.0
  %6983 = vmatpush2.msra.mxu0 0.0
  %6984 = vmatprep.subr.mxu0 0.0
  %6985 = vmatpush2.msra.mxu0 0.0
  %6986 = vmatprep.subr.mxu0 0.0
  %6987 = vmatpush2.msra.mxu0 0.0
  %6988 = vmatprep.subr.mxu0 0.0
  %6989 = vmatpush2.msra.mxu0 0.0
  %6990 = vmatprep.subr.mxu0 0.0
  %6991 = vmatpush2.msra.mxu0 0.0
  %6992 = vmatprep.subr.mxu0 0.0
  %6993 = vmatpush2.msra.mxu0 0.0
  %6994 = vmatprep.subr.mxu0 0.0
  %6995 = vmatpush2.msra.mxu0 0.0
  %6996 = vmatprep.subr.mxu0 0.0
  %6997 = vmatpush2.msra.mxu0 0.0
  %6998 = vmatprep.subr.mxu0 0.0
  %6999 = vmatpush2.msra.mxu0 0.0
  %7000 = vmatprep.subr.mxu0 0.0
  %7001 = vmatpush2.msra.mxu0 0.0
  %7002 = vmatprep.mubr.f32.mxu0 0.0
  %7003 = vmatmul.mubr.f32.gmra.mxu0 %v6927
  %v7004 = vpop.f32.mrf.mxu0
  %v7005 = vadd.f32 0.0, %v7004
  %v7006 = vpop.f32.mrf.mxu0
  %7007 = vmatprep.mubr.f32.mxu0 0.0
  %7008 = vmatmul.mubr.f32.gmra.mxu0 %v6930
  %v7009 = vpop.f32.mrf.mxu0
  %v7010 = vadd.f32 0.0, %v7009
  %v7011 = vpop.f32.mrf.mxu0
  %7012 = vmatprep.mubr.f32.mxu0 0.0
  %7013 = vmatmul.mubr.f32.gmra.mxu0 %v6933
  %v7014 = vpop.f32.mrf.mxu0
  %v7015 = vadd.f32 0.0, %v7014
  %v7016 = vpop.f32.mrf.mxu0
  %7017 = vmatprep.mubr.f32.mxu0 0.0
  %7018 = vmatmul.mubr.f32.gmra.mxu0 %v6936
  %v7019 = vpop.f32.mrf.mxu0
  %v7020 = vadd.f32 0.0, %v7019
  %v7021 = vpop.f32.mrf.mxu0
  %7022 = vdwg.mxu0
  %v7024 = vsel %vm5133, %v6802, 0
  %v7027 = vsel %vm5133, %v6803, 0
  %v7030 = vsel %vm5133, %v6804, 0
  %v7033 = vsel %vm5133, %v6805, 0
  %7035 = vmatprep.subr.mxu0 0.0
  %7036 = vmatpush1.msra.mxu0 0.0
  %7037 = vmatprep.subr.mxu0 0.0
  %7038 = vmatpush1.msra.mxu0 0.0
  %7039 = vmatprep.subr.mxu0 0.0
  %7040 = vmatpush1.msra.mxu0 0.0
  %7041 = vmatprep.subr.mxu0 0.0
  %7042 = vmatpush1.msra.mxu0 0.0
  %7043 = vmatprep.subr.mxu0 0.0
  %7044 = vmatpush1.msra.mxu0 0.0
  %7045 = vmatprep.subr.mxu0 0.0
  %7046 = vmatpush1.msra.mxu0 0.0
  %7047 = vmatprep.subr.mxu0 0.0
  %7048 = vmatpush1.msra.mxu0 0.0
  %7049 = vmatprep.subr.mxu0 0.0
  %7050 = vmatpush1.msra.mxu0 0.0
  %7051 = vmatprep.subr.mxu0 0.0
  %7052 = vmatpush1.msra.mxu0 0.0
  %7053 = vmatprep.subr.mxu0 0.0
  %7054 = vmatpush1.msra.mxu0 0.0
  %7055 = vmatprep.subr.mxu0 0.0
  %7056 = vmatpush1.msra.mxu0 0.0
  %7057 = vmatprep.subr.mxu0 0.0
  %7058 = vmatpush1.msra.mxu0 0.0
  %7059 = vmatprep.subr.mxu0 0.0
  %7060 = vmatpush1.msra.mxu0 %v807
  %7061 = vmatprep.subr.mxu0 0.0
  %7062 = vmatpush1.msra.mxu0 %v801
  %7063 = vmatprep.subr.mxu0 0.0
  %7064 = vmatpush1.msra.mxu0 %v795
  %7065 = vmatprep.subr.mxu0 0.0
  %7066 = vmatpush1.msra.mxu0 %v789
  %7067 = vmatprep.subr.mxu0 0.0
  %7068 = vmatpush2.msra.mxu0 0.0
  %7069 = vmatprep.subr.mxu0 0.0
  %7070 = vmatpush2.msra.mxu0 0.0
  %7071 = vmatprep.subr.mxu0 0.0
  %7072 = vmatpush2.msra.mxu0 0.0
  %7073 = vmatprep.subr.mxu0 0.0
  %7074 = vmatpush2.msra.mxu0 0.0
  %7075 = vmatprep.subr.mxu0 0.0
  %7076 = vmatpush2.msra.mxu0 0.0
  %7077 = vmatprep.subr.mxu0 0.0
  %7078 = vmatpush2.msra.mxu0 0.0
  %7079 = vmatprep.subr.mxu0 0.0
  %7080 = vmatpush2.msra.mxu0 0.0
  %7081 = vmatprep.subr.mxu0 0.0
  %7082 = vmatpush2.msra.mxu0 0.0
  %7083 = vmatprep.subr.mxu0 0.0
  %7084 = vmatpush2.msra.mxu0 0.0
  %7085 = vmatprep.subr.mxu0 0.0
  %7086 = vmatpush2.msra.mxu0 0.0
  %7087 = vmatprep.subr.mxu0 0.0
  %7088 = vmatpush2.msra.mxu0 0.0
  %7089 = vmatprep.subr.mxu0 0.0
  %7090 = vmatpush2.msra.mxu0 0.0
  %7091 = vmatprep.subr.mxu0 0.0
  %7092 = vmatpush2.msra.mxu0 0.0
  %7093 = vmatprep.subr.mxu0 0.0
  %7094 = vmatpush2.msra.mxu0 0.0
  %7095 = vmatprep.subr.mxu0 0.0
  %7096 = vmatpush2.msra.mxu0 0.0
  %7097 = vmatprep.subr.mxu0 0.0
  %7098 = vmatpush2.msra.mxu0 0.0
  %7099 = vmatprep.mubr.f32.mxu0 0.0
  %7100 = vmatmul.mubr.f32.gmra.mxu0 %v7024
  %v7101 = vpop.f32.mrf.mxu0
  %v7102 = vadd.f32 0.0, %v7101
  %v7103 = vpop.f32.mrf.mxu0
  %7104 = vmatprep.mubr.f32.mxu0 0.0
  %7105 = vmatmul.mubr.f32.gmra.mxu0 %v7027
  %v7106 = vpop.f32.mrf.mxu0
  %v7107 = vadd.f32 0.0, %v7106
  %v7108 = vpop.f32.mrf.mxu0
  %7109 = vmatprep.mubr.f32.mxu0 0.0
  %7110 = vmatmul.mubr.f32.gmra.mxu0 %v7030
  %v7111 = vpop.f32.mrf.mxu0
  %v7112 = vadd.f32 0.0, %v7111
  %v7113 = vpop.f32.mrf.mxu0
  %7114 = vmatprep.mubr.f32.mxu0 0.0
  %7115 = vmatmul.mubr.f32.gmra.mxu0 %v7033
  %v7116 = vpop.f32.mrf.mxu0
  %v7117 = vadd.f32 0.0, %v7116
  %v7118 = vpop.f32.mrf.mxu0
  %7119 = vdwg.mxu0
  %v7121 = vsel %vm5133, %v6806, 0
  %v7124 = vsel %vm5133, %v6807, 0
  %v7127 = vsel %vm5133, %v6808, 0
  %v7130 = vsel %vm5133, %v6809, 0
  %7132 = vmatprep.subr.mxu0 0.0
  %7133 = vmatpush1.msra.mxu0 0.0
  %7134 = vmatprep.subr.mxu0 0.0
  %7135 = vmatpush1.msra.mxu0 0.0
  %7136 = vmatprep.subr.mxu0 0.0
  %7137 = vmatpush1.msra.mxu0 0.0
  %7138 = vmatprep.subr.mxu0 0.0
  %7139 = vmatpush1.msra.mxu0 0.0
  %7140 = vmatprep.subr.mxu0 0.0
  %7141 = vmatpush1.msra.mxu0 0.0
  %7142 = vmatprep.subr.mxu0 0.0
  %7143 = vmatpush1.msra.mxu0 0.0
  %7144 = vmatprep.subr.mxu0 0.0
  %7145 = vmatpush1.msra.mxu0 0.0
  %7146 = vmatprep.subr.mxu0 0.0
  %7147 = vmatpush1.msra.mxu0 0.0
  %7148 = vmatprep.subr.mxu0 0.0
  %7149 = vmatpush1.msra.mxu0 0.0
  %7150 = vmatprep.subr.mxu0 0.0
  %7151 = vmatpush1.msra.mxu0 0.0
  %7152 = vmatprep.subr.mxu0 0.0
  %7153 = vmatpush1.msra.mxu0 0.0
  %7154 = vmatprep.subr.mxu0 0.0
  %7155 = vmatpush1.msra.mxu0 0.0
  %7156 = vmatprep.subr.mxu0 0.0
  %7157 = vmatpush1.msra.mxu0 %v831
  %7158 = vmatprep.subr.mxu0 0.0
  %7159 = vmatpush1.msra.mxu0 %v825
  %7160 = vmatprep.subr.mxu0 0.0
  %7161 = vmatpush1.msra.mxu0 %v819
  %7162 = vmatprep.subr.mxu0 0.0
  %7163 = vmatpush1.msra.mxu0 %v813
  %7164 = vmatprep.subr.mxu0 0.0
  %7165 = vmatpush2.msra.mxu0 0.0
  %7166 = vmatprep.subr.mxu0 0.0
  %7167 = vmatpush2.msra.mxu0 0.0
  %7168 = vmatprep.subr.mxu0 0.0
  %7169 = vmatpush2.msra.mxu0 0.0
  %7170 = vmatprep.subr.mxu0 0.0
  %7171 = vmatpush2.msra.mxu0 0.0
  %7172 = vmatprep.subr.mxu0 0.0
  %7173 = vmatpush2.msra.mxu0 0.0
  %7174 = vmatprep.subr.mxu0 0.0
  %7175 = vmatpush2.msra.mxu0 0.0
  %7176 = vmatprep.subr.mxu0 0.0
  %7177 = vmatpush2.msra.mxu0 0.0
  %7178 = vmatprep.subr.mxu0 0.0
  %7179 = vmatpush2.msra.mxu0 0.0
  %7180 = vmatprep.subr.mxu0 0.0
  %7181 = vmatpush2.msra.mxu0 0.0
  %7182 = vmatprep.subr.mxu0 0.0
  %7183 = vmatpush2.msra.mxu0 0.0
  %7184 = vmatprep.subr.mxu0 0.0
  %7185 = vmatpush2.msra.mxu0 0.0
  %7186 = vmatprep.subr.mxu0 0.0
  %7187 = vmatpush2.msra.mxu0 0.0
  %7188 = vmatprep.subr.mxu0 0.0
  %7189 = vmatpush2.msra.mxu0 0.0
  %7190 = vmatprep.subr.mxu0 0.0
  %7191 = vmatpush2.msra.mxu0 0.0
  %7192 = vmatprep.subr.mxu0 0.0
  %7193 = vmatpush2.msra.mxu0 0.0
  %7194 = vmatprep.subr.mxu0 0.0
  %7195 = vmatpush2.msra.mxu0 0.0
  %7196 = vmatprep.mubr.f32.mxu0 0.0
  %7197 = vmatmul.mubr.f32.gmra.mxu0 %v7121
  %v7198 = vpop.f32.mrf.mxu0
  %v7199 = vadd.f32 0.0, %v7198
  %v7200 = vpop.f32.mrf.mxu0
  %7201 = vmatprep.mubr.f32.mxu0 0.0
  %7202 = vmatmul.mubr.f32.gmra.mxu0 %v7124
  %v7203 = vpop.f32.mrf.mxu0
  %v7204 = vadd.f32 0.0, %v7203
  %v7205 = vpop.f32.mrf.mxu0
  %7206 = vmatprep.mubr.f32.mxu0 0.0
  %7207 = vmatmul.mubr.f32.gmra.mxu0 %v7127
  %v7208 = vpop.f32.mrf.mxu0
  %v7209 = vadd.f32 0.0, %v7208
  %v7210 = vpop.f32.mrf.mxu0
  %7211 = vmatprep.mubr.f32.mxu0 0.0
  %7212 = vmatmul.mubr.f32.gmra.mxu0 %v7130
  %v7213 = vpop.f32.mrf.mxu0
  %v7214 = vadd.f32 0.0, %v7213
  %v7215 = vpop.f32.mrf.mxu0
  %7216 = vdwg.mxu0
  %v7218 = vsel %vm5133, %v6810, 0
  %v7221 = vsel %vm5133, %v6811, 0
  %v7224 = vsel %vm5133, %v6812, 0
  %v7227 = vsel %vm5133, %v6813, 0
  %7229 = vmatprep.subr.mxu0 0.0
  %7230 = vmatpush1.msra.mxu0 0.0
  %7231 = vmatprep.subr.mxu0 0.0
  %7232 = vmatpush1.msra.mxu0 0.0
  %7233 = vmatprep.subr.mxu0 0.0
  %7234 = vmatpush1.msra.mxu0 0.0
  %7235 = vmatprep.subr.mxu0 0.0
  %7236 = vmatpush1.msra.mxu0 0.0
  %7237 = vmatprep.subr.mxu0 0.0
  %7238 = vmatpush1.msra.mxu0 0.0
  %7239 = vmatprep.subr.mxu0 0.0
  %7240 = vmatpush1.msra.mxu0 0.0
  %7241 = vmatprep.subr.mxu0 0.0
  %7242 = vmatpush1.msra.mxu0 0.0
  %7243 = vmatprep.subr.mxu0 0.0
  %7244 = vmatpush1.msra.mxu0 0.0
  %7245 = vmatprep.subr.mxu0 0.0
  %7246 = vmatpush1.msra.mxu0 0.0
  %7247 = vmatprep.subr.mxu0 0.0
  %7248 = vmatpush1.msra.mxu0 0.0
  %7249 = vmatprep.subr.mxu0 0.0
  %7250 = vmatpush1.msra.mxu0 0.0
  %7251 = vmatprep.subr.mxu0 0.0
  %7252 = vmatpush1.msra.mxu0 0.0
  %7253 = vmatprep.subr.mxu0 0.0
  %7254 = vmatpush1.msra.mxu0 %v855
  %7255 = vmatprep.subr.mxu0 0.0
  %7256 = vmatpush1.msra.mxu0 %v849
  %7257 = vmatprep.subr.mxu0 0.0
  %7258 = vmatpush1.msra.mxu0 %v843
  %7259 = vmatprep.subr.mxu0 0.0
  %7260 = vmatpush1.msra.mxu0 %v837
  %7261 = vmatprep.subr.mxu0 0.0
  %7262 = vmatpush2.msra.mxu0 0.0
  %7263 = vmatprep.subr.mxu0 0.0
  %7264 = vmatpush2.msra.mxu0 0.0
  %7265 = vmatprep.subr.mxu0 0.0
  %7266 = vmatpush2.msra.mxu0 0.0
  %7267 = vmatprep.subr.mxu0 0.0
  %7268 = vmatpush2.msra.mxu0 0.0
  %7269 = vmatprep.subr.mxu0 0.0
  %7270 = vmatpush2.msra.mxu0 0.0
  %7271 = vmatprep.subr.mxu0 0.0
  %7272 = vmatpush2.msra.mxu0 0.0
  %7273 = vmatprep.subr.mxu0 0.0
  %7274 = vmatpush2.msra.mxu0 0.0
  %7275 = vmatprep.subr.mxu0 0.0
  %7276 = vmatpush2.msra.mxu0 0.0
  %7277 = vmatprep.subr.mxu0 0.0
  %7278 = vmatpush2.msra.mxu0 0.0
  %7279 = vmatprep.subr.mxu0 0.0
  %7280 = vmatpush2.msra.mxu0 0.0
  %7281 = vmatprep.subr.mxu0 0.0
  %7282 = vmatpush2.msra.mxu0 0.0
  %7283 = vmatprep.subr.mxu0 0.0
  %7284 = vmatpush2.msra.mxu0 0.0
  %7285 = vmatprep.subr.mxu0 0.0
  %7286 = vmatpush2.msra.mxu0 0.0
  %7287 = vmatprep.subr.mxu0 0.0
  %7288 = vmatpush2.msra.mxu0 0.0
  %7289 = vmatprep.subr.mxu0 0.0
  %7290 = vmatpush2.msra.mxu0 0.0
  %7291 = vmatprep.subr.mxu0 0.0
  %7292 = vmatpush2.msra.mxu0 0.0
  %7293 = vmatprep.mubr.f32.mxu0 0.0
  %7294 = vmatmul.mubr.f32.gmra.mxu0 %v7218
  %v7295 = vpop.f32.mrf.mxu0
  %v7296 = vadd.f32 0.0, %v7295
  %v7297 = vpop.f32.mrf.mxu0
  %7298 = vmatprep.mubr.f32.mxu0 0.0
  %7299 = vmatmul.mubr.f32.gmra.mxu0 %v7221
  %v7300 = vpop.f32.mrf.mxu0
  %v7301 = vadd.f32 0.0, %v7300
  %v7302 = vpop.f32.mrf.mxu0
  %7303 = vmatprep.mubr.f32.mxu0 0.0
  %7304 = vmatmul.mubr.f32.gmra.mxu0 %v7224
  %v7305 = vpop.f32.mrf.mxu0
  %v7306 = vadd.f32 0.0, %v7305
  %v7307 = vpop.f32.mrf.mxu0
  %7308 = vmatprep.mubr.f32.mxu0 0.0
  %7309 = vmatmul.mubr.f32.gmra.mxu0 %v7227
  %v7310 = vpop.f32.mrf.mxu0
  %v7311 = vadd.f32 0.0, %v7310
  %v7312 = vpop.f32.mrf.mxu0
  %7313 = vdwg.mxu0
  %v7315 = vsel %vm5133, %v6814, 0
  %v7318 = vsel %vm5133, %v6815, 0
  %v7321 = vsel %vm5133, %v6816, 0
  %v7324 = vsel %vm5133, %v6817, 0
  %7326 = vmatprep.subr.mxu0 0.0
  %7327 = vmatpush1.msra.mxu0 0.0
  %7328 = vmatprep.subr.mxu0 0.0
  %7329 = vmatpush1.msra.mxu0 0.0
  %7330 = vmatprep.subr.mxu0 0.0
  %7331 = vmatpush1.msra.mxu0 0.0
  %7332 = vmatprep.subr.mxu0 0.0
  %7333 = vmatpush1.msra.mxu0 0.0
  %7334 = vmatprep.subr.mxu0 0.0
  %7335 = vmatpush1.msra.mxu0 0.0
  %7336 = vmatprep.subr.mxu0 0.0
  %7337 = vmatpush1.msra.mxu0 0.0
  %7338 = vmatprep.subr.mxu0 0.0
  %7339 = vmatpush1.msra.mxu0 0.0
  %7340 = vmatprep.subr.mxu0 0.0
  %7341 = vmatpush1.msra.mxu0 0.0
  %7342 = vmatprep.subr.mxu0 0.0
  %7343 = vmatpush1.msra.mxu0 0.0
  %7344 = vmatprep.subr.mxu0 0.0
  %7345 = vmatpush1.msra.mxu0 0.0
  %7346 = vmatprep.subr.mxu0 0.0
  %7347 = vmatpush1.msra.mxu0 0.0
  %7348 = vmatprep.subr.mxu0 0.0
  %7349 = vmatpush1.msra.mxu0 0.0
  %7350 = vmatprep.subr.mxu0 0.0
  %7351 = vmatpush1.msra.mxu0 %v879
  %7352 = vmatprep.subr.mxu0 0.0
  %7353 = vmatpush1.msra.mxu0 %v873
  %7354 = vmatprep.subr.mxu0 0.0
  %7355 = vmatpush1.msra.mxu0 %v867
  %7356 = vmatprep.subr.mxu0 0.0
  %7357 = vmatpush1.msra.mxu0 %v861
  %7358 = vmatprep.subr.mxu0 0.0
  %7359 = vmatpush2.msra.mxu0 0.0
  %7360 = vmatprep.subr.mxu0 0.0
  %7361 = vmatpush2.msra.mxu0 0.0
  %7362 = vmatprep.subr.mxu0 0.0
  %7363 = vmatpush2.msra.mxu0 0.0
  %7364 = vmatprep.subr.mxu0 0.0
  %7365 = vmatpush2.msra.mxu0 0.0
  %7366 = vmatprep.subr.mxu0 0.0
  %7367 = vmatpush2.msra.mxu0 0.0
  %7368 = vmatprep.subr.mxu0 0.0
  %7369 = vmatpush2.msra.mxu0 0.0
  %7370 = vmatprep.subr.mxu0 0.0
  %7371 = vmatpush2.msra.mxu0 0.0
  %7372 = vmatprep.subr.mxu0 0.0
  %7373 = vmatpush2.msra.mxu0 0.0
  %7374 = vmatprep.subr.mxu0 0.0
  %7375 = vmatpush2.msra.mxu0 0.0
  %7376 = vmatprep.subr.mxu0 0.0
  %7377 = vmatpush2.msra.mxu0 0.0
  %7378 = vmatprep.subr.mxu0 0.0
  %7379 = vmatpush2.msra.mxu0 0.0
  %7380 = vmatprep.subr.mxu0 0.0
  %7381 = vmatpush2.msra.mxu0 0.0
  %7382 = vmatprep.subr.mxu0 0.0
  %7383 = vmatpush2.msra.mxu0 0.0
  %7384 = vmatprep.subr.mxu0 0.0
  %7385 = vmatpush2.msra.mxu0 0.0
  %7386 = vmatprep.subr.mxu0 0.0
  %7387 = vmatpush2.msra.mxu0 0.0
  %7388 = vmatprep.subr.mxu0 0.0
  %7389 = vmatpush2.msra.mxu0 0.0
  %7390 = vmatprep.mubr.f32.mxu0 0.0
  %7391 = vmatmul.mubr.f32.gmra.mxu0 %v7315
  %v7392 = vpop.f32.mrf.mxu0
  %v7393 = vadd.f32 0.0, %v7392
  %v7394 = vpop.f32.mrf.mxu0
  %7395 = vmatprep.mubr.f32.mxu0 0.0
  %7396 = vmatmul.mubr.f32.gmra.mxu0 %v7318
  %v7397 = vpop.f32.mrf.mxu0
  %v7398 = vadd.f32 0.0, %v7397
  %v7399 = vpop.f32.mrf.mxu0
  %7400 = vmatprep.mubr.f32.mxu0 0.0
  %7401 = vmatmul.mubr.f32.gmra.mxu0 %v7321
  %v7402 = vpop.f32.mrf.mxu0
  %v7403 = vadd.f32 0.0, %v7402
  %v7404 = vpop.f32.mrf.mxu0
  %7405 = vmatprep.mubr.f32.mxu0 0.0
  %7406 = vmatmul.mubr.f32.gmra.mxu0 %v7324
  %v7407 = vpop.f32.mrf.mxu0
  %v7408 = vadd.f32 0.0, %v7407
  %v7409 = vpop.f32.mrf.mxu0
  %7410 = vdwg.mxu0
  %v7412 = vsel %vm5133, %v6818, 0
  %v7415 = vsel %vm5133, %v6819, 0
  %v7418 = vsel %vm5133, %v6820, 0
  %v7421 = vsel %vm5133, %v6821, 0
  %7423 = vmatprep.subr.mxu0 0.0
  %7424 = vmatpush1.msra.mxu0 0.0
  %7425 = vmatprep.subr.mxu0 0.0
  %7426 = vmatpush1.msra.mxu0 0.0
  %7427 = vmatprep.subr.mxu0 0.0
  %7428 = vmatpush1.msra.mxu0 0.0
  %7429 = vmatprep.subr.mxu0 0.0
  %7430 = vmatpush1.msra.mxu0 0.0
  %7431 = vmatprep.subr.mxu0 0.0
  %7432 = vmatpush1.msra.mxu0 0.0
  %7433 = vmatprep.subr.mxu0 0.0
  %7434 = vmatpush1.msra.mxu0 0.0
  %7435 = vmatprep.subr.mxu0 0.0
  %7436 = vmatpush1.msra.mxu0 0.0
  %7437 = vmatprep.subr.mxu0 0.0
  %7438 = vmatpush1.msra.mxu0 0.0
  %7439 = vmatprep.subr.mxu0 0.0
  %7440 = vmatpush1.msra.mxu0 0.0
  %7441 = vmatprep.subr.mxu0 0.0
  %7442 = vmatpush1.msra.mxu0 0.0
  %7443 = vmatprep.subr.mxu0 0.0
  %7444 = vmatpush1.msra.mxu0 0.0
  %7445 = vmatprep.subr.mxu0 0.0
  %7446 = vmatpush1.msra.mxu0 0.0
  %7447 = vmatprep.subr.mxu0 0.0
  %7448 = vmatpush1.msra.mxu0 %v903
  %7449 = vmatprep.subr.mxu0 0.0
  %7450 = vmatpush1.msra.mxu0 %v897
  %7451 = vmatprep.subr.mxu0 0.0
  %7452 = vmatpush1.msra.mxu0 %v891
  %7453 = vmatprep.subr.mxu0 0.0
  %7454 = vmatpush1.msra.mxu0 %v885
  %7455 = vmatprep.subr.mxu0 0.0
  %7456 = vmatpush2.msra.mxu0 0.0
  %7457 = vmatprep.subr.mxu0 0.0
  %7458 = vmatpush2.msra.mxu0 0.0
  %7459 = vmatprep.subr.mxu0 0.0
  %7460 = vmatpush2.msra.mxu0 0.0
  %7461 = vmatprep.subr.mxu0 0.0
  %7462 = vmatpush2.msra.mxu0 0.0
  %7463 = vmatprep.subr.mxu0 0.0
  %7464 = vmatpush2.msra.mxu0 0.0
  %7465 = vmatprep.subr.mxu0 0.0
  %7466 = vmatpush2.msra.mxu0 0.0
  %7467 = vmatprep.subr.mxu0 0.0
  %7468 = vmatpush2.msra.mxu0 0.0
  %7469 = vmatprep.subr.mxu0 0.0
  %7470 = vmatpush2.msra.mxu0 0.0
  %7471 = vmatprep.subr.mxu0 0.0
  %7472 = vmatpush2.msra.mxu0 0.0
  %7473 = vmatprep.subr.mxu0 0.0
  %7474 = vmatpush2.msra.mxu0 0.0
  %7475 = vmatprep.subr.mxu0 0.0
  %7476 = vmatpush2.msra.mxu0 0.0
  %7477 = vmatprep.subr.mxu0 0.0
  %7478 = vmatpush2.msra.mxu0 0.0
  %7479 = vmatprep.subr.mxu0 0.0
  %7480 = vmatpush2.msra.mxu0 0.0
  %7481 = vmatprep.subr.mxu0 0.0
  %7482 = vmatpush2.msra.mxu0 0.0
  %7483 = vmatprep.subr.mxu0 0.0
  %7484 = vmatpush2.msra.mxu0 0.0
  %7485 = vmatprep.subr.mxu0 0.0
  %7486 = vmatpush2.msra.mxu0 0.0
  %7487 = vmatprep.mubr.f32.mxu0 0.0
  %7488 = vmatmul.mubr.f32.gmra.mxu0 %v7412
  %v7489 = vpop.f32.mrf.mxu0
  %v7490 = vadd.f32 0.0, %v7489
  %v7491 = vpop.f32.mrf.mxu0
  %7492 = vmatprep.mubr.f32.mxu0 0.0
  %7493 = vmatmul.mubr.f32.gmra.mxu0 %v7415
  %v7494 = vpop.f32.mrf.mxu0
  %v7495 = vadd.f32 0.0, %v7494
  %v7496 = vpop.f32.mrf.mxu0
  %7497 = vmatprep.mubr.f32.mxu0 0.0
  %7498 = vmatmul.mubr.f32.gmra.mxu0 %v7418
  %v7499 = vpop.f32.mrf.mxu0
  %v7500 = vadd.f32 0.0, %v7499
  %v7501 = vpop.f32.mrf.mxu0
  %7502 = vmatprep.mubr.f32.mxu0 0.0
  %7503 = vmatmul.mubr.f32.gmra.mxu0 %v7421
  %v7504 = vpop.f32.mrf.mxu0
  %v7505 = vadd.f32 0.0, %v7504
  %v7506 = vpop.f32.mrf.mxu0
  %7507 = vdwg.mxu0
  %v7509 = vsel %vm5133, %v6822, 0
  %v7512 = vsel %vm5133, %v6823, 0
  %v7515 = vsel %vm5133, %v6824, 0
  %v7518 = vsel %vm5133, %v6825, 0
  %7520 = vmatprep.subr.mxu0 0.0
  %7521 = vmatpush1.msra.mxu0 0.0
  %7522 = vmatprep.subr.mxu0 0.0
  %7523 = vmatpush1.msra.mxu0 0.0
  %7524 = vmatprep.subr.mxu0 0.0
  %7525 = vmatpush1.msra.mxu0 0.0
  %7526 = vmatprep.subr.mxu0 0.0
  %7527 = vmatpush1.msra.mxu0 0.0
  %7528 = vmatprep.subr.mxu0 0.0
  %7529 = vmatpush1.msra.mxu0 0.0
  %7530 = vmatprep.subr.mxu0 0.0
  %7531 = vmatpush1.msra.mxu0 0.0
  %7532 = vmatprep.subr.mxu0 0.0
  %7533 = vmatpush1.msra.mxu0 0.0
  %7534 = vmatprep.subr.mxu0 0.0
  %7535 = vmatpush1.msra.mxu0 0.0
  %7536 = vmatprep.subr.mxu0 0.0
  %7537 = vmatpush1.msra.mxu0 0.0
  %7538 = vmatprep.subr.mxu0 0.0
  %7539 = vmatpush1.msra.mxu0 0.0
  %7540 = vmatprep.subr.mxu0 0.0
  %7541 = vmatpush1.msra.mxu0 0.0
  %7542 = vmatprep.subr.mxu0 0.0
  %7543 = vmatpush1.msra.mxu0 0.0
  %7544 = vmatprep.subr.mxu0 0.0
  %7545 = vmatpush1.msra.mxu0 %v927
  %7546 = vmatprep.subr.mxu0 0.0
  %7547 = vmatpush1.msra.mxu0 %v921
  %7548 = vmatprep.subr.mxu0 0.0
  %7549 = vmatpush1.msra.mxu0 %v915
  %7550 = vmatprep.subr.mxu0 0.0
  %7551 = vmatpush1.msra.mxu0 %v909
  %7552 = vmatprep.subr.mxu0 0.0
  %7553 = vmatpush2.msra.mxu0 0.0
  %7554 = vmatprep.subr.mxu0 0.0
  %7555 = vmatpush2.msra.mxu0 0.0
  %7556 = vmatprep.subr.mxu0 0.0
  %7557 = vmatpush2.msra.mxu0 0.0
  %7558 = vmatprep.subr.mxu0 0.0
  %7559 = vmatpush2.msra.mxu0 0.0
  %7560 = vmatprep.subr.mxu0 0.0
  %7561 = vmatpush2.msra.mxu0 0.0
  %7562 = vmatprep.subr.mxu0 0.0
  %7563 = vmatpush2.msra.mxu0 0.0
  %7564 = vmatprep.subr.mxu0 0.0
  %7565 = vmatpush2.msra.mxu0 0.0
  %7566 = vmatprep.subr.mxu0 0.0
  %7567 = vmatpush2.msra.mxu0 0.0
  %7568 = vmatprep.subr.mxu0 0.0
  %7569 = vmatpush2.msra.mxu0 0.0
  %7570 = vmatprep.subr.mxu0 0.0
  %7571 = vmatpush2.msra.mxu0 0.0
  %7572 = vmatprep.subr.mxu0 0.0
  %7573 = vmatpush2.msra.mxu0 0.0
  %7574 = vmatprep.subr.mxu0 0.0
  %7575 = vmatpush2.msra.mxu0 0.0
  %7576 = vmatprep.subr.mxu0 0.0
  %7577 = vmatpush2.msra.mxu0 0.0
  %7578 = vmatprep.subr.mxu0 0.0
  %7579 = vmatpush2.msra.mxu0 0.0
  %7580 = vmatprep.subr.mxu0 0.0
  %7581 = vmatpush2.msra.mxu0 0.0
  %7582 = vmatprep.subr.mxu0 0.0
  %7583 = vmatpush2.msra.mxu0 0.0
  %7584 = vmatprep.mubr.f32.mxu0 0.0
  %7585 = vmatmul.mubr.f32.gmra.mxu0 %v7509
  %v7586 = vpop.f32.mrf.mxu0
  %v7587 = vadd.f32 0.0, %v7586
  %v7588 = vpop.f32.mrf.mxu0
  %7589 = vmatprep.mubr.f32.mxu0 0.0
  %7590 = vmatmul.mubr.f32.gmra.mxu0 %v7512
  %v7591 = vpop.f32.mrf.mxu0
  %v7592 = vadd.f32 0.0, %v7591
  %v7593 = vpop.f32.mrf.mxu0
  %7594 = vmatprep.mubr.f32.mxu0 0.0
  %7595 = vmatmul.mubr.f32.gmra.mxu0 %v7515
  %v7596 = vpop.f32.mrf.mxu0
  %v7597 = vadd.f32 0.0, %v7596
  %v7598 = vpop.f32.mrf.mxu0
  %7599 = vmatprep.mubr.f32.mxu0 0.0
  %7600 = vmatmul.mubr.f32.gmra.mxu0 %v7518
  %v7601 = vpop.f32.mrf.mxu0
  %v7602 = vadd.f32 0.0, %v7601
  %v7603 = vpop.f32.mrf.mxu0
  %7604 = vdwg.mxu0
  %v7606 = vsel %vm5133, %v6826, 0
  %v7609 = vsel %vm5133, %v6827, 0
  %v7612 = vsel %vm5133, %v6828, 0
  %v7615 = vsel %vm5133, %v6829, 0
  %7617 = vmatprep.subr.mxu0 0.0
  %7618 = vmatpush1.msra.mxu0 0.0
  %7619 = vmatprep.subr.mxu0 0.0
  %7620 = vmatpush1.msra.mxu0 0.0
  %7621 = vmatprep.subr.mxu0 0.0
  %7622 = vmatpush1.msra.mxu0 0.0
  %7623 = vmatprep.subr.mxu0 0.0
  %7624 = vmatpush1.msra.mxu0 0.0
  %7625 = vmatprep.subr.mxu0 0.0
  %7626 = vmatpush1.msra.mxu0 0.0
  %7627 = vmatprep.subr.mxu0 0.0
  %7628 = vmatpush1.msra.mxu0 0.0
  %7629 = vmatprep.subr.mxu0 0.0
  %7630 = vmatpush1.msra.mxu0 0.0
  %7631 = vmatprep.subr.mxu0 0.0
  %7632 = vmatpush1.msra.mxu0 0.0
  %7633 = vmatprep.subr.mxu0 0.0
  %7634 = vmatpush1.msra.mxu0 0.0
  %7635 = vmatprep.subr.mxu0 0.0
  %7636 = vmatpush1.msra.mxu0 0.0
  %7637 = vmatprep.subr.mxu0 0.0
  %7638 = vmatpush1.msra.mxu0 0.0
  %7639 = vmatprep.subr.mxu0 0.0
  %7640 = vmatpush1.msra.mxu0 0.0
  %7641 = vmatprep.subr.mxu0 0.0
  %7642 = vmatpush1.msra.mxu0 %v951
  %7643 = vmatprep.subr.mxu0 0.0
  %7644 = vmatpush1.msra.mxu0 %v945
  %7645 = vmatprep.subr.mxu0 0.0
  %7646 = vmatpush1.msra.mxu0 %v939
  %7647 = vmatprep.subr.mxu0 0.0
  %7648 = vmatpush1.msra.mxu0 %v933
  %7649 = vmatprep.subr.mxu0 0.0
  %7650 = vmatpush2.msra.mxu0 0.0
  %7651 = vmatprep.subr.mxu0 0.0
  %7652 = vmatpush2.msra.mxu0 0.0
  %7653 = vmatprep.subr.mxu0 0.0
  %7654 = vmatpush2.msra.mxu0 0.0
  %7655 = vmatprep.subr.mxu0 0.0
  %7656 = vmatpush2.msra.mxu0 0.0
  %7657 = vmatprep.subr.mxu0 0.0
  %7658 = vmatpush2.msra.mxu0 0.0
  %7659 = vmatprep.subr.mxu0 0.0
  %7660 = vmatpush2.msra.mxu0 0.0
  %7661 = vmatprep.subr.mxu0 0.0
  %7662 = vmatpush2.msra.mxu0 0.0
  %7663 = vmatprep.subr.mxu0 0.0
  %7664 = vmatpush2.msra.mxu0 0.0
  %7665 = vmatprep.subr.mxu0 0.0
  %7666 = vmatpush2.msra.mxu0 0.0
  %7667 = vmatprep.subr.mxu0 0.0
  %7668 = vmatpush2.msra.mxu0 0.0
  %7669 = vmatprep.subr.mxu0 0.0
  %7670 = vmatpush2.msra.mxu0 0.0
  %7671 = vmatprep.subr.mxu0 0.0
  %7672 = vmatpush2.msra.mxu0 0.0
  %7673 = vmatprep.subr.mxu0 0.0
  %7674 = vmatpush2.msra.mxu0 0.0
  %7675 = vmatprep.subr.mxu0 0.0
  %7676 = vmatpush2.msra.mxu0 0.0
  %7677 = vmatprep.subr.mxu0 0.0
  %7678 = vmatpush2.msra.mxu0 0.0
  %7679 = vmatprep.subr.mxu0 0.0
  %7680 = vmatpush2.msra.mxu0 0.0
  %7681 = vmatprep.mubr.f32.mxu0 0.0
  %7682 = vmatmul.mubr.f32.gmra.mxu0 %v7606
  %v7683 = vpop.f32.mrf.mxu0
  %v7684 = vadd.f32 0.0, %v7683
  %v7685 = vpop.f32.mrf.mxu0
  %7686 = vmatprep.mubr.f32.mxu0 0.0
  %7687 = vmatmul.mubr.f32.gmra.mxu0 %v7609
  %v7688 = vpop.f32.mrf.mxu0
  %v7689 = vadd.f32 0.0, %v7688
  %v7690 = vpop.f32.mrf.mxu0
  %7691 = vmatprep.mubr.f32.mxu0 0.0
  %7692 = vmatmul.mubr.f32.gmra.mxu0 %v7612
  %v7693 = vpop.f32.mrf.mxu0
  %v7694 = vadd.f32 0.0, %v7693
  %v7695 = vpop.f32.mrf.mxu0
  %7696 = vmatprep.mubr.f32.mxu0 0.0
  %7697 = vmatmul.mubr.f32.gmra.mxu0 %v7615
  %v7698 = vpop.f32.mrf.mxu0
  %v7699 = vadd.f32 0.0, %v7698
  %v7700 = vpop.f32.mrf.mxu0
  %7701 = vdwg.mxu0
  %v7703 = vsel %vm5133, %v6830, 0
  %v7706 = vsel %vm5133, %v6831, 0
  %v7709 = vsel %vm5133, %v6832, 0
  %v7712 = vsel %vm5133, %v6833, 0
  %7714 = vmatprep.subr.mxu0 0.0
  %7715 = vmatpush1.msra.mxu0 0.0
  %7716 = vmatprep.subr.mxu0 0.0
  %7717 = vmatpush1.msra.mxu0 0.0
  %7718 = vmatprep.subr.mxu0 0.0
  %7719 = vmatpush1.msra.mxu0 0.0
  %7720 = vmatprep.subr.mxu0 0.0
  %7721 = vmatpush1.msra.mxu0 0.0
  %7722 = vmatprep.subr.mxu0 0.0
  %7723 = vmatpush1.msra.mxu0 0.0
  %7724 = vmatprep.subr.mxu0 0.0
  %7725 = vmatpush1.msra.mxu0 0.0
  %7726 = vmatprep.subr.mxu0 0.0
  %7727 = vmatpush1.msra.mxu0 0.0
  %7728 = vmatprep.subr.mxu0 0.0
  %7729 = vmatpush1.msra.mxu0 0.0
  %7730 = vmatprep.subr.mxu0 0.0
  %7731 = vmatpush1.msra.mxu0 0.0
  %7732 = vmatprep.subr.mxu0 0.0
  %7733 = vmatpush1.msra.mxu0 0.0
  %7734 = vmatprep.subr.mxu0 0.0
  %7735 = vmatpush1.msra.mxu0 0.0
  %7736 = vmatprep.subr.mxu0 0.0
  %7737 = vmatpush1.msra.mxu0 0.0
  %7738 = vmatprep.subr.mxu0 0.0
  %7739 = vmatpush1.msra.mxu0 %v1216
  %7740 = vmatprep.subr.mxu0 0.0
  %7741 = vmatpush1.msra.mxu0 %v1214
  %7742 = vmatprep.subr.mxu0 0.0
  %7743 = vmatpush1.msra.mxu0 %v1212
  %7744 = vmatprep.subr.mxu0 0.0
  %7745 = vmatpush1.msra.mxu0 %v1210
  %7746 = vmatprep.subr.mxu0 0.0
  %7747 = vmatpush2.msra.mxu0 0.0
  %7748 = vmatprep.subr.mxu0 0.0
  %7749 = vmatpush2.msra.mxu0 0.0
  %7750 = vmatprep.subr.mxu0 0.0
  %7751 = vmatpush2.msra.mxu0 0.0
  %7752 = vmatprep.subr.mxu0 0.0
  %7753 = vmatpush2.msra.mxu0 0.0
  %7754 = vmatprep.subr.mxu0 0.0
  %7755 = vmatpush2.msra.mxu0 0.0
  %7756 = vmatprep.subr.mxu0 0.0
  %7757 = vmatpush2.msra.mxu0 0.0
  %7758 = vmatprep.subr.mxu0 0.0
  %7759 = vmatpush2.msra.mxu0 0.0
  %7760 = vmatprep.subr.mxu0 0.0
  %7761 = vmatpush2.msra.mxu0 0.0
  %7762 = vmatprep.subr.mxu0 0.0
  %7763 = vmatpush2.msra.mxu0 0.0
  %7764 = vmatprep.subr.mxu0 0.0
  %7765 = vmatpush2.msra.mxu0 0.0
  %7766 = vmatprep.subr.mxu0 0.0
  %7767 = vmatpush2.msra.mxu0 0.0
  %7768 = vmatprep.subr.mxu0 0.0
  %7769 = vmatpush2.msra.mxu0 0.0
  %7770 = vmatprep.subr.mxu0 0.0
  %7771 = vmatpush2.msra.mxu0 0.0
  %7772 = vmatprep.subr.mxu0 0.0
  %7773 = vmatpush2.msra.mxu0 0.0
  %7774 = vmatprep.subr.mxu0 0.0
  %7775 = vmatpush2.msra.mxu0 0.0
  %7776 = vmatprep.subr.mxu0 0.0
  %7777 = vmatpush2.msra.mxu0 0.0
  %7778 = vmatprep.mubr.f32.mxu0 0.0
  %7779 = vmatmul.mubr.f32.gmra.mxu0 %v7703
  %v7780 = vpop.f32.mrf.mxu0
  %v7781 = vadd.f32 0.0, %v7780
  %v7782 = vpop.f32.mrf.mxu0
  %7783 = vmatprep.mubr.f32.mxu0 0.0
  %7784 = vmatmul.mubr.f32.gmra.mxu0 %v7706
  %v7785 = vpop.f32.mrf.mxu0
  %v7786 = vadd.f32 0.0, %v7785
  %v7787 = vpop.f32.mrf.mxu0
  %7788 = vmatprep.mubr.f32.mxu0 0.0
  %7789 = vmatmul.mubr.f32.gmra.mxu0 %v7709
  %v7790 = vpop.f32.mrf.mxu0
  %v7791 = vadd.f32 0.0, %v7790
  %v7792 = vpop.f32.mrf.mxu0
  %7793 = vmatprep.mubr.f32.mxu0 0.0
  %7794 = vmatmul.mubr.f32.gmra.mxu0 %v7712
  %v7795 = vpop.f32.mrf.mxu0
  %v7796 = vadd.f32 0.0, %v7795
  %v7797 = vpop.f32.mrf.mxu0
  %7798 = vdwg.mxu0
  %v7800 = vsel %vm5133, %v6834, 0
  %v7803 = vsel %vm5133, %v6835, 0
  %v7806 = vsel %vm5133, %v6836, 0
  %v7809 = vsel %vm5133, %v6837, 0
  %7811 = vmatprep.subr.mxu0 0.0
  %7812 = vmatpush1.msra.mxu0 0.0
  %7813 = vmatprep.subr.mxu0 0.0
  %7814 = vmatpush1.msra.mxu0 0.0
  %7815 = vmatprep.subr.mxu0 0.0
  %7816 = vmatpush1.msra.mxu0 0.0
  %7817 = vmatprep.subr.mxu0 0.0
  %7818 = vmatpush1.msra.mxu0 0.0
  %7819 = vmatprep.subr.mxu0 0.0
  %7820 = vmatpush1.msra.mxu0 0.0
  %7821 = vmatprep.subr.mxu0 0.0
  %7822 = vmatpush1.msra.mxu0 0.0
  %7823 = vmatprep.subr.mxu0 0.0
  %7824 = vmatpush1.msra.mxu0 0.0
  %7825 = vmatprep.subr.mxu0 0.0
  %7826 = vmatpush1.msra.mxu0 0.0
  %7827 = vmatprep.subr.mxu0 0.0
  %7828 = vmatpush1.msra.mxu0 0.0
  %7829 = vmatprep.subr.mxu0 0.0
  %7830 = vmatpush1.msra.mxu0 0.0
  %7831 = vmatprep.subr.mxu0 0.0
  %7832 = vmatpush1.msra.mxu0 0.0
  %7833 = vmatprep.subr.mxu0 0.0
  %7834 = vmatpush1.msra.mxu0 0.0
  %7835 = vmatprep.subr.mxu0 0.0
  %7836 = vmatpush1.msra.mxu0 %v1224
  %7837 = vmatprep.subr.mxu0 0.0
  %7838 = vmatpush1.msra.mxu0 %v1222
  %7839 = vmatprep.subr.mxu0 0.0
  %7840 = vmatpush1.msra.mxu0 %v1220
  %7841 = vmatprep.subr.mxu0 0.0
  %7842 = vmatpush1.msra.mxu0 %v1218
  %7843 = vmatprep.subr.mxu0 0.0
  %7844 = vmatpush2.msra.mxu0 0.0
  %7845 = vmatprep.subr.mxu0 0.0
  %7846 = vmatpush2.msra.mxu0 0.0
  %7847 = vmatprep.subr.mxu0 0.0
  %7848 = vmatpush2.msra.mxu0 0.0
  %7849 = vmatprep.subr.mxu0 0.0
  %7850 = vmatpush2.msra.mxu0 0.0
  %7851 = vmatprep.subr.mxu0 0.0
  %7852 = vmatpush2.msra.mxu0 0.0
  %7853 = vmatprep.subr.mxu0 0.0
  %7854 = vmatpush2.msra.mxu0 0.0
  %7855 = vmatprep.subr.mxu0 0.0
  %7856 = vmatpush2.msra.mxu0 0.0
  %7857 = vmatprep.subr.mxu0 0.0
  %7858 = vmatpush2.msra.mxu0 0.0
  %7859 = vmatprep.subr.mxu0 0.0
  %7860 = vmatpush2.msra.mxu0 0.0
  %7861 = vmatprep.subr.mxu0 0.0
  %7862 = vmatpush2.msra.mxu0 0.0
  %7863 = vmatprep.subr.mxu0 0.0
  %7864 = vmatpush2.msra.mxu0 0.0
  %7865 = vmatprep.subr.mxu0 0.0
  %7866 = vmatpush2.msra.mxu0 0.0
  %7867 = vmatprep.subr.mxu0 0.0
  %7868 = vmatpush2.msra.mxu0 0.0
  %7869 = vmatprep.subr.mxu0 0.0
  %7870 = vmatpush2.msra.mxu0 0.0
  %7871 = vmatprep.subr.mxu0 0.0
  %7872 = vmatpush2.msra.mxu0 0.0
  %7873 = vmatprep.subr.mxu0 0.0
  %7874 = vmatpush2.msra.mxu0 0.0
  %7875 = vmatprep.mubr.f32.mxu0 0.0
  %7876 = vmatmul.mubr.f32.gmra.mxu0 %v7800
  %v7877 = vpop.f32.mrf.mxu0
  %v7878 = vadd.f32 0.0, %v7877
  %v7879 = vpop.f32.mrf.mxu0
  %7880 = vmatprep.mubr.f32.mxu0 0.0
  %7881 = vmatmul.mubr.f32.gmra.mxu0 %v7803
  %v7882 = vpop.f32.mrf.mxu0
  %v7883 = vadd.f32 0.0, %v7882
  %v7884 = vpop.f32.mrf.mxu0
  %7885 = vmatprep.mubr.f32.mxu0 0.0
  %7886 = vmatmul.mubr.f32.gmra.mxu0 %v7806
  %v7887 = vpop.f32.mrf.mxu0
  %v7888 = vadd.f32 0.0, %v7887
  %v7889 = vpop.f32.mrf.mxu0
  %7890 = vmatprep.mubr.f32.mxu0 0.0
  %7891 = vmatmul.mubr.f32.gmra.mxu0 %v7809
  %v7892 = vpop.f32.mrf.mxu0
  %v7893 = vadd.f32 0.0, %v7892
  %v7894 = vpop.f32.mrf.mxu0
  %7895 = vdwg.mxu0
  %v7897 = vsel %vm5133, %v6838, 0
  %v7900 = vsel %vm5133, %v6839, 0
  %v7903 = vsel %vm5133, %v6840, 0
  %v7906 = vsel %vm5133, %v6841, 0
  %7908 = vmatprep.subr.mxu0 0.0
  %7909 = vmatpush1.msra.mxu0 0.0
  %7910 = vmatprep.subr.mxu0 0.0
  %7911 = vmatpush1.msra.mxu0 0.0
  %7912 = vmatprep.subr.mxu0 0.0
  %7913 = vmatpush1.msra.mxu0 0.0
  %7914 = vmatprep.subr.mxu0 0.0
  %7915 = vmatpush1.msra.mxu0 0.0
  %7916 = vmatprep.subr.mxu0 0.0
  %7917 = vmatpush1.msra.mxu0 0.0
  %7918 = vmatprep.subr.mxu0 0.0
  %7919 = vmatpush1.msra.mxu0 0.0
  %7920 = vmatprep.subr.mxu0 0.0
  %7921 = vmatpush1.msra.mxu0 0.0
  %7922 = vmatprep.subr.mxu0 0.0
  %7923 = vmatpush1.msra.mxu0 0.0
  %7924 = vmatprep.subr.mxu0 0.0
  %7925 = vmatpush1.msra.mxu0 0.0
  %7926 = vmatprep.subr.mxu0 0.0
  %7927 = vmatpush1.msra.mxu0 0.0
  %7928 = vmatprep.subr.mxu0 0.0
  %7929 = vmatpush1.msra.mxu0 0.0
  %7930 = vmatprep.subr.mxu0 0.0
  %7931 = vmatpush1.msra.mxu0 0.0
  %7932 = vmatprep.subr.mxu0 0.0
  %7933 = vmatpush1.msra.mxu0 %v1232
  %7934 = vmatprep.subr.mxu0 0.0
  %7935 = vmatpush1.msra.mxu0 %v1230
  %7936 = vmatprep.subr.mxu0 0.0
  %7937 = vmatpush1.msra.mxu0 %v1228
  %7938 = vmatprep.subr.mxu0 0.0
  %7939 = vmatpush1.msra.mxu0 %v1226
  %7940 = vmatprep.subr.mxu0 0.0
  %7941 = vmatpush2.msra.mxu0 0.0
  %7942 = vmatprep.subr.mxu0 0.0
  %7943 = vmatpush2.msra.mxu0 0.0
  %7944 = vmatprep.subr.mxu0 0.0
  %7945 = vmatpush2.msra.mxu0 0.0
  %7946 = vmatprep.subr.mxu0 0.0
  %7947 = vmatpush2.msra.mxu0 0.0
  %7948 = vmatprep.subr.mxu0 0.0
  %7949 = vmatpush2.msra.mxu0 0.0
  %7950 = vmatprep.subr.mxu0 0.0
  %7951 = vmatpush2.msra.mxu0 0.0
  %7952 = vmatprep.subr.mxu0 0.0
  %7953 = vmatpush2.msra.mxu0 0.0
  %7954 = vmatprep.subr.mxu0 0.0
  %7955 = vmatpush2.msra.mxu0 0.0
  %7956 = vmatprep.subr.mxu0 0.0
  %7957 = vmatpush2.msra.mxu0 0.0
  %7958 = vmatprep.subr.mxu0 0.0
  %7959 = vmatpush2.msra.mxu0 0.0
  %7960 = vmatprep.subr.mxu0 0.0
  %7961 = vmatpush2.msra.mxu0 0.0
  %7962 = vmatprep.subr.mxu0 0.0
  %7963 = vmatpush2.msra.mxu0 0.0
  %7964 = vmatprep.subr.mxu0 0.0
  %7965 = vmatpush2.msra.mxu0 0.0
  %7966 = vmatprep.subr.mxu0 0.0
  %7967 = vmatpush2.msra.mxu0 0.0
  %7968 = vmatprep.subr.mxu0 0.0
  %7969 = vmatpush2.msra.mxu0 0.0
  %7970 = vmatprep.subr.mxu0 0.0
  %7971 = vmatpush2.msra.mxu0 0.0
  %7972 = vmatprep.mubr.f32.mxu0 0.0
  %7973 = vmatmul.mubr.f32.gmra.mxu0 %v7897
  %v7974 = vpop.f32.mrf.mxu0
  %v7975 = vadd.f32 0.0, %v7974
  %v7976 = vpop.f32.mrf.mxu0
  %7977 = vmatprep.mubr.f32.mxu0 0.0
  %7978 = vmatmul.mubr.f32.gmra.mxu0 %v7900
  %v7979 = vpop.f32.mrf.mxu0
  %v7980 = vadd.f32 0.0, %v7979
  %v7981 = vpop.f32.mrf.mxu0
  %7982 = vmatprep.mubr.f32.mxu0 0.0
  %7983 = vmatmul.mubr.f32.gmra.mxu0 %v7903
  %v7984 = vpop.f32.mrf.mxu0
  %v7985 = vadd.f32 0.0, %v7984
  %v7986 = vpop.f32.mrf.mxu0
  %7987 = vmatprep.mubr.f32.mxu0 0.0
  %7988 = vmatmul.mubr.f32.gmra.mxu0 %v7906
  %v7989 = vpop.f32.mrf.mxu0
  %v7990 = vadd.f32 0.0, %v7989
  %v7991 = vpop.f32.mrf.mxu0
  %7992 = vdwg.mxu0
  %v7994 = vsel %vm5133, %v6842, 0
  %v7997 = vsel %vm5133, %v6843, 0
  %v8000 = vsel %vm5133, %v6844, 0
  %v8003 = vsel %vm5133, %v6845, 0
  %8005 = vmatprep.subr.mxu0 0.0
  %8006 = vmatpush1.msra.mxu0 0.0
  %8007 = vmatprep.subr.mxu0 0.0
  %8008 = vmatpush1.msra.mxu0 0.0
  %8009 = vmatprep.subr.mxu0 0.0
  %8010 = vmatpush1.msra.mxu0 0.0
  %8011 = vmatprep.subr.mxu0 0.0
  %8012 = vmatpush1.msra.mxu0 0.0
  %8013 = vmatprep.subr.mxu0 0.0
  %8014 = vmatpush1.msra.mxu0 0.0
  %8015 = vmatprep.subr.mxu0 0.0
  %8016 = vmatpush1.msra.mxu0 0.0
  %8017 = vmatprep.subr.mxu0 0.0
  %8018 = vmatpush1.msra.mxu0 0.0
  %8019 = vmatprep.subr.mxu0 0.0
  %8020 = vmatpush1.msra.mxu0 0.0
  %8021 = vmatprep.subr.mxu0 0.0
  %8022 = vmatpush1.msra.mxu0 0.0
  %8023 = vmatprep.subr.mxu0 0.0
  %8024 = vmatpush1.msra.mxu0 0.0
  %8025 = vmatprep.subr.mxu0 0.0
  %8026 = vmatpush1.msra.mxu0 0.0
  %8027 = vmatprep.subr.mxu0 0.0
  %8028 = vmatpush1.msra.mxu0 0.0
  %8029 = vmatprep.subr.mxu0 0.0
  %8030 = vmatpush1.msra.mxu0 %v1240
  %8031 = vmatprep.subr.mxu0 0.0
  %8032 = vmatpush1.msra.mxu0 %v1238
  %8033 = vmatprep.subr.mxu0 0.0
  %8034 = vmatpush1.msra.mxu0 %v1236
  %8035 = vmatprep.subr.mxu0 0.0
  %8036 = vmatpush1.msra.mxu0 %v1234
  %8037 = vmatprep.subr.mxu0 0.0
  %8038 = vmatpush2.msra.mxu0 0.0
  %8039 = vmatprep.subr.mxu0 0.0
  %8040 = vmatpush2.msra.mxu0 0.0
  %8041 = vmatprep.subr.mxu0 0.0
  %8042 = vmatpush2.msra.mxu0 0.0
  %8043 = vmatprep.subr.mxu0 0.0
  %8044 = vmatpush2.msra.mxu0 0.0
  %8045 = vmatprep.subr.mxu0 0.0
  %8046 = vmatpush2.msra.mxu0 0.0
  %8047 = vmatprep.subr.mxu0 0.0
  %8048 = vmatpush2.msra.mxu0 0.0
  %8049 = vmatprep.subr.mxu0 0.0
  %8050 = vmatpush2.msra.mxu0 0.0
  %8051 = vmatprep.subr.mxu0 0.0
  %8052 = vmatpush2.msra.mxu0 0.0
  %8053 = vmatprep.subr.mxu0 0.0
  %8054 = vmatpush2.msra.mxu0 0.0
  %8055 = vmatprep.subr.mxu0 0.0
  %8056 = vmatpush2.msra.mxu0 0.0
  %8057 = vmatprep.subr.mxu0 0.0
  %8058 = vmatpush2.msra.mxu0 0.0
  %8059 = vmatprep.subr.mxu0 0.0
  %8060 = vmatpush2.msra.mxu0 0.0
  %8061 = vmatprep.subr.mxu0 0.0
  %8062 = vmatpush2.msra.mxu0 0.0
  %8063 = vmatprep.subr.mxu0 0.0
  %8064 = vmatpush2.msra.mxu0 0.0
  %8065 = vmatprep.subr.mxu0 0.0
  %8066 = vmatpush2.msra.mxu0 0.0
  %8067 = vmatprep.subr.mxu0 0.0
  %8068 = vmatpush2.msra.mxu0 0.0
  %8069 = vmatprep.mubr.f32.mxu0 0.0
  %8070 = vmatmul.mubr.f32.gmra.mxu0 %v7994
  %v8071 = vpop.f32.mrf.mxu0
  %v8072 = vadd.f32 0.0, %v8071
  %v8073 = vpop.f32.mrf.mxu0
  %8074 = vmatprep.mubr.f32.mxu0 0.0
  %8075 = vmatmul.mubr.f32.gmra.mxu0 %v7997
  %v8076 = vpop.f32.mrf.mxu0
  %v8077 = vadd.f32 0.0, %v8076
  %v8078 = vpop.f32.mrf.mxu0
  %8079 = vmatprep.mubr.f32.mxu0 0.0
  %8080 = vmatmul.mubr.f32.gmra.mxu0 %v8000
  %v8081 = vpop.f32.mrf.mxu0
  %v8082 = vadd.f32 0.0, %v8081
  %v8083 = vpop.f32.mrf.mxu0
  %8084 = vmatprep.mubr.f32.mxu0 0.0
  %8085 = vmatmul.mubr.f32.gmra.mxu0 %v8003
  %v8086 = vpop.f32.mrf.mxu0
  %v8087 = vadd.f32 0.0, %v8086
  %v8088 = vpop.f32.mrf.mxu0
  %8089 = vdwg.mxu0
  %v8091 = vsel %vm5133, %v6846, 0
  %v8094 = vsel %vm5133, %v6847, 0
  %v8097 = vsel %vm5133, %v6848, 0
  %v8100 = vsel %vm5133, %v6849, 0
  %8102 = vmatprep.subr.mxu0 0.0
  %8103 = vmatpush1.msra.mxu0 0.0
  %8104 = vmatprep.subr.mxu0 0.0
  %8105 = vmatpush1.msra.mxu0 0.0
  %8106 = vmatprep.subr.mxu0 0.0
  %8107 = vmatpush1.msra.mxu0 0.0
  %8108 = vmatprep.subr.mxu0 0.0
  %8109 = vmatpush1.msra.mxu0 0.0
  %8110 = vmatprep.subr.mxu0 0.0
  %8111 = vmatpush1.msra.mxu0 0.0
  %8112 = vmatprep.subr.mxu0 0.0
  %8113 = vmatpush1.msra.mxu0 0.0
  %8114 = vmatprep.subr.mxu0 0.0
  %8115 = vmatpush1.msra.mxu0 0.0
  %8116 = vmatprep.subr.mxu0 0.0
  %8117 = vmatpush1.msra.mxu0 0.0
  %8118 = vmatprep.subr.mxu0 0.0
  %8119 = vmatpush1.msra.mxu0 0.0
  %8120 = vmatprep.subr.mxu0 0.0
  %8121 = vmatpush1.msra.mxu0 0.0
  %8122 = vmatprep.subr.mxu0 0.0
  %8123 = vmatpush1.msra.mxu0 0.0
  %8124 = vmatprep.subr.mxu0 0.0
  %8125 = vmatpush1.msra.mxu0 0.0
  %8126 = vmatprep.subr.mxu0 0.0
  %8127 = vmatpush1.msra.mxu0 %v1248
  %8128 = vmatprep.subr.mxu0 0.0
  %8129 = vmatpush1.msra.mxu0 %v1246
  %8130 = vmatprep.subr.mxu0 0.0
  %8131 = vmatpush1.msra.mxu0 %v1244
  %8132 = vmatprep.subr.mxu0 0.0
  %8133 = vmatpush1.msra.mxu0 %v1242
  %8134 = vmatprep.subr.mxu0 0.0
  %8135 = vmatpush2.msra.mxu0 0.0
  %8136 = vmatprep.subr.mxu0 0.0
  %8137 = vmatpush2.msra.mxu0 0.0
  %8138 = vmatprep.subr.mxu0 0.0
  %8139 = vmatpush2.msra.mxu0 0.0
  %8140 = vmatprep.subr.mxu0 0.0
  %8141 = vmatpush2.msra.mxu0 0.0
  %8142 = vmatprep.subr.mxu0 0.0
  %8143 = vmatpush2.msra.mxu0 0.0
  %8144 = vmatprep.subr.mxu0 0.0
  %8145 = vmatpush2.msra.mxu0 0.0
  %8146 = vmatprep.subr.mxu0 0.0
  %8147 = vmatpush2.msra.mxu0 0.0
  %8148 = vmatprep.subr.mxu0 0.0
  %8149 = vmatpush2.msra.mxu0 0.0
  %8150 = vmatprep.subr.mxu0 0.0
  %8151 = vmatpush2.msra.mxu0 0.0
  %8152 = vmatprep.subr.mxu0 0.0
  %8153 = vmatpush2.msra.mxu0 0.0
  %8154 = vmatprep.subr.mxu0 0.0
  %8155 = vmatpush2.msra.mxu0 0.0
  %8156 = vmatprep.subr.mxu0 0.0
  %8157 = vmatpush2.msra.mxu0 0.0
  %8158 = vmatprep.subr.mxu0 0.0
  %8159 = vmatpush2.msra.mxu0 0.0
  %8160 = vmatprep.subr.mxu0 0.0
  %8161 = vmatpush2.msra.mxu0 0.0
  %8162 = vmatprep.subr.mxu0 0.0
  %8163 = vmatpush2.msra.mxu0 0.0
  %8164 = vmatprep.subr.mxu0 0.0
  %8165 = vmatpush2.msra.mxu0 0.0
  %8166 = vmatprep.mubr.f32.mxu0 0.0
  %8167 = vmatmul.mubr.f32.gmra.mxu0 %v8091
  %v8168 = vpop.f32.mrf.mxu0
  %v8169 = vadd.f32 0.0, %v8168
  %v8170 = vpop.f32.mrf.mxu0
  %8171 = vmatprep.mubr.f32.mxu0 0.0
  %8172 = vmatmul.mubr.f32.gmra.mxu0 %v8094
  %v8173 = vpop.f32.mrf.mxu0
  %v8174 = vadd.f32 0.0, %v8173
  %v8175 = vpop.f32.mrf.mxu0
  %8176 = vmatprep.mubr.f32.mxu0 0.0
  %8177 = vmatmul.mubr.f32.gmra.mxu0 %v8097
  %v8178 = vpop.f32.mrf.mxu0
  %v8179 = vadd.f32 0.0, %v8178
  %v8180 = vpop.f32.mrf.mxu0
  %8181 = vmatprep.mubr.f32.mxu0 0.0
  %8182 = vmatmul.mubr.f32.gmra.mxu0 %v8100
  %v8183 = vpop.f32.mrf.mxu0
  %v8184 = vadd.f32 0.0, %v8183
  %v8185 = vpop.f32.mrf.mxu0
  %8186 = vdwg.mxu0
  %v8188 = vsel %vm5133, %v6850, 0
  %v8191 = vsel %vm5133, %v6851, 0
  %v8194 = vsel %vm5133, %v6852, 0
  %v8197 = vsel %vm5133, %v6853, 0
  %8199 = vmatprep.subr.mxu0 0.0
  %8200 = vmatpush1.msra.mxu0 0.0
  %8201 = vmatprep.subr.mxu0 0.0
  %8202 = vmatpush1.msra.mxu0 0.0
  %8203 = vmatprep.subr.mxu0 0.0
  %8204 = vmatpush1.msra.mxu0 0.0
  %8205 = vmatprep.subr.mxu0 0.0
  %8206 = vmatpush1.msra.mxu0 0.0
  %8207 = vmatprep.subr.mxu0 0.0
  %8208 = vmatpush1.msra.mxu0 0.0
  %8209 = vmatprep.subr.mxu0 0.0
  %8210 = vmatpush1.msra.mxu0 0.0
  %8211 = vmatprep.subr.mxu0 0.0
  %8212 = vmatpush1.msra.mxu0 0.0
  %8213 = vmatprep.subr.mxu0 0.0
  %8214 = vmatpush1.msra.mxu0 0.0
  %8215 = vmatprep.subr.mxu0 0.0
  %8216 = vmatpush1.msra.mxu0 0.0
  %8217 = vmatprep.subr.mxu0 0.0
  %8218 = vmatpush1.msra.mxu0 0.0
  %8219 = vmatprep.subr.mxu0 0.0
  %8220 = vmatpush1.msra.mxu0 0.0
  %8221 = vmatprep.subr.mxu0 0.0
  %8222 = vmatpush1.msra.mxu0 0.0
  %8223 = vmatprep.subr.mxu0 0.0
  %8224 = vmatpush1.msra.mxu0 %v1256
  %8225 = vmatprep.subr.mxu0 0.0
  %8226 = vmatpush1.msra.mxu0 %v1254
  %8227 = vmatprep.subr.mxu0 0.0
  %8228 = vmatpush1.msra.mxu0 %v1252
  %8229 = vmatprep.subr.mxu0 0.0
  %8230 = vmatpush1.msra.mxu0 %v1250
  %8231 = vmatprep.subr.mxu0 0.0
  %8232 = vmatpush2.msra.mxu0 0.0
  %8233 = vmatprep.subr.mxu0 0.0
  %8234 = vmatpush2.msra.mxu0 0.0
  %8235 = vmatprep.subr.mxu0 0.0
  %8236 = vmatpush2.msra.mxu0 0.0
  %8237 = vmatprep.subr.mxu0 0.0
  %8238 = vmatpush2.msra.mxu0 0.0
  %8239 = vmatprep.subr.mxu0 0.0
  %8240 = vmatpush2.msra.mxu0 0.0
  %8241 = vmatprep.subr.mxu0 0.0
  %8242 = vmatpush2.msra.mxu0 0.0
  %8243 = vmatprep.subr.mxu0 0.0
  %8244 = vmatpush2.msra.mxu0 0.0
  %8245 = vmatprep.subr.mxu0 0.0
  %8246 = vmatpush2.msra.mxu0 0.0
  %8247 = vmatprep.subr.mxu0 0.0
  %8248 = vmatpush2.msra.mxu0 0.0
  %8249 = vmatprep.subr.mxu0 0.0
  %8250 = vmatpush2.msra.mxu0 0.0
  %8251 = vmatprep.subr.mxu0 0.0
  %8252 = vmatpush2.msra.mxu0 0.0
  %8253 = vmatprep.subr.mxu0 0.0
  %8254 = vmatpush2.msra.mxu0 0.0
  %8255 = vmatprep.subr.mxu0 0.0
  %8256 = vmatpush2.msra.mxu0 0.0
  %8257 = vmatprep.subr.mxu0 0.0
  %8258 = vmatpush2.msra.mxu0 0.0
  %8259 = vmatprep.subr.mxu0 0.0
  %8260 = vmatpush2.msra.mxu0 0.0
  %8261 = vmatprep.subr.mxu0 0.0
  %8262 = vmatpush2.msra.mxu0 0.0
  %8263 = vmatprep.mubr.f32.mxu0 0.0
  %8264 = vmatmul.mubr.f32.gmra.mxu0 %v8188
  %v8265 = vpop.f32.mrf.mxu0
  %v8266 = vadd.f32 0.0, %v8265
  %v8267 = vpop.f32.mrf.mxu0
  %8268 = vmatprep.mubr.f32.mxu0 0.0
  %8269 = vmatmul.mubr.f32.gmra.mxu0 %v8191
  %v8270 = vpop.f32.mrf.mxu0
  %v8271 = vadd.f32 0.0, %v8270
  %v8272 = vpop.f32.mrf.mxu0
  %8273 = vmatprep.mubr.f32.mxu0 0.0
  %8274 = vmatmul.mubr.f32.gmra.mxu0 %v8194
  %v8275 = vpop.f32.mrf.mxu0
  %v8276 = vadd.f32 0.0, %v8275
  %v8277 = vpop.f32.mrf.mxu0
  %8278 = vmatprep.mubr.f32.mxu0 0.0
  %8279 = vmatmul.mubr.f32.gmra.mxu0 %v8197
  %v8280 = vpop.f32.mrf.mxu0
  %v8281 = vadd.f32 0.0, %v8280
  %v8282 = vpop.f32.mrf.mxu0
  %8283 = vdwg.mxu0
  %v8285 = vsel %vm5133, %v6854, 0
  %v8288 = vsel %vm5133, %v6855, 0
  %v8291 = vsel %vm5133, %v6856, 0
  %v8294 = vsel %vm5133, %v6857, 0
  %8296 = vmatprep.subr.mxu0 0.0
  %8297 = vmatpush1.msra.mxu0 0.0
  %8298 = vmatprep.subr.mxu0 0.0
  %8299 = vmatpush1.msra.mxu0 0.0
  %8300 = vmatprep.subr.mxu0 0.0
  %8301 = vmatpush1.msra.mxu0 0.0
  %8302 = vmatprep.subr.mxu0 0.0
  %8303 = vmatpush1.msra.mxu0 0.0
  %8304 = vmatprep.subr.mxu0 0.0
  %8305 = vmatpush1.msra.mxu0 0.0
  %8306 = vmatprep.subr.mxu0 0.0
  %8307 = vmatpush1.msra.mxu0 0.0
  %8308 = vmatprep.subr.mxu0 0.0
  %8309 = vmatpush1.msra.mxu0 0.0
  %8310 = vmatprep.subr.mxu0 0.0
  %8311 = vmatpush1.msra.mxu0 0.0
  %8312 = vmatprep.subr.mxu0 0.0
  %8313 = vmatpush1.msra.mxu0 0.0
  %8314 = vmatprep.subr.mxu0 0.0
  %8315 = vmatpush1.msra.mxu0 0.0
  %8316 = vmatprep.subr.mxu0 0.0
  %8317 = vmatpush1.msra.mxu0 0.0
  %8318 = vmatprep.subr.mxu0 0.0
  %8319 = vmatpush1.msra.mxu0 0.0
  %8320 = vmatprep.subr.mxu0 0.0
  %8321 = vmatpush1.msra.mxu0 %v1264
  %8322 = vmatprep.subr.mxu0 0.0
  %8323 = vmatpush1.msra.mxu0 %v1262
  %8324 = vmatprep.subr.mxu0 0.0
  %8325 = vmatpush1.msra.mxu0 %v1260
  %8326 = vmatprep.subr.mxu0 0.0
  %8327 = vmatpush1.msra.mxu0 %v1258
  %8328 = vmatprep.subr.mxu0 0.0
  %8329 = vmatpush2.msra.mxu0 0.0
  %8330 = vmatprep.subr.mxu0 0.0
  %8331 = vmatpush2.msra.mxu0 0.0
  %8332 = vmatprep.subr.mxu0 0.0
  %8333 = vmatpush2.msra.mxu0 0.0
  %8334 = vmatprep.subr.mxu0 0.0
  %8335 = vmatpush2.msra.mxu0 0.0
  %8336 = vmatprep.subr.mxu0 0.0
  %8337 = vmatpush2.msra.mxu0 0.0
  %8338 = vmatprep.subr.mxu0 0.0
  %8339 = vmatpush2.msra.mxu0 0.0
  %8340 = vmatprep.subr.mxu0 0.0
  %8341 = vmatpush2.msra.mxu0 0.0
  %8342 = vmatprep.subr.mxu0 0.0
  %8343 = vmatpush2.msra.mxu0 0.0
  %8344 = vmatprep.subr.mxu0 0.0
  %8345 = vmatpush2.msra.mxu0 0.0
  %8346 = vmatprep.subr.mxu0 0.0
  %8347 = vmatpush2.msra.mxu0 0.0
  %8348 = vmatprep.subr.mxu0 0.0
  %8349 = vmatpush2.msra.mxu0 0.0
  %8350 = vmatprep.subr.mxu0 0.0
  %8351 = vmatpush2.msra.mxu0 0.0
  %8352 = vmatprep.subr.mxu0 0.0
  %8353 = vmatpush2.msra.mxu0 0.0
  %8354 = vmatprep.subr.mxu0 0.0
  %8355 = vmatpush2.msra.mxu0 0.0
  %8356 = vmatprep.subr.mxu0 0.0
  %8357 = vmatpush2.msra.mxu0 0.0
  %8358 = vmatprep.subr.mxu0 0.0
  %8359 = vmatpush2.msra.mxu0 0.0
  %8360 = vmatprep.mubr.f32.mxu0 0.0
  %8361 = vmatmul.mubr.f32.gmra.mxu0 %v8285
  %v8362 = vpop.f32.mrf.mxu0
  %v8363 = vadd.f32 0.0, %v8362
  %v8364 = vpop.f32.mrf.mxu0
  %8365 = vmatprep.mubr.f32.mxu0 0.0
  %8366 = vmatmul.mubr.f32.gmra.mxu0 %v8288
  %v8367 = vpop.f32.mrf.mxu0
  %v8368 = vadd.f32 0.0, %v8367
  %v8369 = vpop.f32.mrf.mxu0
  %8370 = vmatprep.mubr.f32.mxu0 0.0
  %8371 = vmatmul.mubr.f32.gmra.mxu0 %v8291
  %v8372 = vpop.f32.mrf.mxu0
  %v8373 = vadd.f32 0.0, %v8372
  %v8374 = vpop.f32.mrf.mxu0
  %8375 = vmatprep.mubr.f32.mxu0 0.0
  %8376 = vmatmul.mubr.f32.gmra.mxu0 %v8294
  %v8377 = vpop.f32.mrf.mxu0
  %v8378 = vadd.f32 0.0, %v8377
  %v8379 = vpop.f32.mrf.mxu0
  %8380 = vdwg.mxu0
  %v8382 = vsel %vm5133, %v6858, 0
  %v8385 = vsel %vm5133, %v6859, 0
  %v8388 = vsel %vm5133, %v6860, 0
  %v8391 = vsel %vm5133, %v6861, 0
  %8393 = vmatprep.subr.mxu0 0.0
  %8394 = vmatpush1.msra.mxu0 0.0
  %8395 = vmatprep.subr.mxu0 0.0
  %8396 = vmatpush1.msra.mxu0 0.0
  %8397 = vmatprep.subr.mxu0 0.0
  %8398 = vmatpush1.msra.mxu0 0.0
  %8399 = vmatprep.subr.mxu0 0.0
  %8400 = vmatpush1.msra.mxu0 0.0
  %8401 = vmatprep.subr.mxu0 0.0
  %8402 = vmatpush1.msra.mxu0 0.0
  %8403 = vmatprep.subr.mxu0 0.0
  %8404 = vmatpush1.msra.mxu0 0.0
  %8405 = vmatprep.subr.mxu0 0.0
  %8406 = vmatpush1.msra.mxu0 0.0
  %8407 = vmatprep.subr.mxu0 0.0
  %8408 = vmatpush1.msra.mxu0 0.0
  %8409 = vmatprep.subr.mxu0 0.0
  %8410 = vmatpush1.msra.mxu0 0.0
  %8411 = vmatprep.subr.mxu0 0.0
  %8412 = vmatpush1.msra.mxu0 0.0
  %8413 = vmatprep.subr.mxu0 0.0
  %8414 = vmatpush1.msra.mxu0 0.0
  %8415 = vmatprep.subr.mxu0 0.0
  %8416 = vmatpush1.msra.mxu0 0.0
  %8417 = vmatprep.subr.mxu0 0.0
  %8418 = vmatpush1.msra.mxu0 %v1272
  %8419 = vmatprep.subr.mxu0 0.0
  %8420 = vmatpush1.msra.mxu0 %v1270
  %8421 = vmatprep.subr.mxu0 0.0
  %8422 = vmatpush1.msra.mxu0 %v1268
  %8423 = vmatprep.subr.mxu0 0.0
  %8424 = vmatpush1.msra.mxu0 %v1266
  %8425 = vmatprep.subr.mxu0 0.0
  %8426 = vmatpush2.msra.mxu0 0.0
  %8427 = vmatprep.subr.mxu0 0.0
  %8428 = vmatpush2.msra.mxu0 0.0
  %8429 = vmatprep.subr.mxu0 0.0
  %8430 = vmatpush2.msra.mxu0 0.0
  %8431 = vmatprep.subr.mxu0 0.0
  %8432 = vmatpush2.msra.mxu0 0.0
  %8433 = vmatprep.subr.mxu0 0.0
  %8434 = vmatpush2.msra.mxu0 0.0
  %8435 = vmatprep.subr.mxu0 0.0
  %8436 = vmatpush2.msra.mxu0 0.0
  %8437 = vmatprep.subr.mxu0 0.0
  %8438 = vmatpush2.msra.mxu0 0.0
  %8439 = vmatprep.subr.mxu0 0.0
  %8440 = vmatpush2.msra.mxu0 0.0
  %8441 = vmatprep.subr.mxu0 0.0
  %8442 = vmatpush2.msra.mxu0 0.0
  %8443 = vmatprep.subr.mxu0 0.0
  %8444 = vmatpush2.msra.mxu0 0.0
  %8445 = vmatprep.subr.mxu0 0.0
  %8446 = vmatpush2.msra.mxu0 0.0
  %8447 = vmatprep.subr.mxu0 0.0
  %8448 = vmatpush2.msra.mxu0 0.0
  %8449 = vmatprep.subr.mxu0 0.0
  %8450 = vmatpush2.msra.mxu0 0.0
  %8451 = vmatprep.subr.mxu0 0.0
  %8452 = vmatpush2.msra.mxu0 0.0
  %8453 = vmatprep.subr.mxu0 0.0
  %8454 = vmatpush2.msra.mxu0 0.0
  %8455 = vmatprep.subr.mxu0 0.0
  %8456 = vmatpush2.msra.mxu0 0.0
  %8457 = vmatprep.mubr.f32.mxu0 0.0
  %8458 = vmatmul.mubr.f32.gmra.mxu0 %v8382
  %v8459 = vpop.f32.mrf.mxu0
  %v8460 = vadd.f32 0.0, %v8459
  %v8461 = vpop.f32.mrf.mxu0
  %8462 = vmatprep.mubr.f32.mxu0 0.0
  %8463 = vmatmul.mubr.f32.gmra.mxu0 %v8385
  %v8464 = vpop.f32.mrf.mxu0
  %v8465 = vadd.f32 0.0, %v8464
  %v8466 = vpop.f32.mrf.mxu0
  %8467 = vmatprep.mubr.f32.mxu0 0.0
  %8468 = vmatmul.mubr.f32.gmra.mxu0 %v8388
  %v8469 = vpop.f32.mrf.mxu0
  %v8470 = vadd.f32 0.0, %v8469
  %v8471 = vpop.f32.mrf.mxu0
  %8472 = vmatprep.mubr.f32.mxu0 0.0
  %8473 = vmatmul.mubr.f32.gmra.mxu0 %v8391
  %v8474 = vpop.f32.mrf.mxu0
  %v8475 = vadd.f32 0.0, %v8474
  %v8476 = vpop.f32.mrf.mxu0
  %8477 = vdwg.mxu0
  %v8479 = vsel %vm5133, %v6862, 0
  %v8482 = vsel %vm5133, %v6863, 0
  %v8485 = vsel %vm5133, %v6864, 0
  %v8488 = vsel %vm5133, %v6865, 0
  %8490 = vmatprep.subr.mxu0 0.0
  %8491 = vmatpush1.msra.mxu0 0.0
  %8492 = vmatprep.subr.mxu0 0.0
  %8493 = vmatpush1.msra.mxu0 0.0
  %8494 = vmatprep.subr.mxu0 0.0
  %8495 = vmatpush1.msra.mxu0 0.0
  %8496 = vmatprep.subr.mxu0 0.0
  %8497 = vmatpush1.msra.mxu0 0.0
  %8498 = vmatprep.subr.mxu0 0.0
  %8499 = vmatpush1.msra.mxu0 0.0
  %8500 = vmatprep.subr.mxu0 0.0
  %8501 = vmatpush1.msra.mxu0 0.0
  %8502 = vmatprep.subr.mxu0 0.0
  %8503 = vmatpush1.msra.mxu0 0.0
  %8504 = vmatprep.subr.mxu0 0.0
  %8505 = vmatpush1.msra.mxu0 0.0
  %8506 = vmatprep.subr.mxu0 0.0
  %8507 = vmatpush1.msra.mxu0 0.0
  %8508 = vmatprep.subr.mxu0 0.0
  %8509 = vmatpush1.msra.mxu0 0.0
  %8510 = vmatprep.subr.mxu0 0.0
  %8511 = vmatpush1.msra.mxu0 0.0
  %8512 = vmatprep.subr.mxu0 0.0
  %8513 = vmatpush1.msra.mxu0 0.0
  %8514 = vmatprep.subr.mxu0 0.0
  %8515 = vmatpush1.msra.mxu0 %v1312
  %8516 = vmatprep.subr.mxu0 0.0
  %8517 = vmatpush1.msra.mxu0 %v1310
  %8518 = vmatprep.subr.mxu0 0.0
  %8519 = vmatpush1.msra.mxu0 %v1308
  %8520 = vmatprep.subr.mxu0 0.0
  %8521 = vmatpush1.msra.mxu0 %v1306
  %8522 = vmatprep.subr.mxu0 0.0
  %8523 = vmatpush2.msra.mxu0 0.0
  %8524 = vmatprep.subr.mxu0 0.0
  %8525 = vmatpush2.msra.mxu0 0.0
  %8526 = vmatprep.subr.mxu0 0.0
  %8527 = vmatpush2.msra.mxu0 0.0
  %8528 = vmatprep.subr.mxu0 0.0
  %8529 = vmatpush2.msra.mxu0 0.0
  %8530 = vmatprep.subr.mxu0 0.0
  %8531 = vmatpush2.msra.mxu0 0.0
  %8532 = vmatprep.subr.mxu0 0.0
  %8533 = vmatpush2.msra.mxu0 0.0
  %8534 = vmatprep.subr.mxu0 0.0
  %8535 = vmatpush2.msra.mxu0 0.0
  %8536 = vmatprep.subr.mxu0 0.0
  %8537 = vmatpush2.msra.mxu0 0.0
  %8538 = vmatprep.subr.mxu0 0.0
  %8539 = vmatpush2.msra.mxu0 0.0
  %8540 = vmatprep.subr.mxu0 0.0
  %8541 = vmatpush2.msra.mxu0 0.0
  %8542 = vmatprep.subr.mxu0 0.0
  %8543 = vmatpush2.msra.mxu0 0.0
  %8544 = vmatprep.subr.mxu0 0.0
  %8545 = vmatpush2.msra.mxu0 0.0
  %8546 = vmatprep.subr.mxu0 0.0
  %8547 = vmatpush2.msra.mxu0 0.0
  %8548 = vmatprep.subr.mxu0 0.0
  %8549 = vmatpush2.msra.mxu0 0.0
  %8550 = vmatprep.subr.mxu0 0.0
  %8551 = vmatpush2.msra.mxu0 0.0
  %8552 = vmatprep.subr.mxu0 0.0
  %8553 = vmatpush2.msra.mxu0 0.0
  %8554 = vmatprep.mubr.f32.mxu0 0.0
  %8555 = vmatmul.mubr.f32.gmra.mxu0 %v8479
  %v8556 = vpop.f32.mrf.mxu0
  %v8557 = vadd.f32 0.0, %v8556
  %v8558 = vpop.f32.mrf.mxu0
  %8559 = vmatprep.mubr.f32.mxu0 0.0
  %8560 = vmatmul.mubr.f32.gmra.mxu0 %v8482
  %v8561 = vpop.f32.mrf.mxu0
  %v8562 = vadd.f32 0.0, %v8561
  %v8563 = vpop.f32.mrf.mxu0
  %8564 = vmatprep.mubr.f32.mxu0 0.0
  %8565 = vmatmul.mubr.f32.gmra.mxu0 %v8485
  %v8566 = vpop.f32.mrf.mxu0
  %v8567 = vadd.f32 0.0, %v8566
  %v8568 = vpop.f32.mrf.mxu0
  %8569 = vmatprep.mubr.f32.mxu0 0.0
  %8570 = vmatmul.mubr.f32.gmra.mxu0 %v8488
  %v8571 = vpop.f32.mrf.mxu0
  %v8572 = vadd.f32 0.0, %v8571
  %v8573 = vpop.f32.mrf.mxu0
  %8574 = vdwg.mxu0
  %v8576 = vsel %vm5133, %v6866, 0
  %v8579 = vsel %vm5133, %v6867, 0
  %v8582 = vsel %vm5133, %v6868, 0
  %v8585 = vsel %vm5133, %v6869, 0
  %8587 = vmatprep.subr.mxu0 0.0
  %8588 = vmatpush1.msra.mxu0 0.0
  %8589 = vmatprep.subr.mxu0 0.0
  %8590 = vmatpush1.msra.mxu0 0.0
  %8591 = vmatprep.subr.mxu0 0.0
  %8592 = vmatpush1.msra.mxu0 0.0
  %8593 = vmatprep.subr.mxu0 0.0
  %8594 = vmatpush1.msra.mxu0 0.0
  %8595 = vmatprep.subr.mxu0 0.0
  %8596 = vmatpush1.msra.mxu0 0.0
  %8597 = vmatprep.subr.mxu0 0.0
  %8598 = vmatpush1.msra.mxu0 0.0
  %8599 = vmatprep.subr.mxu0 0.0
  %8600 = vmatpush1.msra.mxu0 0.0
  %8601 = vmatprep.subr.mxu0 0.0
  %8602 = vmatpush1.msra.mxu0 0.0
  %8603 = vmatprep.subr.mxu0 0.0
  %8604 = vmatpush1.msra.mxu0 0.0
  %8605 = vmatprep.subr.mxu0 0.0
  %8606 = vmatpush1.msra.mxu0 0.0
  %8607 = vmatprep.subr.mxu0 0.0
  %8608 = vmatpush1.msra.mxu0 0.0
  %8609 = vmatprep.subr.mxu0 0.0
  %8610 = vmatpush1.msra.mxu0 0.0
  %8611 = vmatprep.subr.mxu0 0.0
  %8612 = vmatpush1.msra.mxu0 %v1320
  %8613 = vmatprep.subr.mxu0 0.0
  %8614 = vmatpush1.msra.mxu0 %v1318
  %8615 = vmatprep.subr.mxu0 0.0
  %8616 = vmatpush1.msra.mxu0 %v1316
  %8617 = vmatprep.subr.mxu0 0.0
  %8618 = vmatpush1.msra.mxu0 %v1314
  %8619 = vmatprep.subr.mxu0 0.0
  %8620 = vmatpush2.msra.mxu0 0.0
  %8621 = vmatprep.subr.mxu0 0.0
  %8622 = vmatpush2.msra.mxu0 0.0
  %8623 = vmatprep.subr.mxu0 0.0
  %8624 = vmatpush2.msra.mxu0 0.0
  %8625 = vmatprep.subr.mxu0 0.0
  %8626 = vmatpush2.msra.mxu0 0.0
  %8627 = vmatprep.subr.mxu0 0.0
  %8628 = vmatpush2.msra.mxu0 0.0
  %8629 = vmatprep.subr.mxu0 0.0
  %8630 = vmatpush2.msra.mxu0 0.0
  %8631 = vmatprep.subr.mxu0 0.0
  %8632 = vmatpush2.msra.mxu0 0.0
  %8633 = vmatprep.subr.mxu0 0.0
  %8634 = vmatpush2.msra.mxu0 0.0
  %8635 = vmatprep.subr.mxu0 0.0
  %8636 = vmatpush2.msra.mxu0 0.0
  %8637 = vmatprep.subr.mxu0 0.0
  %8638 = vmatpush2.msra.mxu0 0.0
  %8639 = vmatprep.subr.mxu0 0.0
  %8640 = vmatpush2.msra.mxu0 0.0
  %8641 = vmatprep.subr.mxu0 0.0
  %8642 = vmatpush2.msra.mxu0 0.0
  %8643 = vmatprep.subr.mxu0 0.0
  %8644 = vmatpush2.msra.mxu0 0.0
  %8645 = vmatprep.subr.mxu0 0.0
  %8646 = vmatpush2.msra.mxu0 0.0
  %8647 = vmatprep.subr.mxu0 0.0
  %8648 = vmatpush2.msra.mxu0 0.0
  %8649 = vmatprep.subr.mxu0 0.0
  %8650 = vmatpush2.msra.mxu0 0.0
  %8651 = vmatprep.mubr.f32.mxu0 0.0
  %8652 = vmatmul.mubr.f32.gmra.mxu0 %v8576
  %v8653 = vpop.f32.mrf.mxu0
  %v8654 = vadd.f32 0.0, %v8653
  %v8655 = vpop.f32.mrf.mxu0
  %8656 = vmatprep.mubr.f32.mxu0 0.0
  %8657 = vmatmul.mubr.f32.gmra.mxu0 %v8579
  %v8658 = vpop.f32.mrf.mxu0
  %v8659 = vadd.f32 0.0, %v8658
  %v8660 = vpop.f32.mrf.mxu0
  %8661 = vmatprep.mubr.f32.mxu0 0.0
  %8662 = vmatmul.mubr.f32.gmra.mxu0 %v8582
  %v8663 = vpop.f32.mrf.mxu0
  %v8664 = vadd.f32 0.0, %v8663
  %v8665 = vpop.f32.mrf.mxu0
  %8666 = vmatprep.mubr.f32.mxu0 0.0
  %8667 = vmatmul.mubr.f32.gmra.mxu0 %v8585
  %v8668 = vpop.f32.mrf.mxu0
  %v8669 = vadd.f32 0.0, %v8668
  %v8670 = vpop.f32.mrf.mxu0
  %8671 = vdwg.mxu0
  %v8673 = vsel %vm5133, %v6870, 0
  %v8676 = vsel %vm5133, %v6871, 0
  %v8679 = vsel %vm5133, %v6872, 0
  %v8682 = vsel %vm5133, %v6873, 0
  %8684 = vmatprep.subr.mxu0 0.0
  %8685 = vmatpush1.msra.mxu0 0.0
  %8686 = vmatprep.subr.mxu0 0.0
  %8687 = vmatpush1.msra.mxu0 0.0
  %8688 = vmatprep.subr.mxu0 0.0
  %8689 = vmatpush1.msra.mxu0 0.0
  %8690 = vmatprep.subr.mxu0 0.0
  %8691 = vmatpush1.msra.mxu0 0.0
  %8692 = vmatprep.subr.mxu0 0.0
  %8693 = vmatpush1.msra.mxu0 0.0
  %8694 = vmatprep.subr.mxu0 0.0
  %8695 = vmatpush1.msra.mxu0 0.0
  %8696 = vmatprep.subr.mxu0 0.0
  %8697 = vmatpush1.msra.mxu0 0.0
  %8698 = vmatprep.subr.mxu0 0.0
  %8699 = vmatpush1.msra.mxu0 0.0
  %8700 = vmatprep.subr.mxu0 0.0
  %8701 = vmatpush1.msra.mxu0 0.0
  %8702 = vmatprep.subr.mxu0 0.0
  %8703 = vmatpush1.msra.mxu0 0.0
  %8704 = vmatprep.subr.mxu0 0.0
  %8705 = vmatpush1.msra.mxu0 0.0
  %8706 = vmatprep.subr.mxu0 0.0
  %8707 = vmatpush1.msra.mxu0 0.0
  %8708 = vmatprep.subr.mxu0 0.0
  %8709 = vmatpush1.msra.mxu0 %v1328
  %8710 = vmatprep.subr.mxu0 0.0
  %8711 = vmatpush1.msra.mxu0 %v1326
  %8712 = vmatprep.subr.mxu0 0.0
  %8713 = vmatpush1.msra.mxu0 %v1324
  %8714 = vmatprep.subr.mxu0 0.0
  %8715 = vmatpush1.msra.mxu0 %v1322
  %8716 = vmatprep.subr.mxu0 0.0
  %8717 = vmatpush2.msra.mxu0 0.0
  %8718 = vmatprep.subr.mxu0 0.0
  %8719 = vmatpush2.msra.mxu0 0.0
  %8720 = vmatprep.subr.mxu0 0.0
  %8721 = vmatpush2.msra.mxu0 0.0
  %8722 = vmatprep.subr.mxu0 0.0
  %8723 = vmatpush2.msra.mxu0 0.0
  %8724 = vmatprep.subr.mxu0 0.0
  %8725 = vmatpush2.msra.mxu0 0.0
  %8726 = vmatprep.subr.mxu0 0.0
  %8727 = vmatpush2.msra.mxu0 0.0
  %8728 = vmatprep.subr.mxu0 0.0
  %8729 = vmatpush2.msra.mxu0 0.0
  %8730 = vmatprep.subr.mxu0 0.0
  %8731 = vmatpush2.msra.mxu0 0.0
  %8732 = vmatprep.subr.mxu0 0.0
  %8733 = vmatpush2.msra.mxu0 0.0
  %8734 = vmatprep.subr.mxu0 0.0
  %8735 = vmatpush2.msra.mxu0 0.0
  %8736 = vmatprep.subr.mxu0 0.0
  %8737 = vmatpush2.msra.mxu0 0.0
  %8738 = vmatprep.subr.mxu0 0.0
  %8739 = vmatpush2.msra.mxu0 0.0
  %8740 = vmatprep.subr.mxu0 0.0
  %8741 = vmatpush2.msra.mxu0 0.0
  %8742 = vmatprep.subr.mxu0 0.0
  %8743 = vmatpush2.msra.mxu0 0.0
  %8744 = vmatprep.subr.mxu0 0.0
  %8745 = vmatpush2.msra.mxu0 0.0
  %8746 = vmatprep.subr.mxu0 0.0
  %8747 = vmatpush2.msra.mxu0 0.0
  %8748 = vmatprep.mubr.f32.mxu0 0.0
  %8749 = vmatmul.mubr.f32.gmra.mxu0 %v8673
  %v8750 = vpop.f32.mrf.mxu0
  %v8751 = vadd.f32 0.0, %v8750
  %v8752 = vpop.f32.mrf.mxu0
  %8753 = vmatprep.mubr.f32.mxu0 0.0
  %8754 = vmatmul.mubr.f32.gmra.mxu0 %v8676
  %v8755 = vpop.f32.mrf.mxu0
  %v8756 = vadd.f32 0.0, %v8755
  %v8757 = vpop.f32.mrf.mxu0
  %8758 = vmatprep.mubr.f32.mxu0 0.0
  %8759 = vmatmul.mubr.f32.gmra.mxu0 %v8679
  %v8760 = vpop.f32.mrf.mxu0
  %v8761 = vadd.f32 0.0, %v8760
  %v8762 = vpop.f32.mrf.mxu0
  %8763 = vmatprep.mubr.f32.mxu0 0.0
  %8764 = vmatmul.mubr.f32.gmra.mxu0 %v8682
  %v8765 = vpop.f32.mrf.mxu0
  %v8766 = vadd.f32 0.0, %v8765
  %v8767 = vpop.f32.mrf.mxu0
  %8768 = vdwg.mxu0
  %v8770 = vsel %vm5133, %v6874, 0
  %v8773 = vsel %vm5133, %v6875, 0
  %v8776 = vsel %vm5133, %v6876, 0
  %v8779 = vsel %vm5133, %v6877, 0
  %8781 = vmatprep.subr.mxu0 0.0
  %8782 = vmatpush1.msra.mxu0 0.0
  %8783 = vmatprep.subr.mxu0 0.0
  %8784 = vmatpush1.msra.mxu0 0.0
  %8785 = vmatprep.subr.mxu0 0.0
  %8786 = vmatpush1.msra.mxu0 0.0
  %8787 = vmatprep.subr.mxu0 0.0
  %8788 = vmatpush1.msra.mxu0 0.0
  %8789 = vmatprep.subr.mxu0 0.0
  %8790 = vmatpush1.msra.mxu0 0.0
  %8791 = vmatprep.subr.mxu0 0.0
  %8792 = vmatpush1.msra.mxu0 0.0
  %8793 = vmatprep.subr.mxu0 0.0
  %8794 = vmatpush1.msra.mxu0 0.0
  %8795 = vmatprep.subr.mxu0 0.0
  %8796 = vmatpush1.msra.mxu0 0.0
  %8797 = vmatprep.subr.mxu0 0.0
  %8798 = vmatpush1.msra.mxu0 0.0
  %8799 = vmatprep.subr.mxu0 0.0
  %8800 = vmatpush1.msra.mxu0 0.0
  %8801 = vmatprep.subr.mxu0 0.0
  %8802 = vmatpush1.msra.mxu0 0.0
  %8803 = vmatprep.subr.mxu0 0.0
  %8804 = vmatpush1.msra.mxu0 0.0
  %8805 = vmatprep.subr.mxu0 0.0
  %8806 = vmatpush1.msra.mxu0 %v1336
  %8807 = vmatprep.subr.mxu0 0.0
  %8808 = vmatpush1.msra.mxu0 %v1334
  %8809 = vmatprep.subr.mxu0 0.0
  %8810 = vmatpush1.msra.mxu0 %v1332
  %8811 = vmatprep.subr.mxu0 0.0
  %8812 = vmatpush1.msra.mxu0 %v1330
  %8813 = vmatprep.subr.mxu0 0.0
  %8814 = vmatpush2.msra.mxu0 0.0
  %8815 = vmatprep.subr.mxu0 0.0
  %8816 = vmatpush2.msra.mxu0 0.0
  %8817 = vmatprep.subr.mxu0 0.0
  %8818 = vmatpush2.msra.mxu0 0.0
  %8819 = vmatprep.subr.mxu0 0.0
  %8820 = vmatpush2.msra.mxu0 0.0
  %8821 = vmatprep.subr.mxu0 0.0
  %8822 = vmatpush2.msra.mxu0 0.0
  %8823 = vmatprep.subr.mxu0 0.0
  %8824 = vmatpush2.msra.mxu0 0.0
  %8825 = vmatprep.subr.mxu0 0.0
  %8826 = vmatpush2.msra.mxu0 0.0
  %8827 = vmatprep.subr.mxu0 0.0
  %8828 = vmatpush2.msra.mxu0 0.0
  %8829 = vmatprep.subr.mxu0 0.0
  %8830 = vmatpush2.msra.mxu0 0.0
  %8831 = vmatprep.subr.mxu0 0.0
  %8832 = vmatpush2.msra.mxu0 0.0
  %8833 = vmatprep.subr.mxu0 0.0
  %8834 = vmatpush2.msra.mxu0 0.0
  %8835 = vmatprep.subr.mxu0 0.0
  %8836 = vmatpush2.msra.mxu0 0.0
  %8837 = vmatprep.subr.mxu0 0.0
  %8838 = vmatpush2.msra.mxu0 0.0
  %8839 = vmatprep.subr.mxu0 0.0
  %8840 = vmatpush2.msra.mxu0 0.0
  %8841 = vmatprep.subr.mxu0 0.0
  %8842 = vmatpush2.msra.mxu0 0.0
  %8843 = vmatprep.subr.mxu0 0.0
  %8844 = vmatpush2.msra.mxu0 0.0
  %8845 = vmatprep.mubr.f32.mxu0 0.0
  %8846 = vmatmul.mubr.f32.gmra.mxu0 %v8770
  %v8847 = vpop.f32.mrf.mxu0
  %v8848 = vadd.f32 0.0, %v8847
  %v8849 = vpop.f32.mrf.mxu0
  %8850 = vmatprep.mubr.f32.mxu0 0.0
  %8851 = vmatmul.mubr.f32.gmra.mxu0 %v8773
  %v8852 = vpop.f32.mrf.mxu0
  %v8853 = vadd.f32 0.0, %v8852
  %v8854 = vpop.f32.mrf.mxu0
  %8855 = vmatprep.mubr.f32.mxu0 0.0
  %8856 = vmatmul.mubr.f32.gmra.mxu0 %v8776
  %v8857 = vpop.f32.mrf.mxu0
  %v8858 = vadd.f32 0.0, %v8857
  %v8859 = vpop.f32.mrf.mxu0
  %8860 = vmatprep.mubr.f32.mxu0 0.0
  %8861 = vmatmul.mubr.f32.gmra.mxu0 %v8779
  %v8862 = vpop.f32.mrf.mxu0
  %v8863 = vadd.f32 0.0, %v8862
  %v8864 = vpop.f32.mrf.mxu0
  %8865 = vdwg.mxu0
  %v8867 = vsel %vm5133, %v6878, 0
  %v8870 = vsel %vm5133, %v6879, 0
  %v8873 = vsel %vm5133, %v6880, 0
  %v8876 = vsel %vm5133, %v6881, 0
  %8878 = vmatprep.subr.mxu0 0.0
  %8879 = vmatpush1.msra.mxu0 0.0
  %8880 = vmatprep.subr.mxu0 0.0
  %8881 = vmatpush1.msra.mxu0 0.0
  %8882 = vmatprep.subr.mxu0 0.0
  %8883 = vmatpush1.msra.mxu0 0.0
  %8884 = vmatprep.subr.mxu0 0.0
  %8885 = vmatpush1.msra.mxu0 0.0
  %8886 = vmatprep.subr.mxu0 0.0
  %8887 = vmatpush1.msra.mxu0 0.0
  %8888 = vmatprep.subr.mxu0 0.0
  %8889 = vmatpush1.msra.mxu0 0.0
  %8890 = vmatprep.subr.mxu0 0.0
  %8891 = vmatpush1.msra.mxu0 0.0
  %8892 = vmatprep.subr.mxu0 0.0
  %8893 = vmatpush1.msra.mxu0 0.0
  %8894 = vmatprep.subr.mxu0 0.0
  %8895 = vmatpush1.msra.mxu0 0.0
  %8896 = vmatprep.subr.mxu0 0.0
  %8897 = vmatpush1.msra.mxu0 0.0
  %8898 = vmatprep.subr.mxu0 0.0
  %8899 = vmatpush1.msra.mxu0 0.0
  %8900 = vmatprep.subr.mxu0 0.0
  %8901 = vmatpush1.msra.mxu0 0.0
  %8902 = vmatprep.subr.mxu0 0.0
  %8903 = vmatpush1.msra.mxu0 %v1344
  %8904 = vmatprep.subr.mxu0 0.0
  %8905 = vmatpush1.msra.mxu0 %v1342
  %8906 = vmatprep.subr.mxu0 0.0
  %8907 = vmatpush1.msra.mxu0 %v1340
  %8908 = vmatprep.subr.mxu0 0.0
  %8909 = vmatpush1.msra.mxu0 %v1338
  %8910 = vmatprep.subr.mxu0 0.0
  %8911 = vmatpush2.msra.mxu0 0.0
  %8912 = vmatprep.subr.mxu0 0.0
  %8913 = vmatpush2.msra.mxu0 0.0
  %8914 = vmatprep.subr.mxu0 0.0
  %8915 = vmatpush2.msra.mxu0 0.0
  %8916 = vmatprep.subr.mxu0 0.0
  %8917 = vmatpush2.msra.mxu0 0.0
  %8918 = vmatprep.subr.mxu0 0.0
  %8919 = vmatpush2.msra.mxu0 0.0
  %8920 = vmatprep.subr.mxu0 0.0
  %8921 = vmatpush2.msra.mxu0 0.0
  %8922 = vmatprep.subr.mxu0 0.0
  %8923 = vmatpush2.msra.mxu0 0.0
  %8924 = vmatprep.subr.mxu0 0.0
  %8925 = vmatpush2.msra.mxu0 0.0
  %8926 = vmatprep.subr.mxu0 0.0
  %8927 = vmatpush2.msra.mxu0 0.0
  %8928 = vmatprep.subr.mxu0 0.0
  %8929 = vmatpush2.msra.mxu0 0.0
  %8930 = vmatprep.subr.mxu0 0.0
  %8931 = vmatpush2.msra.mxu0 0.0
  %8932 = vmatprep.subr.mxu0 0.0
  %8933 = vmatpush2.msra.mxu0 0.0
  %8934 = vmatprep.subr.mxu0 0.0
  %8935 = vmatpush2.msra.mxu0 0.0
  %8936 = vmatprep.subr.mxu0 0.0
  %8937 = vmatpush2.msra.mxu0 0.0
  %8938 = vmatprep.subr.mxu0 0.0
  %8939 = vmatpush2.msra.mxu0 0.0
  %8940 = vmatprep.subr.mxu0 0.0
  %8941 = vmatpush2.msra.mxu0 0.0
  %8942 = vmatprep.mubr.f32.mxu0 0.0
  %8943 = vmatmul.mubr.f32.gmra.mxu0 %v8867
  %v8944 = vpop.f32.mrf.mxu0
  %v8945 = vadd.f32 0.0, %v8944
  %v8946 = vpop.f32.mrf.mxu0
  %8947 = vmatprep.mubr.f32.mxu0 0.0
  %8948 = vmatmul.mubr.f32.gmra.mxu0 %v8870
  %v8949 = vpop.f32.mrf.mxu0
  %v8950 = vadd.f32 0.0, %v8949
  %v8951 = vpop.f32.mrf.mxu0
  %8952 = vmatprep.mubr.f32.mxu0 0.0
  %8953 = vmatmul.mubr.f32.gmra.mxu0 %v8873
  %v8954 = vpop.f32.mrf.mxu0
  %v8955 = vadd.f32 0.0, %v8954
  %v8956 = vpop.f32.mrf.mxu0
  %8957 = vmatprep.mubr.f32.mxu0 0.0
  %8958 = vmatmul.mubr.f32.gmra.mxu0 %v8876
  %v8959 = vpop.f32.mrf.mxu0
  %v8960 = vadd.f32 0.0, %v8959
  %v8961 = vpop.f32.mrf.mxu0
  %8962 = vdwg.mxu0
  %v8964 = vsel %vm5133, %v6882, 0
  %v8967 = vsel %vm5133, %v6883, 0
  %v8970 = vsel %vm5133, %v6884, 0
  %v8973 = vsel %vm5133, %v6885, 0
  %8975 = vmatprep.subr.mxu0 0.0
  %8976 = vmatpush1.msra.mxu0 0.0
  %8977 = vmatprep.subr.mxu0 0.0
  %8978 = vmatpush1.msra.mxu0 0.0
  %8979 = vmatprep.subr.mxu0 0.0
  %8980 = vmatpush1.msra.mxu0 0.0
  %8981 = vmatprep.subr.mxu0 0.0
  %8982 = vmatpush1.msra.mxu0 0.0
  %8983 = vmatprep.subr.mxu0 0.0
  %8984 = vmatpush1.msra.mxu0 0.0
  %8985 = vmatprep.subr.mxu0 0.0
  %8986 = vmatpush1.msra.mxu0 0.0
  %8987 = vmatprep.subr.mxu0 0.0
  %8988 = vmatpush1.msra.mxu0 0.0
  %8989 = vmatprep.subr.mxu0 0.0
  %8990 = vmatpush1.msra.mxu0 0.0
  %8991 = vmatprep.subr.mxu0 0.0
  %8992 = vmatpush1.msra.mxu0 0.0
  %8993 = vmatprep.subr.mxu0 0.0
  %8994 = vmatpush1.msra.mxu0 0.0
  %8995 = vmatprep.subr.mxu0 0.0
  %8996 = vmatpush1.msra.mxu0 0.0
  %8997 = vmatprep.subr.mxu0 0.0
  %8998 = vmatpush1.msra.mxu0 0.0
  %8999 = vmatprep.subr.mxu0 0.0
  %9000 = vmatpush1.msra.mxu0 %v1352
  %9001 = vmatprep.subr.mxu0 0.0
  %9002 = vmatpush1.msra.mxu0 %v1350
  %9003 = vmatprep.subr.mxu0 0.0
  %9004 = vmatpush1.msra.mxu0 %v1348
  %9005 = vmatprep.subr.mxu0 0.0
  %9006 = vmatpush1.msra.mxu0 %v1346
  %9007 = vmatprep.subr.mxu0 0.0
  %9008 = vmatpush2.msra.mxu0 0.0
  %9009 = vmatprep.subr.mxu0 0.0
  %9010 = vmatpush2.msra.mxu0 0.0
  %9011 = vmatprep.subr.mxu0 0.0
  %9012 = vmatpush2.msra.mxu0 0.0
  %9013 = vmatprep.subr.mxu0 0.0
  %9014 = vmatpush2.msra.mxu0 0.0
  %9015 = vmatprep.subr.mxu0 0.0
  %9016 = vmatpush2.msra.mxu0 0.0
  %9017 = vmatprep.subr.mxu0 0.0
  %9018 = vmatpush2.msra.mxu0 0.0
  %9019 = vmatprep.subr.mxu0 0.0
  %9020 = vmatpush2.msra.mxu0 0.0
  %9021 = vmatprep.subr.mxu0 0.0
  %9022 = vmatpush2.msra.mxu0 0.0
  %9023 = vmatprep.subr.mxu0 0.0
  %9024 = vmatpush2.msra.mxu0 0.0
  %9025 = vmatprep.subr.mxu0 0.0
  %9026 = vmatpush2.msra.mxu0 0.0
  %9027 = vmatprep.subr.mxu0 0.0
  %9028 = vmatpush2.msra.mxu0 0.0
  %9029 = vmatprep.subr.mxu0 0.0
  %9030 = vmatpush2.msra.mxu0 0.0
  %9031 = vmatprep.subr.mxu0 0.0
  %9032 = vmatpush2.msra.mxu0 0.0
  %9033 = vmatprep.subr.mxu0 0.0
  %9034 = vmatpush2.msra.mxu0 0.0
  %9035 = vmatprep.subr.mxu0 0.0
  %9036 = vmatpush2.msra.mxu0 0.0
  %9037 = vmatprep.subr.mxu0 0.0
  %9038 = vmatpush2.msra.mxu0 0.0
  %9039 = vmatprep.mubr.f32.mxu0 0.0
  %9040 = vmatmul.mubr.f32.gmra.mxu0 %v8964
  %v9041 = vpop.f32.mrf.mxu0
  %v9042 = vadd.f32 0.0, %v9041
  %v9043 = vpop.f32.mrf.mxu0
  %9044 = vmatprep.mubr.f32.mxu0 0.0
  %9045 = vmatmul.mubr.f32.gmra.mxu0 %v8967
  %v9046 = vpop.f32.mrf.mxu0
  %v9047 = vadd.f32 0.0, %v9046
  %v9048 = vpop.f32.mrf.mxu0
  %9049 = vmatprep.mubr.f32.mxu0 0.0
  %9050 = vmatmul.mubr.f32.gmra.mxu0 %v8970
  %v9051 = vpop.f32.mrf.mxu0
  %v9052 = vadd.f32 0.0, %v9051
  %v9053 = vpop.f32.mrf.mxu0
  %9054 = vmatprep.mubr.f32.mxu0 0.0
  %9055 = vmatmul.mubr.f32.gmra.mxu0 %v8973
  %v9056 = vpop.f32.mrf.mxu0
  %v9057 = vadd.f32 0.0, %v9056
  %v9058 = vpop.f32.mrf.mxu0
  %9059 = vdwg.mxu0
  %v9061 = vsel %vm5133, %v6886, 0
  %v9064 = vsel %vm5133, %v6887, 0
  %v9067 = vsel %vm5133, %v6888, 0
  %v9070 = vsel %vm5133, %v6889, 0
  %9072 = vmatprep.subr.mxu0 0.0
  %9073 = vmatpush1.msra.mxu0 0.0
  %9074 = vmatprep.subr.mxu0 0.0
  %9075 = vmatpush1.msra.mxu0 0.0
  %9076 = vmatprep.subr.mxu0 0.0
  %9077 = vmatpush1.msra.mxu0 0.0
  %9078 = vmatprep.subr.mxu0 0.0
  %9079 = vmatpush1.msra.mxu0 0.0
  %9080 = vmatprep.subr.mxu0 0.0
  %9081 = vmatpush1.msra.mxu0 0.0
  %9082 = vmatprep.subr.mxu0 0.0
  %9083 = vmatpush1.msra.mxu0 0.0
  %9084 = vmatprep.subr.mxu0 0.0
  %9085 = vmatpush1.msra.mxu0 0.0
  %9086 = vmatprep.subr.mxu0 0.0
  %9087 = vmatpush1.msra.mxu0 0.0
  %9088 = vmatprep.subr.mxu0 0.0
  %9089 = vmatpush1.msra.mxu0 0.0
  %9090 = vmatprep.subr.mxu0 0.0
  %9091 = vmatpush1.msra.mxu0 0.0
  %9092 = vmatprep.subr.mxu0 0.0
  %9093 = vmatpush1.msra.mxu0 0.0
  %9094 = vmatprep.subr.mxu0 0.0
  %9095 = vmatpush1.msra.mxu0 0.0
  %9096 = vmatprep.subr.mxu0 0.0
  %9097 = vmatpush1.msra.mxu0 %v1360
  %9098 = vmatprep.subr.mxu0 0.0
  %9099 = vmatpush1.msra.mxu0 %v1358
  %9100 = vmatprep.subr.mxu0 0.0
  %9101 = vmatpush1.msra.mxu0 %v1356
  %9102 = vmatprep.subr.mxu0 0.0
  %9103 = vmatpush1.msra.mxu0 %v1354
  %9104 = vmatprep.subr.mxu0 0.0
  %9105 = vmatpush2.msra.mxu0 0.0
  %9106 = vmatprep.subr.mxu0 0.0
  %9107 = vmatpush2.msra.mxu0 0.0
  %9108 = vmatprep.subr.mxu0 0.0
  %9109 = vmatpush2.msra.mxu0 0.0
  %9110 = vmatprep.subr.mxu0 0.0
  %9111 = vmatpush2.msra.mxu0 0.0
  %9112 = vmatprep.subr.mxu0 0.0
  %9113 = vmatpush2.msra.mxu0 0.0
  %9114 = vmatprep.subr.mxu0 0.0
  %9115 = vmatpush2.msra.mxu0 0.0
  %9116 = vmatprep.subr.mxu0 0.0
  %9117 = vmatpush2.msra.mxu0 0.0
  %9118 = vmatprep.subr.mxu0 0.0
  %9119 = vmatpush2.msra.mxu0 0.0
  %9120 = vmatprep.subr.mxu0 0.0
  %9121 = vmatpush2.msra.mxu0 0.0
  %9122 = vmatprep.subr.mxu0 0.0
  %9123 = vmatpush2.msra.mxu0 0.0
  %9124 = vmatprep.subr.mxu0 0.0
  %9125 = vmatpush2.msra.mxu0 0.0
  %9126 = vmatprep.subr.mxu0 0.0
  %9127 = vmatpush2.msra.mxu0 0.0
  %9128 = vmatprep.subr.mxu0 0.0
  %9129 = vmatpush2.msra.mxu0 0.0
  %9130 = vmatprep.subr.mxu0 0.0
  %9131 = vmatpush2.msra.mxu0 0.0
  %9132 = vmatprep.subr.mxu0 0.0
  %9133 = vmatpush2.msra.mxu0 0.0
  %9134 = vmatprep.subr.mxu0 0.0
  %9135 = vmatpush2.msra.mxu0 0.0
  %9136 = vmatprep.mubr.f32.mxu0 0.0
  %9137 = vmatmul.mubr.f32.gmra.mxu0 %v9061
  %v9138 = vpop.f32.mrf.mxu0
  %v9139 = vadd.f32 0.0, %v9138
  %v9140 = vpop.f32.mrf.mxu0
  %9141 = vmatprep.mubr.f32.mxu0 0.0
  %9142 = vmatmul.mubr.f32.gmra.mxu0 %v9064
  %v9143 = vpop.f32.mrf.mxu0
  %v9144 = vadd.f32 0.0, %v9143
  %v9145 = vpop.f32.mrf.mxu0
  %9146 = vmatprep.mubr.f32.mxu0 0.0
  %9147 = vmatmul.mubr.f32.gmra.mxu0 %v9067
  %v9148 = vpop.f32.mrf.mxu0
  %v9149 = vadd.f32 0.0, %v9148
  %v9150 = vpop.f32.mrf.mxu0
  %9151 = vmatprep.mubr.f32.mxu0 0.0
  %9152 = vmatmul.mubr.f32.gmra.mxu0 %v9070
  %v9153 = vpop.f32.mrf.mxu0
  %v9154 = vadd.f32 0.0, %v9153
  %v9155 = vpop.f32.mrf.mxu0
  %9156 = vdwg.mxu0
  %v9158 = vsel %vm5133, %v6890, 0
  %v9161 = vsel %vm5133, %v6891, 0
  %v9164 = vsel %vm5133, %v6892, 0
  %v9167 = vsel %vm5133, %v6893, 0
  %9169 = vmatprep.subr.mxu0 0.0
  %9170 = vmatpush1.msra.mxu0 0.0
  %9171 = vmatprep.subr.mxu0 0.0
  %9172 = vmatpush1.msra.mxu0 0.0
  %9173 = vmatprep.subr.mxu0 0.0
  %9174 = vmatpush1.msra.mxu0 0.0
  %9175 = vmatprep.subr.mxu0 0.0
  %9176 = vmatpush1.msra.mxu0 0.0
  %9177 = vmatprep.subr.mxu0 0.0
  %9178 = vmatpush1.msra.mxu0 0.0
  %9179 = vmatprep.subr.mxu0 0.0
  %9180 = vmatpush1.msra.mxu0 0.0
  %9181 = vmatprep.subr.mxu0 0.0
  %9182 = vmatpush1.msra.mxu0 0.0
  %9183 = vmatprep.subr.mxu0 0.0
  %9184 = vmatpush1.msra.mxu0 0.0
  %9185 = vmatprep.subr.mxu0 0.0
  %9186 = vmatpush1.msra.mxu0 0.0
  %9187 = vmatprep.subr.mxu0 0.0
  %9188 = vmatpush1.msra.mxu0 0.0
  %9189 = vmatprep.subr.mxu0 0.0
  %9190 = vmatpush1.msra.mxu0 0.0
  %9191 = vmatprep.subr.mxu0 0.0
  %9192 = vmatpush1.msra.mxu0 0.0
  %9193 = vmatprep.subr.mxu0 0.0
  %9194 = vmatpush1.msra.mxu0 %v1368
  %9195 = vmatprep.subr.mxu0 0.0
  %9196 = vmatpush1.msra.mxu0 %v1366
  %9197 = vmatprep.subr.mxu0 0.0
  %9198 = vmatpush1.msra.mxu0 %v1364
  %9199 = vmatprep.subr.mxu0 0.0
  %9200 = vmatpush1.msra.mxu0 %v1362
  %9201 = vmatprep.subr.mxu0 0.0
  %9202 = vmatpush2.msra.mxu0 0.0
  %9203 = vmatprep.subr.mxu0 0.0
  %9204 = vmatpush2.msra.mxu0 0.0
  %9205 = vmatprep.subr.mxu0 0.0
  %9206 = vmatpush2.msra.mxu0 0.0
  %9207 = vmatprep.subr.mxu0 0.0
  %9208 = vmatpush2.msra.mxu0 0.0
  %9209 = vmatprep.subr.mxu0 0.0
  %9210 = vmatpush2.msra.mxu0 0.0
  %9211 = vmatprep.subr.mxu0 0.0
  %9212 = vmatpush2.msra.mxu0 0.0
  %9213 = vmatprep.subr.mxu0 0.0
  %9214 = vmatpush2.msra.mxu0 0.0
  %9215 = vmatprep.subr.mxu0 0.0
  %9216 = vmatpush2.msra.mxu0 0.0
  %9217 = vmatprep.subr.mxu0 0.0
  %9218 = vmatpush2.msra.mxu0 0.0
  %9219 = vmatprep.subr.mxu0 0.0
  %9220 = vmatpush2.msra.mxu0 0.0
  %9221 = vmatprep.subr.mxu0 0.0
  %9222 = vmatpush2.msra.mxu0 0.0
  %9223 = vmatprep.subr.mxu0 0.0
  %9224 = vmatpush2.msra.mxu0 0.0
  %9225 = vmatprep.subr.mxu0 0.0
  %9226 = vmatpush2.msra.mxu0 0.0
  %9227 = vmatprep.subr.mxu0 0.0
  %9228 = vmatpush2.msra.mxu0 0.0
  %9229 = vmatprep.subr.mxu0 0.0
  %9230 = vmatpush2.msra.mxu0 0.0
  %9231 = vmatprep.subr.mxu0 0.0
  %9232 = vmatpush2.msra.mxu0 0.0
  %9233 = vmatprep.mubr.f32.mxu0 0.0
  %9234 = vmatmul.mubr.f32.gmra.mxu0 %v9158
  %v9235 = vpop.f32.mrf.mxu0
  %v9236 = vadd.f32 0.0, %v9235
  %v9237 = vpop.f32.mrf.mxu0
  %9238 = vmatprep.mubr.f32.mxu0 0.0
  %9239 = vmatmul.mubr.f32.gmra.mxu0 %v9161
  %v9240 = vpop.f32.mrf.mxu0
  %v9241 = vadd.f32 0.0, %v9240
  %v9242 = vpop.f32.mrf.mxu0
  %9243 = vmatprep.mubr.f32.mxu0 0.0
  %9244 = vmatmul.mubr.f32.gmra.mxu0 %v9164
  %v9245 = vpop.f32.mrf.mxu0
  %v9246 = vadd.f32 0.0, %v9245
  %v9247 = vpop.f32.mrf.mxu0
  %9248 = vmatprep.mubr.f32.mxu0 0.0
  %9249 = vmatmul.mubr.f32.gmra.mxu0 %v9167
  %v9250 = vpop.f32.mrf.mxu0
  %v9251 = vadd.f32 0.0, %v9250
  %v9252 = vpop.f32.mrf.mxu0
  %9253 = vdwg.mxu0
  %v9255 = vsel %vm5133, %v6894, 0
  %v9258 = vsel %vm5133, %v6895, 0
  %v9261 = vsel %vm5133, %v6896, 0
  %v9264 = vsel %vm5133, %v6897, 0
  %9266 = vmatprep.subr.mxu0 0.0
  %9267 = vmatpush1.msra.mxu0 0.0
  %9268 = vmatprep.subr.mxu0 0.0
  %9269 = vmatpush1.msra.mxu0 0.0
  %9270 = vmatprep.subr.mxu0 0.0
  %9271 = vmatpush1.msra.mxu0 0.0
  %9272 = vmatprep.subr.mxu0 0.0
  %9273 = vmatpush1.msra.mxu0 0.0
  %9274 = vmatprep.subr.mxu0 0.0
  %9275 = vmatpush1.msra.mxu0 0.0
  %9276 = vmatprep.subr.mxu0 0.0
  %9277 = vmatpush1.msra.mxu0 0.0
  %9278 = vmatprep.subr.mxu0 0.0
  %9279 = vmatpush1.msra.mxu0 0.0
  %9280 = vmatprep.subr.mxu0 0.0
  %9281 = vmatpush1.msra.mxu0 0.0
  %9282 = vmatprep.subr.mxu0 0.0
  %9283 = vmatpush1.msra.mxu0 0.0
  %9284 = vmatprep.subr.mxu0 0.0
  %9285 = vmatpush1.msra.mxu0 0.0
  %9286 = vmatprep.subr.mxu0 0.0
  %9287 = vmatpush1.msra.mxu0 0.0
  %9288 = vmatprep.subr.mxu0 0.0
  %9289 = vmatpush1.msra.mxu0 0.0
  %9290 = vmatprep.subr.mxu0 0.0
  %9291 = vmatpush1.msra.mxu0 %v1408
  %9292 = vmatprep.subr.mxu0 0.0
  %9293 = vmatpush1.msra.mxu0 %v1406
  %9294 = vmatprep.subr.mxu0 0.0
  %9295 = vmatpush1.msra.mxu0 %v1404
  %9296 = vmatprep.subr.mxu0 0.0
  %9297 = vmatpush1.msra.mxu0 %v1402
  %9298 = vmatprep.subr.mxu0 0.0
  %9299 = vmatpush2.msra.mxu0 0.0
  %9300 = vmatprep.subr.mxu0 0.0
  %9301 = vmatpush2.msra.mxu0 0.0
  %9302 = vmatprep.subr.mxu0 0.0
  %9303 = vmatpush2.msra.mxu0 0.0
  %9304 = vmatprep.subr.mxu0 0.0
  %9305 = vmatpush2.msra.mxu0 0.0
  %9306 = vmatprep.subr.mxu0 0.0
  %9307 = vmatpush2.msra.mxu0 0.0
  %9308 = vmatprep.subr.mxu0 0.0
  %9309 = vmatpush2.msra.mxu0 0.0
  %9310 = vmatprep.subr.mxu0 0.0
  %9311 = vmatpush2.msra.mxu0 0.0
  %9312 = vmatprep.subr.mxu0 0.0
  %9313 = vmatpush2.msra.mxu0 0.0
  %9314 = vmatprep.subr.mxu0 0.0
  %9315 = vmatpush2.msra.mxu0 0.0
  %9316 = vmatprep.subr.mxu0 0.0
  %9317 = vmatpush2.msra.mxu0 0.0
  %9318 = vmatprep.subr.mxu0 0.0
  %9319 = vmatpush2.msra.mxu0 0.0
  %9320 = vmatprep.subr.mxu0 0.0
  %9321 = vmatpush2.msra.mxu0 0.0
  %9322 = vmatprep.subr.mxu0 0.0
  %9323 = vmatpush2.msra.mxu0 0.0
  %9324 = vmatprep.subr.mxu0 0.0
  %9325 = vmatpush2.msra.mxu0 0.0
  %9326 = vmatprep.subr.mxu0 0.0
  %9327 = vmatpush2.msra.mxu0 0.0
  %9328 = vmatprep.subr.mxu0 0.0
  %9329 = vmatpush2.msra.mxu0 0.0
  %9330 = vmatprep.mubr.f32.mxu0 0.0
  %9331 = vmatmul.mubr.f32.gmra.mxu0 %v9255
  %v9332 = vpop.f32.mrf.mxu0
  %v9333 = vadd.f32 0.0, %v9332
  %v9334 = vpop.f32.mrf.mxu0
  %9335 = vmatprep.mubr.f32.mxu0 0.0
  %9336 = vmatmul.mubr.f32.gmra.mxu0 %v9258
  %v9337 = vpop.f32.mrf.mxu0
  %v9338 = vadd.f32 0.0, %v9337
  %v9339 = vpop.f32.mrf.mxu0
  %9340 = vmatprep.mubr.f32.mxu0 0.0
  %9341 = vmatmul.mubr.f32.gmra.mxu0 %v9261
  %v9342 = vpop.f32.mrf.mxu0
  %v9343 = vadd.f32 0.0, %v9342
  %v9344 = vpop.f32.mrf.mxu0
  %9345 = vmatprep.mubr.f32.mxu0 0.0
  %9346 = vmatmul.mubr.f32.gmra.mxu0 %v9264
  %v9347 = vpop.f32.mrf.mxu0
  %v9348 = vadd.f32 0.0, %v9347
  %v9349 = vpop.f32.mrf.mxu0
  %9350 = vdwg.mxu0
  %v9352 = vsel %vm5133, %v6898, 0
  %v9355 = vsel %vm5133, %v6899, 0
  %v9358 = vsel %vm5133, %v6900, 0
  %v9361 = vsel %vm5133, %v6901, 0
  %9363 = vmatprep.subr.mxu0 0.0
  %9364 = vmatpush1.msra.mxu0 0.0
  %9365 = vmatprep.subr.mxu0 0.0
  %9366 = vmatpush1.msra.mxu0 0.0
  %9367 = vmatprep.subr.mxu0 0.0
  %9368 = vmatpush1.msra.mxu0 0.0
  %9369 = vmatprep.subr.mxu0 0.0
  %9370 = vmatpush1.msra.mxu0 0.0
  %9371 = vmatprep.subr.mxu0 0.0
  %9372 = vmatpush1.msra.mxu0 0.0
  %9373 = vmatprep.subr.mxu0 0.0
  %9374 = vmatpush1.msra.mxu0 0.0
  %9375 = vmatprep.subr.mxu0 0.0
  %9376 = vmatpush1.msra.mxu0 0.0
  %9377 = vmatprep.subr.mxu0 0.0
  %9378 = vmatpush1.msra.mxu0 0.0
  %9379 = vmatprep.subr.mxu0 0.0
  %9380 = vmatpush1.msra.mxu0 0.0
  %9381 = vmatprep.subr.mxu0 0.0
  %9382 = vmatpush1.msra.mxu0 0.0
  %9383 = vmatprep.subr.mxu0 0.0
  %9384 = vmatpush1.msra.mxu0 0.0
  %9385 = vmatprep.subr.mxu0 0.0
  %9386 = vmatpush1.msra.mxu0 0.0
  %9387 = vmatprep.subr.mxu0 0.0
  %9388 = vmatpush1.msra.mxu0 %v1416
  %9389 = vmatprep.subr.mxu0 0.0
  %9390 = vmatpush1.msra.mxu0 %v1414
  %9391 = vmatprep.subr.mxu0 0.0
  %9392 = vmatpush1.msra.mxu0 %v1412
  %9393 = vmatprep.subr.mxu0 0.0
  %9394 = vmatpush1.msra.mxu0 %v1410
  %9395 = vmatprep.subr.mxu0 0.0
  %9396 = vmatpush2.msra.mxu0 0.0
  %9397 = vmatprep.subr.mxu0 0.0
  %9398 = vmatpush2.msra.mxu0 0.0
  %9399 = vmatprep.subr.mxu0 0.0
  %9400 = vmatpush2.msra.mxu0 0.0
  %9401 = vmatprep.subr.mxu0 0.0
  %9402 = vmatpush2.msra.mxu0 0.0
  %9403 = vmatprep.subr.mxu0 0.0
  %9404 = vmatpush2.msra.mxu0 0.0
  %9405 = vmatprep.subr.mxu0 0.0
  %9406 = vmatpush2.msra.mxu0 0.0
  %9407 = vmatprep.subr.mxu0 0.0
  %9408 = vmatpush2.msra.mxu0 0.0
  %9409 = vmatprep.subr.mxu0 0.0
  %9410 = vmatpush2.msra.mxu0 0.0
  %9411 = vmatprep.subr.mxu0 0.0
  %9412 = vmatpush2.msra.mxu0 0.0
  %9413 = vmatprep.subr.mxu0 0.0
  %9414 = vmatpush2.msra.mxu0 0.0
  %9415 = vmatprep.subr.mxu0 0.0
  %9416 = vmatpush2.msra.mxu0 0.0
  %9417 = vmatprep.subr.mxu0 0.0
  %9418 = vmatpush2.msra.mxu0 0.0
  %9419 = vmatprep.subr.mxu0 0.0
  %9420 = vmatpush2.msra.mxu0 0.0
  %9421 = vmatprep.subr.mxu0 0.0
  %9422 = vmatpush2.msra.mxu0 0.0
  %9423 = vmatprep.subr.mxu0 0.0
  %9424 = vmatpush2.msra.mxu0 0.0
  %9425 = vmatprep.subr.mxu0 0.0
  %9426 = vmatpush2.msra.mxu0 0.0
  %9427 = vmatprep.mubr.f32.mxu0 0.0
  %9428 = vmatmul.mubr.f32.gmra.mxu0 %v9352
  %v9429 = vpop.f32.mrf.mxu0
  %v9430 = vadd.f32 0.0, %v9429
  %v9431 = vpop.f32.mrf.mxu0
  %9432 = vmatprep.mubr.f32.mxu0 0.0
  %9433 = vmatmul.mubr.f32.gmra.mxu0 %v9355
  %v9434 = vpop.f32.mrf.mxu0
  %v9435 = vadd.f32 0.0, %v9434
  %v9436 = vpop.f32.mrf.mxu0
  %9437 = vmatprep.mubr.f32.mxu0 0.0
  %9438 = vmatmul.mubr.f32.gmra.mxu0 %v9358
  %v9439 = vpop.f32.mrf.mxu0
  %v9440 = vadd.f32 0.0, %v9439
  %v9441 = vpop.f32.mrf.mxu0
  %9442 = vmatprep.mubr.f32.mxu0 0.0
  %9443 = vmatmul.mubr.f32.gmra.mxu0 %v9361
  %v9444 = vpop.f32.mrf.mxu0
  %v9445 = vadd.f32 0.0, %v9444
  %v9446 = vpop.f32.mrf.mxu0
  %9447 = vdwg.mxu0
  %v9449 = vsel %vm5133, %v6902, 0
  %v9452 = vsel %vm5133, %v6903, 0
  %v9455 = vsel %vm5133, %v6904, 0
  %v9458 = vsel %vm5133, %v6905, 0
  %9460 = vmatprep.subr.mxu0 0.0
  %9461 = vmatpush1.msra.mxu0 0.0
  %9462 = vmatprep.subr.mxu0 0.0
  %9463 = vmatpush1.msra.mxu0 0.0
  %9464 = vmatprep.subr.mxu0 0.0
  %9465 = vmatpush1.msra.mxu0 0.0
  %9466 = vmatprep.subr.mxu0 0.0
  %9467 = vmatpush1.msra.mxu0 0.0
  %9468 = vmatprep.subr.mxu0 0.0
  %9469 = vmatpush1.msra.mxu0 0.0
  %9470 = vmatprep.subr.mxu0 0.0
  %9471 = vmatpush1.msra.mxu0 0.0
  %9472 = vmatprep.subr.mxu0 0.0
  %9473 = vmatpush1.msra.mxu0 0.0
  %9474 = vmatprep.subr.mxu0 0.0
  %9475 = vmatpush1.msra.mxu0 0.0
  %9476 = vmatprep.subr.mxu0 0.0
  %9477 = vmatpush1.msra.mxu0 0.0
  %9478 = vmatprep.subr.mxu0 0.0
  %9479 = vmatpush1.msra.mxu0 0.0
  %9480 = vmatprep.subr.mxu0 0.0
  %9481 = vmatpush1.msra.mxu0 0.0
  %9482 = vmatprep.subr.mxu0 0.0
  %9483 = vmatpush1.msra.mxu0 0.0
  %9484 = vmatprep.subr.mxu0 0.0
  %9485 = vmatpush1.msra.mxu0 %v1424
  %9486 = vmatprep.subr.mxu0 0.0
  %9487 = vmatpush1.msra.mxu0 %v1422
  %9488 = vmatprep.subr.mxu0 0.0
  %9489 = vmatpush1.msra.mxu0 %v1420
  %9490 = vmatprep.subr.mxu0 0.0
  %9491 = vmatpush1.msra.mxu0 %v1418
  %9492 = vmatprep.subr.mxu0 0.0
  %9493 = vmatpush2.msra.mxu0 0.0
  %9494 = vmatprep.subr.mxu0 0.0
  %9495 = vmatpush2.msra.mxu0 0.0
  %9496 = vmatprep.subr.mxu0 0.0
  %9497 = vmatpush2.msra.mxu0 0.0
  %9498 = vmatprep.subr.mxu0 0.0
  %9499 = vmatpush2.msra.mxu0 0.0
  %9500 = vmatprep.subr.mxu0 0.0
  %9501 = vmatpush2.msra.mxu0 0.0
  %9502 = vmatprep.subr.mxu0 0.0
  %9503 = vmatpush2.msra.mxu0 0.0
  %9504 = vmatprep.subr.mxu0 0.0
  %9505 = vmatpush2.msra.mxu0 0.0
  %9506 = vmatprep.subr.mxu0 0.0
  %9507 = vmatpush2.msra.mxu0 0.0
  %9508 = vmatprep.subr.mxu0 0.0
  %9509 = vmatpush2.msra.mxu0 0.0
  %9510 = vmatprep.subr.mxu0 0.0
  %9511 = vmatpush2.msra.mxu0 0.0
  %9512 = vmatprep.subr.mxu0 0.0
  %9513 = vmatpush2.msra.mxu0 0.0
  %9514 = vmatprep.subr.mxu0 0.0
  %9515 = vmatpush2.msra.mxu0 0.0
  %9516 = vmatprep.subr.mxu0 0.0
  %9517 = vmatpush2.msra.mxu0 0.0
  %9518 = vmatprep.subr.mxu0 0.0
  %9519 = vmatpush2.msra.mxu0 0.0
  %9520 = vmatprep.subr.mxu0 0.0
  %9521 = vmatpush2.msra.mxu0 0.0
  %9522 = vmatprep.subr.mxu0 0.0
  %9523 = vmatpush2.msra.mxu0 0.0
  %9524 = vmatprep.mubr.f32.mxu0 0.0
  %9525 = vmatmul.mubr.f32.gmra.mxu0 %v9449
  %v9526 = vpop.f32.mrf.mxu0
  %v9527 = vadd.f32 0.0, %v9526
  %v9528 = vpop.f32.mrf.mxu0
  %9529 = vmatprep.mubr.f32.mxu0 0.0
  %9530 = vmatmul.mubr.f32.gmra.mxu0 %v9452
  %v9531 = vpop.f32.mrf.mxu0
  %v9532 = vadd.f32 0.0, %v9531
  %v9533 = vpop.f32.mrf.mxu0
  %9534 = vmatprep.mubr.f32.mxu0 0.0
  %9535 = vmatmul.mubr.f32.gmra.mxu0 %v9455
  %v9536 = vpop.f32.mrf.mxu0
  %v9537 = vadd.f32 0.0, %v9536
  %v9538 = vpop.f32.mrf.mxu0
  %9539 = vmatprep.mubr.f32.mxu0 0.0
  %9540 = vmatmul.mubr.f32.gmra.mxu0 %v9458
  %v9541 = vpop.f32.mrf.mxu0
  %v9542 = vadd.f32 0.0, %v9541
  %v9543 = vpop.f32.mrf.mxu0
  %9544 = vdwg.mxu0
  %v9546 = vsel %vm5133, %v6906, 0
  %v9549 = vsel %vm5133, %v6907, 0
  %v9552 = vsel %vm5133, %v6908, 0
  %v9555 = vsel %vm5133, %v6909, 0
  %9557 = vmatprep.subr.mxu0 0.0
  %9558 = vmatpush1.msra.mxu0 0.0
  %9559 = vmatprep.subr.mxu0 0.0
  %9560 = vmatpush1.msra.mxu0 0.0
  %9561 = vmatprep.subr.mxu0 0.0
  %9562 = vmatpush1.msra.mxu0 0.0
  %9563 = vmatprep.subr.mxu0 0.0
  %9564 = vmatpush1.msra.mxu0 0.0
  %9565 = vmatprep.subr.mxu0 0.0
  %9566 = vmatpush1.msra.mxu0 0.0
  %9567 = vmatprep.subr.mxu0 0.0
  %9568 = vmatpush1.msra.mxu0 0.0
  %9569 = vmatprep.subr.mxu0 0.0
  %9570 = vmatpush1.msra.mxu0 0.0
  %9571 = vmatprep.subr.mxu0 0.0
  %9572 = vmatpush1.msra.mxu0 0.0
  %9573 = vmatprep.subr.mxu0 0.0
  %9574 = vmatpush1.msra.mxu0 0.0
  %9575 = vmatprep.subr.mxu0 0.0
  %9576 = vmatpush1.msra.mxu0 0.0
  %9577 = vmatprep.subr.mxu0 0.0
  %9578 = vmatpush1.msra.mxu0 0.0
  %9579 = vmatprep.subr.mxu0 0.0
  %9580 = vmatpush1.msra.mxu0 0.0
  %9581 = vmatprep.subr.mxu0 0.0
  %9582 = vmatpush1.msra.mxu0 %v1432
  %9583 = vmatprep.subr.mxu0 0.0
  %9584 = vmatpush1.msra.mxu0 %v1430
  %9585 = vmatprep.subr.mxu0 0.0
  %9586 = vmatpush1.msra.mxu0 %v1428
  %9587 = vmatprep.subr.mxu0 0.0
  %9588 = vmatpush1.msra.mxu0 %v1426
  %9589 = vmatprep.subr.mxu0 0.0
  %9590 = vmatpush2.msra.mxu0 0.0
  %9591 = vmatprep.subr.mxu0 0.0
  %9592 = vmatpush2.msra.mxu0 0.0
  %9593 = vmatprep.subr.mxu0 0.0
  %9594 = vmatpush2.msra.mxu0 0.0
  %9595 = vmatprep.subr.mxu0 0.0
  %9596 = vmatpush2.msra.mxu0 0.0
  %9597 = vmatprep.subr.mxu0 0.0
  %9598 = vmatpush2.msra.mxu0 0.0
  %9599 = vmatprep.subr.mxu0 0.0
  %9600 = vmatpush2.msra.mxu0 0.0
  %9601 = vmatprep.subr.mxu0 0.0
  %9602 = vmatpush2.msra.mxu0 0.0
  %9603 = vmatprep.subr.mxu0 0.0
  %9604 = vmatpush2.msra.mxu0 0.0
  %9605 = vmatprep.subr.mxu0 0.0
  %9606 = vmatpush2.msra.mxu0 0.0
  %9607 = vmatprep.subr.mxu0 0.0
  %9608 = vmatpush2.msra.mxu0 0.0
  %9609 = vmatprep.subr.mxu0 0.0
  %9610 = vmatpush2.msra.mxu0 0.0
  %9611 = vmatprep.subr.mxu0 0.0
  %9612 = vmatpush2.msra.mxu0 0.0
  %9613 = vmatprep.subr.mxu0 0.0
  %9614 = vmatpush2.msra.mxu0 0.0
  %9615 = vmatprep.subr.mxu0 0.0
  %9616 = vmatpush2.msra.mxu0 0.0
  %9617 = vmatprep.subr.mxu0 0.0
  %9618 = vmatpush2.msra.mxu0 0.0
  %9619 = vmatprep.subr.mxu0 0.0
  %9620 = vmatpush2.msra.mxu0 0.0
  %9621 = vmatprep.mubr.f32.mxu0 0.0
  %9622 = vmatmul.mubr.f32.gmra.mxu0 %v9546
  %v9623 = vpop.f32.mrf.mxu0
  %v9624 = vadd.f32 0.0, %v9623
  %v9625 = vpop.f32.mrf.mxu0
  %9626 = vmatprep.mubr.f32.mxu0 0.0
  %9627 = vmatmul.mubr.f32.gmra.mxu0 %v9549
  %v9628 = vpop.f32.mrf.mxu0
  %v9629 = vadd.f32 0.0, %v9628
  %v9630 = vpop.f32.mrf.mxu0
  %9631 = vmatprep.mubr.f32.mxu0 0.0
  %9632 = vmatmul.mubr.f32.gmra.mxu0 %v9552
  %v9633 = vpop.f32.mrf.mxu0
  %v9634 = vadd.f32 0.0, %v9633
  %v9635 = vpop.f32.mrf.mxu0
  %9636 = vmatprep.mubr.f32.mxu0 0.0
  %9637 = vmatmul.mubr.f32.gmra.mxu0 %v9555
  %v9638 = vpop.f32.mrf.mxu0
  %v9639 = vadd.f32 0.0, %v9638
  %v9640 = vpop.f32.mrf.mxu0
  %9641 = vdwg.mxu0
  %v9643 = vsel %vm5133, %v6910, 0
  %v9646 = vsel %vm5133, %v6911, 0
  %v9649 = vsel %vm5133, %v6912, 0
  %v9652 = vsel %vm5133, %v6913, 0
  %9654 = vmatprep.subr.mxu0 0.0
  %9655 = vmatpush1.msra.mxu0 0.0
  %9656 = vmatprep.subr.mxu0 0.0
  %9657 = vmatpush1.msra.mxu0 0.0
  %9658 = vmatprep.subr.mxu0 0.0
  %9659 = vmatpush1.msra.mxu0 0.0
  %9660 = vmatprep.subr.mxu0 0.0
  %9661 = vmatpush1.msra.mxu0 0.0
  %9662 = vmatprep.subr.mxu0 0.0
  %9663 = vmatpush1.msra.mxu0 0.0
  %9664 = vmatprep.subr.mxu0 0.0
  %9665 = vmatpush1.msra.mxu0 0.0
  %9666 = vmatprep.subr.mxu0 0.0
  %9667 = vmatpush1.msra.mxu0 0.0
  %9668 = vmatprep.subr.mxu0 0.0
  %9669 = vmatpush1.msra.mxu0 0.0
  %9670 = vmatprep.subr.mxu0 0.0
  %9671 = vmatpush1.msra.mxu0 0.0
  %9672 = vmatprep.subr.mxu0 0.0
  %9673 = vmatpush1.msra.mxu0 0.0
  %9674 = vmatprep.subr.mxu0 0.0
  %9675 = vmatpush1.msra.mxu0 0.0
  %9676 = vmatprep.subr.mxu0 0.0
  %9677 = vmatpush1.msra.mxu0 0.0
  %9678 = vmatprep.subr.mxu0 0.0
  %9679 = vmatpush1.msra.mxu0 %v1440
  %9680 = vmatprep.subr.mxu0 0.0
  %9681 = vmatpush1.msra.mxu0 %v1438
  %9682 = vmatprep.subr.mxu0 0.0
  %9683 = vmatpush1.msra.mxu0 %v1436
  %9684 = vmatprep.subr.mxu0 0.0
  %9685 = vmatpush1.msra.mxu0 %v1434
  %9686 = vmatprep.subr.mxu0 0.0
  %9687 = vmatpush2.msra.mxu0 0.0
  %9688 = vmatprep.subr.mxu0 0.0
  %9689 = vmatpush2.msra.mxu0 0.0
  %9690 = vmatprep.subr.mxu0 0.0
  %9691 = vmatpush2.msra.mxu0 0.0
  %9692 = vmatprep.subr.mxu0 0.0
  %9693 = vmatpush2.msra.mxu0 0.0
  %9694 = vmatprep.subr.mxu0 0.0
  %9695 = vmatpush2.msra.mxu0 0.0
  %9696 = vmatprep.subr.mxu0 0.0
  %9697 = vmatpush2.msra.mxu0 0.0
  %9698 = vmatprep.subr.mxu0 0.0
  %9699 = vmatpush2.msra.mxu0 0.0
  %9700 = vmatprep.subr.mxu0 0.0
  %9701 = vmatpush2.msra.mxu0 0.0
  %9702 = vmatprep.subr.mxu0 0.0
  %9703 = vmatpush2.msra.mxu0 0.0
  %9704 = vmatprep.subr.mxu0 0.0
  %9705 = vmatpush2.msra.mxu0 0.0
  %9706 = vmatprep.subr.mxu0 0.0
  %9707 = vmatpush2.msra.mxu0 0.0
  %9708 = vmatprep.subr.mxu0 0.0
  %9709 = vmatpush2.msra.mxu0 0.0
  %9710 = vmatprep.subr.mxu0 0.0
  %9711 = vmatpush2.msra.mxu0 0.0
  %9712 = vmatprep.subr.mxu0 0.0
  %9713 = vmatpush2.msra.mxu0 0.0
  %9714 = vmatprep.subr.mxu0 0.0
  %9715 = vmatpush2.msra.mxu0 0.0
  %9716 = vmatprep.subr.mxu0 0.0
  %9717 = vmatpush2.msra.mxu0 0.0
  %9718 = vmatprep.mubr.f32.mxu0 0.0
  %9719 = vmatmul.mubr.f32.gmra.mxu0 %v9643
  %v9720 = vpop.f32.mrf.mxu0
  %v9721 = vadd.f32 0.0, %v9720
  %v9722 = vpop.f32.mrf.mxu0
  %9723 = vmatprep.mubr.f32.mxu0 0.0
  %9724 = vmatmul.mubr.f32.gmra.mxu0 %v9646
  %v9725 = vpop.f32.mrf.mxu0
  %v9726 = vadd.f32 0.0, %v9725
  %v9727 = vpop.f32.mrf.mxu0
  %9728 = vmatprep.mubr.f32.mxu0 0.0
  %9729 = vmatmul.mubr.f32.gmra.mxu0 %v9649
  %v9730 = vpop.f32.mrf.mxu0
  %v9731 = vadd.f32 0.0, %v9730
  %v9732 = vpop.f32.mrf.mxu0
  %9733 = vmatprep.mubr.f32.mxu0 0.0
  %9734 = vmatmul.mubr.f32.gmra.mxu0 %v9652
  %v9735 = vpop.f32.mrf.mxu0
  %v9736 = vadd.f32 0.0, %v9735
  %v9737 = vpop.f32.mrf.mxu0
  %9738 = vdwg.mxu0
  %v9740 = vsel %vm5133, %v6914, 0
  %v9743 = vsel %vm5133, %v6915, 0
  %v9746 = vsel %vm5133, %v6916, 0
  %v9749 = vsel %vm5133, %v6917, 0
  %9751 = vmatprep.subr.mxu0 0.0
  %9752 = vmatpush1.msra.mxu0 0.0
  %9753 = vmatprep.subr.mxu0 0.0
  %9754 = vmatpush1.msra.mxu0 0.0
  %9755 = vmatprep.subr.mxu0 0.0
  %9756 = vmatpush1.msra.mxu0 0.0
  %9757 = vmatprep.subr.mxu0 0.0
  %9758 = vmatpush1.msra.mxu0 0.0
  %9759 = vmatprep.subr.mxu0 0.0
  %9760 = vmatpush1.msra.mxu0 0.0
  %9761 = vmatprep.subr.mxu0 0.0
  %9762 = vmatpush1.msra.mxu0 0.0
  %9763 = vmatprep.subr.mxu0 0.0
  %9764 = vmatpush1.msra.mxu0 0.0
  %9765 = vmatprep.subr.mxu0 0.0
  %9766 = vmatpush1.msra.mxu0 0.0
  %9767 = vmatprep.subr.mxu0 0.0
  %9768 = vmatpush1.msra.mxu0 0.0
  %9769 = vmatprep.subr.mxu0 0.0
  %9770 = vmatpush1.msra.mxu0 0.0
  %9771 = vmatprep.subr.mxu0 0.0
  %9772 = vmatpush1.msra.mxu0 0.0
  %9773 = vmatprep.subr.mxu0 0.0
  %9774 = vmatpush1.msra.mxu0 0.0
  %9775 = vmatprep.subr.mxu0 0.0
  %9776 = vmatpush1.msra.mxu0 %v1448
  %9777 = vmatprep.subr.mxu0 0.0
  %9778 = vmatpush1.msra.mxu0 %v1446
  %9779 = vmatprep.subr.mxu0 0.0
  %9780 = vmatpush1.msra.mxu0 %v1444
  %9781 = vmatprep.subr.mxu0 0.0
  %9782 = vmatpush1.msra.mxu0 %v1442
  %9783 = vmatprep.subr.mxu0 0.0
  %9784 = vmatpush2.msra.mxu0 0.0
  %9785 = vmatprep.subr.mxu0 0.0
  %9786 = vmatpush2.msra.mxu0 0.0
  %9787 = vmatprep.subr.mxu0 0.0
  %9788 = vmatpush2.msra.mxu0 0.0
  %9789 = vmatprep.subr.mxu0 0.0
  %9790 = vmatpush2.msra.mxu0 0.0
  %9791 = vmatprep.subr.mxu0 0.0
  %9792 = vmatpush2.msra.mxu0 0.0
  %9793 = vmatprep.subr.mxu0 0.0
  %9794 = vmatpush2.msra.mxu0 0.0
  %9795 = vmatprep.subr.mxu0 0.0
  %9796 = vmatpush2.msra.mxu0 0.0
  %9797 = vmatprep.subr.mxu0 0.0
  %9798 = vmatpush2.msra.mxu0 0.0
  %9799 = vmatprep.subr.mxu0 0.0
  %9800 = vmatpush2.msra.mxu0 0.0
  %9801 = vmatprep.subr.mxu0 0.0
  %9802 = vmatpush2.msra.mxu0 0.0
  %9803 = vmatprep.subr.mxu0 0.0
  %9804 = vmatpush2.msra.mxu0 0.0
  %9805 = vmatprep.subr.mxu0 0.0
  %9806 = vmatpush2.msra.mxu0 0.0
  %9807 = vmatprep.subr.mxu0 0.0
  %9808 = vmatpush2.msra.mxu0 0.0
  %9809 = vmatprep.subr.mxu0 0.0
  %9810 = vmatpush2.msra.mxu0 0.0
  %9811 = vmatprep.subr.mxu0 0.0
  %9812 = vmatpush2.msra.mxu0 0.0
  %9813 = vmatprep.subr.mxu0 0.0
  %9814 = vmatpush2.msra.mxu0 0.0
  %9815 = vmatprep.mubr.f32.mxu0 0.0
  %9816 = vmatmul.mubr.f32.gmra.mxu0 %v9740
  %v9817 = vpop.f32.mrf.mxu0
  %v9818 = vadd.f32 0.0, %v9817
  %v9819 = vpop.f32.mrf.mxu0
  %9820 = vmatprep.mubr.f32.mxu0 0.0
  %9821 = vmatmul.mubr.f32.gmra.mxu0 %v9743
  %v9822 = vpop.f32.mrf.mxu0
  %v9823 = vadd.f32 0.0, %v9822
  %v9824 = vpop.f32.mrf.mxu0
  %9825 = vmatprep.mubr.f32.mxu0 0.0
  %9826 = vmatmul.mubr.f32.gmra.mxu0 %v9746
  %v9827 = vpop.f32.mrf.mxu0
  %v9828 = vadd.f32 0.0, %v9827
  %v9829 = vpop.f32.mrf.mxu0
  %9830 = vmatprep.mubr.f32.mxu0 0.0
  %9831 = vmatmul.mubr.f32.gmra.mxu0 %v9749
  %v9832 = vpop.f32.mrf.mxu0
  %v9833 = vadd.f32 0.0, %v9832
  %v9834 = vpop.f32.mrf.mxu0
  %9835 = vdwg.mxu0
  %v9837 = vsel %vm5133, %v6918, 0
  %v9840 = vsel %vm5133, %v6919, 0
  %v9843 = vsel %vm5133, %v6920, 0
  %v9846 = vsel %vm5133, %v6921, 0
  %9848 = vmatprep.subr.mxu0 0.0
  %9849 = vmatpush1.msra.mxu0 0.0
  %9850 = vmatprep.subr.mxu0 0.0
  %9851 = vmatpush1.msra.mxu0 0.0
  %9852 = vmatprep.subr.mxu0 0.0
  %9853 = vmatpush1.msra.mxu0 0.0
  %9854 = vmatprep.subr.mxu0 0.0
  %9855 = vmatpush1.msra.mxu0 0.0
  %9856 = vmatprep.subr.mxu0 0.0
  %9857 = vmatpush1.msra.mxu0 0.0
  %9858 = vmatprep.subr.mxu0 0.0
  %9859 = vmatpush1.msra.mxu0 0.0
  %9860 = vmatprep.subr.mxu0 0.0
  %9861 = vmatpush1.msra.mxu0 0.0
  %9862 = vmatprep.subr.mxu0 0.0
  %9863 = vmatpush1.msra.mxu0 0.0
  %9864 = vmatprep.subr.mxu0 0.0
  %9865 = vmatpush1.msra.mxu0 0.0
  %9866 = vmatprep.subr.mxu0 0.0
  %9867 = vmatpush1.msra.mxu0 0.0
  %9868 = vmatprep.subr.mxu0 0.0
  %9869 = vmatpush1.msra.mxu0 0.0
  %9870 = vmatprep.subr.mxu0 0.0
  %9871 = vmatpush1.msra.mxu0 0.0
  %9872 = vmatprep.subr.mxu0 0.0
  %9873 = vmatpush1.msra.mxu0 %v1456
  %9874 = vmatprep.subr.mxu0 0.0
  %9875 = vmatpush1.msra.mxu0 %v1454
  %9876 = vmatprep.subr.mxu0 0.0
  %9877 = vmatpush1.msra.mxu0 %v1452
  %9878 = vmatprep.subr.mxu0 0.0
  %9879 = vmatpush1.msra.mxu0 %v1450
  %9880 = vmatprep.subr.mxu0 0.0
  %9881 = vmatpush2.msra.mxu0 0.0
  %9882 = vmatprep.subr.mxu0 0.0
  %9883 = vmatpush2.msra.mxu0 0.0
  %9884 = vmatprep.subr.mxu0 0.0
  %9885 = vmatpush2.msra.mxu0 0.0
  %9886 = vmatprep.subr.mxu0 0.0
  %9887 = vmatpush2.msra.mxu0 0.0
  %9888 = vmatprep.subr.mxu0 0.0
  %9889 = vmatpush2.msra.mxu0 0.0
  %9890 = vmatprep.subr.mxu0 0.0
  %9891 = vmatpush2.msra.mxu0 0.0
  %9892 = vmatprep.subr.mxu0 0.0
  %9893 = vmatpush2.msra.mxu0 0.0
  %9894 = vmatprep.subr.mxu0 0.0
  %9895 = vmatpush2.msra.mxu0 0.0
  %9896 = vmatprep.subr.mxu0 0.0
  %9897 = vmatpush2.msra.mxu0 0.0
  %9898 = vmatprep.subr.mxu0 0.0
  %9899 = vmatpush2.msra.mxu0 0.0
  %9900 = vmatprep.subr.mxu0 0.0
  %9901 = vmatpush2.msra.mxu0 0.0
  %9902 = vmatprep.subr.mxu0 0.0
  %9903 = vmatpush2.msra.mxu0 0.0
  %9904 = vmatprep.subr.mxu0 0.0
  %9905 = vmatpush2.msra.mxu0 0.0
  %9906 = vmatprep.subr.mxu0 0.0
  %9907 = vmatpush2.msra.mxu0 0.0
  %9908 = vmatprep.subr.mxu0 0.0
  %9909 = vmatpush2.msra.mxu0 0.0
  %9910 = vmatprep.subr.mxu0 0.0
  %9911 = vmatpush2.msra.mxu0 0.0
  %9912 = vmatprep.mubr.f32.mxu0 0.0
  %9913 = vmatmul.mubr.f32.gmra.mxu0 %v9837
  %v9914 = vpop.f32.mrf.mxu0
  %v9915 = vadd.f32 0.0, %v9914
  %v9916 = vpop.f32.mrf.mxu0
  %9917 = vmatprep.mubr.f32.mxu0 0.0
  %9918 = vmatmul.mubr.f32.gmra.mxu0 %v9840
  %v9919 = vpop.f32.mrf.mxu0
  %v9920 = vadd.f32 0.0, %v9919
  %v9921 = vpop.f32.mrf.mxu0
  %9922 = vmatprep.mubr.f32.mxu0 0.0
  %9923 = vmatmul.mubr.f32.gmra.mxu0 %v9843
  %v9924 = vpop.f32.mrf.mxu0
  %v9925 = vadd.f32 0.0, %v9924
  %v9926 = vpop.f32.mrf.mxu0
  %9927 = vmatprep.mubr.f32.mxu0 0.0
  %9928 = vmatmul.mubr.f32.gmra.mxu0 %v9846
  %v9929 = vpop.f32.mrf.mxu0
  %v9930 = vadd.f32 0.0, %v9929
  %v9931 = vpop.f32.mrf.mxu0
  %9932 = vdwg.mxu0
  %v9934 = vsel %vm5133, %v6922, 0
  %v9937 = vsel %vm5133, %v6923, 0
  %v9940 = vsel %vm5133, %v6924, 0
  %v9943 = vsel %vm5133, %v6925, 0
  %9945 = vmatprep.subr.mxu0 0.0
  %9946 = vmatpush1.msra.mxu0 0.0
  %9947 = vmatprep.subr.mxu0 0.0
  %9948 = vmatpush1.msra.mxu0 0.0
  %9949 = vmatprep.subr.mxu0 0.0
  %9950 = vmatpush1.msra.mxu0 0.0
  %9951 = vmatprep.subr.mxu0 0.0
  %9952 = vmatpush1.msra.mxu0 0.0
  %9953 = vmatprep.subr.mxu0 0.0
  %9954 = vmatpush1.msra.mxu0 0.0
  %9955 = vmatprep.subr.mxu0 0.0
  %9956 = vmatpush1.msra.mxu0 0.0
  %9957 = vmatprep.subr.mxu0 0.0
  %9958 = vmatpush1.msra.mxu0 0.0
  %9959 = vmatprep.subr.mxu0 0.0
  %9960 = vmatpush1.msra.mxu0 0.0
  %9961 = vmatprep.subr.mxu0 0.0
  %9962 = vmatpush1.msra.mxu0 0.0
  %9963 = vmatprep.subr.mxu0 0.0
  %9964 = vmatpush1.msra.mxu0 0.0
  %9965 = vmatprep.subr.mxu0 0.0
  %9966 = vmatpush1.msra.mxu0 0.0
  %9967 = vmatprep.subr.mxu0 0.0
  %9968 = vmatpush1.msra.mxu0 0.0
  %9969 = vmatprep.subr.mxu0 0.0
  %9970 = vmatpush1.msra.mxu0 %v1464
  %9971 = vmatprep.subr.mxu0 0.0
  %9972 = vmatpush1.msra.mxu0 %v1462
  %9973 = vmatprep.subr.mxu0 0.0
  %9974 = vmatpush1.msra.mxu0 %v1460
  %9975 = vmatprep.subr.mxu0 0.0
  %9976 = vmatpush1.msra.mxu0 %v1458
  %9977 = vmatprep.subr.mxu0 0.0
  %9978 = vmatpush2.msra.mxu0 0.0
  %9979 = vmatprep.subr.mxu0 0.0
  %9980 = vmatpush2.msra.mxu0 0.0
  %9981 = vmatprep.subr.mxu0 0.0
  %9982 = vmatpush2.msra.mxu0 0.0
  %9983 = vmatprep.subr.mxu0 0.0
  %9984 = vmatpush2.msra.mxu0 0.0
  %9985 = vmatprep.subr.mxu0 0.0
  %9986 = vmatpush2.msra.mxu0 0.0
  %9987 = vmatprep.subr.mxu0 0.0
  %9988 = vmatpush2.msra.mxu0 0.0
  %9989 = vmatprep.subr.mxu0 0.0
  %9990 = vmatpush2.msra.mxu0 0.0
  %9991 = vmatprep.subr.mxu0 0.0
  %9992 = vmatpush2.msra.mxu0 0.0
  %9993 = vmatprep.subr.mxu0 0.0
  %9994 = vmatpush2.msra.mxu0 0.0
  %9995 = vmatprep.subr.mxu0 0.0
  %9996 = vmatpush2.msra.mxu0 0.0
  %9997 = vmatprep.subr.mxu0 0.0
  %9998 = vmatpush2.msra.mxu0 0.0
  %9999 = vmatprep.subr.mxu0 0.0
  %10000 = vmatpush2.msra.mxu0 0.0
  %10001 = vmatprep.subr.mxu0 0.0
  %10002 = vmatpush2.msra.mxu0 0.0
  %10003 = vmatprep.subr.mxu0 0.0
  %10004 = vmatpush2.msra.mxu0 0.0
  %10005 = vmatprep.subr.mxu0 0.0
  %10006 = vmatpush2.msra.mxu0 0.0
  %10007 = vmatprep.subr.mxu0 0.0
  %10008 = vmatpush2.msra.mxu0 0.0
  %10009 = vmatprep.mubr.f32.mxu0 0.0
  %10010 = vmatmul.mubr.f32.gmra.mxu0 %v9934
  %v10011 = vpop.f32.mrf.mxu0
  %v10012 = vadd.f32 0.0, %v10011
  %v10013 = vpop.f32.mrf.mxu0
  %10014 = vmatprep.mubr.f32.mxu0 0.0
  %10015 = vmatmul.mubr.f32.gmra.mxu0 %v9937
  %v10016 = vpop.f32.mrf.mxu0
  %v10017 = vadd.f32 0.0, %v10016
  %v10018 = vpop.f32.mrf.mxu0
  %10019 = vmatprep.mubr.f32.mxu0 0.0
  %10020 = vmatmul.mubr.f32.gmra.mxu0 %v9940
  %v10021 = vpop.f32.mrf.mxu0
  %v10022 = vadd.f32 0.0, %v10021
  %v10023 = vpop.f32.mrf.mxu0
  %10024 = vmatprep.mubr.f32.mxu0 0.0
  %10025 = vmatmul.mubr.f32.gmra.mxu0 %v9943
  %v10026 = vpop.f32.mrf.mxu0
  %v10027 = vadd.f32 0.0, %v10026
  %v10028 = vpop.f32.mrf.mxu0
  %10029 = vdwg.mxu0
  %10062 = vrot.lane.b32.xlu0 %v7781, 16
  %v10063 = vpop.permute.xlu0 %10062
  %10064 = vrot.lane.b32.xlu0 %v7786, 16
  %v10065 = vpop.permute.xlu0 %10064
  %10066 = vrot.lane.b32.xlu0 %v7791, 16
  %v10067 = vpop.permute.xlu0 %10066
  %10068 = vrot.lane.b32.xlu0 %v7796, 16
  %v10069 = vpop.permute.xlu0 %10068
  %10070 = vrot.lane.b32.xlu0 %v7878, 16
  %v10071 = vpop.permute.xlu0 %10070
  %10072 = vrot.lane.b32.xlu0 %v7883, 16
  %v10073 = vpop.permute.xlu0 %10072
  %10074 = vrot.lane.b32.xlu0 %v7888, 16
  %v10075 = vpop.permute.xlu0 %10074
  %10076 = vrot.lane.b32.xlu0 %v7893, 16
  %v10077 = vpop.permute.xlu0 %10076
  %10078 = vrot.lane.b32.xlu0 %v7975, 16
  %v10079 = vpop.permute.xlu0 %10078
  %10080 = vrot.lane.b32.xlu0 %v7980, 16
  %v10081 = vpop.permute.xlu0 %10080
  %10082 = vrot.lane.b32.xlu0 %v7985, 16
  %v10083 = vpop.permute.xlu0 %10082
  %10084 = vrot.lane.b32.xlu0 %v7990, 16
  %v10085 = vpop.permute.xlu0 %10084
  %10086 = vrot.lane.b32.xlu0 %v8072, 16
  %v10087 = vpop.permute.xlu0 %10086
  %10088 = vrot.lane.b32.xlu0 %v8077, 16
  %v10089 = vpop.permute.xlu0 %10088
  %10090 = vrot.lane.b32.xlu0 %v8082, 16
  %v10091 = vpop.permute.xlu0 %10090
  %10092 = vrot.lane.b32.xlu0 %v8087, 16
  %v10093 = vpop.permute.xlu0 %10092
  %10094 = vrot.lane.b32.xlu0 %v8169, 16
  %v10095 = vpop.permute.xlu0 %10094
  %10096 = vrot.lane.b32.xlu0 %v8174, 16
  %v10097 = vpop.permute.xlu0 %10096
  %10098 = vrot.lane.b32.xlu0 %v8179, 16
  %v10099 = vpop.permute.xlu0 %10098
  %10100 = vrot.lane.b32.xlu0 %v8184, 16
  %v10101 = vpop.permute.xlu0 %10100
  %10102 = vrot.lane.b32.xlu0 %v8266, 16
  %v10103 = vpop.permute.xlu0 %10102
  %10104 = vrot.lane.b32.xlu0 %v8271, 16
  %v10105 = vpop.permute.xlu0 %10104
  %10106 = vrot.lane.b32.xlu0 %v8276, 16
  %v10107 = vpop.permute.xlu0 %10106
  %10108 = vrot.lane.b32.xlu0 %v8281, 16
  %v10109 = vpop.permute.xlu0 %10108
  %10110 = vrot.lane.b32.xlu0 %v8363, 16
  %v10111 = vpop.permute.xlu0 %10110
  %10112 = vrot.lane.b32.xlu0 %v8368, 16
  %v10113 = vpop.permute.xlu0 %10112
  %10114 = vrot.lane.b32.xlu0 %v8373, 16
  %v10115 = vpop.permute.xlu0 %10114
  %10116 = vrot.lane.b32.xlu0 %v8378, 16
  %v10117 = vpop.permute.xlu0 %10116
  %10118 = vrot.lane.b32.xlu0 %v8460, 16
  %v10119 = vpop.permute.xlu0 %10118
  %10120 = vrot.lane.b32.xlu0 %v8465, 16
  %v10121 = vpop.permute.xlu0 %10120
  %10122 = vrot.lane.b32.xlu0 %v8470, 16
  %v10123 = vpop.permute.xlu0 %10122
  %10124 = vrot.lane.b32.xlu0 %v8475, 16
  %v10125 = vpop.permute.xlu0 %10124
  %10190 = vrot.lane.b32.xlu0 %v8557, 32
  %v10191 = vpop.permute.xlu0 %10190
  %10192 = vrot.lane.b32.xlu0 %v8562, 32
  %v10193 = vpop.permute.xlu0 %10192
  %10194 = vrot.lane.b32.xlu0 %v8567, 32
  %v10195 = vpop.permute.xlu0 %10194
  %10196 = vrot.lane.b32.xlu0 %v8572, 32
  %v10197 = vpop.permute.xlu0 %10196
  %10198 = vrot.lane.b32.xlu0 %v8654, 32
  %v10199 = vpop.permute.xlu0 %10198
  %10200 = vrot.lane.b32.xlu0 %v8659, 32
  %v10201 = vpop.permute.xlu0 %10200
  %10202 = vrot.lane.b32.xlu0 %v8664, 32
  %v10203 = vpop.permute.xlu0 %10202
  %10204 = vrot.lane.b32.xlu0 %v8669, 32
  %v10205 = vpop.permute.xlu0 %10204
  %10206 = vrot.lane.b32.xlu0 %v8751, 32
  %v10207 = vpop.permute.xlu0 %10206
  %10208 = vrot.lane.b32.xlu0 %v8756, 32
  %v10209 = vpop.permute.xlu0 %10208
  %10210 = vrot.lane.b32.xlu0 %v8761, 32
  %v10211 = vpop.permute.xlu0 %10210
  %10212 = vrot.lane.b32.xlu0 %v8766, 32
  %v10213 = vpop.permute.xlu0 %10212
  %10214 = vrot.lane.b32.xlu0 %v8848, 32
  %v10215 = vpop.permute.xlu0 %10214
  %10216 = vrot.lane.b32.xlu0 %v8853, 32
  %v10217 = vpop.permute.xlu0 %10216
  %10218 = vrot.lane.b32.xlu0 %v8858, 32
  %v10219 = vpop.permute.xlu0 %10218
  %10220 = vrot.lane.b32.xlu0 %v8863, 32
  %v10221 = vpop.permute.xlu0 %10220
  %10222 = vrot.lane.b32.xlu0 %v8945, 32
  %v10223 = vpop.permute.xlu0 %10222
  %10224 = vrot.lane.b32.xlu0 %v8950, 32
  %v10225 = vpop.permute.xlu0 %10224
  %10226 = vrot.lane.b32.xlu0 %v8955, 32
  %v10227 = vpop.permute.xlu0 %10226
  %10228 = vrot.lane.b32.xlu0 %v8960, 32
  %v10229 = vpop.permute.xlu0 %10228
  %10230 = vrot.lane.b32.xlu0 %v9042, 32
  %v10231 = vpop.permute.xlu0 %10230
  %10232 = vrot.lane.b32.xlu0 %v9047, 32
  %v10233 = vpop.permute.xlu0 %10232
  %10234 = vrot.lane.b32.xlu0 %v9052, 32
  %v10235 = vpop.permute.xlu0 %10234
  %10236 = vrot.lane.b32.xlu0 %v9057, 32
  %v10237 = vpop.permute.xlu0 %10236
  %10238 = vrot.lane.b32.xlu0 %v9139, 32
  %v10239 = vpop.permute.xlu0 %10238
  %10240 = vrot.lane.b32.xlu0 %v9144, 32
  %v10241 = vpop.permute.xlu0 %10240
  %10242 = vrot.lane.b32.xlu0 %v9149, 32
  %v10243 = vpop.permute.xlu0 %10242
  %10244 = vrot.lane.b32.xlu0 %v9154, 32
  %v10245 = vpop.permute.xlu0 %10244
  %10246 = vrot.lane.b32.xlu0 %v9236, 32
  %v10247 = vpop.permute.xlu0 %10246
  %10248 = vrot.lane.b32.xlu0 %v9241, 32
  %v10249 = vpop.permute.xlu0 %10248
  %10250 = vrot.lane.b32.xlu0 %v9246, 32
  %v10251 = vpop.permute.xlu0 %10250
  %10252 = vrot.lane.b32.xlu0 %v9251, 32
  %v10253 = vpop.permute.xlu0 %10252
  %10318 = vrot.lane.b32.xlu0 %v9333, 48
  %v10319 = vpop.permute.xlu0 %10318
  %10320 = vrot.lane.b32.xlu0 %v9338, 48
  %v10321 = vpop.permute.xlu0 %10320
  %10322 = vrot.lane.b32.xlu0 %v9343, 48
  %v10323 = vpop.permute.xlu0 %10322
  %10324 = vrot.lane.b32.xlu0 %v9348, 48
  %v10325 = vpop.permute.xlu0 %10324
  %10326 = vrot.lane.b32.xlu0 %v9430, 48
  %v10327 = vpop.permute.xlu0 %10326
  %10328 = vrot.lane.b32.xlu0 %v9435, 48
  %v10329 = vpop.permute.xlu0 %10328
  %10330 = vrot.lane.b32.xlu0 %v9440, 48
  %v10331 = vpop.permute.xlu0 %10330
  %10332 = vrot.lane.b32.xlu0 %v9445, 48
  %v10333 = vpop.permute.xlu0 %10332
  %10334 = vrot.lane.b32.xlu0 %v9527, 48
  %v10335 = vpop.permute.xlu0 %10334
  %10336 = vrot.lane.b32.xlu0 %v9532, 48
  %v10337 = vpop.permute.xlu0 %10336
  %10338 = vrot.lane.b32.xlu0 %v9537, 48
  %v10339 = vpop.permute.xlu0 %10338
  %10340 = vrot.lane.b32.xlu0 %v9542, 48
  %v10341 = vpop.permute.xlu0 %10340
  %10342 = vrot.lane.b32.xlu0 %v9624, 48
  %v10343 = vpop.permute.xlu0 %10342
  %10344 = vrot.lane.b32.xlu0 %v9629, 48
  %v10345 = vpop.permute.xlu0 %10344
  %10346 = vrot.lane.b32.xlu0 %v9634, 48
  %v10347 = vpop.permute.xlu0 %10346
  %10348 = vrot.lane.b32.xlu0 %v9639, 48
  %v10349 = vpop.permute.xlu0 %10348
  %10350 = vrot.lane.b32.xlu0 %v9721, 48
  %v10351 = vpop.permute.xlu0 %10350
  %10352 = vrot.lane.b32.xlu0 %v9726, 48
  %v10353 = vpop.permute.xlu0 %10352
  %10354 = vrot.lane.b32.xlu0 %v9731, 48
  %v10355 = vpop.permute.xlu0 %10354
  %10356 = vrot.lane.b32.xlu0 %v9736, 48
  %v10357 = vpop.permute.xlu0 %10356
  %10358 = vrot.lane.b32.xlu0 %v9818, 48
  %v10359 = vpop.permute.xlu0 %10358
  %10360 = vrot.lane.b32.xlu0 %v9823, 48
  %v10361 = vpop.permute.xlu0 %10360
  %10362 = vrot.lane.b32.xlu0 %v9828, 48
  %v10363 = vpop.permute.xlu0 %10362
  %10364 = vrot.lane.b32.xlu0 %v9833, 48
  %v10365 = vpop.permute.xlu0 %10364
  %10366 = vrot.lane.b32.xlu0 %v9915, 48
  %v10367 = vpop.permute.xlu0 %10366
  %10368 = vrot.lane.b32.xlu0 %v9920, 48
  %v10369 = vpop.permute.xlu0 %10368
  %10370 = vrot.lane.b32.xlu0 %v9925, 48
  %v10371 = vpop.permute.xlu0 %10370
  %10372 = vrot.lane.b32.xlu0 %v9930, 48
  %v10373 = vpop.permute.xlu0 %10372
  %10374 = vrot.lane.b32.xlu0 %v10012, 48
  %v10375 = vpop.permute.xlu0 %10374
  %10376 = vrot.lane.b32.xlu0 %v10017, 48
  %v10377 = vpop.permute.xlu0 %10376
  %10378 = vrot.lane.b32.xlu0 %v10022, 48
  %v10379 = vpop.permute.xlu0 %10378
  %10380 = vrot.lane.b32.xlu0 %v10027, 48
  %v10381 = vpop.permute.xlu0 %10380
  %v10414 = vsel %vm1516, %v7005, %v10063
  %v10415 = vsel %vm1516, %v7010, %v10065
  %v10416 = vsel %vm1516, %v7015, %v10067
  %v10417 = vsel %vm1516, %v7020, %v10069
  %v10418 = vsel %vm1516, %v7102, %v10071
  %v10419 = vsel %vm1516, %v7107, %v10073
  %v10420 = vsel %vm1516, %v7112, %v10075
  %v10421 = vsel %vm1516, %v7117, %v10077
  %v10422 = vsel %vm1516, %v7199, %v10079
  %v10423 = vsel %vm1516, %v7204, %v10081
  %v10424 = vsel %vm1516, %v7209, %v10083
  %v10425 = vsel %vm1516, %v7214, %v10085
  %v10426 = vsel %vm1516, %v7296, %v10087
  %v10427 = vsel %vm1516, %v7301, %v10089
  %v10428 = vsel %vm1516, %v7306, %v10091
  %v10429 = vsel %vm1516, %v7311, %v10093
  %v10430 = vsel %vm1516, %v7393, %v10095
  %v10431 = vsel %vm1516, %v7398, %v10097
  %v10432 = vsel %vm1516, %v7403, %v10099
  %v10433 = vsel %vm1516, %v7408, %v10101
  %v10434 = vsel %vm1516, %v7490, %v10103
  %v10435 = vsel %vm1516, %v7495, %v10105
  %v10436 = vsel %vm1516, %v7500, %v10107
  %v10437 = vsel %vm1516, %v7505, %v10109
  %v10438 = vsel %vm1516, %v7587, %v10111
  %v10439 = vsel %vm1516, %v7592, %v10113
  %v10440 = vsel %vm1516, %v7597, %v10115
  %v10441 = vsel %vm1516, %v7602, %v10117
  %v10442 = vsel %vm1516, %v7684, %v10119
  %v10443 = vsel %vm1516, %v7689, %v10121
  %v10444 = vsel %vm1516, %v7694, %v10123
  %v10445 = vsel %vm1516, %v7699, %v10125
  %v10446 = vsel %vm5133, %v10414, %v10191
  %v10447 = vsel %vm5133, %v10415, %v10193
  %v10448 = vsel %vm5133, %v10416, %v10195
  %v10449 = vsel %vm5133, %v10417, %v10197
  %v10450 = vsel %vm5133, %v10418, %v10199
  %v10451 = vsel %vm5133, %v10419, %v10201
  %v10452 = vsel %vm5133, %v10420, %v10203
  %v10453 = vsel %vm5133, %v10421, %v10205
  %v10454 = vsel %vm5133, %v10422, %v10207
  %v10455 = vsel %vm5133, %v10423, %v10209
  %v10456 = vsel %vm5133, %v10424, %v10211
  %v10457 = vsel %vm5133, %v10425, %v10213
  %v10458 = vsel %vm5133, %v10426, %v10215
  %v10459 = vsel %vm5133, %v10427, %v10217
  %v10460 = vsel %vm5133, %v10428, %v10219
  %v10461 = vsel %vm5133, %v10429, %v10221
  %v10462 = vsel %vm5133, %v10430, %v10223
  %v10463 = vsel %vm5133, %v10431, %v10225
  %v10464 = vsel %vm5133, %v10432, %v10227
  %v10465 = vsel %vm5133, %v10433, %v10229
  %v10466 = vsel %vm5133, %v10434, %v10231
  %v10467 = vsel %vm5133, %v10435, %v10233
  %v10468 = vsel %vm5133, %v10436, %v10235
  %v10469 = vsel %vm5133, %v10437, %v10237
  %v10470 = vsel %vm5133, %v10438, %v10239
  %v10471 = vsel %vm5133, %v10439, %v10241
  %v10472 = vsel %vm5133, %v10440, %v10243
  %v10473 = vsel %vm5133, %v10441, %v10245
  %v10474 = vsel %vm5133, %v10442, %v10247
  %v10475 = vsel %vm5133, %v10443, %v10249
  %v10476 = vsel %vm5133, %v10444, %v10251
  %v10477 = vsel %vm5133, %v10445, %v10253
  %vm10478 = vcmask 392192
  %v10479 = vsel %vm10478, %v10446, %v10319
  %v10480 = vsel %vm10478, %v10447, %v10321
  %v10481 = vsel %vm10478, %v10448, %v10323
  %v10482 = vsel %vm10478, %v10449, %v10325
  %v10483 = vsel %vm10478, %v10450, %v10327
  %v10484 = vsel %vm10478, %v10451, %v10329
  %v10485 = vsel %vm10478, %v10452, %v10331
  %v10486 = vsel %vm10478, %v10453, %v10333
  %v10487 = vsel %vm10478, %v10454, %v10335
  %v10488 = vsel %vm10478, %v10455, %v10337
  %v10489 = vsel %vm10478, %v10456, %v10339
  %v10490 = vsel %vm10478, %v10457, %v10341
  %v10491 = vsel %vm10478, %v10458, %v10343
  %v10492 = vsel %vm10478, %v10459, %v10345
  %v10493 = vsel %vm10478, %v10460, %v10347
  %v10494 = vsel %vm10478, %v10461, %v10349
  %v10495 = vsel %vm10478, %v10462, %v10351
  %v10496 = vsel %vm10478, %v10463, %v10353
  %v10497 = vsel %vm10478, %v10464, %v10355
  %v10498 = vsel %vm10478, %v10465, %v10357
  %v10499 = vsel %vm10478, %v10466, %v10359
  %v10500 = vsel %vm10478, %v10467, %v10361
  %v10501 = vsel %vm10478, %v10468, %v10363
  %v10502 = vsel %vm10478, %v10469, %v10365
  %v10503 = vsel %vm10478, %v10470, %v10367
  %v10504 = vsel %vm10478, %v10471, %v10369
  %v10505 = vsel %vm10478, %v10472, %v10371
  %v10506 = vsel %vm10478, %v10473, %v10373
  %v10507 = vsel %vm10478, %v10474, %v10375
  %v10508 = vsel %vm10478, %v10475, %v10377
  %v10509 = vsel %vm10478, %v10476, %v10379
  %v10510 = vsel %vm10478, %v10477, %v10381
  %v10511 = vld [vmem:[%s5] sm:$0xff]
  %v10512 = vld [vmem:[%s5 + $0x8] sm:$0xff]
  %v10513 = vld [vmem:[%s5 + $0x10] sm:$0xff]
  %v10514 = vld [vmem:[%s5 + $0x18] sm:$0xff]
  %v10515 = vld [vmem:[%s5 + $0x20] sm:$0xff]
  %v10516 = vld [vmem:[%s5 + $0x28] sm:$0xff]
  %v10517 = vld [vmem:[%s5 + $0x30] sm:$0xff]
  %v10518 = vld [vmem:[%s5 + $0x38] sm:$0xff]
  %v10520 = vsel %vm78, %v10479, 0
  %v10523 = vsel %vm78, %v10480, 0
  %v10526 = vsel %vm78, %v10481, 0
  %v10529 = vsel %vm78, %v10482, 0
  %v10532 = vsel %vm78, %v10483, 0
  %v10535 = vsel %vm78, %v10484, 0
  %v10538 = vsel %vm78, %v10485, 0
  %v10541 = vsel %vm78, %v10486, 0
  %v10544 = vsel %vm78, %v10487, 0
  %v10547 = vsel %vm78, %v10488, 0
  %v10550 = vsel %vm78, %v10489, 0
  %v10553 = vsel %vm78, %v10490, 0
  %v10556 = vsel %vm78, %v10491, 0
  %v10559 = vsel %vm78, %v10492, 0
  %v10562 = vsel %vm78, %v10493, 0
  %v10565 = vsel %vm78, %v10494, 0
  %v10568 = vsel %vm78, %v10495, 0
  %v10571 = vsel %vm78, %v10496, 0
  %v10574 = vsel %vm78, %v10497, 0
  %v10577 = vsel %vm78, %v10498, 0
  %v10580 = vsel %vm78, %v10499, 0
  %v10583 = vsel %vm78, %v10500, 0
  %v10586 = vsel %vm78, %v10501, 0
  %v10589 = vsel %vm78, %v10502, 0
  %v10592 = vsel %vm78, %v10503, 0
  %v10595 = vsel %vm78, %v10504, 0
  %v10598 = vsel %vm78, %v10505, 0
  %v10601 = vsel %vm78, %v10506, 0
  %v10604 = vsel %vm78, %v10507, 0
  %v10607 = vsel %vm78, %v10508, 0
  %v10610 = vsel %vm78, %v10509, 0
  %v10613 = vsel %vm78, %v10510, 0
  %10615 = vmatprep.subr.mxu0 0.0
  %10616 = vmatpush1.msra.mxu0 0.0
  %10617 = vmatprep.subr.mxu0 0.0
  %10618 = vmatpush1.msra.mxu0 0.0
  %10619 = vmatprep.subr.mxu0 0.0
  %10620 = vmatpush1.msra.mxu0 0.0
  %10621 = vmatprep.subr.mxu0 0.0
  %10622 = vmatpush1.msra.mxu0 0.0
  %10623 = vmatprep.subr.mxu0 0.0
  %10624 = vmatpush1.msra.mxu0 0.0
  %10625 = vmatprep.subr.mxu0 0.0
  %10626 = vmatpush1.msra.mxu0 0.0
  %10627 = vmatprep.subr.mxu0 0.0
  %10628 = vmatpush1.msra.mxu0 0.0
  %10629 = vmatprep.subr.mxu0 0.0
  %10630 = vmatpush1.msra.mxu0 0.0
  %10631 = vmatprep.subr.mxu0 0.0
  %10632 = vmatpush1.msra.mxu0 %v10518
  %10633 = vmatprep.subr.mxu0 0.0
  %10634 = vmatpush1.msra.mxu0 %v10517
  %10635 = vmatprep.subr.mxu0 0.0
  %10636 = vmatpush1.msra.mxu0 %v10516
  %10637 = vmatprep.subr.mxu0 0.0
  %10638 = vmatpush1.msra.mxu0 %v10515
  %10639 = vmatprep.subr.mxu0 0.0
  %10640 = vmatpush1.msra.mxu0 %v10514
  %10641 = vmatprep.subr.mxu0 0.0
  %10642 = vmatpush1.msra.mxu0 %v10513
  %10643 = vmatprep.subr.mxu0 0.0
  %10644 = vmatpush1.msra.mxu0 %v10512
  %10645 = vmatprep.subr.mxu0 0.0
  %10646 = vmatpush1.msra.mxu0 %v10511
  %10647 = vmatprep.subr.mxu0 0.0
  %10648 = vmatpush2.msra.mxu0 0.0
  %10649 = vmatprep.subr.mxu0 0.0
  %10650 = vmatpush2.msra.mxu0 0.0
  %10651 = vmatprep.subr.mxu0 0.0
  %10652 = vmatpush2.msra.mxu0 0.0
  %10653 = vmatprep.subr.mxu0 0.0
  %10654 = vmatpush2.msra.mxu0 0.0
  %10655 = vmatprep.subr.mxu0 0.0
  %10656 = vmatpush2.msra.mxu0 0.0
  %10657 = vmatprep.subr.mxu0 0.0
  %10658 = vmatpush2.msra.mxu0 0.0
  %10659 = vmatprep.subr.mxu0 0.0
  %10660 = vmatpush2.msra.mxu0 0.0
  %10661 = vmatprep.subr.mxu0 0.0
  %10662 = vmatpush2.msra.mxu0 0.0
  %10663 = vmatprep.subr.mxu0 0.0
  %10664 = vmatpush2.msra.mxu0 0.0
  %10665 = vmatprep.subr.mxu0 0.0
  %10666 = vmatpush2.msra.mxu0 0.0
  %10667 = vmatprep.subr.mxu0 0.0
  %10668 = vmatpush2.msra.mxu0 0.0
  %10669 = vmatprep.subr.mxu0 0.0
  %10670 = vmatpush2.msra.mxu0 0.0
  %10671 = vmatprep.subr.mxu0 0.0
  %10672 = vmatpush2.msra.mxu0 0.0
  %10673 = vmatprep.subr.mxu0 0.0
  %10674 = vmatpush2.msra.mxu0 0.0
  %10675 = vmatprep.subr.mxu0 0.0
  %10676 = vmatpush2.msra.mxu0 0.0
  %10677 = vmatprep.subr.mxu0 0.0
  %10678 = vmatpush2.msra.mxu0 0.0
  %10679 = vmatprep.mubr.f32.mxu0 0.0
  %10680 = vmatmul.mubr.f32.gmra.mxu0 %v10520
  %v10681 = vpop.f32.mrf.mxu0
  %v10682 = vadd.f32 0.0, %v10681
  %v10683 = vpop.f32.mrf.mxu0
  %10684 = vmatprep.mubr.f32.mxu0 0.0
  %10685 = vmatmul.mubr.f32.gmra.mxu0 %v10523
  %v10686 = vpop.f32.mrf.mxu0
  %v10687 = vadd.f32 0.0, %v10686
  %v10688 = vpop.f32.mrf.mxu0
  %10689 = vmatprep.mubr.f32.mxu0 0.0
  %10690 = vmatmul.mubr.f32.gmra.mxu0 %v10526
  %v10691 = vpop.f32.mrf.mxu0
  %v10692 = vadd.f32 0.0, %v10691
  %v10693 = vpop.f32.mrf.mxu0
  %10694 = vmatprep.mubr.f32.mxu0 0.0
  %10695 = vmatmul.mubr.f32.gmra.mxu0 %v10529
  %v10696 = vpop.f32.mrf.mxu0
  %v10697 = vadd.f32 0.0, %v10696
  %v10698 = vpop.f32.mrf.mxu0
  %10699 = vmatprep.mubr.f32.mxu0 0.0
  %10700 = vmatmul.mubr.f32.gmra.mxu0 %v10532
  %v10701 = vpop.f32.mrf.mxu0
  %v10702 = vadd.f32 0.0, %v10701
  %v10703 = vpop.f32.mrf.mxu0
  %10704 = vmatprep.mubr.f32.mxu0 0.0
  %10705 = vmatmul.mubr.f32.gmra.mxu0 %v10535
  %v10706 = vpop.f32.mrf.mxu0
  %v10707 = vadd.f32 0.0, %v10706
  %v10708 = vpop.f32.mrf.mxu0
  %10709 = vmatprep.mubr.f32.mxu0 0.0
  %10710 = vmatmul.mubr.f32.gmra.mxu0 %v10538
  %v10711 = vpop.f32.mrf.mxu0
  %v10712 = vadd.f32 0.0, %v10711
  %v10713 = vpop.f32.mrf.mxu0
  %10714 = vmatprep.mubr.f32.mxu0 0.0
  %10715 = vmatmul.mubr.f32.gmra.mxu0 %v10541
  %v10716 = vpop.f32.mrf.mxu0
  %v10717 = vadd.f32 0.0, %v10716
  %v10718 = vpop.f32.mrf.mxu0
  %10719 = vmatprep.mubr.f32.mxu0 0.0
  %10720 = vmatmul.mubr.f32.gmra.mxu0 %v10544
  %v10721 = vpop.f32.mrf.mxu0
  %v10722 = vadd.f32 0.0, %v10721
  %v10723 = vpop.f32.mrf.mxu0
  %10724 = vmatprep.mubr.f32.mxu0 0.0
  %10725 = vmatmul.mubr.f32.gmra.mxu0 %v10547
  %v10726 = vpop.f32.mrf.mxu0
  %v10727 = vadd.f32 0.0, %v10726
  %v10728 = vpop.f32.mrf.mxu0
  %10729 = vmatprep.mubr.f32.mxu0 0.0
  %10730 = vmatmul.mubr.f32.gmra.mxu0 %v10550
  %v10731 = vpop.f32.mrf.mxu0
  %v10732 = vadd.f32 0.0, %v10731
  %v10733 = vpop.f32.mrf.mxu0
  %10734 = vmatprep.mubr.f32.mxu0 0.0
  %10735 = vmatmul.mubr.f32.gmra.mxu0 %v10553
  %v10736 = vpop.f32.mrf.mxu0
  %v10737 = vadd.f32 0.0, %v10736
  %v10738 = vpop.f32.mrf.mxu0
  %10739 = vmatprep.mubr.f32.mxu0 0.0
  %10740 = vmatmul.mubr.f32.gmra.mxu0 %v10556
  %v10741 = vpop.f32.mrf.mxu0
  %v10742 = vadd.f32 0.0, %v10741
  %v10743 = vpop.f32.mrf.mxu0
  %10744 = vmatprep.mubr.f32.mxu0 0.0
  %10745 = vmatmul.mubr.f32.gmra.mxu0 %v10559
  %v10746 = vpop.f32.mrf.mxu0
  %v10747 = vadd.f32 0.0, %v10746
  %v10748 = vpop.f32.mrf.mxu0
  %10749 = vmatprep.mubr.f32.mxu0 0.0
  %10750 = vmatmul.mubr.f32.gmra.mxu0 %v10562
  %v10751 = vpop.f32.mrf.mxu0
  %v10752 = vadd.f32 0.0, %v10751
  %v10753 = vpop.f32.mrf.mxu0
  %10754 = vmatprep.mubr.f32.mxu0 0.0
  %10755 = vmatmul.mubr.f32.gmra.mxu0 %v10565
  %v10756 = vpop.f32.mrf.mxu0
  %v10757 = vadd.f32 0.0, %v10756
  %v10758 = vpop.f32.mrf.mxu0
  %10759 = vmatprep.mubr.f32.mxu0 0.0
  %10760 = vmatmul.mubr.f32.gmra.mxu0 %v10568
  %v10761 = vpop.f32.mrf.mxu0
  %v10762 = vadd.f32 0.0, %v10761
  %v10763 = vpop.f32.mrf.mxu0
  %10764 = vmatprep.mubr.f32.mxu0 0.0
  %10765 = vmatmul.mubr.f32.gmra.mxu0 %v10571
  %v10766 = vpop.f32.mrf.mxu0
  %v10767 = vadd.f32 0.0, %v10766
  %v10768 = vpop.f32.mrf.mxu0
  %10769 = vmatprep.mubr.f32.mxu0 0.0
  %10770 = vmatmul.mubr.f32.gmra.mxu0 %v10574
  %v10771 = vpop.f32.mrf.mxu0
  %v10772 = vadd.f32 0.0, %v10771
  %v10773 = vpop.f32.mrf.mxu0
  %10774 = vmatprep.mubr.f32.mxu0 0.0
  %10775 = vmatmul.mubr.f32.gmra.mxu0 %v10577
  %v10776 = vpop.f32.mrf.mxu0
  %v10777 = vadd.f32 0.0, %v10776
  %v10778 = vpop.f32.mrf.mxu0
  %10779 = vmatprep.mubr.f32.mxu0 0.0
  %10780 = vmatmul.mubr.f32.gmra.mxu0 %v10580
  %v10781 = vpop.f32.mrf.mxu0
  %v10782 = vadd.f32 0.0, %v10781
  %v10783 = vpop.f32.mrf.mxu0
  %10784 = vmatprep.mubr.f32.mxu0 0.0
  %10785 = vmatmul.mubr.f32.gmra.mxu0 %v10583
  %v10786 = vpop.f32.mrf.mxu0
  %v10787 = vadd.f32 0.0, %v10786
  %v10788 = vpop.f32.mrf.mxu0
  %10789 = vmatprep.mubr.f32.mxu0 0.0
  %10790 = vmatmul.mubr.f32.gmra.mxu0 %v10586
  %v10791 = vpop.f32.mrf.mxu0
  %v10792 = vadd.f32 0.0, %v10791
  %v10793 = vpop.f32.mrf.mxu0
  %10794 = vmatprep.mubr.f32.mxu0 0.0
  %10795 = vmatmul.mubr.f32.gmra.mxu0 %v10589
  %v10796 = vpop.f32.mrf.mxu0
  %v10797 = vadd.f32 0.0, %v10796
  %v10798 = vpop.f32.mrf.mxu0
  %10799 = vmatprep.mubr.f32.mxu0 0.0
  %10800 = vmatmul.mubr.f32.gmra.mxu0 %v10592
  %v10801 = vpop.f32.mrf.mxu0
  %v10802 = vadd.f32 0.0, %v10801
  %v10803 = vpop.f32.mrf.mxu0
  %10804 = vmatprep.mubr.f32.mxu0 0.0
  %10805 = vmatmul.mubr.f32.gmra.mxu0 %v10595
  %v10806 = vpop.f32.mrf.mxu0
  %v10807 = vadd.f32 0.0, %v10806
  %v10808 = vpop.f32.mrf.mxu0
  %10809 = vmatprep.mubr.f32.mxu0 0.0
  %10810 = vmatmul.mubr.f32.gmra.mxu0 %v10598
  %v10811 = vpop.f32.mrf.mxu0
  %v10812 = vadd.f32 0.0, %v10811
  %v10813 = vpop.f32.mrf.mxu0
  %10814 = vmatprep.mubr.f32.mxu0 0.0
  %10815 = vmatmul.mubr.f32.gmra.mxu0 %v10601
  %v10816 = vpop.f32.mrf.mxu0
  %v10817 = vadd.f32 0.0, %v10816
  %v10818 = vpop.f32.mrf.mxu0
  %10819 = vmatprep.mubr.f32.mxu0 0.0
  %10820 = vmatmul.mubr.f32.gmra.mxu0 %v10604
  %v10821 = vpop.f32.mrf.mxu0
  %v10822 = vadd.f32 0.0, %v10821
  %v10823 = vpop.f32.mrf.mxu0
  %10824 = vmatprep.mubr.f32.mxu0 0.0
  %10825 = vmatmul.mubr.f32.gmra.mxu0 %v10607
  %v10826 = vpop.f32.mrf.mxu0
  %v10827 = vadd.f32 0.0, %v10826
  %v10828 = vpop.f32.mrf.mxu0
  %10829 = vmatprep.mubr.f32.mxu0 0.0
  %10830 = vmatmul.mubr.f32.gmra.mxu0 %v10610
  %v10831 = vpop.f32.mrf.mxu0
  %v10832 = vadd.f32 0.0, %v10831
  %v10833 = vpop.f32.mrf.mxu0
  %10834 = vmatprep.mubr.f32.mxu0 0.0
  %10835 = vmatmul.mubr.f32.gmra.mxu0 %v10613
  %v10836 = vpop.f32.mrf.mxu0
  %v10837 = vadd.f32 0.0, %v10836
  %v10838 = vpop.f32.mrf.mxu0
  %10839 = vdwg.mxu0
  %v10840 = vadd.f32 %v44, %v10682
  %v10841 = vadd.f32 %v45, %v10687
  %v10842 = vadd.f32 %v46, %v10692
  %v10843 = vadd.f32 %v47, %v10697
  %v10844 = vadd.f32 %v48, %v10702
  %v10845 = vadd.f32 %v49, %v10707
  %v10846 = vadd.f32 %v50, %v10712
  %v10847 = vadd.f32 %v51, %v10717
  %v10848 = vadd.f32 %v52, %v10722
  %v10849 = vadd.f32 %v53, %v10727
  %v10850 = vadd.f32 %v54, %v10732
  %v10851 = vadd.f32 %v55, %v10737
  %v10852 = vadd.f32 %v56, %v10742
  %v10853 = vadd.f32 %v57, %v10747
  %v10854 = vadd.f32 %v58, %v10752
  %v10855 = vadd.f32 %v59, %v10757
  %v10856 = vadd.f32 %v60, %v10762
  %v10857 = vadd.f32 %v61, %v10767
  %v10858 = vadd.f32 %v62, %v10772
  %v10859 = vadd.f32 %v63, %v10777
  %v10860 = vadd.f32 %v64, %v10782
  %v10861 = vadd.f32 %v65, %v10787
  %v10862 = vadd.f32 %v66, %v10792
  %v10863 = vadd.f32 %v67, %v10797
  %v10864 = vadd.f32 %v68, %v10802
  %v10865 = vadd.f32 %v69, %v10807
  %v10866 = vadd.f32 %v70, %v10812
  %v10867 = vadd.f32 %v71, %v10817
  %v10868 = vadd.f32 %v72, %v10822
  %v10869 = vadd.f32 %v73, %v10827
  %v10870 = vadd.f32 %v74, %v10832
  %v10871 = vadd.f32 %v75, %v10837
  %v10872 = vld [vmem:[%s6] sm:$0x1]
  %v10874 = vlaneseq
  %v10875 = vshrl.u32 %v10874, 7
  %v10876 = vsub.s32 0, %v10875
  %v10877 = vrot.slane %v10872, %v10876
  %v10879 = vadd.f32 %v10840, %v10877
  %v10880 = vadd.f32 %v10841, %v10877
  %v10881 = vadd.f32 %v10842, %v10877
  %v10882 = vadd.f32 %v10843, %v10877
  %v10883 = vadd.f32 %v10844, %v10877
  %v10884 = vadd.f32 %v10845, %v10877
  %v10885 = vadd.f32 %v10846, %v10877
  %v10886 = vadd.f32 %v10847, %v10877
  %v10887 = vadd.f32 %v10848, %v10877
  %v10888 = vadd.f32 %v10849, %v10877
  %v10889 = vadd.f32 %v10850, %v10877
  %v10890 = vadd.f32 %v10851, %v10877
  %v10891 = vadd.f32 %v10852, %v10877
  %v10892 = vadd.f32 %v10853, %v10877
  %v10893 = vadd.f32 %v10854, %v10877
  %v10894 = vadd.f32 %v10855, %v10877
  %v10895 = vadd.f32 %v10856, %v10877
  %v10896 = vadd.f32 %v10857, %v10877
  %v10897 = vadd.f32 %v10858, %v10877
  %v10898 = vadd.f32 %v10859, %v10877
  %v10899 = vadd.f32 %v10860, %v10877
  %v10900 = vadd.f32 %v10861, %v10877
  %v10901 = vadd.f32 %v10862, %v10877
  %v10902 = vadd.f32 %v10863, %v10877
  %v10903 = vadd.f32 %v10864, %v10877
  %v10904 = vadd.f32 %v10865, %v10877
  %v10905 = vadd.f32 %v10866, %v10877
  %v10906 = vadd.f32 %v10867, %v10877
  %v10907 = vadd.f32 %v10868, %v10877
  %v10908 = vadd.f32 %v10869, %v10877
  %v10909 = vadd.f32 %v10870, %v10877
  %v10910 = vadd.f32 %v10871, %v10877
  %v10911 = vld [vmem:[%s7] sm:$0x1]
  %v10912 = vld [vmem:[%s8] sm:$0x1]
  %v10913 = vsel %vm78, %v10879, 0.0
  %10914 = vadd.xlane.f32.xlu0 %v10913
  %v10915 = vpop.xlane.xlu0 %10914
  %v10916 = vsel %vm78, %v10880, 0.0
  %10917 = vadd.xlane.f32.xlu0 %v10916
  %v10918 = vpop.xlane.xlu0 %10917
  %v10919 = vsel %vm78, %v10881, 0.0
  %10920 = vadd.xlane.f32.xlu0 %v10919
  %v10921 = vpop.xlane.xlu0 %10920
  %v10922 = vsel %vm78, %v10882, 0.0
  %10923 = vadd.xlane.f32.xlu0 %v10922
  %v10924 = vpop.xlane.xlu0 %10923
  %v10925 = vsel %vm78, %v10883, 0.0
  %10926 = vadd.xlane.f32.xlu0 %v10925
  %v10927 = vpop.xlane.xlu0 %10926
  %v10928 = vsel %vm78, %v10884, 0.0
  %10929 = vadd.xlane.f32.xlu0 %v10928
  %v10930 = vpop.xlane.xlu0 %10929
  %v10931 = vsel %vm78, %v10885, 0.0
  %10932 = vadd.xlane.f32.xlu0 %v10931
  %v10933 = vpop.xlane.xlu0 %10932
  %v10934 = vsel %vm78, %v10886, 0.0
  %10935 = vadd.xlane.f32.xlu0 %v10934
  %v10936 = vpop.xlane.xlu0 %10935
  %v10937 = vsel %vm78, %v10887, 0.0
  %10938 = vadd.xlane.f32.xlu0 %v10937
  %v10939 = vpop.xlane.xlu0 %10938
  %v10940 = vsel %vm78, %v10888, 0.0
  %10941 = vadd.xlane.f32.xlu0 %v10940
  %v10942 = vpop.xlane.xlu0 %10941
  %v10943 = vsel %vm78, %v10889, 0.0
  %10944 = vadd.xlane.f32.xlu0 %v10943
  %v10945 = vpop.xlane.xlu0 %10944
  %v10946 = vsel %vm78, %v10890, 0.0
  %10947 = vadd.xlane.f32.xlu0 %v10946
  %v10948 = vpop.xlane.xlu0 %10947
  %v10949 = vsel %vm78, %v10891, 0.0
  %10950 = vadd.xlane.f32.xlu0 %v10949
  %v10951 = vpop.xlane.xlu0 %10950
  %v10952 = vsel %vm78, %v10892, 0.0
  %10953 = vadd.xlane.f32.xlu0 %v10952
  %v10954 = vpop.xlane.xlu0 %10953
  %v10955 = vsel %vm78, %v10893, 0.0
  %10956 = vadd.xlane.f32.xlu0 %v10955
  %v10957 = vpop.xlane.xlu0 %10956
  %v10958 = vsel %vm78, %v10894, 0.0
  %10959 = vadd.xlane.f32.xlu0 %v10958
  %v10960 = vpop.xlane.xlu0 %10959
  %v10961 = vsel %vm78, %v10895, 0.0
  %10962 = vadd.xlane.f32.xlu0 %v10961
  %v10963 = vpop.xlane.xlu0 %10962
  %v10964 = vsel %vm78, %v10896, 0.0
  %10965 = vadd.xlane.f32.xlu0 %v10964
  %v10966 = vpop.xlane.xlu0 %10965
  %v10967 = vsel %vm78, %v10897, 0.0
  %10968 = vadd.xlane.f32.xlu0 %v10967
  %v10969 = vpop.xlane.xlu0 %10968
  %v10970 = vsel %vm78, %v10898, 0.0
  %10971 = vadd.xlane.f32.xlu0 %v10970
  %v10972 = vpop.xlane.xlu0 %10971
  %v10973 = vsel %vm78, %v10899, 0.0
  %10974 = vadd.xlane.f32.xlu0 %v10973
  %v10975 = vpop.xlane.xlu0 %10974
  %v10976 = vsel %vm78, %v10900, 0.0
  %10977 = vadd.xlane.f32.xlu0 %v10976
  %v10978 = vpop.xlane.xlu0 %10977
  %v10979 = vsel %vm78, %v10901, 0.0
  %10980 = vadd.xlane.f32.xlu0 %v10979
  %v10981 = vpop.xlane.xlu0 %10980
  %v10982 = vsel %vm78, %v10902, 0.0
  %10983 = vadd.xlane.f32.xlu0 %v10982
  %v10984 = vpop.xlane.xlu0 %10983
  %v10985 = vsel %vm78, %v10903, 0.0
  %10986 = vadd.xlane.f32.xlu0 %v10985
  %v10987 = vpop.xlane.xlu0 %10986
  %v10988 = vsel %vm78, %v10904, 0.0
  %10989 = vadd.xlane.f32.xlu0 %v10988
  %v10990 = vpop.xlane.xlu0 %10989
  %v10991 = vsel %vm78, %v10905, 0.0
  %10992 = vadd.xlane.f32.xlu0 %v10991
  %v10993 = vpop.xlane.xlu0 %10992
  %v10994 = vsel %vm78, %v10906, 0.0
  %10995 = vadd.xlane.f32.xlu0 %v10994
  %v10996 = vpop.xlane.xlu0 %10995
  %v10997 = vsel %vm78, %v10907, 0.0
  %10998 = vadd.xlane.f32.xlu0 %v10997
  %v10999 = vpop.xlane.xlu0 %10998
  %v11000 = vsel %vm78, %v10908, 0.0
  %11001 = vadd.xlane.f32.xlu0 %v11000
  %v11002 = vpop.xlane.xlu0 %11001
  %v11003 = vsel %vm78, %v10909, 0.0
  %11004 = vadd.xlane.f32.xlu0 %v11003
  %v11005 = vpop.xlane.xlu0 %11004
  %v11006 = vsel %vm78, %v10910, 0.0
  %11007 = vadd.xlane.f32.xlu0 %v11006
  %v11008 = vpop.xlane.xlu0 %11007
  %v11009 = vmul.f32 %v10915, %v175
  %v11010 = vmul.f32 %v10918, %v175
  %v11011 = vmul.f32 %v10921, %v175
  %v11012 = vmul.f32 %v10924, %v175
  %v11013 = vmul.f32 %v10927, %v175
  %v11014 = vmul.f32 %v10930, %v175
  %v11015 = vmul.f32 %v10933, %v175
  %v11016 = vmul.f32 %v10936, %v175
  %v11017 = vmul.f32 %v10939, %v175
  %v11018 = vmul.f32 %v10942, %v175
  %v11019 = vmul.f32 %v10945, %v175
  %v11020 = vmul.f32 %v10948, %v175
  %v11021 = vmul.f32 %v10951, %v175
  %v11022 = vmul.f32 %v10954, %v175
  %v11023 = vmul.f32 %v10957, %v175
  %v11024 = vmul.f32 %v10960, %v175
  %v11025 = vmul.f32 %v10963, %v175
  %v11026 = vmul.f32 %v10966, %v175
  %v11027 = vmul.f32 %v10969, %v175
  %v11028 = vmul.f32 %v10972, %v175
  %v11029 = vmul.f32 %v10975, %v175
  %v11030 = vmul.f32 %v10978, %v175
  %v11031 = vmul.f32 %v10981, %v175
  %v11032 = vmul.f32 %v10984, %v175
  %v11033 = vmul.f32 %v10987, %v175
  %v11034 = vmul.f32 %v10990, %v175
  %v11035 = vmul.f32 %v10993, %v175
  %v11036 = vmul.f32 %v10996, %v175
  %v11037 = vmul.f32 %v10999, %v175
  %v11038 = vmul.f32 %v11002, %v175
  %v11039 = vmul.f32 %v11005, %v175
  %v11040 = vmul.f32 %v11008, %v175
  %v11041 = vsub.f32 %v10879, %v11009
  %v11042 = vsub.f32 %v10880, %v11010
  %v11043 = vsub.f32 %v10881, %v11011
  %v11044 = vsub.f32 %v10882, %v11012
  %v11045 = vsub.f32 %v10883, %v11013
  %v11046 = vsub.f32 %v10884, %v11014
  %v11047 = vsub.f32 %v10885, %v11015
  %v11048 = vsub.f32 %v10886, %v11016
  %v11049 = vsub.f32 %v10887, %v11017
  %v11050 = vsub.f32 %v10888, %v11018
  %v11051 = vsub.f32 %v10889, %v11019
  %v11052 = vsub.f32 %v10890, %v11020
  %v11053 = vsub.f32 %v10891, %v11021
  %v11054 = vsub.f32 %v10892, %v11022
  %v11055 = vsub.f32 %v10893, %v11023
  %v11056 = vsub.f32 %v10894, %v11024
  %v11057 = vsub.f32 %v10895, %v11025
  %v11058 = vsub.f32 %v10896, %v11026
  %v11059 = vsub.f32 %v10897, %v11027
  %v11060 = vsub.f32 %v10898, %v11028
  %v11061 = vsub.f32 %v10899, %v11029
  %v11062 = vsub.f32 %v10900, %v11030
  %v11063 = vsub.f32 %v10901, %v11031
  %v11064 = vsub.f32 %v10902, %v11032
  %v11065 = vsub.f32 %v10903, %v11033
  %v11066 = vsub.f32 %v10904, %v11034
  %v11067 = vsub.f32 %v10905, %v11035
  %v11068 = vsub.f32 %v10906, %v11036
  %v11069 = vsub.f32 %v10907, %v11037
  %v11070 = vsub.f32 %v10908, %v11038
  %v11071 = vsub.f32 %v10909, %v11039
  %v11072 = vsub.f32 %v10910, %v11040
  %v11073 = vmul.f32 %v11041, %v11041
  %v11074 = vmul.f32 %v11042, %v11042
  %v11075 = vmul.f32 %v11043, %v11043
  %v11076 = vmul.f32 %v11044, %v11044
  %v11077 = vmul.f32 %v11045, %v11045
  %v11078 = vmul.f32 %v11046, %v11046
  %v11079 = vmul.f32 %v11047, %v11047
  %v11080 = vmul.f32 %v11048, %v11048
  %v11081 = vmul.f32 %v11049, %v11049
  %v11082 = vmul.f32 %v11050, %v11050
  %v11083 = vmul.f32 %v11051, %v11051
  %v11084 = vmul.f32 %v11052, %v11052
  %v11085 = vmul.f32 %v11053, %v11053
  %v11086 = vmul.f32 %v11054, %v11054
  %v11087 = vmul.f32 %v11055, %v11055
  %v11088 = vmul.f32 %v11056, %v11056
  %v11089 = vmul.f32 %v11057, %v11057
  %v11090 = vmul.f32 %v11058, %v11058
  %v11091 = vmul.f32 %v11059, %v11059
  %v11092 = vmul.f32 %v11060, %v11060
  %v11093 = vmul.f32 %v11061, %v11061
  %v11094 = vmul.f32 %v11062, %v11062
  %v11095 = vmul.f32 %v11063, %v11063
  %v11096 = vmul.f32 %v11064, %v11064
  %v11097 = vmul.f32 %v11065, %v11065
  %v11098 = vmul.f32 %v11066, %v11066
  %v11099 = vmul.f32 %v11067, %v11067
  %v11100 = vmul.f32 %v11068, %v11068
  %v11101 = vmul.f32 %v11069, %v11069
  %v11102 = vmul.f32 %v11070, %v11070
  %v11103 = vmul.f32 %v11071, %v11071
  %v11104 = vmul.f32 %v11072, %v11072
  %v11105 = vsel %vm78, %v11073, 0.0
  %11106 = vadd.xlane.f32.xlu0 %v11105
  %v11107 = vpop.xlane.xlu0 %11106
  %v11108 = vsel %vm78, %v11074, 0.0
  %11109 = vadd.xlane.f32.xlu0 %v11108
  %v11110 = vpop.xlane.xlu0 %11109
  %v11111 = vsel %vm78, %v11075, 0.0
  %11112 = vadd.xlane.f32.xlu0 %v11111
  %v11113 = vpop.xlane.xlu0 %11112
  %v11114 = vsel %vm78, %v11076, 0.0
  %11115 = vadd.xlane.f32.xlu0 %v11114
  %v11116 = vpop.xlane.xlu0 %11115
  %v11117 = vsel %vm78, %v11077, 0.0
  %11118 = vadd.xlane.f32.xlu0 %v11117
  %v11119 = vpop.xlane.xlu0 %11118
  %v11120 = vsel %vm78, %v11078, 0.0
  %11121 = vadd.xlane.f32.xlu0 %v11120
  %v11122 = vpop.xlane.xlu0 %11121
  %v11123 = vsel %vm78, %v11079, 0.0
  %11124 = vadd.xlane.f32.xlu0 %v11123
  %v11125 = vpop.xlane.xlu0 %11124
  %v11126 = vsel %vm78, %v11080, 0.0
  %11127 = vadd.xlane.f32.xlu0 %v11126
  %v11128 = vpop.xlane.xlu0 %11127
  %v11129 = vsel %vm78, %v11081, 0.0
  %11130 = vadd.xlane.f32.xlu0 %v11129
  %v11131 = vpop.xlane.xlu0 %11130
  %v11132 = vsel %vm78, %v11082, 0.0
  %11133 = vadd.xlane.f32.xlu0 %v11132
  %v11134 = vpop.xlane.xlu0 %11133
  %v11135 = vsel %vm78, %v11083, 0.0
  %11136 = vadd.xlane.f32.xlu0 %v11135
  %v11137 = vpop.xlane.xlu0 %11136
  %v11138 = vsel %vm78, %v11084, 0.0
  %11139 = vadd.xlane.f32.xlu0 %v11138
  %v11140 = vpop.xlane.xlu0 %11139
  %v11141 = vsel %vm78, %v11085, 0.0
  %11142 = vadd.xlane.f32.xlu0 %v11141
  %v11143 = vpop.xlane.xlu0 %11142
  %v11144 = vsel %vm78, %v11086, 0.0
  %11145 = vadd.xlane.f32.xlu0 %v11144
  %v11146 = vpop.xlane.xlu0 %11145
  %v11147 = vsel %vm78, %v11087, 0.0
  %11148 = vadd.xlane.f32.xlu0 %v11147
  %v11149 = vpop.xlane.xlu0 %11148
  %v11150 = vsel %vm78, %v11088, 0.0
  %11151 = vadd.xlane.f32.xlu0 %v11150
  %v11152 = vpop.xlane.xlu0 %11151
  %v11153 = vsel %vm78, %v11089, 0.0
  %11154 = vadd.xlane.f32.xlu0 %v11153
  %v11155 = vpop.xlane.xlu0 %11154
  %v11156 = vsel %vm78, %v11090, 0.0
  %11157 = vadd.xlane.f32.xlu0 %v11156
  %v11158 = vpop.xlane.xlu0 %11157
  %v11159 = vsel %vm78, %v11091, 0.0
  %11160 = vadd.xlane.f32.xlu0 %v11159
  %v11161 = vpop.xlane.xlu0 %11160
  %v11162 = vsel %vm78, %v11092, 0.0
  %11163 = vadd.xlane.f32.xlu0 %v11162
  %v11164 = vpop.xlane.xlu0 %11163
  %v11165 = vsel %vm78, %v11093, 0.0
  %11166 = vadd.xlane.f32.xlu0 %v11165
  %v11167 = vpop.xlane.xlu0 %11166
  %v11168 = vsel %vm78, %v11094, 0.0
  %11169 = vadd.xlane.f32.xlu0 %v11168
  %v11170 = vpop.xlane.xlu0 %11169
  %v11171 = vsel %vm78, %v11095, 0.0
  %11172 = vadd.xlane.f32.xlu0 %v11171
  %v11173 = vpop.xlane.xlu0 %11172
  %v11174 = vsel %vm78, %v11096, 0.0
  %11175 = vadd.xlane.f32.xlu0 %v11174
  %v11176 = vpop.xlane.xlu0 %11175
  %v11177 = vsel %vm78, %v11097, 0.0
  %11178 = vadd.xlane.f32.xlu0 %v11177
  %v11179 = vpop.xlane.xlu0 %11178
  %v11180 = vsel %vm78, %v11098, 0.0
  %11181 = vadd.xlane.f32.xlu0 %v11180
  %v11182 = vpop.xlane.xlu0 %11181
  %v11183 = vsel %vm78, %v11099, 0.0
  %11184 = vadd.xlane.f32.xlu0 %v11183
  %v11185 = vpop.xlane.xlu0 %11184
  %v11186 = vsel %vm78, %v11100, 0.0
  %11187 = vadd.xlane.f32.xlu0 %v11186
  %v11188 = vpop.xlane.xlu0 %11187
  %v11189 = vsel %vm78, %v11101, 0.0
  %11190 = vadd.xlane.f32.xlu0 %v11189
  %v11191 = vpop.xlane.xlu0 %11190
  %v11192 = vsel %vm78, %v11102, 0.0
  %11193 = vadd.xlane.f32.xlu0 %v11192
  %v11194 = vpop.xlane.xlu0 %11193
  %v11195 = vsel %vm78, %v11103, 0.0
  %11196 = vadd.xlane.f32.xlu0 %v11195
  %v11197 = vpop.xlane.xlu0 %11196
  %v11198 = vsel %vm78, %v11104, 0.0
  %11199 = vadd.xlane.f32.xlu0 %v11198
  %v11200 = vpop.xlane.xlu0 %11199
  %v11201 = vmul.f32 %v11107, %v175
  %v11202 = vmul.f32 %v11110, %v175
  %v11203 = vmul.f32 %v11113, %v175
  %v11204 = vmul.f32 %v11116, %v175
  %v11205 = vmul.f32 %v11119, %v175
  %v11206 = vmul.f32 %v11122, %v175
  %v11207 = vmul.f32 %v11125, %v175
  %v11208 = vmul.f32 %v11128, %v175
  %v11209 = vmul.f32 %v11131, %v175
  %v11210 = vmul.f32 %v11134, %v175
  %v11211 = vmul.f32 %v11137, %v175
  %v11212 = vmul.f32 %v11140, %v175
  %v11213 = vmul.f32 %v11143, %v175
  %v11214 = vmul.f32 %v11146, %v175
  %v11215 = vmul.f32 %v11149, %v175
  %v11216 = vmul.f32 %v11152, %v175
  %v11217 = vmul.f32 %v11155, %v175
  %v11218 = vmul.f32 %v11158, %v175
  %v11219 = vmul.f32 %v11161, %v175
  %v11220 = vmul.f32 %v11164, %v175
  %v11221 = vmul.f32 %v11167, %v175
  %v11222 = vmul.f32 %v11170, %v175
  %v11223 = vmul.f32 %v11173, %v175
  %v11224 = vmul.f32 %v11176, %v175
  %v11225 = vmul.f32 %v11179, %v175
  %v11226 = vmul.f32 %v11182, %v175
  %v11227 = vmul.f32 %v11185, %v175
  %v11228 = vmul.f32 %v11188, %v175
  %v11229 = vmul.f32 %v11191, %v175
  %v11230 = vmul.f32 %v11194, %v175
  %v11231 = vmul.f32 %v11197, %v175
  %v11232 = vmul.f32 %v11200, %v175
  %v11233 = vadd.f32 %v11201, 1e-05
  %v11234 = vadd.f32 %v11202, 1e-05
  %v11235 = vadd.f32 %v11203, 1e-05
  %v11236 = vadd.f32 %v11204, 1e-05
  %v11237 = vadd.f32 %v11205, 1e-05
  %v11238 = vadd.f32 %v11206, 1e-05
  %v11239 = vadd.f32 %v11207, 1e-05
  %v11240 = vadd.f32 %v11208, 1e-05
  %v11241 = vadd.f32 %v11209, 1e-05
  %v11242 = vadd.f32 %v11210, 1e-05
  %v11243 = vadd.f32 %v11211, 1e-05
  %v11244 = vadd.f32 %v11212, 1e-05
  %v11245 = vadd.f32 %v11213, 1e-05
  %v11246 = vadd.f32 %v11214, 1e-05
  %v11247 = vadd.f32 %v11215, 1e-05
  %v11248 = vadd.f32 %v11216, 1e-05
  %v11249 = vadd.f32 %v11217, 1e-05
  %v11250 = vadd.f32 %v11218, 1e-05
  %v11251 = vadd.f32 %v11219, 1e-05
  %v11252 = vadd.f32 %v11220, 1e-05
  %v11253 = vadd.f32 %v11221, 1e-05
  %v11254 = vadd.f32 %v11222, 1e-05
  %v11255 = vadd.f32 %v11223, 1e-05
  %v11256 = vadd.f32 %v11224, 1e-05
  %v11257 = vadd.f32 %v11225, 1e-05
  %v11258 = vadd.f32 %v11226, 1e-05
  %v11259 = vadd.f32 %v11227, 1e-05
  %v11260 = vadd.f32 %v11228, 1e-05
  %v11261 = vadd.f32 %v11229, 1e-05
  %v11262 = vadd.f32 %v11230, 1e-05
  %v11263 = vadd.f32 %v11231, 1e-05
  %v11264 = vadd.f32 %v11232, 1e-05
  %v11265 = vrsqrt.pop %v11233
  %v11266 = vrsqrt.pop %v11234
  %v11267 = vrsqrt.pop %v11235
  %v11268 = vrsqrt.pop %v11236
  %v11269 = vrsqrt.pop %v11237
  %v11270 = vrsqrt.pop %v11238
  %v11271 = vrsqrt.pop %v11239
  %v11272 = vrsqrt.pop %v11240
  %v11273 = vrsqrt.pop %v11241
  %v11274 = vrsqrt.pop %v11242
  %v11275 = vrsqrt.pop %v11243
  %v11276 = vrsqrt.pop %v11244
  %v11277 = vrsqrt.pop %v11245
  %v11278 = vrsqrt.pop %v11246
  %v11279 = vrsqrt.pop %v11247
  %v11280 = vrsqrt.pop %v11248
  %v11281 = vrsqrt.pop %v11249
  %v11282 = vrsqrt.pop %v11250
  %v11283 = vrsqrt.pop %v11251
  %v11284 = vrsqrt.pop %v11252
  %v11285 = vrsqrt.pop %v11253
  %v11286 = vrsqrt.pop %v11254
  %v11287 = vrsqrt.pop %v11255
  %v11288 = vrsqrt.pop %v11256
  %v11289 = vrsqrt.pop %v11257
  %v11290 = vrsqrt.pop %v11258
  %v11291 = vrsqrt.pop %v11259
  %v11292 = vrsqrt.pop %v11260
  %v11293 = vrsqrt.pop %v11261
  %v11294 = vrsqrt.pop %v11262
  %v11295 = vrsqrt.pop %v11263
  %v11296 = vrsqrt.pop %v11264
  %v11297 = vmul.f32 %v11041, %v11265
  %v11298 = vmul.f32 %v11042, %v11266
  %v11299 = vmul.f32 %v11043, %v11267
  %v11300 = vmul.f32 %v11044, %v11268
  %v11301 = vmul.f32 %v11045, %v11269
  %v11302 = vmul.f32 %v11046, %v11270
  %v11303 = vmul.f32 %v11047, %v11271
  %v11304 = vmul.f32 %v11048, %v11272
  %v11305 = vmul.f32 %v11049, %v11273
  %v11306 = vmul.f32 %v11050, %v11274
  %v11307 = vmul.f32 %v11051, %v11275
  %v11308 = vmul.f32 %v11052, %v11276
  %v11309 = vmul.f32 %v11053, %v11277
  %v11310 = vmul.f32 %v11054, %v11278
  %v11311 = vmul.f32 %v11055, %v11279
  %v11312 = vmul.f32 %v11056, %v11280
  %v11313 = vmul.f32 %v11057, %v11281
  %v11314 = vmul.f32 %v11058, %v11282
  %v11315 = vmul.f32 %v11059, %v11283
  %v11316 = vmul.f32 %v11060, %v11284
  %v11317 = vmul.f32 %v11061, %v11285
  %v11318 = vmul.f32 %v11062, %v11286
  %v11319 = vmul.f32 %v11063, %v11287
  %v11320 = vmul.f32 %v11064, %v11288
  %v11321 = vmul.f32 %v11065, %v11289
  %v11322 = vmul.f32 %v11066, %v11290
  %v11323 = vmul.f32 %v11067, %v11291
  %v11324 = vmul.f32 %v11068, %v11292
  %v11325 = vmul.f32 %v11069, %v11293
  %v11326 = vmul.f32 %v11070, %v11294
  %v11327 = vmul.f32 %v11071, %v11295
  %v11328 = vmul.f32 %v11072, %v11296
  %v11330 = vlaneseq
  %v11331 = vshrl.u32 %v11330, 7
  %v11332 = vsub.s32 0, %v11331
  %v11333 = vrot.slane %v10911, %v11332
  %v11335 = vmul.f32 %v11297, %v11333
  %v11336 = vmul.f32 %v11298, %v11333
  %v11337 = vmul.f32 %v11299, %v11333
  %v11338 = vmul.f32 %v11300, %v11333
  %v11339 = vmul.f32 %v11301, %v11333
  %v11340 = vmul.f32 %v11302, %v11333
  %v11341 = vmul.f32 %v11303, %v11333
  %v11342 = vmul.f32 %v11304, %v11333
  %v11343 = vmul.f32 %v11305, %v11333
  %v11344 = vmul.f32 %v11306, %v11333
  %v11345 = vmul.f32 %v11307, %v11333
  %v11346 = vmul.f32 %v11308, %v11333
  %v11347 = vmul.f32 %v11309, %v11333
  %v11348 = vmul.f32 %v11310, %v11333
  %v11349 = vmul.f32 %v11311, %v11333
  %v11350 = vmul.f32 %v11312, %v11333
  %v11351 = vmul.f32 %v11313, %v11333
  %v11352 = vmul.f32 %v11314, %v11333
  %v11353 = vmul.f32 %v11315, %v11333
  %v11354 = vmul.f32 %v11316, %v11333
  %v11355 = vmul.f32 %v11317, %v11333
  %v11356 = vmul.f32 %v11318, %v11333
  %v11357 = vmul.f32 %v11319, %v11333
  %v11358 = vmul.f32 %v11320, %v11333
  %v11359 = vmul.f32 %v11321, %v11333
  %v11360 = vmul.f32 %v11322, %v11333
  %v11361 = vmul.f32 %v11323, %v11333
  %v11362 = vmul.f32 %v11324, %v11333
  %v11363 = vmul.f32 %v11325, %v11333
  %v11364 = vmul.f32 %v11326, %v11333
  %v11365 = vmul.f32 %v11327, %v11333
  %v11366 = vmul.f32 %v11328, %v11333
  %v11368 = vlaneseq
  %v11369 = vshrl.u32 %v11368, 7
  %v11370 = vsub.s32 0, %v11369
  %v11371 = vrot.slane %v10912, %v11370
  %v11373 = vadd.f32 %v11335, %v11371
  %v11374 = vadd.f32 %v11336, %v11371
  %v11375 = vadd.f32 %v11337, %v11371
  %v11376 = vadd.f32 %v11338, %v11371
  %v11377 = vadd.f32 %v11339, %v11371
  %v11378 = vadd.f32 %v11340, %v11371
  %v11379 = vadd.f32 %v11341, %v11371
  %v11380 = vadd.f32 %v11342, %v11371
  %v11381 = vadd.f32 %v11343, %v11371
  %v11382 = vadd.f32 %v11344, %v11371
  %v11383 = vadd.f32 %v11345, %v11371
  %v11384 = vadd.f32 %v11346, %v11371
  %v11385 = vadd.f32 %v11347, %v11371
  %v11386 = vadd.f32 %v11348, %v11371
  %v11387 = vadd.f32 %v11349, %v11371
  %v11388 = vadd.f32 %v11350, %v11371
  %v11389 = vadd.f32 %v11351, %v11371
  %v11390 = vadd.f32 %v11352, %v11371
  %v11391 = vadd.f32 %v11353, %v11371
  %v11392 = vadd.f32 %v11354, %v11371
  %v11393 = vadd.f32 %v11355, %v11371
  %v11394 = vadd.f32 %v11356, %v11371
  %v11395 = vadd.f32 %v11357, %v11371
  %v11396 = vadd.f32 %v11358, %v11371
  %v11397 = vadd.f32 %v11359, %v11371
  %v11398 = vadd.f32 %v11360, %v11371
  %v11399 = vadd.f32 %v11361, %v11371
  %v11400 = vadd.f32 %v11362, %v11371
  %v11401 = vadd.f32 %v11363, %v11371
  %v11402 = vadd.f32 %v11364, %v11371
  %v11403 = vadd.f32 %v11365, %v11371
  %v11404 = vadd.f32 %v11366, %v11371
  %v11405 = vld [vmem:[%s9] sm:$0xff]
  %v11406 = vld [vmem:[%s9 + $0x8] sm:$0xff]
  %v11407 = vld [vmem:[%s9 + $0x10] sm:$0xff]
  %v11408 = vld [vmem:[%s9 + $0x18] sm:$0xff]
  %v11409 = vld [vmem:[%s9 + $0x20] sm:$0xff]
  %v11410 = vld [vmem:[%s9 + $0x28] sm:$0xff]
  %v11411 = vld [vmem:[%s9 + $0x30] sm:$0xff]
  %v11412 = vld [vmem:[%s9 + $0x38] sm:$0xff]
  %v11413 = vld [vmem:[%s9 + $0x40] sm:$0xff]
  %v11414 = vld [vmem:[%s9 + $0x48] sm:$0xff]
  %v11415 = vld [vmem:[%s9 + $0x50] sm:$0xff]
  %v11416 = vld [vmem:[%s9 + $0x58] sm:$0xff]
  %v11417 = vld [vmem:[%s9 + $0x60] sm:$0xff]
  %v11418 = vld [vmem:[%s9 + $0x68] sm:$0xff]
  %v11419 = vld [vmem:[%s9 + $0x70] sm:$0xff]
  %v11420 = vld [vmem:[%s9 + $0x78] sm:$0xff]
  %v11421 = vld [vmem:[%s10] sm:$0x3]
  %v11423 = vlaneseq
  %v11424 = vshrl.u32 %v11423, 7
  %v11425 = vsub.s32 0, %v11424
  %v11426 = vrot.slane %v11421, %v11425
  %v11427 = vlaneseq
  %v11428 = vshrl.u32 %v11427, 7
  %v11429 = vsub.s32 1, %v11428
  %v11430 = vrot.slane %v11421, %v11429
  %v11434 = vsel %vm78, %v11373, 0
  %v11437 = vsel %vm78, %v11374, 0
  %v11440 = vsel %vm78, %v11375, 0
  %v11443 = vsel %vm78, %v11376, 0
  %v11446 = vsel %vm78, %v11377, 0
  %v11449 = vsel %vm78, %v11378, 0
  %v11452 = vsel %vm78, %v11379, 0
  %v11455 = vsel %vm78, %v11380, 0
  %v11458 = vsel %vm78, %v11381, 0
  %v11461 = vsel %vm78, %v11382, 0
  %v11464 = vsel %vm78, %v11383, 0
  %v11467 = vsel %vm78, %v11384, 0
  %v11470 = vsel %vm78, %v11385, 0
  %v11473 = vsel %vm78, %v11386, 0
  %v11476 = vsel %vm78, %v11387, 0
  %v11479 = vsel %vm78, %v11388, 0
  %v11482 = vsel %vm78, %v11389, 0
  %v11485 = vsel %vm78, %v11390, 0
  %v11488 = vsel %vm78, %v11391, 0
  %v11491 = vsel %vm78, %v11392, 0
  %v11494 = vsel %vm78, %v11393, 0
  %v11497 = vsel %vm78, %v11394, 0
  %v11500 = vsel %vm78, %v11395, 0
  %v11503 = vsel %vm78, %v11396, 0
  %v11506 = vsel %vm78, %v11397, 0
  %v11509 = vsel %vm78, %v11398, 0
  %v11512 = vsel %vm78, %v11399, 0
  %v11515 = vsel %vm78, %v11400, 0
  %v11518 = vsel %vm78, %v11401, 0
  %v11521 = vsel %vm78, %v11402, 0
  %v11524 = vsel %vm78, %v11403, 0
  %v11527 = vsel %vm78, %v11404, 0
  %11529 = vmatprep.subr.mxu0 0.0
  %11530 = vmatpush1.msra.mxu0 0.0
  %11531 = vmatprep.subr.mxu0 0.0
  %11532 = vmatpush1.msra.mxu0 0.0
  %11533 = vmatprep.subr.mxu0 0.0
  %11534 = vmatpush1.msra.mxu0 0.0
  %11535 = vmatprep.subr.mxu0 0.0
  %11536 = vmatpush1.msra.mxu0 0.0
  %11537 = vmatprep.subr.mxu0 0.0
  %11538 = vmatpush1.msra.mxu0 0.0
  %11539 = vmatprep.subr.mxu0 0.0
  %11540 = vmatpush1.msra.mxu0 0.0
  %11541 = vmatprep.subr.mxu0 0.0
  %11542 = vmatpush1.msra.mxu0 0.0
  %11543 = vmatprep.subr.mxu0 0.0
  %11544 = vmatpush1.msra.mxu0 0.0
  %11545 = vmatprep.subr.mxu0 %v11420
  %11546 = vmatpush1.msra.mxu0 %v11419
  %11547 = vmatprep.subr.mxu0 %v11418
  %11548 = vmatpush1.msra.mxu0 %v11417
  %11549 = vmatprep.subr.mxu0 %v11416
  %11550 = vmatpush1.msra.mxu0 %v11415
  %11551 = vmatprep.subr.mxu0 %v11414
  %11552 = vmatpush1.msra.mxu0 %v11413
  %11553 = vmatprep.subr.mxu0 %v11412
  %11554 = vmatpush1.msra.mxu0 %v11411
  %11555 = vmatprep.subr.mxu0 %v11410
  %11556 = vmatpush1.msra.mxu0 %v11409
  %11557 = vmatprep.subr.mxu0 %v11408
  %11558 = vmatpush1.msra.mxu0 %v11407
  %11559 = vmatprep.subr.mxu0 %v11406
  %11560 = vmatpush1.msra.mxu0 %v11405
  %11561 = vmatprep.subr.mxu0 0.0
  %11562 = vmatpush2.msra.mxu0 0.0
  %11563 = vmatprep.subr.mxu0 0.0
  %11564 = vmatpush2.msra.mxu0 0.0
  %11565 = vmatprep.subr.mxu0 0.0
  %11566 = vmatpush2.msra.mxu0 0.0
  %11567 = vmatprep.subr.mxu0 0.0
  %11568 = vmatpush2.msra.mxu0 0.0
  %11569 = vmatprep.subr.mxu0 0.0
  %11570 = vmatpush2.msra.mxu0 0.0
  %11571 = vmatprep.subr.mxu0 0.0
  %11572 = vmatpush2.msra.mxu0 0.0
  %11573 = vmatprep.subr.mxu0 0.0
  %11574 = vmatpush2.msra.mxu0 0.0
  %11575 = vmatprep.subr.mxu0 0.0
  %11576 = vmatpush2.msra.mxu0 0.0
  %11577 = vmatprep.subr.mxu0 0.0
  %11578 = vmatpush2.msra.mxu0 0.0
  %11579 = vmatprep.subr.mxu0 0.0
  %11580 = vmatpush2.msra.mxu0 0.0
  %11581 = vmatprep.subr.mxu0 0.0
  %11582 = vmatpush2.msra.mxu0 0.0
  %11583 = vmatprep.subr.mxu0 0.0
  %11584 = vmatpush2.msra.mxu0 0.0
  %11585 = vmatprep.subr.mxu0 0.0
  %11586 = vmatpush2.msra.mxu0 0.0
  %11587 = vmatprep.subr.mxu0 0.0
  %11588 = vmatpush2.msra.mxu0 0.0
  %11589 = vmatprep.subr.mxu0 0.0
  %11590 = vmatpush2.msra.mxu0 0.0
  %11591 = vmatprep.subr.mxu0 0.0
  %11592 = vmatpush2.msra.mxu0 0.0
  %11593 = vmatprep.mubr.f32.mxu0 0.0
  %11594 = vmatmul.mubr.f32.gmra.mxu0 %v11434
  %v11595 = vpop.f32.mrf.mxu0
  %v11596 = vadd.f32 %v11426, %v11595
  %v11597 = vpop.f32.mrf.mxu0
  %v11598 = vadd.f32 %v11430, %v11597
  %11599 = vmatprep.mubr.f32.mxu0 0.0
  %11600 = vmatmul.mubr.f32.gmra.mxu0 %v11437
  %v11601 = vpop.f32.mrf.mxu0
  %v11602 = vadd.f32 %v11426, %v11601
  %v11603 = vpop.f32.mrf.mxu0
  %v11604 = vadd.f32 %v11430, %v11603
  %11605 = vmatprep.mubr.f32.mxu0 0.0
  %11606 = vmatmul.mubr.f32.gmra.mxu0 %v11440
  %v11607 = vpop.f32.mrf.mxu0
  %v11608 = vadd.f32 %v11426, %v11607
  %v11609 = vpop.f32.mrf.mxu0
  %v11610 = vadd.f32 %v11430, %v11609
  %11611 = vmatprep.mubr.f32.mxu0 0.0
  %11612 = vmatmul.mubr.f32.gmra.mxu0 %v11443
  %v11613 = vpop.f32.mrf.mxu0
  %v11614 = vadd.f32 %v11426, %v11613
  %v11615 = vpop.f32.mrf.mxu0
  %v11616 = vadd.f32 %v11430, %v11615
  %11617 = vmatprep.mubr.f32.mxu0 0.0
  %11618 = vmatmul.mubr.f32.gmra.mxu0 %v11446
  %v11619 = vpop.f32.mrf.mxu0
  %v11620 = vadd.f32 %v11426, %v11619
  %v11621 = vpop.f32.mrf.mxu0
  %v11622 = vadd.f32 %v11430, %v11621
  %11623 = vmatprep.mubr.f32.mxu0 0.0
  %11624 = vmatmul.mubr.f32.gmra.mxu0 %v11449
  %v11625 = vpop.f32.mrf.mxu0
  %v11626 = vadd.f32 %v11426, %v11625
  %v11627 = vpop.f32.mrf.mxu0
  %v11628 = vadd.f32 %v11430, %v11627
  %11629 = vmatprep.mubr.f32.mxu0 0.0
  %11630 = vmatmul.mubr.f32.gmra.mxu0 %v11452
  %v11631 = vpop.f32.mrf.mxu0
  %v11632 = vadd.f32 %v11426, %v11631
  %v11633 = vpop.f32.mrf.mxu0
  %v11634 = vadd.f32 %v11430, %v11633
  %11635 = vmatprep.mubr.f32.mxu0 0.0
  %11636 = vmatmul.mubr.f32.gmra.mxu0 %v11455
  %v11637 = vpop.f32.mrf.mxu0
  %v11638 = vadd.f32 %v11426, %v11637
  %v11639 = vpop.f32.mrf.mxu0
  %v11640 = vadd.f32 %v11430, %v11639
  %11641 = vmatprep.mubr.f32.mxu0 0.0
  %11642 = vmatmul.mubr.f32.gmra.mxu0 %v11458
  %v11643 = vpop.f32.mrf.mxu0
  %v11644 = vadd.f32 %v11426, %v11643
  %v11645 = vpop.f32.mrf.mxu0
  %v11646 = vadd.f32 %v11430, %v11645
  %11647 = vmatprep.mubr.f32.mxu0 0.0
  %11648 = vmatmul.mubr.f32.gmra.mxu0 %v11461
  %v11649 = vpop.f32.mrf.mxu0
  %v11650 = vadd.f32 %v11426, %v11649
  %v11651 = vpop.f32.mrf.mxu0
  %v11652 = vadd.f32 %v11430, %v11651
  %11653 = vmatprep.mubr.f32.mxu0 0.0
  %11654 = vmatmul.mubr.f32.gmra.mxu0 %v11464
  %v11655 = vpop.f32.mrf.mxu0
  %v11656 = vadd.f32 %v11426, %v11655
  %v11657 = vpop.f32.mrf.mxu0
  %v11658 = vadd.f32 %v11430, %v11657
  %11659 = vmatprep.mubr.f32.mxu0 0.0
  %11660 = vmatmul.mubr.f32.gmra.mxu0 %v11467
  %v11661 = vpop.f32.mrf.mxu0
  %v11662 = vadd.f32 %v11426, %v11661
  %v11663 = vpop.f32.mrf.mxu0
  %v11664 = vadd.f32 %v11430, %v11663
  %11665 = vmatprep.mubr.f32.mxu0 0.0
  %11666 = vmatmul.mubr.f32.gmra.mxu0 %v11470
  %v11667 = vpop.f32.mrf.mxu0
  %v11668 = vadd.f32 %v11426, %v11667
  %v11669 = vpop.f32.mrf.mxu0
  %v11670 = vadd.f32 %v11430, %v11669
  %11671 = vmatprep.mubr.f32.mxu0 0.0
  %11672 = vmatmul.mubr.f32.gmra.mxu0 %v11473
  %v11673 = vpop.f32.mrf.mxu0
  %v11674 = vadd.f32 %v11426, %v11673
  %v11675 = vpop.f32.mrf.mxu0
  %v11676 = vadd.f32 %v11430, %v11675
  %11677 = vmatprep.mubr.f32.mxu0 0.0
  %11678 = vmatmul.mubr.f32.gmra.mxu0 %v11476
  %v11679 = vpop.f32.mrf.mxu0
  %v11680 = vadd.f32 %v11426, %v11679
  %v11681 = vpop.f32.mrf.mxu0
  %v11682 = vadd.f32 %v11430, %v11681
  %11683 = vmatprep.mubr.f32.mxu0 0.0
  %11684 = vmatmul.mubr.f32.gmra.mxu0 %v11479
  %v11685 = vpop.f32.mrf.mxu0
  %v11686 = vadd.f32 %v11426, %v11685
  %v11687 = vpop.f32.mrf.mxu0
  %v11688 = vadd.f32 %v11430, %v11687
  %11689 = vmatprep.mubr.f32.mxu0 0.0
  %11690 = vmatmul.mubr.f32.gmra.mxu0 %v11482
  %v11691 = vpop.f32.mrf.mxu0
  %v11692 = vadd.f32 %v11426, %v11691
  %v11693 = vpop.f32.mrf.mxu0
  %v11694 = vadd.f32 %v11430, %v11693
  %11695 = vmatprep.mubr.f32.mxu0 0.0
  %11696 = vmatmul.mubr.f32.gmra.mxu0 %v11485
  %v11697 = vpop.f32.mrf.mxu0
  %v11698 = vadd.f32 %v11426, %v11697
  %v11699 = vpop.f32.mrf.mxu0
  %v11700 = vadd.f32 %v11430, %v11699
  %11701 = vmatprep.mubr.f32.mxu0 0.0
  %11702 = vmatmul.mubr.f32.gmra.mxu0 %v11488
  %v11703 = vpop.f32.mrf.mxu0
  %v11704 = vadd.f32 %v11426, %v11703
  %v11705 = vpop.f32.mrf.mxu0
  %v11706 = vadd.f32 %v11430, %v11705
  %11707 = vmatprep.mubr.f32.mxu0 0.0
  %11708 = vmatmul.mubr.f32.gmra.mxu0 %v11491
  %v11709 = vpop.f32.mrf.mxu0
  %v11710 = vadd.f32 %v11426, %v11709
  %v11711 = vpop.f32.mrf.mxu0
  %v11712 = vadd.f32 %v11430, %v11711
  %11713 = vmatprep.mubr.f32.mxu0 0.0
  %11714 = vmatmul.mubr.f32.gmra.mxu0 %v11494
  %v11715 = vpop.f32.mrf.mxu0
  %v11716 = vadd.f32 %v11426, %v11715
  %v11717 = vpop.f32.mrf.mxu0
  %v11718 = vadd.f32 %v11430, %v11717
  %11719 = vmatprep.mubr.f32.mxu0 0.0
  %11720 = vmatmul.mubr.f32.gmra.mxu0 %v11497
  %v11721 = vpop.f32.mrf.mxu0
  %v11722 = vadd.f32 %v11426, %v11721
  %v11723 = vpop.f32.mrf.mxu0
  %v11724 = vadd.f32 %v11430, %v11723
  %11725 = vmatprep.mubr.f32.mxu0 0.0
  %11726 = vmatmul.mubr.f32.gmra.mxu0 %v11500
  %v11727 = vpop.f32.mrf.mxu0
  %v11728 = vadd.f32 %v11426, %v11727
  %v11729 = vpop.f32.mrf.mxu0
  %v11730 = vadd.f32 %v11430, %v11729
  %11731 = vmatprep.mubr.f32.mxu0 0.0
  %11732 = vmatmul.mubr.f32.gmra.mxu0 %v11503
  %v11733 = vpop.f32.mrf.mxu0
  %v11734 = vadd.f32 %v11426, %v11733
  %v11735 = vpop.f32.mrf.mxu0
  %v11736 = vadd.f32 %v11430, %v11735
  %11737 = vmatprep.mubr.f32.mxu0 0.0
  %11738 = vmatmul.mubr.f32.gmra.mxu0 %v11506
  %v11739 = vpop.f32.mrf.mxu0
  %v11740 = vadd.f32 %v11426, %v11739
  %v11741 = vpop.f32.mrf.mxu0
  %v11742 = vadd.f32 %v11430, %v11741
  %11743 = vmatprep.mubr.f32.mxu0 0.0
  %11744 = vmatmul.mubr.f32.gmra.mxu0 %v11509
  %v11745 = vpop.f32.mrf.mxu0
  %v11746 = vadd.f32 %v11426, %v11745
  %v11747 = vpop.f32.mrf.mxu0
  %v11748 = vadd.f32 %v11430, %v11747
  %11749 = vmatprep.mubr.f32.mxu0 0.0
  %11750 = vmatmul.mubr.f32.gmra.mxu0 %v11512
  %v11751 = vpop.f32.mrf.mxu0
  %v11752 = vadd.f32 %v11426, %v11751
  %v11753 = vpop.f32.mrf.mxu0
  %v11754 = vadd.f32 %v11430, %v11753
  %11755 = vmatprep.mubr.f32.mxu0 0.0
  %11756 = vmatmul.mubr.f32.gmra.mxu0 %v11515
  %v11757 = vpop.f32.mrf.mxu0
  %v11758 = vadd.f32 %v11426, %v11757
  %v11759 = vpop.f32.mrf.mxu0
  %v11760 = vadd.f32 %v11430, %v11759
  %11761 = vmatprep.mubr.f32.mxu0 0.0
  %11762 = vmatmul.mubr.f32.gmra.mxu0 %v11518
  %v11763 = vpop.f32.mrf.mxu0
  %v11764 = vadd.f32 %v11426, %v11763
  %v11765 = vpop.f32.mrf.mxu0
  %v11766 = vadd.f32 %v11430, %v11765
  %11767 = vmatprep.mubr.f32.mxu0 0.0
  %11768 = vmatmul.mubr.f32.gmra.mxu0 %v11521
  %v11769 = vpop.f32.mrf.mxu0
  %v11770 = vadd.f32 %v11426, %v11769
  %v11771 = vpop.f32.mrf.mxu0
  %v11772 = vadd.f32 %v11430, %v11771
  %11773 = vmatprep.mubr.f32.mxu0 0.0
  %11774 = vmatmul.mubr.f32.gmra.mxu0 %v11524
  %v11775 = vpop.f32.mrf.mxu0
  %v11776 = vadd.f32 %v11426, %v11775
  %v11777 = vpop.f32.mrf.mxu0
  %v11778 = vadd.f32 %v11430, %v11777
  %11779 = vmatprep.mubr.f32.mxu0 0.0
  %11780 = vmatmul.mubr.f32.gmra.mxu0 %v11527
  %v11781 = vpop.f32.mrf.mxu0
  %v11782 = vadd.f32 %v11426, %v11781
  %v11783 = vpop.f32.mrf.mxu0
  %v11784 = vadd.f32 %v11430, %v11783
  %11785 = vdwg.mxu0
  %v11786 = vmax.f32 %v11596, 0.0
  %v11787 = vmax.f32 %v11598, 0.0
  %v11788 = vmax.f32 %v11602, 0.0
  %v11789 = vmax.f32 %v11604, 0.0
  %v11790 = vmax.f32 %v11608, 0.0
  %v11791 = vmax.f32 %v11610, 0.0
  %v11792 = vmax.f32 %v11614, 0.0
  %v11793 = vmax.f32 %v11616, 0.0
  %v11794 = vmax.f32 %v11620, 0.0
  %v11795 = vmax.f32 %v11622, 0.0
  %v11796 = vmax.f32 %v11626, 0.0
  %v11797 = vmax.f32 %v11628, 0.0
  %v11798 = vmax.f32 %v11632, 0.0
  %v11799 = vmax.f32 %v11634, 0.0
  %v11800 = vmax.f32 %v11638, 0.0
  %v11801 = vmax.f32 %v11640, 0.0
  %v11802 = vmax.f32 %v11644, 0.0
  %v11803 = vmax.f32 %v11646, 0.0
  %v11804 = vmax.f32 %v11650, 0.0
  %v11805 = vmax.f32 %v11652, 0.0
  %v11806 = vmax.f32 %v11656, 0.0
  %v11807 = vmax.f32 %v11658, 0.0
  %v11808 = vmax.f32 %v11662, 0.0
  %v11809 = vmax.f32 %v11664, 0.0
  %v11810 = vmax.f32 %v11668, 0.0
  %v11811 = vmax.f32 %v11670, 0.0
  %v11812 = vmax.f32 %v11674, 0.0
  %v11813 = vmax.f32 %v11676, 0.0
  %v11814 = vmax.f32 %v11680, 0.0
  %v11815 = vmax.f32 %v11682, 0.0
  %v11816 = vmax.f32 %v11686, 0.0
  %v11817 = vmax.f32 %v11688, 0.0
  %v11818 = vmax.f32 %v11692, 0.0
  %v11819 = vmax.f32 %v11694, 0.0
  %v11820 = vmax.f32 %v11698, 0.0
  %v11821 = vmax.f32 %v11700, 0.0
  %v11822 = vmax.f32 %v11704, 0.0
  %v11823 = vmax.f32 %v11706, 0.0
  %v11824 = vmax.f32 %v11710, 0.0
  %v11825 = vmax.f32 %v11712, 0.0
  %v11826 = vmax.f32 %v11716, 0.0
  %v11827 = vmax.f32 %v11718, 0.0
  %v11828 = vmax.f32 %v11722, 0.0
  %v11829 = vmax.f32 %v11724, 0.0
  %v11830 = vmax.f32 %v11728, 0.0
  %v11831 = vmax.f32 %v11730, 0.0
  %v11832 = vmax.f32 %v11734, 0.0
  %v11833 = vmax.f32 %v11736, 0.0
  %v11834 = vmax.f32 %v11740, 0.0
  %v11835 = vmax.f32 %v11742, 0.0
  %v11836 = vmax.f32 %v11746, 0.0
  %v11837 = vmax.f32 %v11748, 0.0
  %v11838 = vmax.f32 %v11752, 0.0
  %v11839 = vmax.f32 %v11754, 0.0
  %v11840 = vmax.f32 %v11758, 0.0
  %v11841 = vmax.f32 %v11760, 0.0
  %v11842 = vmax.f32 %v11764, 0.0
  %v11843 = vmax.f32 %v11766, 0.0
  %v11844 = vmax.f32 %v11770, 0.0
  %v11845 = vmax.f32 %v11772, 0.0
  %v11846 = vmax.f32 %v11776, 0.0
  %v11847 = vmax.f32 %v11778, 0.0
  %v11848 = vmax.f32 %v11782, 0.0
  %v11849 = vmax.f32 %v11784, 0.0
  %v11850 = vld [vmem:[%s11] sm:$0xff]
  %v11851 = vld [vmem:[%s11 + $0x8] sm:$0xff]
  %v11852 = vld [vmem:[%s11 + $0x10] sm:$0xff]
  %v11853 = vld [vmem:[%s11 + $0x18] sm:$0xff]
  %v11854 = vld [vmem:[%s11 + $0x20] sm:$0xff]
  %v11855 = vld [vmem:[%s11 + $0x28] sm:$0xff]
  %v11856 = vld [vmem:[%s11 + $0x30] sm:$0xff]
  %v11857 = vld [vmem:[%s11 + $0x38] sm:$0xff]
  %v11858 = vld [vmem:[%s11 + $0x40] sm:$0xff]
  %v11859 = vld [vmem:[%s11 + $0x48] sm:$0xff]
  %v11860 = vld [vmem:[%s11 + $0x50] sm:$0xff]
  %v11861 = vld [vmem:[%s11 + $0x58] sm:$0xff]
  %v11862 = vld [vmem:[%s11 + $0x60] sm:$0xff]
  %v11863 = vld [vmem:[%s11 + $0x68] sm:$0xff]
  %v11864 = vld [vmem:[%s11 + $0x70] sm:$0xff]
  %v11865 = vld [vmem:[%s11 + $0x78] sm:$0xff]
  %v11866 = vld [vmem:[%s11 + $0x80] sm:$0xff]
  %v11867 = vld [vmem:[%s11 + $0x88] sm:$0xff]
  %v11868 = vld [vmem:[%s11 + $0x90] sm:$0xff]
  %v11869 = vld [vmem:[%s11 + $0x98] sm:$0xff]
  %v11870 = vld [vmem:[%s11 + $0xa0] sm:$0xff]
  %v11871 = vld [vmem:[%s11 + $0xa8] sm:$0xff]
  %v11872 = vld [vmem:[%s11 + $0xb0] sm:$0xff]
  %v11873 = vld [vmem:[%s11 + $0xb8] sm:$0xff]
  %v11874 = vld [vmem:[%s11 + $0xc0] sm:$0xff]
  %v11875 = vld [vmem:[%s11 + $0xc8] sm:$0xff]
  %v11876 = vld [vmem:[%s11 + $0xd0] sm:$0xff]
  %v11877 = vld [vmem:[%s11 + $0xd8] sm:$0xff]
  %v11878 = vld [vmem:[%s11 + $0xe0] sm:$0xff]
  %v11879 = vld [vmem:[%s11 + $0xe8] sm:$0xff]
  %v11880 = vld [vmem:[%s11 + $0xf0] sm:$0xff]
  %v11881 = vld [vmem:[%s11 + $0xf8] sm:$0xff]
  %v11882 = vld [vmem:[%s12] sm:$0x1]
  %v11884 = vlaneseq
  %v11885 = vshrl.u32 %v11884, 7
  %v11886 = vsub.s32 0, %v11885
  %v11887 = vrot.slane %v11882, %v11886
  %11889 = vmatprep.subr.mxu0 0.0
  %11890 = vmatpush1.msra.mxu0 %v11865
  %11891 = vmatprep.subr.mxu0 0.0
  %11892 = vmatpush1.msra.mxu0 %v11864
  %11893 = vmatprep.subr.mxu0 0.0
  %11894 = vmatpush1.msra.mxu0 %v11863
  %11895 = vmatprep.subr.mxu0 0.0
  %11896 = vmatpush1.msra.mxu0 %v11862
  %11897 = vmatprep.subr.mxu0 0.0
  %11898 = vmatpush1.msra.mxu0 %v11861
  %11899 = vmatprep.subr.mxu0 0.0
  %11900 = vmatpush1.msra.mxu0 %v11860
  %11901 = vmatprep.subr.mxu0 0.0
  %11902 = vmatpush1.msra.mxu0 %v11859
  %11903 = vmatprep.subr.mxu0 0.0
  %11904 = vmatpush1.msra.mxu0 %v11858
  %11905 = vmatprep.subr.mxu0 0.0
  %11906 = vmatpush1.msra.mxu0 %v11857
  %11907 = vmatprep.subr.mxu0 0.0
  %11908 = vmatpush1.msra.mxu0 %v11856
  %11909 = vmatprep.subr.mxu0 0.0
  %11910 = vmatpush1.msra.mxu0 %v11855
  %11911 = vmatprep.subr.mxu0 0.0
  %11912 = vmatpush1.msra.mxu0 %v11854
  %11913 = vmatprep.subr.mxu0 0.0
  %11914 = vmatpush1.msra.mxu0 %v11853
  %11915 = vmatprep.subr.mxu0 0.0
  %11916 = vmatpush1.msra.mxu0 %v11852
  %11917 = vmatprep.subr.mxu0 0.0
  %11918 = vmatpush1.msra.mxu0 %v11851
  %11919 = vmatprep.subr.mxu0 0.0
  %11920 = vmatpush1.msra.mxu0 %v11850
  %11921 = vmatprep.subr.mxu0 0.0
  %11922 = vmatpush2.msra.mxu0 %v11881
  %11923 = vmatprep.subr.mxu0 0.0
  %11924 = vmatpush2.msra.mxu0 %v11880
  %11925 = vmatprep.subr.mxu0 0.0
  %11926 = vmatpush2.msra.mxu0 %v11879
  %11927 = vmatprep.subr.mxu0 0.0
  %11928 = vmatpush2.msra.mxu0 %v11878
  %11929 = vmatprep.subr.mxu0 0.0
  %11930 = vmatpush2.msra.mxu0 %v11877
  %11931 = vmatprep.subr.mxu0 0.0
  %11932 = vmatpush2.msra.mxu0 %v11876
  %11933 = vmatprep.subr.mxu0 0.0
  %11934 = vmatpush2.msra.mxu0 %v11875
  %11935 = vmatprep.subr.mxu0 0.0
  %11936 = vmatpush2.msra.mxu0 %v11874
  %11937 = vmatprep.subr.mxu0 0.0
  %11938 = vmatpush2.msra.mxu0 %v11873
  %11939 = vmatprep.subr.mxu0 0.0
  %11940 = vmatpush2.msra.mxu0 %v11872
  %11941 = vmatprep.subr.mxu0 0.0
  %11942 = vmatpush2.msra.mxu0 %v11871
  %11943 = vmatprep.subr.mxu0 0.0
  %11944 = vmatpush2.msra.mxu0 %v11870
  %11945 = vmatprep.subr.mxu0 0.0
  %11946 = vmatpush2.msra.mxu0 %v11869
  %11947 = vmatprep.subr.mxu0 0.0
  %11948 = vmatpush2.msra.mxu0 %v11868
  %11949 = vmatprep.subr.mxu0 0.0
  %11950 = vmatpush2.msra.mxu0 %v11867
  %11951 = vmatprep.subr.mxu0 0.0
  %11952 = vmatpush2.msra.mxu0 %v11866
  %11953 = vmatprep.mubr.f32.mxu0 %v11787
  %11954 = vmatmul.mubr.f32.gmra.mxu0 %v11786
  %v11955 = vpop.f32.mrf.mxu0
  %v11956 = vadd.f32 %v11887, %v11955
  %v11957 = vpop.f32.mrf.mxu0
  %11958 = vmatprep.mubr.f32.mxu0 %v11789
  %11959 = vmatmul.mubr.f32.gmra.mxu0 %v11788
  %v11960 = vpop.f32.mrf.mxu0
  %v11961 = vadd.f32 %v11887, %v11960
  %v11962 = vpop.f32.mrf.mxu0
  %11963 = vmatprep.mubr.f32.mxu0 %v11791
  %11964 = vmatmul.mubr.f32.gmra.mxu0 %v11790
  %v11965 = vpop.f32.mrf.mxu0
  %v11966 = vadd.f32 %v11887, %v11965
  %v11967 = vpop.f32.mrf.mxu0
  %11968 = vmatprep.mubr.f32.mxu0 %v11793
  %11969 = vmatmul.mubr.f32.gmra.mxu0 %v11792
  %v11970 = vpop.f32.mrf.mxu0
  %v11971 = vadd.f32 %v11887, %v11970
  %v11972 = vpop.f32.mrf.mxu0
  %11973 = vmatprep.mubr.f32.mxu0 %v11795
  %11974 = vmatmul.mubr.f32.gmra.mxu0 %v11794
  %v11975 = vpop.f32.mrf.mxu0
  %v11976 = vadd.f32 %v11887, %v11975
  %v11977 = vpop.f32.mrf.mxu0
  %11978 = vmatprep.mubr.f32.mxu0 %v11797
  %11979 = vmatmul.mubr.f32.gmra.mxu0 %v11796
  %v11980 = vpop.f32.mrf.mxu0
  %v11981 = vadd.f32 %v11887, %v11980
  %v11982 = vpop.f32.mrf.mxu0
  %11983 = vmatprep.mubr.f32.mxu0 %v11799
  %11984 = vmatmul.mubr.f32.gmra.mxu0 %v11798
  %v11985 = vpop.f32.mrf.mxu0
  %v11986 = vadd.f32 %v11887, %v11985
  %v11987 = vpop.f32.mrf.mxu0
  %11988 = vmatprep.mubr.f32.mxu0 %v11801
  %11989 = vmatmul.mubr.f32.gmra.mxu0 %v11800
  %v11990 = vpop.f32.mrf.mxu0
  %v11991 = vadd.f32 %v11887, %v11990
  %v11992 = vpop.f32.mrf.mxu0
  %11993 = vmatprep.mubr.f32.mxu0 %v11803
  %11994 = vmatmul.mubr.f32.gmra.mxu0 %v11802
  %v11995 = vpop.f32.mrf.mxu0
  %v11996 = vadd.f32 %v11887, %v11995
  %v11997 = vpop.f32.mrf.mxu0
  %11998 = vmatprep.mubr.f32.mxu0 %v11805
  %11999 = vmatmul.mubr.f32.gmra.mxu0 %v11804
  %v12000 = vpop.f32.mrf.mxu0
  %v12001 = vadd.f32 %v11887, %v12000
  %v12002 = vpop.f32.mrf.mxu0
  %12003 = vmatprep.mubr.f32.mxu0 %v11807
  %12004 = vmatmul.mubr.f32.gmra.mxu0 %v11806
  %v12005 = vpop.f32.mrf.mxu0
  %v12006 = vadd.f32 %v11887, %v12005
  %v12007 = vpop.f32.mrf.mxu0
  %12008 = vmatprep.mubr.f32.mxu0 %v11809
  %12009 = vmatmul.mubr.f32.gmra.mxu0 %v11808
  %v12010 = vpop.f32.mrf.mxu0
  %v12011 = vadd.f32 %v11887, %v12010
  %v12012 = vpop.f32.mrf.mxu0
  %12013 = vmatprep.mubr.f32.mxu0 %v11811
  %12014 = vmatmul.mubr.f32.gmra.mxu0 %v11810
  %v12015 = vpop.f32.mrf.mxu0
  %v12016 = vadd.f32 %v11887, %v12015
  %v12017 = vpop.f32.mrf.mxu0
  %12018 = vmatprep.mubr.f32.mxu0 %v11813
  %12019 = vmatmul.mubr.f32.gmra.mxu0 %v11812
  %v12020 = vpop.f32.mrf.mxu0
  %v12021 = vadd.f32 %v11887, %v12020
  %v12022 = vpop.f32.mrf.mxu0
  %12023 = vmatprep.mubr.f32.mxu0 %v11815
  %12024 = vmatmul.mubr.f32.gmra.mxu0 %v11814
  %v12025 = vpop.f32.mrf.mxu0
  %v12026 = vadd.f32 %v11887, %v12025
  %v12027 = vpop.f32.mrf.mxu0
  %12028 = vmatprep.mubr.f32.mxu0 %v11817
  %12029 = vmatmul.mubr.f32.gmra.mxu0 %v11816
  %v12030 = vpop.f32.mrf.mxu0
  %v12031 = vadd.f32 %v11887, %v12030
  %v12032 = vpop.f32.mrf.mxu0
  %12033 = vmatprep.mubr.f32.mxu0 %v11819
  %12034 = vmatmul.mubr.f32.gmra.mxu0 %v11818
  %v12035 = vpop.f32.mrf.mxu0
  %v12036 = vadd.f32 %v11887, %v12035
  %v12037 = vpop.f32.mrf.mxu0
  %12038 = vmatprep.mubr.f32.mxu0 %v11821
  %12039 = vmatmul.mubr.f32.gmra.mxu0 %v11820
  %v12040 = vpop.f32.mrf.mxu0
  %v12041 = vadd.f32 %v11887, %v12040
  %v12042 = vpop.f32.mrf.mxu0
  %12043 = vmatprep.mubr.f32.mxu0 %v11823
  %12044 = vmatmul.mubr.f32.gmra.mxu0 %v11822
  %v12045 = vpop.f32.mrf.mxu0
  %v12046 = vadd.f32 %v11887, %v12045
  %v12047 = vpop.f32.mrf.mxu0
  %12048 = vmatprep.mubr.f32.mxu0 %v11825
  %12049 = vmatmul.mubr.f32.gmra.mxu0 %v11824
  %v12050 = vpop.f32.mrf.mxu0
  %v12051 = vadd.f32 %v11887, %v12050
  %v12052 = vpop.f32.mrf.mxu0
  %12053 = vmatprep.mubr.f32.mxu0 %v11827
  %12054 = vmatmul.mubr.f32.gmra.mxu0 %v11826
  %v12055 = vpop.f32.mrf.mxu0
  %v12056 = vadd.f32 %v11887, %v12055
  %v12057 = vpop.f32.mrf.mxu0
  %12058 = vmatprep.mubr.f32.mxu0 %v11829
  %12059 = vmatmul.mubr.f32.gmra.mxu0 %v11828
  %v12060 = vpop.f32.mrf.mxu0
  %v12061 = vadd.f32 %v11887, %v12060
  %v12062 = vpop.f32.mrf.mxu0
  %12063 = vmatprep.mubr.f32.mxu0 %v11831
  %12064 = vmatmul.mubr.f32.gmra.mxu0 %v11830
  %v12065 = vpop.f32.mrf.mxu0
  %v12066 = vadd.f32 %v11887, %v12065
  %v12067 = vpop.f32.mrf.mxu0
  %12068 = vmatprep.mubr.f32.mxu0 %v11833
  %12069 = vmatmul.mubr.f32.gmra.mxu0 %v11832
  %v12070 = vpop.f32.mrf.mxu0
  %v12071 = vadd.f32 %v11887, %v12070
  %v12072 = vpop.f32.mrf.mxu0
  %12073 = vmatprep.mubr.f32.mxu0 %v11835
  %12074 = vmatmul.mubr.f32.gmra.mxu0 %v11834
  %v12075 = vpop.f32.mrf.mxu0
  %v12076 = vadd.f32 %v11887, %v12075
  %v12077 = vpop.f32.mrf.mxu0
  %12078 = vmatprep.mubr.f32.mxu0 %v11837
  %12079 = vmatmul.mubr.f32.gmra.mxu0 %v11836
  %v12080 = vpop.f32.mrf.mxu0
  %v12081 = vadd.f32 %v11887, %v12080
  %v12082 = vpop.f32.mrf.mxu0
  %12083 = vmatprep.mubr.f32.mxu0 %v11839
  %12084 = vmatmul.mubr.f32.gmra.mxu0 %v11838
  %v12085 = vpop.f32.mrf.mxu0
  %v12086 = vadd.f32 %v11887, %v12085
  %v12087 = vpop.f32.mrf.mxu0
  %12088 = vmatprep.mubr.f32.mxu0 %v11841
  %12089 = vmatmul.mubr.f32.gmra.mxu0 %v11840
  %v12090 = vpop.f32.mrf.mxu0
  %v12091 = vadd.f32 %v11887, %v12090
  %v12092 = vpop.f32.mrf.mxu0
  %12093 = vmatprep.mubr.f32.mxu0 %v11843
  %12094 = vmatmul.mubr.f32.gmra.mxu0 %v11842
  %v12095 = vpop.f32.mrf.mxu0
  %v12096 = vadd.f32 %v11887, %v12095
  %v12097 = vpop.f32.mrf.mxu0
  %12098 = vmatprep.mubr.f32.mxu0 %v11845
  %12099 = vmatmul.mubr.f32.gmra.mxu0 %v11844
  %v12100 = vpop.f32.mrf.mxu0
  %v12101 = vadd.f32 %v11887, %v12100
  %v12102 = vpop.f32.mrf.mxu0
  %12103 = vmatprep.mubr.f32.mxu0 %v11847
  %12104 = vmatmul.mubr.f32.gmra.mxu0 %v11846
  %v12105 = vpop.f32.mrf.mxu0
  %v12106 = vadd.f32 %v11887, %v12105
  %v12107 = vpop.f32.mrf.mxu0
  %12108 = vmatprep.mubr.f32.mxu0 %v11849
  %12109 = vmatmul.mubr.f32.gmra.mxu0 %v11848
  %v12110 = vpop.f32.mrf.mxu0
  %v12111 = vadd.f32 %v11887, %v12110
  %v12112 = vpop.f32.mrf.mxu0
  %12113 = vdwg.mxu0
  %v12114 = vadd.f32 %v10879, %v11956
  %v12115 = vadd.f32 %v10880, %v11961
  %v12116 = vadd.f32 %v10881, %v11966
  %v12117 = vadd.f32 %v10882, %v11971
  %v12118 = vadd.f32 %v10883, %v11976
  %v12119 = vadd.f32 %v10884, %v11981
  %v12120 = vadd.f32 %v10885, %v11986
  %v12121 = vadd.f32 %v10886, %v11991
  %v12122 = vadd.f32 %v10887, %v11996
  %v12123 = vadd.f32 %v10888, %v12001
  %v12124 = vadd.f32 %v10889, %v12006
  %v12125 = vadd.f32 %v10890, %v12011
  %v12126 = vadd.f32 %v10891, %v12016
  %v12127 = vadd.f32 %v10892, %v12021
  %v12128 = vadd.f32 %v10893, %v12026
  %v12129 = vadd.f32 %v10894, %v12031
  %v12130 = vadd.f32 %v10895, %v12036
  %v12131 = vadd.f32 %v10896, %v12041
  %v12132 = vadd.f32 %v10897, %v12046
  %v12133 = vadd.f32 %v10898, %v12051
  %v12134 = vadd.f32 %v10899, %v12056
  %v12135 = vadd.f32 %v10900, %v12061
  %v12136 = vadd.f32 %v10901, %v12066
  %v12137 = vadd.f32 %v10902, %v12071
  %v12138 = vadd.f32 %v10903, %v12076
  %v12139 = vadd.f32 %v10904, %v12081
  %v12140 = vadd.f32 %v10905, %v12086
  %v12141 = vadd.f32 %v10906, %v12091
  %v12142 = vadd.f32 %v10907, %v12096
  %v12143 = vadd.f32 %v10908, %v12101
  %v12144 = vadd.f32 %v10909, %v12106
  %v12145 = vadd.f32 %v10910, %v12111
  %12146 = vst.msk [vmem:[%s13] sm:$0xff] %vm78, %v12114
  %12147 = vst.msk [vmem:[%s13 + $0x8] sm:$0xff] %vm78, %v12115
  %12148 = vst.msk [vmem:[%s13 + $0x10] sm:$0xff] %vm78, %v12116
  %12149 = vst.msk [vmem:[%s13 + $0x18] sm:$0xff] %vm78, %v12117
  %12150 = vst.msk [vmem:[%s13 + $0x20] sm:$0xff] %vm78, %v12118
  %12151 = vst.msk [vmem:[%s13 + $0x28] sm:$0xff] %vm78, %v12119
  %12152 = vst.msk [vmem:[%s13 + $0x30] sm:$0xff] %vm78, %v12120
  %12153 = vst.msk [vmem:[%s13 + $0x38] sm:$0xff] %vm78, %v12121
  %12154 = vst.msk [vmem:[%s13 + $0x40] sm:$0xff] %vm78, %v12122
  %12155 = vst.msk [vmem:[%s13 + $0x48] sm:$0xff] %vm78, %v12123
  %12156 = vst.msk [vmem:[%s13 + $0x50] sm:$0xff] %vm78, %v12124
  %12157 = vst.msk [vmem:[%s13 + $0x58] sm:$0xff] %vm78, %v12125
  %12158 = vst.msk [vmem:[%s13 + $0x60] sm:$0xff] %vm78, %v12126
  %12159 = vst.msk [vmem:[%s13 + $0x68] sm:$0xff] %vm78, %v12127
  %12160 = vst.msk [vmem:[%s13 + $0x70] sm:$0xff] %vm78, %v12128
  %12161 = vst.msk [vmem:[%s13 + $0x78] sm:$0xff] %vm78, %v12129
  %12162 = vst.msk [vmem:[%s13 + $0x80] sm:$0xff] %vm78, %v12130
  %12163 = vst.msk [vmem:[%s13 + $0x88] sm:$0xff] %vm78, %v12131
  %12164 = vst.msk [vmem:[%s13 + $0x90] sm:$0xff] %vm78, %v12132
  %12165 = vst.msk [vmem:[%s13 + $0x98] sm:$0xff] %vm78, %v12133
  %12166 = vst.msk [vmem:[%s13 + $0xa0] sm:$0xff] %vm78, %v12134
  %12167 = vst.msk [vmem:[%s13 + $0xa8] sm:$0xff] %vm78, %v12135
  %12168 = vst.msk [vmem:[%s13 + $0xb0] sm:$0xff] %vm78, %v12136
  %12169 = vst.msk [vmem:[%s13 + $0xb8] sm:$0xff] %vm78, %v12137
  %12170 = vst.msk [vmem:[%s13 + $0xc0] sm:$0xff] %vm78, %v12138
  %12171 = vst.msk [vmem:[%s13 + $0xc8] sm:$0xff] %vm78, %v12139
  %12172 = vst.msk [vmem:[%s13 + $0xd0] sm:$0xff] %vm78, %v12140
  %12173 = vst.msk [vmem:[%s13 + $0xd8] sm:$0xff] %vm78, %v12141
  %12174 = vst.msk [vmem:[%s13 + $0xe0] sm:$0xff] %vm78, %v12142
  %12175 = vst.msk [vmem:[%s13 + $0xe8] sm:$0xff] %vm78, %v12143
  %12176 = vst.msk [vmem:[%s13 + $0xf0] sm:$0xff] %vm78, %v12144
  %12177 = vst.msk [vmem:[%s13 + $0xf8] sm:$0xff] %vm78, %v12145
  // Predicated region
  $region54: #{tpu_custom_call.1} parent=0 // pred_check
    _
  $region55: #{tpu_custom_call.1} parent=0 // pred_check_branch
    %12179 = sbr.rel (0) target = $region57
  $region56: #{tpu_custom_call.1} parent=0 // pred_region
    _
  $region57: #{tpu_custom_call.1} parent=0 // pred_fallthru
    _
  // Predicated region
  $region58: #{tpu_custom_call.1} parent=0 // pred_check
    _
  $region59: #{tpu_custom_call.1} parent=0 // pred_check_branch
    %12181 = sbr.rel (0) target = $region61
  $region60: #{tpu_custom_call.1} parent=0 // pred_region
    _
  $region61: #{tpu_custom_call.1} parent=0 // pred_fallthru
    _

</llo_original>
